<compile_context>
chip_gen: v5e
topology: v5e:2x2
jax: 0.10.0
libtpu: 0.0.40
codegen_flags: <defaults>
</compile_context>

<pallas_src>
import functools

import jax
import jax.numpy as jnp
from jax.experimental import pallas as pl
from jax.experimental.pallas import tpu as pltpu

KS = 7            # depthwise kernel size
PAD = KS // 2     # padding 3
LPW = 8           # left pad width of the conv-window scratch (>= PAD, aligned)
BN_EPS = 1e-5


def _choose_tile_h(H, W, max_rows=1024):
    """Largest divisor TH of H (TH >= PAD) with TH*W <= max_rows rows per grid
    step; if even the smallest divisor exceeds it, take the smallest one."""
    divs = [d for d in range(PAD, H + 1) if H % d == 0]
    if not divs:
        return H
    fitting = [d for d in divs if d * W <= max_rows]
    return max(fitting) if fitting else min(divs)


def _choose_chunk_rows(TH, W, max_rows=512, min_rows=256):
    """Row sub-chunk CH (divisor of TH): whole tile if it is already small,
    otherwise the smallest divisor giving a matmul M = CH*W >= min_rows, so
    the fp32 conv accumulator stays vreg-sized while the MXU stays filled."""
    if TH * W <= max_rows:
        return TH
    cands = [d for d in range(1, TH + 1) if TH % d == 0 and d * W >= min_rows]
    return min(cands) if cands else TH


# ----------------------------------------------------------------------------
# Fused kernel: depthwise 7x7 conv (+ folded BN) -> MLP (+ folded gamma, 1/6)
#               -> residual add, for one (batch, H-tile) grid step.
# ----------------------------------------------------------------------------
def fused_block_kernel(x_ref, dw_ref, w1_ref, b1_ref, w2_ref, b2_ref,
                       o_ref, xpad_ref, *, ch_rows):
    # x_ref   : (H, W, C)                 full NHWC image (resident per batch)
    # dw_ref  : (49, C)   f32             depthwise taps, tap-major
    # w1_ref  : (C, 4C)   bf16            BN-folded pwconv1 weight
    # b1_ref  : (1, 4C)   f32             BN-folded pwconv1 bias
    # w2_ref  : (4C, C)   bf16            (gamma/6)-folded pwconv2 weight
    # b2_ref  : (1, C)    f32             gamma-folded pwconv2 bias
    # o_ref   : (TH, W, C)                output rows of this H-tile
    # xpad_ref: (TH+6, LPW+W+PAD, C) f32  zero-padded conv window (VMEM)
    TH, W, C = o_ref.shape
    j = pl.program_id(1)
    nh = pl.num_programs(1)
    h0 = j * TH

    # ---- build the padded conv window (only pad regions are zero-filled) ----
    zcol = jnp.zeros((TH + 2 * PAD, PAD, C), jnp.float32)
    xpad_ref[:, LPW - PAD:LPW, :] = zcol                    # left pad cols
    xpad_ref[:, LPW + W:LPW + W + PAD, :] = zcol            # right pad cols

    xpad_ref[PAD:PAD + TH, LPW:LPW + W, :] = (
        x_ref[pl.ds(h0, TH), :, :].astype(jnp.float32))     # interior rows

    @pl.when(j > 0)
    def _top_halo():
        xpad_ref[0:PAD, LPW:LPW + W, :] = (
            x_ref[pl.ds(h0 - PAD, PAD), :, :].astype(jnp.float32))

    @pl.when(j == 0)
    def _top_zero():
        xpad_ref[0:PAD, LPW:LPW + W, :] = jnp.zeros((PAD, W, C), jnp.float32)

    @pl.when(j < nh - 1)
    def _bottom_halo():
        xpad_ref[PAD + TH:PAD + TH + PAD, LPW:LPW + W, :] = (
            x_ref[pl.ds(h0 + TH, PAD), :, :].astype(jnp.float32))

    @pl.when(j == nh - 1)
    def _bottom_zero():
        xpad_ref[PAD + TH:PAD + TH + PAD, LPW:LPW + W, :] = (
            jnp.zeros((PAD, W, C), jnp.float32))

    # ---- per-row-chunk: 49 taps (VPU, f32) -> pwconv MLP (MXU) -> residual ----
    b1 = b1_ref[...]
    b2 = b2_ref[...]
    for r0 in range(0, TH, ch_rows):                         # static chunk loop
        acc = jnp.zeros((ch_rows, W, C), jnp.float32)
        for kh in range(KS):                                 # static tap loops
            xh = xpad_ref[r0 + kh:r0 + kh + ch_rows, :, :]   # one load per kh
            for kw in range(KS):
                tap = dw_ref[kh * KS + kw]                   # (C,)
                acc = acc + xh[:, LPW - PAD + kw:LPW - PAD + kw + W, :] * tap

        # pointwise MLP on the MXU: bf16 operands, fp32 accumulation.
        a = acc.reshape(ch_rows * W, C).astype(jnp.bfloat16)
        h = jnp.dot(a, w1_ref[...], preferred_element_type=jnp.float32) + b1
        h = h * jnp.clip(h + 3.0, 0.0, 6.0)       # Hardswish (1/6 folded in w2)
        y = jnp.dot(h.astype(jnp.bfloat16), w2_ref[...],
                    preferred_element_type=jnp.float32) + b2

        # residual straight from the resident f32 conv window.
        res = xpad_ref[PAD + r0:PAD + r0 + ch_rows, LPW:LPW + W, :]
        o_ref[r0:r0 + ch_rows, :, :] = (
            res + y.reshape(ch_rows, W, C)).astype(o_ref.dtype)


# ----------------------------------------------------------------------------
# Wrapper (accepts / returns NCHW like the PyTorch module)
# ----------------------------------------------------------------------------
def conv_encoder_bnhs(x_nchw, params):
    N, C, H, W = x_nchw.shape
    dtype = x_nchw.dtype

    # NCHW -> NHWC so channels sit on the lane dim inside the kernel.
    x_nhwc = jnp.transpose(x_nchw, (0, 2, 3, 1))

    # Depthwise weight (C, 7, 7) -> tap-major (49, C), f32.
    dw_w = jnp.transpose(params["dw_weight"], (1, 2, 0)).reshape(KS * KS, C)
    dw_w = dw_w.astype(jnp.float32)

    # Fold BatchNorm (running stats) into pwconv1 and the layer-scale gamma
    # together with Hardswish's 1/6 into pwconv2:
    #   (conv*s + t) @ W1 + b1          = conv @ (s[:,None]*W1) + (t @ W1 + b1)
    #   gamma * ((h*relu6(h+3)/6)@W2+b2)= (h*relu6(h+3)) @ (W2*gamma/6) + b2*gamma
    # TODO(synk): training-mode BatchNorm (batch statistics) not implemented.
    s = params["bn_weight"] / jnp.sqrt(params["bn_running_var"] + BN_EPS)
    t = params["bn_bias"] - params["bn_running_mean"] * s
    w1 = params["w1"].astype(jnp.float32)
    b1 = params["b1"].reshape(-1).astype(jnp.float32)
    w2 = params["w2"].astype(jnp.float32)
    b2 = params["b2"].reshape(-1).astype(jnp.float32)
    gamma = params["gamma"].reshape(-1).astype(jnp.float32)

    w1f = (s[:, None] * w1).astype(jnp.bfloat16)                 # (C, 4C)
    b1f = (b1 + t @ w1).reshape(1, -1).astype(jnp.float32)       # (1, 4C)
    w2f = (w2 * (gamma[None, :] / 6.0)).astype(jnp.bfloat16)     # (4C, C)
    b2f = (b2 * gamma).reshape(1, -1).astype(jnp.float32)        # (1, C)
    HID = w1.shape[1]

    TH = _choose_tile_h(H, W)
    CH = _choose_chunk_rows(TH, W)
    nH = H // TH

    # Rough VMEM budget (double-buffered blocks + scratch + hidden slack),
    # so larger tiles still fit under the scoped limit on every generation.
    xb = x_nhwc.dtype.itemsize
    est = (2 * H * W * C * xb                 # resident input block
           + 2 * TH * W * C * xb              # output block
           + 2 * KS * KS * C * 4              # taps
           + 2 * (2 * C * HID) * 2            # bf16 weights
           + 2 * (HID + C) * 4                # biases
           + (TH + 2 * PAD) * (LPW + W + PAD) * C * 4   # conv-window scratch
           + 4 * CH * W * HID * 4)            # in-flight hidden activation
    vmem_limit = int(min(max(2 * est, 32 * 1024 * 1024), 64 * 1024 * 1024))

    kernel = functools.partial(fused_block_kernel, ch_rows=CH)

    out_nhwc = pl.pallas_call(
        kernel,
        out_shape=jax.ShapeDtypeStruct((N, H, W, C), dtype),
        grid=(N, nH),
        in_specs=[
            # full image stays resident across the H-tiles of one batch elem
            pl.BlockSpec((None, H, W, C), lambda n, j: (n, 0, 0, 0)),
            pl.BlockSpec((KS * KS, C), lambda n, j: (0, 0)),
            pl.BlockSpec((C, HID), lambda n, j: (0, 0)),
            pl.BlockSpec((1, HID), lambda n, j: (0, 0)),
            pl.BlockSpec((HID, C), lambda n, j: (0, 0)),
            pl.BlockSpec((1, C), lambda n, j: (0, 0)),
        ],
        out_specs=pl.BlockSpec((None, TH, W, C), lambda n, j: (n, j, 0, 0)),
        scratch_shapes=[
            pltpu.VMEM((TH + 2 * PAD, LPW + W + PAD, C), jnp.float32),
        ],
        compiler_params=pltpu.CompilerParams(
            dimension_semantics=("parallel", "parallel"),
            vmem_limit_bytes=vmem_limit),
    )(x_nhwc, dw_w, w1f, b1f, w2f, b2f)

    return jnp.transpose(out_nhwc, (0, 3, 1, 2))   # back to NCHW


# ----------------------------------------------------------------------------
# Pure-JAX reference (inference-mode PyTorch semantics), for a sanity check.
# ----------------------------------------------------------------------------
def _reference(x_nchw, params):
    N, C, H, W = x_nchw.shape
    x = jnp.transpose(x_nchw, (0, 2, 3, 1)).astype(jnp.float32)   # NHWC
    xp = jnp.pad(x, ((0, 0), (PAD, PAD), (PAD, PAD), (0, 0)))
    w = jnp.transpose(params["dw_weight"], (1, 2, 0))             # (7, 7, C)
    y = jnp.zeros_like(x)
    for kh in range(KS):
        for kw in range(KS):
            y = y + xp[:, kh:kh + H, kw:kw + W, :] * w[kh, kw]
    s = params["bn_weight"] / jnp.sqrt(params["bn_running_var"] + BN_EPS)
    t = params["bn_bias"] - params["bn_running_mean"] * s
    y = y * s + t
    h = y @ params["w1"] + params["b1"]
    h = h * jnp.clip(h + 3.0, 0.0, 6.0) / 6.0
    y2 = h @ params["w2"] + params["b2"]
    y2 = y2 * params["gamma"]
    out = x + y2
    return jnp.transpose(out, (0, 3, 1, 2)).astype(x_nchw.dtype)


def init_params(key, dim, expan_ratio=4, layer_scale_init_value=1e-6):
    hid = expan_ratio * dim
    ks = jax.random.split(key, 6)
    return {
        # nn.Conv2d(dim, dim, 7, groups=dim, bias=False): weight (dim, 1, 7, 7)
        "dw_weight": jax.random.normal(ks[0], (dim, KS, KS), jnp.float32) * 0.1,
        # nn.BatchNorm2d(dim): affine + running stats (inference mode)
        "bn_weight": 1.0 + 0.05 * jax.random.normal(ks[1], (dim,), jnp.float32),
        "bn_bias": 0.05 * jax.random.normal(ks[2], (dim,), jnp.float32),
        "bn_running_mean": jnp.zeros((dim,), jnp.float32),
        "bn_running_var": jnp.ones((dim,), jnp.float32),
        # nn.Linear(dim, 4*dim), stored as (in, out) so the kernel does x@W+b
        "w1": jax.random.normal(ks[3], (dim, hid), jnp.float32) * (dim ** -0.5),
        "b1": jnp.zeros((1, hid), jnp.float32),
        # nn.Linear(4*dim, dim)
        "w2": jax.random.normal(ks[4], (hid, dim), jnp.float32) * (hid ** -0.5),
        "b2": jnp.zeros((1, dim), jnp.float32),
        # layer scale gamma
        "gamma": layer_scale_init_value * jnp.ones((1, dim), jnp.float32),
    }


if __name__ == "__main__":
    key = jax.random.PRNGKey(0)
    k_x, k_p, k_x2, k_p2 = jax.random.split(key, 4)

    # Primary shape (single H-tile, single row-chunk path).
    N, dim, H, W = 2, 32, 16, 16
    x = jax.random.normal(k_x, (N, dim, H, W), jnp.float32)   # NCHW input
    # layer_scale_init_value=0.5 keeps the MLP branch numerically visible so
    # the tolerance check actually exercises the fused conv+MLP path.
    params = init_params(k_p, dim, layer_scale_init_value=0.5)

    fwd = jax.jit(conv_encoder_bnhs)
    out = jax.block_until_ready(fwd(x, params))
    assert out.shape == (N, dim, H, W), out.shape
    ref = _reference(x, params)
    err = float(jnp.max(jnp.abs(out - ref)))
    assert bool(jnp.allclose(out, ref, rtol=5e-2, atol=5e-2)), err

    # Secondary shape: exercises multi-H-tile halos and the row-chunked path.
    N2, dim2, H2, W2 = 1, 32, 48, 32
    x2 = jax.random.normal(k_x2, (N2, dim2, H2, W2), jnp.float32)
    params2 = init_params(k_p2, dim2, layer_scale_init_value=0.5)
    out2 = jax.block_until_ready(jax.jit(conv_encoder_bnhs)(x2, params2))
    assert out2.shape == (N2, dim2, H2, W2), out2.shape
    ref2 = _reference(x2, params2)
    err2 = float(jnp.max(jnp.abs(out2 - ref2)))
    assert bool(jnp.allclose(out2, ref2, rtol=5e-2, atol=5e-2)), err2

    print("KERNEL_OK")
</pallas_src>

<mosaic_0001>
module attributes {stable_mosaic.version = 11 : i64} {
  func.func @fused_block_kernel(%arg0: i32, %arg1: i32, %arg2: memref<1x16x16x32xf32, #tpu.memory_space<vmem>>, %arg3: memref<49x32xf32, #tpu.memory_space<vmem>>, %arg4: memref<32x128xbf16, #tpu.memory_space<vmem>>, %arg5: memref<1x128xf32, #tpu.memory_space<vmem>>, %arg6: memref<128x32xbf16, #tpu.memory_space<vmem>>, %arg7: memref<1x32xf32, #tpu.memory_space<vmem>>, %arg8: memref<1x16x16x32xf32, #tpu.memory_space<vmem>>, %arg9: memref<22x27x32xf32, #tpu.memory_space<vmem>>) attributes {dimension_semantics = [#tpu.dimension_semantics<parallel>, #tpu.dimension_semantics<parallel>], iteration_bounds = array<i64: 2, 1>, scalar_prefetch = 0 : i64, scratch_operands = 1 : i64, tpu.core_type = #tpu.core_type<tc>, window_params = [{transform_indices = @transform_0, window_bounds = array<i64: 1, 16, 16, 32>}, {pipeline_mode = #tpu.pipeline_mode<synchronous>, transform_indices = @transform_1, window_bounds = array<i64: 49, 32>}, {pipeline_mode = #tpu.pipeline_mode<synchronous>, transform_indices = @transform_2, window_bounds = array<i64: 32, 128>}, {pipeline_mode = #tpu.pipeline_mode<synchronous>, transform_indices = @transform_3, window_bounds = array<i64: 1, 128>}, {pipeline_mode = #tpu.pipeline_mode<synchronous>, transform_indices = @transform_4, window_bounds = array<i64: 128, 32>}, {pipeline_mode = #tpu.pipeline_mode<synchronous>, transform_indices = @transform_5, window_bounds = array<i64: 1, 32>}, {transform_indices = @transform_6, window_bounds = array<i64: 1, 16, 16, 32>}]} {
    %c16_i32 = arith.constant 16 : i32
    %0 = arith.muli %arg1, %c16_i32 : i32
    %cst = arith.constant 0.000000e+00 : f32
    %1 = vector.broadcast %cst : f32 to vector<22x3x32xf32>
    %c0 = arith.constant 0 : index
    %c5 = arith.constant 5 : index
    %c0_0 = arith.constant 0 : index
    %2 = vector.load %arg9[%c0, %c5, %c0_0] : memref<22x27x32xf32, #tpu.memory_space<vmem>>, vector<22x3x32xf32>
    tpu.vector_store %arg9[%c0, %c5, %c0_0], %1 {strides = array<i32>} : memref<22x27x32xf32, #tpu.memory_space<vmem>>, vector<22x3x32xf32>,
    %c0_1 = arith.constant 0 : index
    %c24 = arith.constant 24 : index
    %c0_2 = arith.constant 0 : index
    %3 = vector.load %arg9[%c0_1, %c24, %c0_2] : memref<22x27x32xf32, #tpu.memory_space<vmem>>, vector<22x3x32xf32>
    tpu.vector_store %arg9[%c0_1, %c24, %c0_2], %1 {strides = array<i32>} : memref<22x27x32xf32, #tpu.memory_space<vmem>>, vector<22x3x32xf32>,
    %c0_3 = arith.constant 0 : index
    %4 = arith.index_cast %0 : i32 to index
    %c0_4 = arith.constant 0 : index
    %c0_5 = arith.constant 0 : index
    %5 = vector.load %arg2[%c0_3, %4, %c0_4, %c0_5] : memref<1x16x16x32xf32, #tpu.memory_space<vmem>>, vector<1x16x16x32xf32>
    %6 = vector.shape_cast %5 : vector<1x16x16x32xf32> to vector<16x16x32xf32>
    %c3 = arith.constant 3 : index
    %c8 = arith.constant 8 : index
    %c0_6 = arith.constant 0 : index
    %7 = vector.load %arg9[%c3, %c8, %c0_6] : memref<22x27x32xf32, #tpu.memory_space<vmem>>, vector<16x16x32xf32>
    tpu.vector_store %arg9[%c3, %c8, %c0_6], %6 {strides = array<i32>} : memref<22x27x32xf32, #tpu.memory_space<vmem>>, vector<16x16x32xf32>,
    %c0_i32 = arith.constant 0 : i32
    %8 = arith.cmpi sgt, %arg1, %c0_i32 : i32
    %9 = arith.extui %8 : i1 to i32
    %c0_i32_7 = arith.constant 0 : i32
    %10 = arith.cmpi ne, %9, %c0_i32_7 : i32
    scf.if %10 {
      %c3_i32 = arith.constant 3 : i32
      %397 = arith.subi %0, %c3_i32 : i32
      %c0_110 = arith.constant 0 : index
      %398 = arith.index_cast %397 : i32 to index
      %c0_111 = arith.constant 0 : index
      %c0_112 = arith.constant 0 : index
      %399 = vector.load %arg2[%c0_110, %398, %c0_111, %c0_112] : memref<1x16x16x32xf32, #tpu.memory_space<vmem>>, vector<1x3x16x32xf32>
      %400 = vector.shape_cast %399 : vector<1x3x16x32xf32> to vector<3x16x32xf32>
      %c0_113 = arith.constant 0 : index
      %c8_114 = arith.constant 8 : index
      %c0_115 = arith.constant 0 : index
      %401 = vector.load %arg9[%c0_113, %c8_114, %c0_115] : memref<22x27x32xf32, #tpu.memory_space<vmem>>, vector<3x16x32xf32>
      tpu.vector_store %arg9[%c0_113, %c8_114, %c0_115], %400 {strides = array<i32>} : memref<22x27x32xf32, #tpu.memory_space<vmem>>, vector<3x16x32xf32>,
    } else {
    }
    %c0_i32_8 = arith.constant 0 : i32
    %11 = arith.cmpi eq, %arg1, %c0_i32_8 : i32
    %12 = arith.extui %11 : i1 to i32
    %c0_i32_9 = arith.constant 0 : i32
    %13 = arith.cmpi ne, %12, %c0_i32_9 : i32
    scf.if %13 {
      %cst_110 = arith.constant 0.000000e+00 : f32
      %397 = vector.broadcast %cst_110 : f32 to vector<3x16x32xf32>
      %c0_111 = arith.constant 0 : index
      %c8_112 = arith.constant 8 : index
      %c0_113 = arith.constant 0 : index
      %398 = vector.load %arg9[%c0_111, %c8_112, %c0_113] : memref<22x27x32xf32, #tpu.memory_space<vmem>>, vector<3x16x32xf32>
      tpu.vector_store %arg9[%c0_111, %c8_112, %c0_113], %397 {strides = array<i32>} : memref<22x27x32xf32, #tpu.memory_space<vmem>>, vector<3x16x32xf32>,
    } else {
    }
    %c0_i32_10 = arith.constant 0 : i32
    %14 = arith.cmpi slt, %arg1, %c0_i32_10 : i32
    %15 = arith.extui %14 : i1 to i32
    %c0_i32_11 = arith.constant 0 : i32
    %16 = arith.cmpi ne, %15, %c0_i32_11 : i32
    scf.if %16 {
      %c16_i32_110 = arith.constant 16 : i32
      %397 = arith.addi %0, %c16_i32_110 : i32
      %c0_111 = arith.constant 0 : index
      %398 = arith.index_cast %397 : i32 to index
      %c0_112 = arith.constant 0 : index
      %c0_113 = arith.constant 0 : index
      %399 = vector.load %arg2[%c0_111, %398, %c0_112, %c0_113] : memref<1x16x16x32xf32, #tpu.memory_space<vmem>>, vector<1x3x16x32xf32>
      %400 = vector.shape_cast %399 : vector<1x3x16x32xf32> to vector<3x16x32xf32>
      %c19_114 = arith.constant 19 : index
      %c8_115 = arith.constant 8 : index
      %c0_116 = arith.constant 0 : index
      %401 = vector.load %arg9[%c19_114, %c8_115, %c0_116] : memref<22x27x32xf32, #tpu.memory_space<vmem>>, vector<3x16x32xf32>
      tpu.vector_store %arg9[%c19_114, %c8_115, %c0_116], %400 {strides = array<i32>} : memref<22x27x32xf32, #tpu.memory_space<vmem>>, vector<3x16x32xf32>,
    } else {
    }
    %c0_i32_12 = arith.constant 0 : i32
    %17 = arith.cmpi eq, %arg1, %c0_i32_12 : i32
    %18 = arith.extui %17 : i1 to i32
    %c0_i32_13 = arith.constant 0 : i32
    %19 = arith.cmpi ne, %18, %c0_i32_13 : i32
    scf.if %19 {
      %cst_110 = arith.constant 0.000000e+00 : f32
      %397 = vector.broadcast %cst_110 : f32 to vector<3x16x32xf32>
      %c19_111 = arith.constant 19 : index
      %c8_112 = arith.constant 8 : index
      %c0_113 = arith.constant 0 : index
      %398 = vector.load %arg9[%c19_111, %c8_112, %c0_113] : memref<22x27x32xf32, #tpu.memory_space<vmem>>, vector<3x16x32xf32>
      tpu.vector_store %arg9[%c19_111, %c8_112, %c0_113], %397 {strides = array<i32>} : memref<22x27x32xf32, #tpu.memory_space<vmem>>, vector<3x16x32xf32>,
    } else {
    }
    %c0_14 = arith.constant 0 : index
    %c0_15 = arith.constant 0 : index
    %20 = vector.load %arg5[%c0_14, %c0_15] : memref<1x128xf32, #tpu.memory_space<vmem>>, vector<1x128xf32>
    %c0_16 = arith.constant 0 : index
    %c0_17 = arith.constant 0 : index
    %21 = vector.load %arg7[%c0_16, %c0_17] : memref<1x32xf32, #tpu.memory_space<vmem>>, vector<1x32xf32>
    %cst_18 = arith.constant 0.000000e+00 : f32
    %22 = vector.broadcast %cst_18 : f32 to vector<16x16x32xf32>
    %c0_19 = arith.constant 0 : index
    %c0_20 = arith.constant 0 : index
    %c0_21 = arith.constant 0 : index
    %23 = vector.load %arg9[%c0_19, %c0_20, %c0_21] : memref<22x27x32xf32, #tpu.memory_space<vmem>>, vector<16x27x32xf32>
    %c0_22 = arith.constant 0 : index
    %c0_23 = arith.constant 0 : index
    %24 = vector.load %arg3[%c0_22, %c0_23] : memref<49x32xf32, #tpu.memory_space<vmem>>, vector<1x32xf32>
    %25 = vector.shape_cast %24 : vector<1x32xf32> to vector<32xf32>
    %26 = vector.extract_strided_slice %23 {offsets = [0, 5, 0], sizes = [16, 16, 32], strides = [1, 1, 1]} : vector<16x27x32xf32> to vector<16x16x32xf32>
    %27 = vector.shape_cast %25 : vector<32xf32> to vector<1x1x32xf32>
    %28 = vector.broadcast %27 : vector<1x1x32xf32> to vector<16x16x32xf32>
    %29 = arith.mulf %26, %28 : vector<16x16x32xf32>
    %30 = arith.addf %22, %29 : vector<16x16x32xf32>
    %c1 = arith.constant 1 : index
    %c0_24 = arith.constant 0 : index
    %31 = vector.load %arg3[%c1, %c0_24] : memref<49x32xf32, #tpu.memory_space<vmem>>, vector<1x32xf32>
    %32 = vector.shape_cast %31 : vector<1x32xf32> to vector<32xf32>
    %33 = vector.extract_strided_slice %23 {offsets = [0, 6, 0], sizes = [16, 16, 32], strides = [1, 1, 1]} : vector<16x27x32xf32> to vector<16x16x32xf32>
    %34 = vector.shape_cast %32 : vector<32xf32> to vector<1x1x32xf32>
    %35 = vector.broadcast %34 : vector<1x1x32xf32> to vector<16x16x32xf32>
    %36 = arith.mulf %33, %35 : vector<16x16x32xf32>
    %37 = arith.addf %30, %36 : vector<16x16x32xf32>
    %c2 = arith.constant 2 : index
    %c0_25 = arith.constant 0 : index
    %38 = vector.load %arg3[%c2, %c0_25] : memref<49x32xf32, #tpu.memory_space<vmem>>, vector<1x32xf32>
    %39 = vector.shape_cast %38 : vector<1x32xf32> to vector<32xf32>
    %40 = vector.extract_strided_slice %23 {offsets = [0, 7, 0], sizes = [16, 16, 32], strides = [1, 1, 1]} : vector<16x27x32xf32> to vector<16x16x32xf32>
    %41 = vector.shape_cast %39 : vector<32xf32> to vector<1x1x32xf32>
    %42 = vector.broadcast %41 : vector<1x1x32xf32> to vector<16x16x32xf32>
    %43 = arith.mulf %40, %42 : vector<16x16x32xf32>
    %44 = arith.addf %37, %43 : vector<16x16x32xf32>
    %c3_26 = arith.constant 3 : index
    %c0_27 = arith.constant 0 : index
    %45 = vector.load %arg3[%c3_26, %c0_27] : memref<49x32xf32, #tpu.memory_space<vmem>>, vector<1x32xf32>
    %46 = vector.shape_cast %45 : vector<1x32xf32> to vector<32xf32>
    %47 = vector.extract_strided_slice %23 {offsets = [0, 8, 0], sizes = [16, 16, 32], strides = [1, 1, 1]} : vector<16x27x32xf32> to vector<16x16x32xf32>
    %48 = vector.shape_cast %46 : vector<32xf32> to vector<1x1x32xf32>
    %49 = vector.broadcast %48 : vector<1x1x32xf32> to vector<16x16x32xf32>
    %50 = arith.mulf %47, %49 : vector<16x16x32xf32>
    %51 = arith.addf %44, %50 : vector<16x16x32xf32>
    %c4 = arith.constant 4 : index
    %c0_28 = arith.constant 0 : index
    %52 = vector.load %arg3[%c4, %c0_28] : memref<49x32xf32, #tpu.memory_space<vmem>>, vector<1x32xf32>
    %53 = vector.shape_cast %52 : vector<1x32xf32> to vector<32xf32>
    %54 = vector.extract_strided_slice %23 {offsets = [0, 9, 0], sizes = [16, 16, 32], strides = [1, 1, 1]} : vector<16x27x32xf32> to vector<16x16x32xf32>
    %55 = vector.shape_cast %53 : vector<32xf32> to vector<1x1x32xf32>
    %56 = vector.broadcast %55 : vector<1x1x32xf32> to vector<16x16x32xf32>
    %57 = arith.mulf %54, %56 : vector<16x16x32xf32>
    %58 = arith.addf %51, %57 : vector<16x16x32xf32>
    %c5_29 = arith.constant 5 : index
    %c0_30 = arith.constant 0 : index
    %59 = vector.load %arg3[%c5_29, %c0_30] : memref<49x32xf32, #tpu.memory_space<vmem>>, vector<1x32xf32>
    %60 = vector.shape_cast %59 : vector<1x32xf32> to vector<32xf32>
    %61 = vector.extract_strided_slice %23 {offsets = [0, 10, 0], sizes = [16, 16, 32], strides = [1, 1, 1]} : vector<16x27x32xf32> to vector<16x16x32xf32>
    %62 = vector.shape_cast %60 : vector<32xf32> to vector<1x1x32xf32>
    %63 = vector.broadcast %62 : vector<1x1x32xf32> to vector<16x16x32xf32>
    %64 = arith.mulf %61, %63 : vector<16x16x32xf32>
    %65 = arith.addf %58, %64 : vector<16x16x32xf32>
    %c6 = arith.constant 6 : index
    %c0_31 = arith.constant 0 : index
    %66 = vector.load %arg3[%c6, %c0_31] : memref<49x32xf32, #tpu.memory_space<vmem>>, vector<1x32xf32>
    %67 = vector.shape_cast %66 : vector<1x32xf32> to vector<32xf32>
    %68 = vector.extract_strided_slice %23 {offsets = [0, 11, 0], sizes = [16, 16, 32], strides = [1, 1, 1]} : vector<16x27x32xf32> to vector<16x16x32xf32>
    %69 = vector.shape_cast %67 : vector<32xf32> to vector<1x1x32xf32>
    %70 = vector.broadcast %69 : vector<1x1x32xf32> to vector<16x16x32xf32>
    %71 = arith.mulf %68, %70 : vector<16x16x32xf32>
    %72 = arith.addf %65, %71 : vector<16x16x32xf32>
    %c1_32 = arith.constant 1 : index
    %c0_33 = arith.constant 0 : index
    %c0_34 = arith.constant 0 : index
    %73 = vector.load %arg9[%c1_32, %c0_33, %c0_34] : memref<22x27x32xf32, #tpu.memory_space<vmem>>, vector<16x27x32xf32>
    %c7 = arith.constant 7 : index
    %c0_35 = arith.constant 0 : index
    %74 = vector.load %arg3[%c7, %c0_35] : memref<49x32xf32, #tpu.memory_space<vmem>>, vector<1x32xf32>
    %75 = vector.shape_cast %74 : vector<1x32xf32> to vector<32xf32>
    %76 = vector.extract_strided_slice %73 {offsets = [0, 5, 0], sizes = [16, 16, 32], strides = [1, 1, 1]} : vector<16x27x32xf32> to vector<16x16x32xf32>
    %77 = vector.shape_cast %75 : vector<32xf32> to vector<1x1x32xf32>
    %78 = vector.broadcast %77 : vector<1x1x32xf32> to vector<16x16x32xf32>
    %79 = arith.mulf %76, %78 : vector<16x16x32xf32>
    %80 = arith.addf %72, %79 : vector<16x16x32xf32>
    %c8_36 = arith.constant 8 : index
    %c0_37 = arith.constant 0 : index
    %81 = vector.load %arg3[%c8_36, %c0_37] : memref<49x32xf32, #tpu.memory_space<vmem>>, vector<1x32xf32>
    %82 = vector.shape_cast %81 : vector<1x32xf32> to vector<32xf32>
    %83 = vector.extract_strided_slice %73 {offsets = [0, 6, 0], sizes = [16, 16, 32], strides = [1, 1, 1]} : vector<16x27x32xf32> to vector<16x16x32xf32>
    %84 = vector.shape_cast %82 : vector<32xf32> to vector<1x1x32xf32>
    %85 = vector.broadcast %84 : vector<1x1x32xf32> to vector<16x16x32xf32>
    %86 = arith.mulf %83, %85 : vector<16x16x32xf32>
    %87 = arith.addf %80, %86 : vector<16x16x32xf32>
    %c9 = arith.constant 9 : index
    %c0_38 = arith.constant 0 : index
    %88 = vector.load %arg3[%c9, %c0_38] : memref<49x32xf32, #tpu.memory_space<vmem>>, vector<1x32xf32>
    %89 = vector.shape_cast %88 : vector<1x32xf32> to vector<32xf32>
    %90 = vector.extract_strided_slice %73 {offsets = [0, 7, 0], sizes = [16, 16, 32], strides = [1, 1, 1]} : vector<16x27x32xf32> to vector<16x16x32xf32>
    %91 = vector.shape_cast %89 : vector<32xf32> to vector<1x1x32xf32>
    %92 = vector.broadcast %91 : vector<1x1x32xf32> to vector<16x16x32xf32>
    %93 = arith.mulf %90, %92 : vector<16x16x32xf32>
    %94 = arith.addf %87, %93 : vector<16x16x32xf32>
    %c10 = arith.constant 10 : index
    %c0_39 = arith.constant 0 : index
    %95 = vector.load %arg3[%c10, %c0_39] : memref<49x32xf32, #tpu.memory_space<vmem>>, vector<1x32xf32>
    %96 = vector.shape_cast %95 : vector<1x32xf32> to vector<32xf32>
    %97 = vector.extract_strided_slice %73 {offsets = [0, 8, 0], sizes = [16, 16, 32], strides = [1, 1, 1]} : vector<16x27x32xf32> to vector<16x16x32xf32>
    %98 = vector.shape_cast %96 : vector<32xf32> to vector<1x1x32xf32>
    %99 = vector.broadcast %98 : vector<1x1x32xf32> to vector<16x16x32xf32>
    %100 = arith.mulf %97, %99 : vector<16x16x32xf32>
    %101 = arith.addf %94, %100 : vector<16x16x32xf32>
    %c11 = arith.constant 11 : index
    %c0_40 = arith.constant 0 : index
    %102 = vector.load %arg3[%c11, %c0_40] : memref<49x32xf32, #tpu.memory_space<vmem>>, vector<1x32xf32>
    %103 = vector.shape_cast %102 : vector<1x32xf32> to vector<32xf32>
    %104 = vector.extract_strided_slice %73 {offsets = [0, 9, 0], sizes = [16, 16, 32], strides = [1, 1, 1]} : vector<16x27x32xf32> to vector<16x16x32xf32>
    %105 = vector.shape_cast %103 : vector<32xf32> to vector<1x1x32xf32>
    %106 = vector.broadcast %105 : vector<1x1x32xf32> to vector<16x16x32xf32>
    %107 = arith.mulf %104, %106 : vector<16x16x32xf32>
    %108 = arith.addf %101, %107 : vector<16x16x32xf32>
    %c12 = arith.constant 12 : index
    %c0_41 = arith.constant 0 : index
    %109 = vector.load %arg3[%c12, %c0_41] : memref<49x32xf32, #tpu.memory_space<vmem>>, vector<1x32xf32>
    %110 = vector.shape_cast %109 : vector<1x32xf32> to vector<32xf32>
    %111 = vector.extract_strided_slice %73 {offsets = [0, 10, 0], sizes = [16, 16, 32], strides = [1, 1, 1]} : vector<16x27x32xf32> to vector<16x16x32xf32>
    %112 = vector.shape_cast %110 : vector<32xf32> to vector<1x1x32xf32>
    %113 = vector.broadcast %112 : vector<1x1x32xf32> to vector<16x16x32xf32>
    %114 = arith.mulf %111, %113 : vector<16x16x32xf32>
    %115 = arith.addf %108, %114 : vector<16x16x32xf32>
    %c13 = arith.constant 13 : index
    %c0_42 = arith.constant 0 : index
    %116 = vector.load %arg3[%c13, %c0_42] : memref<49x32xf32, #tpu.memory_space<vmem>>, vector<1x32xf32>
    %117 = vector.shape_cast %116 : vector<1x32xf32> to vector<32xf32>
    %118 = vector.extract_strided_slice %73 {offsets = [0, 11, 0], sizes = [16, 16, 32], strides = [1, 1, 1]} : vector<16x27x32xf32> to vector<16x16x32xf32>
    %119 = vector.shape_cast %117 : vector<32xf32> to vector<1x1x32xf32>
    %120 = vector.broadcast %119 : vector<1x1x32xf32> to vector<16x16x32xf32>
    %121 = arith.mulf %118, %120 : vector<16x16x32xf32>
    %122 = arith.addf %115, %121 : vector<16x16x32xf32>
    %c2_43 = arith.constant 2 : index
    %c0_44 = arith.constant 0 : index
    %c0_45 = arith.constant 0 : index
    %123 = vector.load %arg9[%c2_43, %c0_44, %c0_45] : memref<22x27x32xf32, #tpu.memory_space<vmem>>, vector<16x27x32xf32>
    %c14 = arith.constant 14 : index
    %c0_46 = arith.constant 0 : index
    %124 = vector.load %arg3[%c14, %c0_46] : memref<49x32xf32, #tpu.memory_space<vmem>>, vector<1x32xf32>
    %125 = vector.shape_cast %124 : vector<1x32xf32> to vector<32xf32>
    %126 = vector.extract_strided_slice %123 {offsets = [0, 5, 0], sizes = [16, 16, 32], strides = [1, 1, 1]} : vector<16x27x32xf32> to vector<16x16x32xf32>
    %127 = vector.shape_cast %125 : vector<32xf32> to vector<1x1x32xf32>
    %128 = vector.broadcast %127 : vector<1x1x32xf32> to vector<16x16x32xf32>
    %129 = arith.mulf %126, %128 : vector<16x16x32xf32>
    %130 = arith.addf %122, %129 : vector<16x16x32xf32>
    %c15 = arith.constant 15 : index
    %c0_47 = arith.constant 0 : index
    %131 = vector.load %arg3[%c15, %c0_47] : memref<49x32xf32, #tpu.memory_space<vmem>>, vector<1x32xf32>
    %132 = vector.shape_cast %131 : vector<1x32xf32> to vector<32xf32>
    %133 = vector.extract_strided_slice %123 {offsets = [0, 6, 0], sizes = [16, 16, 32], strides = [1, 1, 1]} : vector<16x27x32xf32> to vector<16x16x32xf32>
    %134 = vector.shape_cast %132 : vector<32xf32> to vector<1x1x32xf32>
    %135 = vector.broadcast %134 : vector<1x1x32xf32> to vector<16x16x32xf32>
    %136 = arith.mulf %133, %135 : vector<16x16x32xf32>
    %137 = arith.addf %130, %136 : vector<16x16x32xf32>
    %c16 = arith.constant 16 : index
    %c0_48 = arith.constant 0 : index
    %138 = vector.load %arg3[%c16, %c0_48] : memref<49x32xf32, #tpu.memory_space<vmem>>, vector<1x32xf32>
    %139 = vector.shape_cast %138 : vector<1x32xf32> to vector<32xf32>
    %140 = vector.extract_strided_slice %123 {offsets = [0, 7, 0], sizes = [16, 16, 32], strides = [1, 1, 1]} : vector<16x27x32xf32> to vector<16x16x32xf32>
    %141 = vector.shape_cast %139 : vector<32xf32> to vector<1x1x32xf32>
    %142 = vector.broadcast %141 : vector<1x1x32xf32> to vector<16x16x32xf32>
    %143 = arith.mulf %140, %142 : vector<16x16x32xf32>
    %144 = arith.addf %137, %143 : vector<16x16x32xf32>
    %c17 = arith.constant 17 : index
    %c0_49 = arith.constant 0 : index
    %145 = vector.load %arg3[%c17, %c0_49] : memref<49x32xf32, #tpu.memory_space<vmem>>, vector<1x32xf32>
    %146 = vector.shape_cast %145 : vector<1x32xf32> to vector<32xf32>
    %147 = vector.extract_strided_slice %123 {offsets = [0, 8, 0], sizes = [16, 16, 32], strides = [1, 1, 1]} : vector<16x27x32xf32> to vector<16x16x32xf32>
    %148 = vector.shape_cast %146 : vector<32xf32> to vector<1x1x32xf32>
    %149 = vector.broadcast %148 : vector<1x1x32xf32> to vector<16x16x32xf32>
    %150 = arith.mulf %147, %149 : vector<16x16x32xf32>
    %151 = arith.addf %144, %150 : vector<16x16x32xf32>
    %c18 = arith.constant 18 : index
    %c0_50 = arith.constant 0 : index
    %152 = vector.load %arg3[%c18, %c0_50] : memref<49x32xf32, #tpu.memory_space<vmem>>, vector<1x32xf32>
    %153 = vector.shape_cast %152 : vector<1x32xf32> to vector<32xf32>
    %154 = vector.extract_strided_slice %123 {offsets = [0, 9, 0], sizes = [16, 16, 32], strides = [1, 1, 1]} : vector<16x27x32xf32> to vector<16x16x32xf32>
    %155 = vector.shape_cast %153 : vector<32xf32> to vector<1x1x32xf32>
    %156 = vector.broadcast %155 : vector<1x1x32xf32> to vector<16x16x32xf32>
    %157 = arith.mulf %154, %156 : vector<16x16x32xf32>
    %158 = arith.addf %151, %157 : vector<16x16x32xf32>
    %c19 = arith.constant 19 : index
    %c0_51 = arith.constant 0 : index
    %159 = vector.load %arg3[%c19, %c0_51] : memref<49x32xf32, #tpu.memory_space<vmem>>, vector<1x32xf32>
    %160 = vector.shape_cast %159 : vector<1x32xf32> to vector<32xf32>
    %161 = vector.extract_strided_slice %123 {offsets = [0, 10, 0], sizes = [16, 16, 32], strides = [1, 1, 1]} : vector<16x27x32xf32> to vector<16x16x32xf32>
    %162 = vector.shape_cast %160 : vector<32xf32> to vector<1x1x32xf32>
    %163 = vector.broadcast %162 : vector<1x1x32xf32> to vector<16x16x32xf32>
    %164 = arith.mulf %161, %163 : vector<16x16x32xf32>
    %165 = arith.addf %158, %164 : vector<16x16x32xf32>
    %c20 = arith.constant 20 : index
    %c0_52 = arith.constant 0 : index
    %166 = vector.load %arg3[%c20, %c0_52] : memref<49x32xf32, #tpu.memory_space<vmem>>, vector<1x32xf32>
    %167 = vector.shape_cast %166 : vector<1x32xf32> to vector<32xf32>
    %168 = vector.extract_strided_slice %123 {offsets = [0, 11, 0], sizes = [16, 16, 32], strides = [1, 1, 1]} : vector<16x27x32xf32> to vector<16x16x32xf32>
    %169 = vector.shape_cast %167 : vector<32xf32> to vector<1x1x32xf32>
    %170 = vector.broadcast %169 : vector<1x1x32xf32> to vector<16x16x32xf32>
    %171 = arith.mulf %168, %170 : vector<16x16x32xf32>
    %172 = arith.addf %165, %171 : vector<16x16x32xf32>
    %c3_53 = arith.constant 3 : index
    %c0_54 = arith.constant 0 : index
    %c0_55 = arith.constant 0 : index
    %173 = vector.load %arg9[%c3_53, %c0_54, %c0_55] : memref<22x27x32xf32, #tpu.memory_space<vmem>>, vector<16x27x32xf32>
    %c21 = arith.constant 21 : index
    %c0_56 = arith.constant 0 : index
    %174 = vector.load %arg3[%c21, %c0_56] : memref<49x32xf32, #tpu.memory_space<vmem>>, vector<1x32xf32>
    %175 = vector.shape_cast %174 : vector<1x32xf32> to vector<32xf32>
    %176 = vector.extract_strided_slice %173 {offsets = [0, 5, 0], sizes = [16, 16, 32], strides = [1, 1, 1]} : vector<16x27x32xf32> to vector<16x16x32xf32>
    %177 = vector.shape_cast %175 : vector<32xf32> to vector<1x1x32xf32>
    %178 = vector.broadcast %177 : vector<1x1x32xf32> to vector<16x16x32xf32>
    %179 = arith.mulf %176, %178 : vector<16x16x32xf32>
    %180 = arith.addf %172, %179 : vector<16x16x32xf32>
    %c22 = arith.constant 22 : index
    %c0_57 = arith.constant 0 : index
    %181 = vector.load %arg3[%c22, %c0_57] : memref<49x32xf32, #tpu.memory_space<vmem>>, vector<1x32xf32>
    %182 = vector.shape_cast %181 : vector<1x32xf32> to vector<32xf32>
    %183 = vector.extract_strided_slice %173 {offsets = [0, 6, 0], sizes = [16, 16, 32], strides = [1, 1, 1]} : vector<16x27x32xf32> to vector<16x16x32xf32>
    %184 = vector.shape_cast %182 : vector<32xf32> to vector<1x1x32xf32>
    %185 = vector.broadcast %184 : vector<1x1x32xf32> to vector<16x16x32xf32>
    %186 = arith.mulf %183, %185 : vector<16x16x32xf32>
    %187 = arith.addf %180, %186 : vector<16x16x32xf32>
    %c23 = arith.constant 23 : index
    %c0_58 = arith.constant 0 : index
    %188 = vector.load %arg3[%c23, %c0_58] : memref<49x32xf32, #tpu.memory_space<vmem>>, vector<1x32xf32>
    %189 = vector.shape_cast %188 : vector<1x32xf32> to vector<32xf32>
    %190 = vector.extract_strided_slice %173 {offsets = [0, 7, 0], sizes = [16, 16, 32], strides = [1, 1, 1]} : vector<16x27x32xf32> to vector<16x16x32xf32>
    %191 = vector.shape_cast %189 : vector<32xf32> to vector<1x1x32xf32>
    %192 = vector.broadcast %191 : vector<1x1x32xf32> to vector<16x16x32xf32>
    %193 = arith.mulf %190, %192 : vector<16x16x32xf32>
    %194 = arith.addf %187, %193 : vector<16x16x32xf32>
    %c24_59 = arith.constant 24 : index
    %c0_60 = arith.constant 0 : index
    %195 = vector.load %arg3[%c24_59, %c0_60] : memref<49x32xf32, #tpu.memory_space<vmem>>, vector<1x32xf32>
    %196 = vector.shape_cast %195 : vector<1x32xf32> to vector<32xf32>
    %197 = vector.extract_strided_slice %173 {offsets = [0, 8, 0], sizes = [16, 16, 32], strides = [1, 1, 1]} : vector<16x27x32xf32> to vector<16x16x32xf32>
    %198 = vector.shape_cast %196 : vector<32xf32> to vector<1x1x32xf32>
    %199 = vector.broadcast %198 : vector<1x1x32xf32> to vector<16x16x32xf32>
    %200 = arith.mulf %197, %199 : vector<16x16x32xf32>
    %201 = arith.addf %194, %200 : vector<16x16x32xf32>
    %c25 = arith.constant 25 : index
    %c0_61 = arith.constant 0 : index
    %202 = vector.load %arg3[%c25, %c0_61] : memref<49x32xf32, #tpu.memory_space<vmem>>, vector<1x32xf32>
    %203 = vector.shape_cast %202 : vector<1x32xf32> to vector<32xf32>
    %204 = vector.extract_strided_slice %173 {offsets = [0, 9, 0], sizes = [16, 16, 32], strides = [1, 1, 1]} : vector<16x27x32xf32> to vector<16x16x32xf32>
    %205 = vector.shape_cast %203 : vector<32xf32> to vector<1x1x32xf32>
    %206 = vector.broadcast %205 : vector<1x1x32xf32> to vector<16x16x32xf32>
    %207 = arith.mulf %204, %206 : vector<16x16x32xf32>
    %208 = arith.addf %201, %207 : vector<16x16x32xf32>
    %c26 = arith.constant 26 : index
    %c0_62 = arith.constant 0 : index
    %209 = vector.load %arg3[%c26, %c0_62] : memref<49x32xf32, #tpu.memory_space<vmem>>, vector<1x32xf32>
    %210 = vector.shape_cast %209 : vector<1x32xf32> to vector<32xf32>
    %211 = vector.extract_strided_slice %173 {offsets = [0, 10, 0], sizes = [16, 16, 32], strides = [1, 1, 1]} : vector<16x27x32xf32> to vector<16x16x32xf32>
    %212 = vector.shape_cast %210 : vector<32xf32> to vector<1x1x32xf32>
    %213 = vector.broadcast %212 : vector<1x1x32xf32> to vector<16x16x32xf32>
    %214 = arith.mulf %211, %213 : vector<16x16x32xf32>
    %215 = arith.addf %208, %214 : vector<16x16x32xf32>
    %c27 = arith.constant 27 : index
    %c0_63 = arith.constant 0 : index
    %216 = vector.load %arg3[%c27, %c0_63] : memref<49x32xf32, #tpu.memory_space<vmem>>, vector<1x32xf32>
    %217 = vector.shape_cast %216 : vector<1x32xf32> to vector<32xf32>
    %218 = vector.extract_strided_slice %173 {offsets = [0, 11, 0], sizes = [16, 16, 32], strides = [1, 1, 1]} : vector<16x27x32xf32> to vector<16x16x32xf32>
    %219 = vector.shape_cast %217 : vector<32xf32> to vector<1x1x32xf32>
    %220 = vector.broadcast %219 : vector<1x1x32xf32> to vector<16x16x32xf32>
    %221 = arith.mulf %218, %220 : vector<16x16x32xf32>
    %222 = arith.addf %215, %221 : vector<16x16x32xf32>
    %c4_64 = arith.constant 4 : index
    %c0_65 = arith.constant 0 : index
    %c0_66 = arith.constant 0 : index
    %223 = vector.load %arg9[%c4_64, %c0_65, %c0_66] : memref<22x27x32xf32, #tpu.memory_space<vmem>>, vector<16x27x32xf32>
    %c28 = arith.constant 28 : index
    %c0_67 = arith.constant 0 : index
    %224 = vector.load %arg3[%c28, %c0_67] : memref<49x32xf32, #tpu.memory_space<vmem>>, vector<1x32xf32>
    %225 = vector.shape_cast %224 : vector<1x32xf32> to vector<32xf32>
    %226 = vector.extract_strided_slice %223 {offsets = [0, 5, 0], sizes = [16, 16, 32], strides = [1, 1, 1]} : vector<16x27x32xf32> to vector<16x16x32xf32>
    %227 = vector.shape_cast %225 : vector<32xf32> to vector<1x1x32xf32>
    %228 = vector.broadcast %227 : vector<1x1x32xf32> to vector<16x16x32xf32>
    %229 = arith.mulf %226, %228 : vector<16x16x32xf32>
    %230 = arith.addf %222, %229 : vector<16x16x32xf32>
    %c29 = arith.constant 29 : index
    %c0_68 = arith.constant 0 : index
    %231 = vector.load %arg3[%c29, %c0_68] : memref<49x32xf32, #tpu.memory_space<vmem>>, vector<1x32xf32>
    %232 = vector.shape_cast %231 : vector<1x32xf32> to vector<32xf32>
    %233 = vector.extract_strided_slice %223 {offsets = [0, 6, 0], sizes = [16, 16, 32], strides = [1, 1, 1]} : vector<16x27x32xf32> to vector<16x16x32xf32>
    %234 = vector.shape_cast %232 : vector<32xf32> to vector<1x1x32xf32>
    %235 = vector.broadcast %234 : vector<1x1x32xf32> to vector<16x16x32xf32>
    %236 = arith.mulf %233, %235 : vector<16x16x32xf32>
    %237 = arith.addf %230, %236 : vector<16x16x32xf32>
    %c30 = arith.constant 30 : index
    %c0_69 = arith.constant 0 : index
    %238 = vector.load %arg3[%c30, %c0_69] : memref<49x32xf32, #tpu.memory_space<vmem>>, vector<1x32xf32>
    %239 = vector.shape_cast %238 : vector<1x32xf32> to vector<32xf32>
    %240 = vector.extract_strided_slice %223 {offsets = [0, 7, 0], sizes = [16, 16, 32], strides = [1, 1, 1]} : vector<16x27x32xf32> to vector<16x16x32xf32>
    %241 = vector.shape_cast %239 : vector<32xf32> to vector<1x1x32xf32>
    %242 = vector.broadcast %241 : vector<1x1x32xf32> to vector<16x16x32xf32>
    %243 = arith.mulf %240, %242 : vector<16x16x32xf32>
    %244 = arith.addf %237, %243 : vector<16x16x32xf32>
    %c31 = arith.constant 31 : index
    %c0_70 = arith.constant 0 : index
    %245 = vector.load %arg3[%c31, %c0_70] : memref<49x32xf32, #tpu.memory_space<vmem>>, vector<1x32xf32>
    %246 = vector.shape_cast %245 : vector<1x32xf32> to vector<32xf32>
    %247 = vector.extract_strided_slice %223 {offsets = [0, 8, 0], sizes = [16, 16, 32], strides = [1, 1, 1]} : vector<16x27x32xf32> to vector<16x16x32xf32>
    %248 = vector.shape_cast %246 : vector<32xf32> to vector<1x1x32xf32>
    %249 = vector.broadcast %248 : vector<1x1x32xf32> to vector<16x16x32xf32>
    %250 = arith.mulf %247, %249 : vector<16x16x32xf32>
    %251 = arith.addf %244, %250 : vector<16x16x32xf32>
    %c32 = arith.constant 32 : index
    %c0_71 = arith.constant 0 : index
    %252 = vector.load %arg3[%c32, %c0_71] : memref<49x32xf32, #tpu.memory_space<vmem>>, vector<1x32xf32>
    %253 = vector.shape_cast %252 : vector<1x32xf32> to vector<32xf32>
    %254 = vector.extract_strided_slice %223 {offsets = [0, 9, 0], sizes = [16, 16, 32], strides = [1, 1, 1]} : vector<16x27x32xf32> to vector<16x16x32xf32>
    %255 = vector.shape_cast %253 : vector<32xf32> to vector<1x1x32xf32>
    %256 = vector.broadcast %255 : vector<1x1x32xf32> to vector<16x16x32xf32>
    %257 = arith.mulf %254, %256 : vector<16x16x32xf32>
    %258 = arith.addf %251, %257 : vector<16x16x32xf32>
    %c33 = arith.constant 33 : index
    %c0_72 = arith.constant 0 : index
    %259 = vector.load %arg3[%c33, %c0_72] : memref<49x32xf32, #tpu.memory_space<vmem>>, vector<1x32xf32>
    %260 = vector.shape_cast %259 : vector<1x32xf32> to vector<32xf32>
    %261 = vector.extract_strided_slice %223 {offsets = [0, 10, 0], sizes = [16, 16, 32], strides = [1, 1, 1]} : vector<16x27x32xf32> to vector<16x16x32xf32>
    %262 = vector.shape_cast %260 : vector<32xf32> to vector<1x1x32xf32>
    %263 = vector.broadcast %262 : vector<1x1x32xf32> to vector<16x16x32xf32>
    %264 = arith.mulf %261, %263 : vector<16x16x32xf32>
    %265 = arith.addf %258, %264 : vector<16x16x32xf32>
    %c34 = arith.constant 34 : index
    %c0_73 = arith.constant 0 : index
    %266 = vector.load %arg3[%c34, %c0_73] : memref<49x32xf32, #tpu.memory_space<vmem>>, vector<1x32xf32>
    %267 = vector.shape_cast %266 : vector<1x32xf32> to vector<32xf32>
    %268 = vector.extract_strided_slice %223 {offsets = [0, 11, 0], sizes = [16, 16, 32], strides = [1, 1, 1]} : vector<16x27x32xf32> to vector<16x16x32xf32>
    %269 = vector.shape_cast %267 : vector<32xf32> to vector<1x1x32xf32>
    %270 = vector.broadcast %269 : vector<1x1x32xf32> to vector<16x16x32xf32>
    %271 = arith.mulf %268, %270 : vector<16x16x32xf32>
    %272 = arith.addf %265, %271 : vector<16x16x32xf32>
    %c5_74 = arith.constant 5 : index
    %c0_75 = arith.constant 0 : index
    %c0_76 = arith.constant 0 : index
    %273 = vector.load %arg9[%c5_74, %c0_75, %c0_76] : memref<22x27x32xf32, #tpu.memory_space<vmem>>, vector<16x27x32xf32>
    %c35 = arith.constant 35 : index
    %c0_77 = arith.constant 0 : index
    %274 = vector.load %arg3[%c35, %c0_77] : memref<49x32xf32, #tpu.memory_space<vmem>>, vector<1x32xf32>
    %275 = vector.shape_cast %274 : vector<1x32xf32> to vector<32xf32>
    %276 = vector.extract_strided_slice %273 {offsets = [0, 5, 0], sizes = [16, 16, 32], strides = [1, 1, 1]} : vector<16x27x32xf32> to vector<16x16x32xf32>
    %277 = vector.shape_cast %275 : vector<32xf32> to vector<1x1x32xf32>
    %278 = vector.broadcast %277 : vector<1x1x32xf32> to vector<16x16x32xf32>
    %279 = arith.mulf %276, %278 : vector<16x16x32xf32>
    %280 = arith.addf %272, %279 : vector<16x16x32xf32>
    %c36 = arith.constant 36 : index
    %c0_78 = arith.constant 0 : index
    %281 = vector.load %arg3[%c36, %c0_78] : memref<49x32xf32, #tpu.memory_space<vmem>>, vector<1x32xf32>
    %282 = vector.shape_cast %281 : vector<1x32xf32> to vector<32xf32>
    %283 = vector.extract_strided_slice %273 {offsets = [0, 6, 0], sizes = [16, 16, 32], strides = [1, 1, 1]} : vector<16x27x32xf32> to vector<16x16x32xf32>
    %284 = vector.shape_cast %282 : vector<32xf32> to vector<1x1x32xf32>
    %285 = vector.broadcast %284 : vector<1x1x32xf32> to vector<16x16x32xf32>
    %286 = arith.mulf %283, %285 : vector<16x16x32xf32>
    %287 = arith.addf %280, %286 : vector<16x16x32xf32>
    %c37 = arith.constant 37 : index
    %c0_79 = arith.constant 0 : index
    %288 = vector.load %arg3[%c37, %c0_79] : memref<49x32xf32, #tpu.memory_space<vmem>>, vector<1x32xf32>
    %289 = vector.shape_cast %288 : vector<1x32xf32> to vector<32xf32>
    %290 = vector.extract_strided_slice %273 {offsets = [0, 7, 0], sizes = [16, 16, 32], strides = [1, 1, 1]} : vector<16x27x32xf32> to vector<16x16x32xf32>
    %291 = vector.shape_cast %289 : vector<32xf32> to vector<1x1x32xf32>
    %292 = vector.broadcast %291 : vector<1x1x32xf32> to vector<16x16x32xf32>
    %293 = arith.mulf %290, %292 : vector<16x16x32xf32>
    %294 = arith.addf %287, %293 : vector<16x16x32xf32>
    %c38 = arith.constant 38 : index
    %c0_80 = arith.constant 0 : index
    %295 = vector.load %arg3[%c38, %c0_80] : memref<49x32xf32, #tpu.memory_space<vmem>>, vector<1x32xf32>
    %296 = vector.shape_cast %295 : vector<1x32xf32> to vector<32xf32>
    %297 = vector.extract_strided_slice %273 {offsets = [0, 8, 0], sizes = [16, 16, 32], strides = [1, 1, 1]} : vector<16x27x32xf32> to vector<16x16x32xf32>
    %298 = vector.shape_cast %296 : vector<32xf32> to vector<1x1x32xf32>
    %299 = vector.broadcast %298 : vector<1x1x32xf32> to vector<16x16x32xf32>
    %300 = arith.mulf %297, %299 : vector<16x16x32xf32>
    %301 = arith.addf %294, %300 : vector<16x16x32xf32>
    %c39 = arith.constant 39 : index
    %c0_81 = arith.constant 0 : index
    %302 = vector.load %arg3[%c39, %c0_81] : memref<49x32xf32, #tpu.memory_space<vmem>>, vector<1x32xf32>
    %303 = vector.shape_cast %302 : vector<1x32xf32> to vector<32xf32>
    %304 = vector.extract_strided_slice %273 {offsets = [0, 9, 0], sizes = [16, 16, 32], strides = [1, 1, 1]} : vector<16x27x32xf32> to vector<16x16x32xf32>
    %305 = vector.shape_cast %303 : vector<32xf32> to vector<1x1x32xf32>
    %306 = vector.broadcast %305 : vector<1x1x32xf32> to vector<16x16x32xf32>
    %307 = arith.mulf %304, %306 : vector<16x16x32xf32>
    %308 = arith.addf %301, %307 : vector<16x16x32xf32>
    %c40 = arith.constant 40 : index
    %c0_82 = arith.constant 0 : index
    %309 = vector.load %arg3[%c40, %c0_82] : memref<49x32xf32, #tpu.memory_space<vmem>>, vector<1x32xf32>
    %310 = vector.shape_cast %309 : vector<1x32xf32> to vector<32xf32>
    %311 = vector.extract_strided_slice %273 {offsets = [0, 10, 0], sizes = [16, 16, 32], strides = [1, 1, 1]} : vector<16x27x32xf32> to vector<16x16x32xf32>
    %312 = vector.shape_cast %310 : vector<32xf32> to vector<1x1x32xf32>
    %313 = vector.broadcast %312 : vector<1x1x32xf32> to vector<16x16x32xf32>
    %314 = arith.mulf %311, %313 : vector<16x16x32xf32>
    %315 = arith.addf %308, %314 : vector<16x16x32xf32>
    %c41 = arith.constant 41 : index
    %c0_83 = arith.constant 0 : index
    %316 = vector.load %arg3[%c41, %c0_83] : memref<49x32xf32, #tpu.memory_space<vmem>>, vector<1x32xf32>
    %317 = vector.shape_cast %316 : vector<1x32xf32> to vector<32xf32>
    %318 = vector.extract_strided_slice %273 {offsets = [0, 11, 0], sizes = [16, 16, 32], strides = [1, 1, 1]} : vector<16x27x32xf32> to vector<16x16x32xf32>
    %319 = vector.shape_cast %317 : vector<32xf32> to vector<1x1x32xf32>
    %320 = vector.broadcast %319 : vector<1x1x32xf32> to vector<16x16x32xf32>
    %321 = arith.mulf %318, %320 : vector<16x16x32xf32>
    %322 = arith.addf %315, %321 : vector<16x16x32xf32>
    %c6_84 = arith.constant 6 : index
    %c0_85 = arith.constant 0 : index
    %c0_86 = arith.constant 0 : index
    %323 = vector.load %arg9[%c6_84, %c0_85, %c0_86] : memref<22x27x32xf32, #tpu.memory_space<vmem>>, vector<16x27x32xf32>
    %c42 = arith.constant 42 : index
    %c0_87 = arith.constant 0 : index
    %324 = vector.load %arg3[%c42, %c0_87] : memref<49x32xf32, #tpu.memory_space<vmem>>, vector<1x32xf32>
    %325 = vector.shape_cast %324 : vector<1x32xf32> to vector<32xf32>
    %326 = vector.extract_strided_slice %323 {offsets = [0, 5, 0], sizes = [16, 16, 32], strides = [1, 1, 1]} : vector<16x27x32xf32> to vector<16x16x32xf32>
    %327 = vector.shape_cast %325 : vector<32xf32> to vector<1x1x32xf32>
    %328 = vector.broadcast %327 : vector<1x1x32xf32> to vector<16x16x32xf32>
    %329 = arith.mulf %326, %328 : vector<16x16x32xf32>
    %330 = arith.addf %322, %329 : vector<16x16x32xf32>
    %c43 = arith.constant 43 : index
    %c0_88 = arith.constant 0 : index
    %331 = vector.load %arg3[%c43, %c0_88] : memref<49x32xf32, #tpu.memory_space<vmem>>, vector<1x32xf32>
    %332 = vector.shape_cast %331 : vector<1x32xf32> to vector<32xf32>
    %333 = vector.extract_strided_slice %323 {offsets = [0, 6, 0], sizes = [16, 16, 32], strides = [1, 1, 1]} : vector<16x27x32xf32> to vector<16x16x32xf32>
    %334 = vector.shape_cast %332 : vector<32xf32> to vector<1x1x32xf32>
    %335 = vector.broadcast %334 : vector<1x1x32xf32> to vector<16x16x32xf32>
    %336 = arith.mulf %333, %335 : vector<16x16x32xf32>
    %337 = arith.addf %330, %336 : vector<16x16x32xf32>
    %c44 = arith.constant 44 : index
    %c0_89 = arith.constant 0 : index
    %338 = vector.load %arg3[%c44, %c0_89] : memref<49x32xf32, #tpu.memory_space<vmem>>, vector<1x32xf32>
    %339 = vector.shape_cast %338 : vector<1x32xf32> to vector<32xf32>
    %340 = vector.extract_strided_slice %323 {offsets = [0, 7, 0], sizes = [16, 16, 32], strides = [1, 1, 1]} : vector<16x27x32xf32> to vector<16x16x32xf32>
    %341 = vector.shape_cast %339 : vector<32xf32> to vector<1x1x32xf32>
    %342 = vector.broadcast %341 : vector<1x1x32xf32> to vector<16x16x32xf32>
    %343 = arith.mulf %340, %342 : vector<16x16x32xf32>
    %344 = arith.addf %337, %343 : vector<16x16x32xf32>
    %c45 = arith.constant 45 : index
    %c0_90 = arith.constant 0 : index
    %345 = vector.load %arg3[%c45, %c0_90] : memref<49x32xf32, #tpu.memory_space<vmem>>, vector<1x32xf32>
    %346 = vector.shape_cast %345 : vector<1x32xf32> to vector<32xf32>
    %347 = vector.extract_strided_slice %323 {offsets = [0, 8, 0], sizes = [16, 16, 32], strides = [1, 1, 1]} : vector<16x27x32xf32> to vector<16x16x32xf32>
    %348 = vector.shape_cast %346 : vector<32xf32> to vector<1x1x32xf32>
    %349 = vector.broadcast %348 : vector<1x1x32xf32> to vector<16x16x32xf32>
    %350 = arith.mulf %347, %349 : vector<16x16x32xf32>
    %351 = arith.addf %344, %350 : vector<16x16x32xf32>
    %c46 = arith.constant 46 : index
    %c0_91 = arith.constant 0 : index
    %352 = vector.load %arg3[%c46, %c0_91] : memref<49x32xf32, #tpu.memory_space<vmem>>, vector<1x32xf32>
    %353 = vector.shape_cast %352 : vector<1x32xf32> to vector<32xf32>
    %354 = vector.extract_strided_slice %323 {offsets = [0, 9, 0], sizes = [16, 16, 32], strides = [1, 1, 1]} : vector<16x27x32xf32> to vector<16x16x32xf32>
    %355 = vector.shape_cast %353 : vector<32xf32> to vector<1x1x32xf32>
    %356 = vector.broadcast %355 : vector<1x1x32xf32> to vector<16x16x32xf32>
    %357 = arith.mulf %354, %356 : vector<16x16x32xf32>
    %358 = arith.addf %351, %357 : vector<16x16x32xf32>
    %c47 = arith.constant 47 : index
    %c0_92 = arith.constant 0 : index
    %359 = vector.load %arg3[%c47, %c0_92] : memref<49x32xf32, #tpu.memory_space<vmem>>, vector<1x32xf32>
    %360 = vector.shape_cast %359 : vector<1x32xf32> to vector<32xf32>
    %361 = vector.extract_strided_slice %323 {offsets = [0, 10, 0], sizes = [16, 16, 32], strides = [1, 1, 1]} : vector<16x27x32xf32> to vector<16x16x32xf32>
    %362 = vector.shape_cast %360 : vector<32xf32> to vector<1x1x32xf32>
    %363 = vector.broadcast %362 : vector<1x1x32xf32> to vector<16x16x32xf32>
    %364 = arith.mulf %361, %363 : vector<16x16x32xf32>
    %365 = arith.addf %358, %364 : vector<16x16x32xf32>
    %c48 = arith.constant 48 : index
    %c0_93 = arith.constant 0 : index
    %366 = vector.load %arg3[%c48, %c0_93] : memref<49x32xf32, #tpu.memory_space<vmem>>, vector<1x32xf32>
    %367 = vector.shape_cast %366 : vector<1x32xf32> to vector<32xf32>
    %368 = vector.extract_strided_slice %323 {offsets = [0, 11, 0], sizes = [16, 16, 32], strides = [1, 1, 1]} : vector<16x27x32xf32> to vector<16x16x32xf32>
    %369 = vector.shape_cast %367 : vector<32xf32> to vector<1x1x32xf32>
    %370 = vector.broadcast %369 : vector<1x1x32xf32> to vector<16x16x32xf32>
    %371 = arith.mulf %368, %370 : vector<16x16x32xf32>
    %372 = arith.addf %365, %371 : vector<16x16x32xf32>
    %373 = vector.shape_cast %372 : vector<16x16x32xf32> to vector<256x32xf32>
    %374 = arith.truncf %373 : vector<256x32xf32> to vector<256x32xbf16>
    %c0_94 = arith.constant 0 : index
    %c0_95 = arith.constant 0 : index
    %375 = vector.load %arg4[%c0_94, %c0_95] : memref<32x128xbf16, #tpu.memory_space<vmem>>, vector<32x128xbf16>
    %cst_96 = arith.constant dense<0.000000e+00> : vector<256x128xf32>
    %376 = tpu.matmul %374, %375, %cst_96 {dimension_numbers = #tpu.dot_dimension_numbers<[1], [0], [0], [1], [0, 0, 1, 1], [], []>} : vector<256x32xbf16>, vector<32x128xbf16>, vector<256x128xf32> -> vector<256x128xf32>
    %377 = vector.broadcast %20 : vector<1x128xf32> to vector<256x128xf32>
    %378 = arith.addf %376, %377 : vector<256x128xf32>
    %cst_97 = arith.constant 3.000000e+00 : f32
    %379 = vector.broadcast %cst_97 : f32 to vector<256x128xf32>
    %380 = arith.addf %378, %379 : vector<256x128xf32>
    %cst_98 = arith.constant 0.000000e+00 : f32
    %cst_99 = arith.constant 6.000000e+00 : f32
    %381 = vector.broadcast %cst_98 : f32 to vector<256x128xf32>
    %382 = arith.maximumf %381, %380 : vector<256x128xf32>
    %383 = vector.broadcast %cst_99 : f32 to vector<256x128xf32>
    %384 = arith.minimumf %383, %382 : vector<256x128xf32>
    %385 = arith.mulf %378, %384 : vector<256x128xf32>
    %386 = arith.truncf %385 : vector<256x128xf32> to vector<256x128xbf16>
    %c0_100 = arith.constant 0 : index
    %c0_101 = arith.constant 0 : index
    %387 = vector.load %arg6[%c0_100, %c0_101] : memref<128x32xbf16, #tpu.memory_space<vmem>>, vector<128x32xbf16>
    %cst_102 = arith.constant dense<0.000000e+00> : vector<256x32xf32>
    %388 = tpu.matmul %386, %387, %cst_102 {dimension_numbers = #tpu.dot_dimension_numbers<[1], [0], [0], [1], [0, 0, 1, 1], [], []>} : vector<256x128xbf16>, vector<128x32xbf16>, vector<256x32xf32> -> vector<256x32xf32>
    %389 = vector.broadcast %21 : vector<1x32xf32> to vector<256x32xf32>
    %390 = arith.addf %388, %389 : vector<256x32xf32>
    %c3_103 = arith.constant 3 : index
    %c8_104 = arith.constant 8 : index
    %c0_105 = arith.constant 0 : index
    %391 = vector.load %arg9[%c3_103, %c8_104, %c0_105] : memref<22x27x32xf32, #tpu.memory_space<vmem>>, vector<16x16x32xf32>
    %392 = vector.shape_cast %390 : vector<256x32xf32> to vector<16x16x32xf32>
    %393 = arith.addf %391, %392 : vector<16x16x32xf32>
    %c0_106 = arith.constant 0 : index
    %c0_107 = arith.constant 0 : index
    %c0_108 = arith.constant 0 : index
    %c0_109 = arith.constant 0 : index
    %394 = vector.load %arg8[%c0_106, %c0_107, %c0_108, %c0_109] : memref<1x16x16x32xf32, #tpu.memory_space<vmem>>, vector<1x16x16x32xf32>
    %395 = vector.shape_cast %394 : vector<1x16x16x32xf32> to vector<16x16x32xf32>
    %396 = vector.shape_cast %393 : vector<16x16x32xf32> to vector<1x16x16x32xf32>
    tpu.vector_store %arg8[%c0_106, %c0_107, %c0_108, %c0_109], %396 {strides = array<i32>} : memref<1x16x16x32xf32, #tpu.memory_space<vmem>>, vector<1x16x16x32xf32>,
    return
  }
  func.func @transform_0(%arg0: i32, %arg1: i32) -> (i32, i32, i32, i32) {
    %c0_i32 = arith.constant 0 : i32
    %c0_i32_0 = arith.constant 0 : i32
    %c0_i32_1 = arith.constant 0 : i32
    %c0_i32_2 = arith.constant 0 : i32
    return %arg0, %c0_i32, %c0_i32_0, %c0_i32_1 : i32, i32, i32, i32
  }
  func.func @transform_1(%arg0: i32, %arg1: i32) -> (i32, i32) {
    %c0_i32 = arith.constant 0 : i32
    %c0_i32_0 = arith.constant 0 : i32
    %c0_i32_1 = arith.constant 0 : i32
    return %c0_i32, %c0_i32_0 : i32, i32
  }
  func.func @transform_2(%arg0: i32, %arg1: i32) -> (i32, i32) {
    %c0_i32 = arith.constant 0 : i32
    %c0_i32_0 = arith.constant 0 : i32
    %c0_i32_1 = arith.constant 0 : i32
    return %c0_i32, %c0_i32_0 : i32, i32
  }
  func.func @transform_3(%arg0: i32, %arg1: i32) -> (i32, i32) {
    %c0_i32 = arith.constant 0 : i32
    %c0_i32_0 = arith.constant 0 : i32
    %c0_i32_1 = arith.constant 0 : i32
    return %c0_i32, %c0_i32_0 : i32, i32
  }
  func.func @transform_4(%arg0: i32, %arg1: i32) -> (i32, i32) {
    %c0_i32 = arith.constant 0 : i32
    %c0_i32_0 = arith.constant 0 : i32
    %c0_i32_1 = arith.constant 0 : i32
    return %c0_i32, %c0_i32_0 : i32, i32
  }
  func.func @transform_5(%arg0: i32, %arg1: i32) -> (i32, i32) {
    %c0_i32 = arith.constant 0 : i32
    %c0_i32_0 = arith.constant 0 : i32
    %c0_i32_1 = arith.constant 0 : i32
    return %c0_i32, %c0_i32_0 : i32, i32
  }
  func.func @transform_6(%arg0: i32, %arg1: i32) -> (i32, i32, i32, i32) {
    %c0_i32 = arith.constant 0 : i32
    %c0_i32_0 = arith.constant 0 : i32
    %c0_i32_1 = arith.constant 0 : i32
    return %arg0, %arg1, %c0_i32, %c0_i32_0 : i32, i32, i32, i32
  }
}

</mosaic_0001>

<llo_original>
// kernel: conv_encoder_bnhs.1
$region0: #{conv_encoder_bnhs.1}
  #allocation0 [shape = 'u32[]', space=smem, size = 0x4, offset = 0x4, fixed_abs, tag = 'smem constant byte address 0x4 - core index']
  #allocation1 [shape = 'u32[72,128]{1,0:T(1,128)}', space=vmem, size = 0x9000, scoped, tag = 'internal scratch']
  #allocation2 [shape = 'f32[22,27,32]{2,1,0:T(8,128)}', space=vmem, size = 0x58000, scoped, tag = 'scratch operand']
  %s0 = inlined_call_operand.hbm [shape: f32[2,16,16,32], index: 0, kind: input, shape index: {}]
  %s1 = inlined_call_operand.vmem [shape: f32[49,32], index: 1, kind: input, shape index: {}]
  %s2 = inlined_call_operand.vmem [shape: bf16[32,128], index: 2, kind: input, shape index: {}]
  %s3 = inlined_call_operand.vmem [shape: f32[1,128], index: 3, kind: input, shape index: {}]
  %s4 = inlined_call_operand.vmem [shape: bf16[128,32], index: 4, kind: input, shape index: {}]
  %s5 = inlined_call_operand.vmem [shape: f32[1,32], index: 5, kind: input, shape index: {}]
  %s6 = inlined_call_operand.hbm [shape: f32[2,16,16,32], index: 6, kind: output, shape index: {}]
  %s7 = sld [smem:[#allocation0]]
  $region77: #{conv_encoder_bnhs.1} parent=0
    _
  %s9 = ssub.s32 1, %s7
  %s10 = scalar_select 0, %s9, %s7
  $region1: #{conv_encoder_bnhs.1} parent=0
    #allocation3 [shape = 'u8[262144]{0}', space=vmem, size = 0x40000, scoped, tag = 'input window, operand 0']
    #allocation4 [shape = 's32[2]{0}', space=sflag, size = 0x8, scoped, tag = 'scoped memory for conv_encoder_bnhs.1']
    #allocation5 [shape = 's32[2]{0}', space=sflag, size = 0x8, scoped, tag = 'scoped memory for conv_encoder_bnhs.1']
    #allocation6 [shape = 'u8[262144]{0}', space=vmem, size = 0x40000, scoped, tag = 'output window, operand 0']
    %11 = vsyncpa [#allocation4], 0
    %s12 = scalar_lea.sflag [#allocation4], 1
    %13 = vsyncpa %s12, 0
    %14 = vsyncpa [#allocation5], 0
    %s15 = scalar_lea.sflag [#allocation5], 1
    %16 = vsyncpa %s15, 0
    loop: start=0, step=1, limit=4
    $region2: #{conv_encoder_bnhs.1} parent=1 // loop_pre_header
      _
    $region3: #{conv_encoder_bnhs.1} parent=1 // loop_header
      %s18 = sphi 0, %s22
      %p19 = scmp.ge.s32.totalorder %s18, 4
      %s25 = sphi 0, %s37
      %s26 = sphi 0, %s33
      %s27 = sphi 0, %s25
      %s28 = sphi 0, %s26
      %s29 = sphi 0, %s27
      %s30 = sphi 0, %s28
      %s40 = sphi 0, %s42
      %s43 = sphi 0, %s40
      %s44 = sphi 0, %s43
      %s60 = sphi 0, %s44
      %s64 = sphi 0, %s64
      %s66 = sphi 0, %s64
      %s67 = sphi 0, %s66
      %s81 = sphi 0, %s67
      %s85 = sphi 0, %s85
      %s87 = sphi 0, %s85
      %s88 = sphi 0, %s87
      %s102 = sphi 0, %s88
      %s106 = sphi 0, %s106
      %s108 = sphi 0, %s106
      %s109 = sphi 0, %s108
      %s123 = sphi 0, %s109
      %s127 = sphi 0, %s127
      %s129 = sphi 0, %s127
      %s130 = sphi 0, %s129
      %s144 = sphi 0, %s130
      %s148 = sphi 0, %s148
      %s150 = sphi 0, %s148
      %s151 = sphi 0, %s150
      %s165 = sphi 0, %s151
      %s173 = sphi 0, %s175
      %s176 = sphi 0, %s173
      %s177 = sphi 0, %s176
      %s193 = sphi 0, %s177
    $region4: #{conv_encoder_bnhs.1} parent=1 // loop_header_branch
      %21 = sbr.rel (%p19) target = $region8
    $region5: #{conv_encoder_bnhs.1} parent=1 // loop_body
      %s23 = ssub.s32 %s18, 1
      %s24 = ssub.s32 %s18, 2
      %s31 = sadd.s32 1, %s26
      %p32 = scmp.ge.s32.totalorder %s31, 1
      %s33 = scalar_select %p32, 0, %s31
      %s34 = sadd.s32 1, %s25
      %s35 = scalar_select %p32, %s34, %s25
      %p36 = scmp.ge.s32.totalorder %s35, 2
      %s37 = scalar_select %p36, 0, %s35
      %s38 = ssub.s32 %s25, %s37
      %p39 = scmp.eq.s32.totalorder %s38, 0
      %s41 = sadd.s32 %s40, 1
      %s42 = scalar_select %p39, %s40, %s41
      %p45 = pneg %p39
      %p46 = scmp.eq.s32.totalorder %s18, 1
      %p47 = por %p45, %p46
      %p48 = scmp.ne.s32.totalorder %s40, %s43
      %p49 = scmp.eq.s32.totalorder %s18, 0
      %p50 = por %p48, %p49
      %p51 = scmp.ne.s32.totalorder %s40, %s43
      %p52 = scmp.eq.s32.totalorder %s23, 1
      %p53 = por %p51, %p52
      %p54 = scmp.ne.s32.totalorder %s43, %s44
      %p55 = scmp.eq.s32.totalorder %s23, 0
      %p56 = por %p54, %p55
      %p57 = scmp.ne.s32.totalorder %s43, %s44
      %p58 = scmp.eq.s32.totalorder %s24, 1
      %p59 = por %p57, %p58
      %p61 = scmp.ne.s32.totalorder %s44, %s60
      %p62 = scmp.eq.s32.totalorder %s24, 0
      %p63 = por %p61, %p62
      %s65 = sadd.s32 %s64, 1
      %p68 = scmp.eq.s32.totalorder %s18, 1
      %p69 = scmp.ne.s32.totalorder %s64, %s66
      %p70 = scmp.eq.s32.totalorder %s18, 0
      %p71 = por %p69, %p70
      %p72 = scmp.ne.s32.totalorder %s64, %s66
      %p73 = scmp.eq.s32.totalorder %s23, 1
      %p74 = por %p72, %p73
      %p75 = scmp.ne.s32.totalorder %s66, %s67
      %p76 = scmp.eq.s32.totalorder %s23, 0
      %p77 = por %p75, %p76
      %p78 = scmp.ne.s32.totalorder %s66, %s67
      %p79 = scmp.eq.s32.totalorder %s24, 1
      %p80 = por %p78, %p79
      %p82 = scmp.ne.s32.totalorder %s67, %s81
      %p83 = scmp.eq.s32.totalorder %s24, 0
      %p84 = por %p82, %p83
      %s86 = sadd.s32 %s85, 1
      %p89 = scmp.eq.s32.totalorder %s18, 1
      %p90 = scmp.ne.s32.totalorder %s85, %s87
      %p91 = scmp.eq.s32.totalorder %s18, 0
      %p92 = por %p90, %p91
      %p93 = scmp.ne.s32.totalorder %s85, %s87
      %p94 = scmp.eq.s32.totalorder %s23, 1
      %p95 = por %p93, %p94
      %p96 = scmp.ne.s32.totalorder %s87, %s88
      %p97 = scmp.eq.s32.totalorder %s23, 0
      %p98 = por %p96, %p97
      %p99 = scmp.ne.s32.totalorder %s87, %s88
      %p100 = scmp.eq.s32.totalorder %s24, 1
      %p101 = por %p99, %p100
      %p103 = scmp.ne.s32.totalorder %s88, %s102
      %p104 = scmp.eq.s32.totalorder %s24, 0
      %p105 = por %p103, %p104
      %s107 = sadd.s32 %s106, 1
      %p110 = scmp.eq.s32.totalorder %s18, 1
      %p111 = scmp.ne.s32.totalorder %s106, %s108
      %p112 = scmp.eq.s32.totalorder %s18, 0
      %p113 = por %p111, %p112
      %p114 = scmp.ne.s32.totalorder %s106, %s108
      %p115 = scmp.eq.s32.totalorder %s23, 1
      %p116 = por %p114, %p115
      %p117 = scmp.ne.s32.totalorder %s108, %s109
      %p118 = scmp.eq.s32.totalorder %s23, 0
      %p119 = por %p117, %p118
      %p120 = scmp.ne.s32.totalorder %s108, %s109
      %p121 = scmp.eq.s32.totalorder %s24, 1
      %p122 = por %p120, %p121
      %p124 = scmp.ne.s32.totalorder %s109, %s123
      %p125 = scmp.eq.s32.totalorder %s24, 0
      %p126 = por %p124, %p125
      %s128 = sadd.s32 %s127, 1
      %p131 = scmp.eq.s32.totalorder %s18, 1
      %p132 = scmp.ne.s32.totalorder %s127, %s129
      %p133 = scmp.eq.s32.totalorder %s18, 0
      %p134 = por %p132, %p133
      %p135 = scmp.ne.s32.totalorder %s127, %s129
      %p136 = scmp.eq.s32.totalorder %s23, 1
      %p137 = por %p135, %p136
      %p138 = scmp.ne.s32.totalorder %s129, %s130
      %p139 = scmp.eq.s32.totalorder %s23, 0
      %p140 = por %p138, %p139
      %p141 = scmp.ne.s32.totalorder %s129, %s130
      %p142 = scmp.eq.s32.totalorder %s24, 1
      %p143 = por %p141, %p142
      %p145 = scmp.ne.s32.totalorder %s130, %s144
      %p146 = scmp.eq.s32.totalorder %s24, 0
      %p147 = por %p145, %p146
      %s149 = sadd.s32 %s148, 1
      %p152 = scmp.eq.s32.totalorder %s18, 1
      %p153 = scmp.ne.s32.totalorder %s148, %s150
      %p154 = scmp.eq.s32.totalorder %s18, 0
      %p155 = por %p153, %p154
      %p156 = scmp.ne.s32.totalorder %s148, %s150
      %p157 = scmp.eq.s32.totalorder %s23, 1
      %p158 = por %p156, %p157
      %p159 = scmp.ne.s32.totalorder %s150, %s151
      %p160 = scmp.eq.s32.totalorder %s23, 0
      %p161 = por %p159, %p160
      %p162 = scmp.ne.s32.totalorder %s150, %s151
      %p163 = scmp.eq.s32.totalorder %s24, 1
      %p164 = por %p162, %p163
      %p166 = scmp.ne.s32.totalorder %s151, %s165
      %p167 = scmp.eq.s32.totalorder %s24, 0
      %p168 = por %p166, %p167
      %s169 = ssub.s32 %s25, %s37
      %s170 = ssub.s32 %s26, %s33
      %s171 = sor.u32 %s169, %s170
      %p172 = scmp.eq.s32.totalorder %s171, 0
      %s174 = sadd.s32 %s173, 1
      %s175 = scalar_select %p172, %s173, %s174
      %p178 = pneg %p172
      %p179 = scmp.eq.s32.totalorder %s18, 1
      %p180 = por %p178, %p179
      %p181 = scmp.ne.s32.totalorder %s173, %s176
      %p182 = scmp.eq.s32.totalorder %s18, 0
      %p183 = por %p181, %p182
      %p184 = scmp.ne.s32.totalorder %s173, %s176
      %p185 = scmp.eq.s32.totalorder %s23, 1
      %p186 = por %p184, %p185
      %p187 = scmp.ne.s32.totalorder %s176, %s177
      %p188 = scmp.eq.s32.totalorder %s23, 0
      %p189 = por %p187, %p188
      %p190 = scmp.ne.s32.totalorder %s176, %s177
      %p191 = scmp.eq.s32.totalorder %s24, 1
      %p192 = por %p190, %p191
      %p194 = scmp.ne.s32.totalorder %s177, %s193
      %p195 = scmp.eq.s32.totalorder %s24, 0
      %p196 = por %p194, %p195
      %p197 = scmp.le.s32.totalorder 1, %s18
      %p198 = scmp.lt.s32.totalorder %s18, 3
      %p199 = pnand %p197, %p198
      %p200 = pneg %p199
      // Predicated region
      $region9: #{conv_encoder_bnhs.1} parent=5 // pred_check
        _
      $region10: #{conv_encoder_bnhs.1} parent=5 // pred_check_branch
        %202 = sbr.rel (%p199) target = $region12
      $region11: #{conv_encoder_bnhs.1} parent=5 // pred_region
        %s203 = ssub.s32 %s18, 1
        // Predicated region
        $region13: #{conv_encoder_bnhs.1} parent=11 // pred_check
          %p204 = pneg %p77
        $region14: #{conv_encoder_bnhs.1} parent=11 // pred_check_branch
          %206 = sbr.rel (%p204) target = $region16
        $region15: #{conv_encoder_bnhs.1} parent=11 // pred_region
          _
        $region16: #{conv_encoder_bnhs.1} parent=11 // pred_fallthru
          _
        // Predicated region
        $region17: #{conv_encoder_bnhs.1} parent=11 // pred_check
          %p207 = pneg %p98
        $region18: #{conv_encoder_bnhs.1} parent=11 // pred_check_branch
          %209 = sbr.rel (%p207) target = $region20
        $region19: #{conv_encoder_bnhs.1} parent=11 // pred_region
          _
        $region20: #{conv_encoder_bnhs.1} parent=11 // pred_fallthru
          _
        // Predicated region
        $region21: #{conv_encoder_bnhs.1} parent=11 // pred_check
          %p210 = pneg %p119
        $region22: #{conv_encoder_bnhs.1} parent=11 // pred_check_branch
          %212 = sbr.rel (%p210) target = $region24
        $region23: #{conv_encoder_bnhs.1} parent=11 // pred_region
          _
        $region24: #{conv_encoder_bnhs.1} parent=11 // pred_fallthru
          _
        // Predicated region
        $region25: #{conv_encoder_bnhs.1} parent=11 // pred_check
          %p213 = pneg %p140
        $region26: #{conv_encoder_bnhs.1} parent=11 // pred_check_branch
          %215 = sbr.rel (%p213) target = $region28
        $region27: #{conv_encoder_bnhs.1} parent=11 // pred_region
          _
        $region28: #{conv_encoder_bnhs.1} parent=11 // pred_fallthru
          _
        // Predicated region
        $region29: #{conv_encoder_bnhs.1} parent=11 // pred_check
          %p216 = pneg %p161
        $region30: #{conv_encoder_bnhs.1} parent=11 // pred_check_branch
          %218 = sbr.rel (%p216) target = $region32
        $region31: #{conv_encoder_bnhs.1} parent=11 // pred_region
          _
        $region32: #{conv_encoder_bnhs.1} parent=11 // pred_fallthru
          _
      $region12: #{conv_encoder_bnhs.1} parent=5 // pred_fallthru
        _
      %p219 = scmp.lt.s32.totalorder %s18, 2
      // Predicated region
      $region33: #{conv_encoder_bnhs.1} parent=5 // pred_check
        %p220 = pneg %p219
      $region34: #{conv_encoder_bnhs.1} parent=5 // pred_check_branch
        %222 = sbr.rel (%p220) target = $region36
      $region35: #{conv_encoder_bnhs.1} parent=5 // pred_region
        // Predicated region
        $region37: #{conv_encoder_bnhs.1} parent=35 // pred_check
          %p223 = pneg %p50
        $region38: #{conv_encoder_bnhs.1} parent=35 // pred_check_branch
          %225 = sbr.rel (%p223) target = $region40
        $region39: #{conv_encoder_bnhs.1} parent=35 // pred_region
          %s226 = sand.u32 %s40, 1
          %s227 = scalar_lea.sflag [#allocation4], %s226
          %s228 = sand.u32 %s40, 1
          %s229 = smul.addr %s228, 256
          %s230 = scalar_lea.vmem [#allocation3], %s229
          %232 = vsyncadd %s227, 0
          %s233 = smul.addr %s25, 32
          %s234 = smul.addr %s233, 8
          %s235 = scalar_lea.hbm %s0, %s234
          %s236 = sshll.u32 %s235, 4
          %s237 = int_to_ptr.hbm [resolvable:$true] %s236
          %s238 = sshll.u32 %s230, 4
          %s239 = int_to_ptr.vmem [resolvable:$true] %s238
          %244 = dma.hbm_to_vmem [thread:$0]  %s237, 4096, %s239, %s227, 128, 128, 8
        $region40: #{conv_encoder_bnhs.1} parent=35 // pred_fallthru
          _
      $region36: #{conv_encoder_bnhs.1} parent=5 // pred_fallthru
        _
      %p245 = scmp.le.s32.totalorder 1, %s18
      %p246 = scmp.lt.s32.totalorder %s18, 3
      %p247 = pnand %p245, %p246
      %p248 = pneg %p247
      // Predicated region
      $region41: #{conv_encoder_bnhs.1} parent=5 // pred_check
        _
      $region42: #{conv_encoder_bnhs.1} parent=5 // pred_check_branch
        %250 = sbr.rel (%p247) target = $region44
      $region43: #{conv_encoder_bnhs.1} parent=5 // pred_region
        %s251 = ssub.s32 %s18, 1
        %s252 = sand.u32 %s43, 1
        %s253 = scalar_lea.sflag [#allocation4], %s252
        %s254 = sand.u32 %s43, 1
        %s255 = smul.addr %s254, 256
        %s256 = scalar_lea.vmem [#allocation3], %s255
        // Predicated region
        $region45: #{conv_encoder_bnhs.1} parent=43 // pred_check
          %p257 = pneg %p56
        $region46: #{conv_encoder_bnhs.1} parent=43 // pred_check_branch
          %259 = sbr.rel (%p257) target = $region48
        $region47: #{conv_encoder_bnhs.1} parent=43 // pred_region
          %261 = dma.done %s253, 4096
        $region48: #{conv_encoder_bnhs.1} parent=43 // pred_fallthru
          _
        %s262 = sand.u32 %s43, 1
        %s263 = scalar_lea.sflag [#allocation4], %s262
        %s264 = sand.u32 %s43, 1
        %s265 = smul.addr %s264, 256
        %s266 = scalar_lea.vmem [#allocation3], %s265
        %p267 = pneg %p56
        %p268 = pneg %p53
        %p269 = pneg %p77
        %p270 = pneg %p74
        %p271 = pneg %p98
        %p272 = pneg %p95
        %p273 = pneg %p119
        %p274 = pneg %p116
        %p275 = pneg %p140
        %p276 = pneg %p137
        %p277 = pneg %p161
        %p278 = pneg %p158
        %p279 = pneg %p189
        %p280 = pneg %p186
        %s281 = sand.u32 %s176, 1
        %s282 = scalar_lea.sflag [#allocation5], %s281
        %s283 = sand.u32 %s176, 1
        %s284 = smul.addr %s283, 256
        %s285 = scalar_lea.vmem [#allocation6], %s284
        %s286 = smul.u32 16, %s28
        %s288 = smul.u32 %s28, 16
        %vm289 = vcmask 256000
        %290 = vst.msk [vmem:[#allocation2 + $0x5] sm:$0x7] %vm289, 0.0
        %291 = vst.msk [vmem:[#allocation2 + $0x25] sm:$0x7] %vm289, 0.0
        %292 = vst.msk [vmem:[#allocation2 + $0x45] sm:$0x7] %vm289, 0.0
        %293 = vst.msk [vmem:[#allocation2 + $0x65] sm:$0x7] %vm289, 0.0
        %294 = vst.msk [vmem:[#allocation2 + $0x85] sm:$0x7] %vm289, 0.0
        %295 = vst.msk [vmem:[#allocation2 + $0xa5] sm:$0x7] %vm289, 0.0
        %296 = vst.msk [vmem:[#allocation2 + $0xc5] sm:$0x7] %vm289, 0.0
        %297 = vst.msk [vmem:[#allocation2 + $0xe5] sm:$0x7] %vm289, 0.0
        %298 = vst.msk [vmem:[#allocation2 + $0x105] sm:$0x7] %vm289, 0.0
        %299 = vst.msk [vmem:[#allocation2 + $0x125] sm:$0x7] %vm289, 0.0
        %300 = vst.msk [vmem:[#allocation2 + $0x145] sm:$0x7] %vm289, 0.0
        %301 = vst.msk [vmem:[#allocation2 + $0x165] sm:$0x7] %vm289, 0.0
        %302 = vst.msk [vmem:[#allocation2 + $0x185] sm:$0x7] %vm289, 0.0
        %303 = vst.msk [vmem:[#allocation2 + $0x1a5] sm:$0x7] %vm289, 0.0
        %304 = vst.msk [vmem:[#allocation2 + $0x1c5] sm:$0x7] %vm289, 0.0
        %305 = vst.msk [vmem:[#allocation2 + $0x1e5] sm:$0x7] %vm289, 0.0
        %306 = vst.msk [vmem:[#allocation2 + $0x205] sm:$0x7] %vm289, 0.0
        %307 = vst.msk [vmem:[#allocation2 + $0x225] sm:$0x7] %vm289, 0.0
        %308 = vst.msk [vmem:[#allocation2 + $0x245] sm:$0x7] %vm289, 0.0
        %309 = vst.msk [vmem:[#allocation2 + $0x265] sm:$0x7] %vm289, 0.0
        %310 = vst.msk [vmem:[#allocation2 + $0x285] sm:$0x7] %vm289, 0.0
        %311 = vst.msk [vmem:[#allocation2 + $0x2a5] sm:$0x7] %vm289, 0.0
        %312 = vst.msk [vmem:[#allocation2 + $0x18] sm:$0x7] %vm289, 0.0
        %313 = vst.msk [vmem:[#allocation2 + $0x38] sm:$0x7] %vm289, 0.0
        %314 = vst.msk [vmem:[#allocation2 + $0x58] sm:$0x7] %vm289, 0.0
        %315 = vst.msk [vmem:[#allocation2 + $0x78] sm:$0x7] %vm289, 0.0
        %316 = vst.msk [vmem:[#allocation2 + $0x98] sm:$0x7] %vm289, 0.0
        %317 = vst.msk [vmem:[#allocation2 + $0xb8] sm:$0x7] %vm289, 0.0
        %318 = vst.msk [vmem:[#allocation2 + $0xd8] sm:$0x7] %vm289, 0.0
        %319 = vst.msk [vmem:[#allocation2 + $0xf8] sm:$0x7] %vm289, 0.0
        %320 = vst.msk [vmem:[#allocation2 + $0x118] sm:$0x7] %vm289, 0.0
        %321 = vst.msk [vmem:[#allocation2 + $0x138] sm:$0x7] %vm289, 0.0
        %322 = vst.msk [vmem:[#allocation2 + $0x158] sm:$0x7] %vm289, 0.0
        %323 = vst.msk [vmem:[#allocation2 + $0x178] sm:$0x7] %vm289, 0.0
        %324 = vst.msk [vmem:[#allocation2 + $0x198] sm:$0x7] %vm289, 0.0
        %325 = vst.msk [vmem:[#allocation2 + $0x1b8] sm:$0x7] %vm289, 0.0
        %326 = vst.msk [vmem:[#allocation2 + $0x1d8] sm:$0x7] %vm289, 0.0
        %327 = vst.msk [vmem:[#allocation2 + $0x1f8] sm:$0x7] %vm289, 0.0
        %328 = vst.msk [vmem:[#allocation2 + $0x218] sm:$0x7] %vm289, 0.0
        %329 = vst.msk [vmem:[#allocation2 + $0x238] sm:$0x7] %vm289, 0.0
        %330 = vst.msk [vmem:[#allocation2 + $0x258] sm:$0x7] %vm289, 0.0
        %331 = vst.msk [vmem:[#allocation2 + $0x278] sm:$0x7] %vm289, 0.0
        %332 = vst.msk [vmem:[#allocation2 + $0x298] sm:$0x7] %vm289, 0.0
        %333 = vst.msk [vmem:[#allocation2 + $0x2b8] sm:$0x7] %vm289, 0.0
        %s334 = smul.u32 %s288, 16
        %s335 = scalar_lea.vmem %s256, %s334 [#allocation3]
        %v336 = vld [vmem:[%s335] sm:$0xff]
        %v337 = vld [vmem:[%s335 + $0x8] sm:$0xff]
        %v338 = vld [vmem:[%s335 + $0x10] sm:$0xff]
        %v339 = vld [vmem:[%s335 + $0x18] sm:$0xff]
        %v340 = vld [vmem:[%s335 + $0x20] sm:$0xff]
        %v341 = vld [vmem:[%s335 + $0x28] sm:$0xff]
        %v342 = vld [vmem:[%s335 + $0x30] sm:$0xff]
        %v343 = vld [vmem:[%s335 + $0x38] sm:$0xff]
        %v344 = vld [vmem:[%s335 + $0x40] sm:$0xff]
        %v345 = vld [vmem:[%s335 + $0x48] sm:$0xff]
        %v346 = vld [vmem:[%s335 + $0x50] sm:$0xff]
        %v347 = vld [vmem:[%s335 + $0x58] sm:$0xff]
        %v348 = vld [vmem:[%s335 + $0x60] sm:$0xff]
        %v349 = vld [vmem:[%s335 + $0x68] sm:$0xff]
        %v350 = vld [vmem:[%s335 + $0x70] sm:$0xff]
        %v351 = vld [vmem:[%s335 + $0x78] sm:$0xff]
        %v352 = vld [vmem:[%s335 + $0x80] sm:$0xff]
        %v353 = vld [vmem:[%s335 + $0x88] sm:$0xff]
        %v354 = vld [vmem:[%s335 + $0x90] sm:$0xff]
        %v355 = vld [vmem:[%s335 + $0x98] sm:$0xff]
        %v356 = vld [vmem:[%s335 + $0xa0] sm:$0xff]
        %v357 = vld [vmem:[%s335 + $0xa8] sm:$0xff]
        %v358 = vld [vmem:[%s335 + $0xb0] sm:$0xff]
        %v359 = vld [vmem:[%s335 + $0xb8] sm:$0xff]
        %v360 = vld [vmem:[%s335 + $0xc0] sm:$0xff]
        %v361 = vld [vmem:[%s335 + $0xc8] sm:$0xff]
        %v362 = vld [vmem:[%s335 + $0xd0] sm:$0xff]
        %v363 = vld [vmem:[%s335 + $0xd8] sm:$0xff]
        %v364 = vld [vmem:[%s335 + $0xe0] sm:$0xff]
        %v365 = vld [vmem:[%s335 + $0xe8] sm:$0xff]
        %v366 = vld [vmem:[%s335 + $0xf0] sm:$0xff]
        %v367 = vld [vmem:[%s335 + $0xf8] sm:$0xff]
        %s368 = scalar_lea.vmem [#allocation2], 96
        %vm369 = vcmask 261120
        %370 = vst.msk [vmem:[%s368 + $0x8] sm:$0xff] %vm369, %v336
        %371 = vst.msk [vmem:[%s368 + $0x10] sm:$0xff] %vm369, %v337
        %372 = vst.msk [vmem:[%s368 + $0x28] sm:$0xff] %vm369, %v338
        %373 = vst.msk [vmem:[%s368 + $0x30] sm:$0xff] %vm369, %v339
        %374 = vst.msk [vmem:[%s368 + $0x48] sm:$0xff] %vm369, %v340
        %375 = vst.msk [vmem:[%s368 + $0x50] sm:$0xff] %vm369, %v341
        %376 = vst.msk [vmem:[%s368 + $0x68] sm:$0xff] %vm369, %v342
        %377 = vst.msk [vmem:[%s368 + $0x70] sm:$0xff] %vm369, %v343
        %378 = vst.msk [vmem:[%s368 + $0x88] sm:$0xff] %vm369, %v344
        %379 = vst.msk [vmem:[%s368 + $0x90] sm:$0xff] %vm369, %v345
        %380 = vst.msk [vmem:[%s368 + $0xa8] sm:$0xff] %vm369, %v346
        %381 = vst.msk [vmem:[%s368 + $0xb0] sm:$0xff] %vm369, %v347
        %382 = vst.msk [vmem:[%s368 + $0xc8] sm:$0xff] %vm369, %v348
        %383 = vst.msk [vmem:[%s368 + $0xd0] sm:$0xff] %vm369, %v349
        %384 = vst.msk [vmem:[%s368 + $0xe8] sm:$0xff] %vm369, %v350
        %385 = vst.msk [vmem:[%s368 + $0xf0] sm:$0xff] %vm369, %v351
        %386 = vst.msk [vmem:[%s368 + $0x108] sm:$0xff] %vm369, %v352
        %387 = vst.msk [vmem:[%s368 + $0x110] sm:$0xff] %vm369, %v353
        %388 = vst.msk [vmem:[%s368 + $0x128] sm:$0xff] %vm369, %v354
        %389 = vst.msk [vmem:[%s368 + $0x130] sm:$0xff] %vm369, %v355
        %390 = vst.msk [vmem:[%s368 + $0x148] sm:$0xff] %vm369, %v356
        %391 = vst.msk [vmem:[%s368 + $0x150] sm:$0xff] %vm369, %v357
        %392 = vst.msk [vmem:[%s368 + $0x168] sm:$0xff] %vm369, %v358
        %393 = vst.msk [vmem:[%s368 + $0x170] sm:$0xff] %vm369, %v359
        %394 = vst.msk [vmem:[%s368 + $0x188] sm:$0xff] %vm369, %v360
        %395 = vst.msk [vmem:[%s368 + $0x190] sm:$0xff] %vm369, %v361
        %396 = vst.msk [vmem:[%s368 + $0x1a8] sm:$0xff] %vm369, %v362
        %397 = vst.msk [vmem:[%s368 + $0x1b0] sm:$0xff] %vm369, %v363
        %398 = vst.msk [vmem:[%s368 + $0x1c8] sm:$0xff] %vm369, %v364
        %399 = vst.msk [vmem:[%s368 + $0x1d0] sm:$0xff] %vm369, %v365
        %400 = vst.msk [vmem:[%s368 + $0x1e8] sm:$0xff] %vm369, %v366
        %401 = vst.msk [vmem:[%s368 + $0x1f0] sm:$0xff] %vm369, %v367
        %p402 = scmp.gt.s32.totalorder %s28, 0
        // Predicated region
        $region49: #{conv_encoder_bnhs.1} parent=43 // pred_check
          %p403 = pneg %p402
        $region50: #{conv_encoder_bnhs.1} parent=43 // pred_check_branch
          %405 = sbr.rel (%p403) target = $region52
        $region51: #{conv_encoder_bnhs.1} parent=43 // pred_region
          %s406 = ssub.s32 %s288, 3
          %s407 = smul.u32 %s406, 16
          %s408 = scalar_lea.vmem %s256, %s407 [#allocation3]
          %v409 = vld [vmem:[%s408] sm:$0xff]
          %v410 = vld [vmem:[%s408 + $0x8] sm:$0xff]
          %v411 = vld [vmem:[%s408 + $0x10] sm:$0xff]
          %v412 = vld [vmem:[%s408 + $0x18] sm:$0xff]
          %v413 = vld [vmem:[%s408 + $0x20] sm:$0xff]
          %v414 = vld [vmem:[%s408 + $0x28] sm:$0xff]
          %415 = vst.msk [vmem:[#allocation2 + $0x8] sm:$0xff] %vm369, %v409
          %416 = vst.msk [vmem:[#allocation2 + $0x10] sm:$0xff] %vm369, %v410
          %417 = vst.msk [vmem:[#allocation2 + $0x28] sm:$0xff] %vm369, %v411
          %418 = vst.msk [vmem:[#allocation2 + $0x30] sm:$0xff] %vm369, %v412
          %419 = vst.msk [vmem:[#allocation2 + $0x48] sm:$0xff] %vm369, %v413
          %420 = vst.msk [vmem:[#allocation2 + $0x50] sm:$0xff] %vm369, %v414
        $region52: #{conv_encoder_bnhs.1} parent=43 // pred_fallthru
          _
        %p421 = scmp.eq.s32.totalorder %s28, 0
        // Predicated region
        $region53: #{conv_encoder_bnhs.1} parent=43 // pred_check
          %p422 = pneg %p421
        $region54: #{conv_encoder_bnhs.1} parent=43 // pred_check_branch
          %424 = sbr.rel (%p422) target = $region56
        $region55: #{conv_encoder_bnhs.1} parent=43 // pred_region
          %425 = vst.msk [vmem:[#allocation2 + $0x8] sm:$0xff] %vm369, 0.0
          %426 = vst.msk [vmem:[#allocation2 + $0x10] sm:$0xff] %vm369, 0.0
          %427 = vst.msk [vmem:[#allocation2 + $0x28] sm:$0xff] %vm369, 0.0
          %428 = vst.msk [vmem:[#allocation2 + $0x30] sm:$0xff] %vm369, 0.0
          %429 = vst.msk [vmem:[#allocation2 + $0x48] sm:$0xff] %vm369, 0.0
          %430 = vst.msk [vmem:[#allocation2 + $0x50] sm:$0xff] %vm369, 0.0
        $region56: #{conv_encoder_bnhs.1} parent=43 // pred_fallthru
          _
        %p431 = scmp.lt.s32.totalorder %s28, 0
        // Predicated region
        $region57: #{conv_encoder_bnhs.1} parent=43 // pred_check
          %p432 = pneg %p431
        $region58: #{conv_encoder_bnhs.1} parent=43 // pred_check_branch
          %434 = sbr.rel (%p432) target = $region60
        $region59: #{conv_encoder_bnhs.1} parent=43 // pred_region
          %s435 = sadd.s32 %s288, 16
          %s436 = smul.u32 %s435, 16
          %s437 = scalar_lea.vmem %s256, %s436 [#allocation3]
          %v438 = vld [vmem:[%s437] sm:$0xff]
          %v439 = vld [vmem:[%s437 + $0x8] sm:$0xff]
          %v440 = vld [vmem:[%s437 + $0x10] sm:$0xff]
          %v441 = vld [vmem:[%s437 + $0x18] sm:$0xff]
          %v442 = vld [vmem:[%s437 + $0x20] sm:$0xff]
          %v443 = vld [vmem:[%s437 + $0x28] sm:$0xff]
          %s444 = scalar_lea.vmem [#allocation2], 608
          %445 = vst.msk [vmem:[%s444 + $0x8] sm:$0xff] %vm369, %v438
          %446 = vst.msk [vmem:[%s444 + $0x10] sm:$0xff] %vm369, %v439
          %447 = vst.msk [vmem:[%s444 + $0x28] sm:$0xff] %vm369, %v440
          %448 = vst.msk [vmem:[%s444 + $0x30] sm:$0xff] %vm369, %v441
          %449 = vst.msk [vmem:[%s444 + $0x48] sm:$0xff] %vm369, %v442
          %450 = vst.msk [vmem:[%s444 + $0x50] sm:$0xff] %vm369, %v443
        $region60: #{conv_encoder_bnhs.1} parent=43 // pred_fallthru
          _
        // Predicated region
        $region61: #{conv_encoder_bnhs.1} parent=43 // pred_check
          %p451 = pneg %p421
        $region62: #{conv_encoder_bnhs.1} parent=43 // pred_check_branch
          %453 = sbr.rel (%p451) target = $region64
        $region63: #{conv_encoder_bnhs.1} parent=43 // pred_region
          %s454 = scalar_lea.vmem [#allocation2], 608
          %455 = vst.msk [vmem:[%s454 + $0x8] sm:$0xff] %vm369, 0.0
          %456 = vst.msk [vmem:[%s454 + $0x10] sm:$0xff] %vm369, 0.0
          %457 = vst.msk [vmem:[%s454 + $0x28] sm:$0xff] %vm369, 0.0
          %458 = vst.msk [vmem:[%s454 + $0x30] sm:$0xff] %vm369, 0.0
          %459 = vst.msk [vmem:[%s454 + $0x48] sm:$0xff] %vm369, 0.0
          %460 = vst.msk [vmem:[%s454 + $0x50] sm:$0xff] %vm369, 0.0
        $region64: #{conv_encoder_bnhs.1} parent=43 // pred_fallthru
          _
        %v461 = vld [vmem:[%s3] sm:$0x1]
        %v462 = vld [vmem:[%s5] sm:$0x1]
        %v463 = vld [vmem:[#allocation2] sm:$0xff]
        %v464 = vld [vmem:[#allocation2 + $0x8] sm:$0xff]
        %v465 = vld [vmem:[#allocation2 + $0x10] sm:$0xff]
        %v466 = vld [vmem:[#allocation2 + $0x18] sm:$0x7]
        %v467 = vld [vmem:[#allocation2 + $0x20] sm:$0xff]
        %v468 = vld [vmem:[#allocation2 + $0x28] sm:$0xff]
        %v469 = vld [vmem:[#allocation2 + $0x30] sm:$0xff]
        %v470 = vld [vmem:[#allocation2 + $0x38] sm:$0x7]
        %v471 = vld [vmem:[#allocation2 + $0x40] sm:$0xff]
        %v472 = vld [vmem:[#allocation2 + $0x48] sm:$0xff]
        %v473 = vld [vmem:[#allocation2 + $0x50] sm:$0xff]
        %v474 = vld [vmem:[#allocation2 + $0x58] sm:$0x7]
        %v475 = vld [vmem:[#allocation2 + $0x60] sm:$0xff]
        %v476 = vld [vmem:[#allocation2 + $0x68] sm:$0xff]
        %v477 = vld [vmem:[#allocation2 + $0x70] sm:$0xff]
        %v478 = vld [vmem:[#allocation2 + $0x78] sm:$0x7]
        %v479 = vld [vmem:[#allocation2 + $0x80] sm:$0xff]
        %v480 = vld [vmem:[#allocation2 + $0x88] sm:$0xff]
        %v481 = vld [vmem:[#allocation2 + $0x90] sm:$0xff]
        %v482 = vld [vmem:[#allocation2 + $0x98] sm:$0x7]
        %v483 = vld [vmem:[#allocation2 + $0xa0] sm:$0xff]
        %v484 = vld [vmem:[#allocation2 + $0xa8] sm:$0xff]
        %v485 = vld [vmem:[#allocation2 + $0xb0] sm:$0xff]
        %v486 = vld [vmem:[#allocation2 + $0xb8] sm:$0x7]
        %v487 = vld [vmem:[#allocation2 + $0xc0] sm:$0xff]
        %v488 = vld [vmem:[#allocation2 + $0xc8] sm:$0xff]
        %v489 = vld [vmem:[#allocation2 + $0xd0] sm:$0xff]
        %v490 = vld [vmem:[#allocation2 + $0xd8] sm:$0x7]
        %v491 = vld [vmem:[#allocation2 + $0xe0] sm:$0xff]
        %v492 = vld [vmem:[#allocation2 + $0xe8] sm:$0xff]
        %v493 = vld [vmem:[#allocation2 + $0xf0] sm:$0xff]
        %v494 = vld [vmem:[#allocation2 + $0xf8] sm:$0x7]
        %v495 = vld [vmem:[#allocation2 + $0x100] sm:$0xff]
        %v496 = vld [vmem:[#allocation2 + $0x108] sm:$0xff]
        %v497 = vld [vmem:[#allocation2 + $0x110] sm:$0xff]
        %v498 = vld [vmem:[#allocation2 + $0x118] sm:$0x7]
        %v499 = vld [vmem:[#allocation2 + $0x120] sm:$0xff]
        %v500 = vld [vmem:[#allocation2 + $0x128] sm:$0xff]
        %v501 = vld [vmem:[#allocation2 + $0x130] sm:$0xff]
        %v502 = vld [vmem:[#allocation2 + $0x138] sm:$0x7]
        %v503 = vld [vmem:[#allocation2 + $0x140] sm:$0xff]
        %v504 = vld [vmem:[#allocation2 + $0x148] sm:$0xff]
        %v505 = vld [vmem:[#allocation2 + $0x150] sm:$0xff]
        %v506 = vld [vmem:[#allocation2 + $0x158] sm:$0x7]
        %v507 = vld [vmem:[#allocation2 + $0x160] sm:$0xff]
        %v508 = vld [vmem:[#allocation2 + $0x168] sm:$0xff]
        %v509 = vld [vmem:[#allocation2 + $0x170] sm:$0xff]
        %v510 = vld [vmem:[#allocation2 + $0x178] sm:$0x7]
        %v511 = vld [vmem:[#allocation2 + $0x180] sm:$0xff]
        %v512 = vld [vmem:[#allocation2 + $0x188] sm:$0xff]
        %v513 = vld [vmem:[#allocation2 + $0x190] sm:$0xff]
        %v514 = vld [vmem:[#allocation2 + $0x198] sm:$0x7]
        %v515 = vld [vmem:[#allocation2 + $0x1a0] sm:$0xff]
        %v516 = vld [vmem:[#allocation2 + $0x1a8] sm:$0xff]
        %v517 = vld [vmem:[#allocation2 + $0x1b0] sm:$0xff]
        %v518 = vld [vmem:[#allocation2 + $0x1b8] sm:$0x7]
        %v519 = vld [vmem:[#allocation2 + $0x1c0] sm:$0xff]
        %v520 = vld [vmem:[#allocation2 + $0x1c8] sm:$0xff]
        %v521 = vld [vmem:[#allocation2 + $0x1d0] sm:$0xff]
        %v522 = vld [vmem:[#allocation2 + $0x1d8] sm:$0x7]
        %v523 = vld [vmem:[#allocation2 + $0x1e0] sm:$0xff]
        %v524 = vld [vmem:[#allocation2 + $0x1e8] sm:$0xff]
        %v525 = vld [vmem:[#allocation2 + $0x1f0] sm:$0xff]
        %v526 = vld [vmem:[#allocation2 + $0x1f8] sm:$0x7]
        %v527 = vld [vmem:[%s1] sm:$0x1]
        %v528 = vperm.slane %v527, 0
        %v529 = vmul.f32 %v463, %v528
        %v530 = vmul.f32 %v464, %v528
        %v531 = vmul.f32 %v465, %v528
        %v532 = vmul.f32 %v467, %v528
        %v533 = vmul.f32 %v468, %v528
        %v534 = vmul.f32 %v469, %v528
        %v535 = vmul.f32 %v471, %v528
        %v536 = vmul.f32 %v472, %v528
        %v537 = vmul.f32 %v473, %v528
        %v538 = vmul.f32 %v475, %v528
        %v539 = vmul.f32 %v476, %v528
        %v540 = vmul.f32 %v477, %v528
        %v541 = vmul.f32 %v479, %v528
        %v542 = vmul.f32 %v480, %v528
        %v543 = vmul.f32 %v481, %v528
        %v544 = vmul.f32 %v483, %v528
        %v545 = vmul.f32 %v484, %v528
        %v546 = vmul.f32 %v485, %v528
        %v547 = vmul.f32 %v487, %v528
        %v548 = vmul.f32 %v488, %v528
        %v549 = vmul.f32 %v489, %v528
        %v550 = vmul.f32 %v491, %v528
        %v551 = vmul.f32 %v492, %v528
        %v552 = vmul.f32 %v493, %v528
        %v553 = vmul.f32 %v495, %v528
        %v554 = vmul.f32 %v496, %v528
        %v555 = vmul.f32 %v497, %v528
        %v556 = vmul.f32 %v499, %v528
        %v557 = vmul.f32 %v500, %v528
        %v558 = vmul.f32 %v501, %v528
        %v559 = vmul.f32 %v503, %v528
        %v560 = vmul.f32 %v504, %v528
        %v561 = vmul.f32 %v505, %v528
        %v562 = vmul.f32 %v507, %v528
        %v563 = vmul.f32 %v508, %v528
        %v564 = vmul.f32 %v509, %v528
        %v565 = vmul.f32 %v511, %v528
        %v566 = vmul.f32 %v512, %v528
        %v567 = vmul.f32 %v513, %v528
        %v568 = vmul.f32 %v515, %v528
        %v569 = vmul.f32 %v516, %v528
        %v570 = vmul.f32 %v517, %v528
        %v571 = vmul.f32 %v519, %v528
        %v572 = vmul.f32 %v520, %v528
        %v573 = vmul.f32 %v521, %v528
        %v574 = vmul.f32 %v523, %v528
        %v575 = vmul.f32 %v524, %v528
        %v576 = vmul.f32 %v525, %v528
        %v577 = vadd.f32 %v529, 0.0
        %v578 = vadd.f32 %v530, 0.0
        %v579 = vadd.f32 %v531, 0.0
        %v580 = vadd.f32 %v532, 0.0
        %v581 = vadd.f32 %v533, 0.0
        %v582 = vadd.f32 %v534, 0.0
        %v583 = vadd.f32 %v535, 0.0
        %v584 = vadd.f32 %v536, 0.0
        %v585 = vadd.f32 %v537, 0.0
        %v586 = vadd.f32 %v538, 0.0
        %v587 = vadd.f32 %v539, 0.0
        %v588 = vadd.f32 %v540, 0.0
        %v589 = vadd.f32 %v541, 0.0
        %v590 = vadd.f32 %v542, 0.0
        %v591 = vadd.f32 %v543, 0.0
        %v592 = vadd.f32 %v544, 0.0
        %v593 = vadd.f32 %v545, 0.0
        %v594 = vadd.f32 %v546, 0.0
        %v595 = vadd.f32 %v547, 0.0
        %v596 = vadd.f32 %v548, 0.0
        %v597 = vadd.f32 %v549, 0.0
        %v598 = vadd.f32 %v550, 0.0
        %v599 = vadd.f32 %v551, 0.0
        %v600 = vadd.f32 %v552, 0.0
        %v601 = vadd.f32 %v553, 0.0
        %v602 = vadd.f32 %v554, 0.0
        %v603 = vadd.f32 %v555, 0.0
        %v604 = vadd.f32 %v556, 0.0
        %v605 = vadd.f32 %v557, 0.0
        %v606 = vadd.f32 %v558, 0.0
        %v607 = vadd.f32 %v559, 0.0
        %v608 = vadd.f32 %v560, 0.0
        %v609 = vadd.f32 %v561, 0.0
        %v610 = vadd.f32 %v562, 0.0
        %v611 = vadd.f32 %v563, 0.0
        %v612 = vadd.f32 %v564, 0.0
        %v613 = vadd.f32 %v565, 0.0
        %v614 = vadd.f32 %v566, 0.0
        %v615 = vadd.f32 %v567, 0.0
        %v616 = vadd.f32 %v568, 0.0
        %v617 = vadd.f32 %v569, 0.0
        %v618 = vadd.f32 %v570, 0.0
        %v619 = vadd.f32 %v571, 0.0
        %v620 = vadd.f32 %v572, 0.0
        %v621 = vadd.f32 %v573, 0.0
        %v622 = vadd.f32 %v574, 0.0
        %v623 = vadd.f32 %v575, 0.0
        %v624 = vadd.f32 %v576, 0.0
        %v625 = vld [vmem:[%s1 + $0x1] sm:$0x1]
        %v626 = vperm.slane %v625, 0
        %v627 = vmul.f32 %v463, %v626
        %v628 = vmul.f32 %v464, %v626
        %v629 = vmul.f32 %v465, %v626
        %v630 = vmul.f32 %v467, %v626
        %v631 = vmul.f32 %v468, %v626
        %v632 = vmul.f32 %v469, %v626
        %v633 = vmul.f32 %v471, %v626
        %v634 = vmul.f32 %v472, %v626
        %v635 = vmul.f32 %v473, %v626
        %v636 = vmul.f32 %v475, %v626
        %v637 = vmul.f32 %v476, %v626
        %v638 = vmul.f32 %v477, %v626
        %v639 = vmul.f32 %v479, %v626
        %v640 = vmul.f32 %v480, %v626
        %v641 = vmul.f32 %v481, %v626
        %v642 = vmul.f32 %v483, %v626
        %v643 = vmul.f32 %v484, %v626
        %v644 = vmul.f32 %v485, %v626
        %v645 = vmul.f32 %v487, %v626
        %v646 = vmul.f32 %v488, %v626
        %v647 = vmul.f32 %v489, %v626
        %v648 = vmul.f32 %v491, %v626
        %v649 = vmul.f32 %v492, %v626
        %v650 = vmul.f32 %v493, %v626
        %v651 = vmul.f32 %v495, %v626
        %v652 = vmul.f32 %v496, %v626
        %v653 = vmul.f32 %v497, %v626
        %v654 = vmul.f32 %v499, %v626
        %v655 = vmul.f32 %v500, %v626
        %v656 = vmul.f32 %v501, %v626
        %v657 = vmul.f32 %v503, %v626
        %v658 = vmul.f32 %v504, %v626
        %v659 = vmul.f32 %v505, %v626
        %v660 = vmul.f32 %v507, %v626
        %v661 = vmul.f32 %v508, %v626
        %v662 = vmul.f32 %v509, %v626
        %v663 = vmul.f32 %v511, %v626
        %v664 = vmul.f32 %v512, %v626
        %v665 = vmul.f32 %v513, %v626
        %v666 = vmul.f32 %v515, %v626
        %v667 = vmul.f32 %v516, %v626
        %v668 = vmul.f32 %v517, %v626
        %v669 = vmul.f32 %v519, %v626
        %v670 = vmul.f32 %v520, %v626
        %v671 = vmul.f32 %v521, %v626
        %v672 = vmul.f32 %v523, %v626
        %v673 = vmul.f32 %v524, %v626
        %v674 = vmul.f32 %v525, %v626
        %vm723 = vcmask 1046528
        %v724 = vrot.slane %v627, 1
        %v725 = vrot.slane %v628, 1
        %v726 = vsel %vm723, %v724, %v725
        %v727 = vrot.slane %v629, 1
        %v728 = vsel %vm723, %v725, %v727
        %v729 = vrot.slane %v630, 1
        %v730 = vrot.slane %v631, 1
        %v731 = vsel %vm723, %v729, %v730
        %v732 = vrot.slane %v632, 1
        %v733 = vsel %vm723, %v730, %v732
        %v734 = vrot.slane %v633, 1
        %v735 = vrot.slane %v634, 1
        %v736 = vsel %vm723, %v734, %v735
        %v737 = vrot.slane %v635, 1
        %v738 = vsel %vm723, %v735, %v737
        %v739 = vrot.slane %v636, 1
        %v740 = vrot.slane %v637, 1
        %v741 = vsel %vm723, %v739, %v740
        %v742 = vrot.slane %v638, 1
        %v743 = vsel %vm723, %v740, %v742
        %v744 = vrot.slane %v639, 1
        %v745 = vrot.slane %v640, 1
        %v746 = vsel %vm723, %v744, %v745
        %v747 = vrot.slane %v641, 1
        %v748 = vsel %vm723, %v745, %v747
        %v749 = vrot.slane %v642, 1
        %v750 = vrot.slane %v643, 1
        %v751 = vsel %vm723, %v749, %v750
        %v752 = vrot.slane %v644, 1
        %v753 = vsel %vm723, %v750, %v752
        %v754 = vrot.slane %v645, 1
        %v755 = vrot.slane %v646, 1
        %v756 = vsel %vm723, %v754, %v755
        %v757 = vrot.slane %v647, 1
        %v758 = vsel %vm723, %v755, %v757
        %v759 = vrot.slane %v648, 1
        %v760 = vrot.slane %v649, 1
        %v761 = vsel %vm723, %v759, %v760
        %v762 = vrot.slane %v650, 1
        %v763 = vsel %vm723, %v760, %v762
        %v764 = vrot.slane %v651, 1
        %v765 = vrot.slane %v652, 1
        %v766 = vsel %vm723, %v764, %v765
        %v767 = vrot.slane %v653, 1
        %v768 = vsel %vm723, %v765, %v767
        %v769 = vrot.slane %v654, 1
        %v770 = vrot.slane %v655, 1
        %v771 = vsel %vm723, %v769, %v770
        %v772 = vrot.slane %v656, 1
        %v773 = vsel %vm723, %v770, %v772
        %v774 = vrot.slane %v657, 1
        %v775 = vrot.slane %v658, 1
        %v776 = vsel %vm723, %v774, %v775
        %v777 = vrot.slane %v659, 1
        %v778 = vsel %vm723, %v775, %v777
        %v779 = vrot.slane %v660, 1
        %v780 = vrot.slane %v661, 1
        %v781 = vsel %vm723, %v779, %v780
        %v782 = vrot.slane %v662, 1
        %v783 = vsel %vm723, %v780, %v782
        %v784 = vrot.slane %v663, 1
        %v785 = vrot.slane %v664, 1
        %v786 = vsel %vm723, %v784, %v785
        %v787 = vrot.slane %v665, 1
        %v788 = vsel %vm723, %v785, %v787
        %v789 = vrot.slane %v666, 1
        %v790 = vrot.slane %v667, 1
        %v791 = vsel %vm723, %v789, %v790
        %v792 = vrot.slane %v668, 1
        %v793 = vsel %vm723, %v790, %v792
        %v794 = vrot.slane %v669, 1
        %v795 = vrot.slane %v670, 1
        %v796 = vsel %vm723, %v794, %v795
        %v797 = vrot.slane %v671, 1
        %v798 = vsel %vm723, %v795, %v797
        %v799 = vrot.slane %v672, 1
        %v800 = vrot.slane %v673, 1
        %v801 = vsel %vm723, %v799, %v800
        %v802 = vrot.slane %v674, 1
        %v803 = vsel %vm723, %v800, %v802
        %v852 = vadd.f32 %v577, %v726
        %v853 = vadd.f32 %v578, %v728
        %v854 = vadd.f32 %v579, %v727
        %v855 = vadd.f32 %v580, %v731
        %v856 = vadd.f32 %v581, %v733
        %v857 = vadd.f32 %v582, %v732
        %v858 = vadd.f32 %v583, %v736
        %v859 = vadd.f32 %v584, %v738
        %v860 = vadd.f32 %v585, %v737
        %v861 = vadd.f32 %v586, %v741
        %v862 = vadd.f32 %v587, %v743
        %v863 = vadd.f32 %v588, %v742
        %v864 = vadd.f32 %v589, %v746
        %v865 = vadd.f32 %v590, %v748
        %v866 = vadd.f32 %v591, %v747
        %v867 = vadd.f32 %v592, %v751
        %v868 = vadd.f32 %v593, %v753
        %v869 = vadd.f32 %v594, %v752
        %v870 = vadd.f32 %v595, %v756
        %v871 = vadd.f32 %v596, %v758
        %v872 = vadd.f32 %v597, %v757
        %v873 = vadd.f32 %v598, %v761
        %v874 = vadd.f32 %v599, %v763
        %v875 = vadd.f32 %v600, %v762
        %v876 = vadd.f32 %v601, %v766
        %v877 = vadd.f32 %v602, %v768
        %v878 = vadd.f32 %v603, %v767
        %v879 = vadd.f32 %v604, %v771
        %v880 = vadd.f32 %v605, %v773
        %v881 = vadd.f32 %v606, %v772
        %v882 = vadd.f32 %v607, %v776
        %v883 = vadd.f32 %v608, %v778
        %v884 = vadd.f32 %v609, %v777
        %v885 = vadd.f32 %v610, %v781
        %v886 = vadd.f32 %v611, %v783
        %v887 = vadd.f32 %v612, %v782
        %v888 = vadd.f32 %v613, %v786
        %v889 = vadd.f32 %v614, %v788
        %v890 = vadd.f32 %v615, %v787
        %v891 = vadd.f32 %v616, %v791
        %v892 = vadd.f32 %v617, %v793
        %v893 = vadd.f32 %v618, %v792
        %v894 = vadd.f32 %v619, %v796
        %v895 = vadd.f32 %v620, %v798
        %v896 = vadd.f32 %v621, %v797
        %v897 = vadd.f32 %v622, %v801
        %v898 = vadd.f32 %v623, %v803
        %v899 = vadd.f32 %v624, %v802
        %v900 = vld [vmem:[%s1 + $0x2] sm:$0x1]
        %v901 = vperm.slane %v900, 0
        %v902 = vmul.f32 %v463, %v901
        %v903 = vmul.f32 %v464, %v901
        %v904 = vmul.f32 %v465, %v901
        %v905 = vmul.f32 %v467, %v901
        %v906 = vmul.f32 %v468, %v901
        %v907 = vmul.f32 %v469, %v901
        %v908 = vmul.f32 %v471, %v901
        %v909 = vmul.f32 %v472, %v901
        %v910 = vmul.f32 %v473, %v901
        %v911 = vmul.f32 %v475, %v901
        %v912 = vmul.f32 %v476, %v901
        %v913 = vmul.f32 %v477, %v901
        %v914 = vmul.f32 %v479, %v901
        %v915 = vmul.f32 %v480, %v901
        %v916 = vmul.f32 %v481, %v901
        %v917 = vmul.f32 %v483, %v901
        %v918 = vmul.f32 %v484, %v901
        %v919 = vmul.f32 %v485, %v901
        %v920 = vmul.f32 %v487, %v901
        %v921 = vmul.f32 %v488, %v901
        %v922 = vmul.f32 %v489, %v901
        %v923 = vmul.f32 %v491, %v901
        %v924 = vmul.f32 %v492, %v901
        %v925 = vmul.f32 %v493, %v901
        %v926 = vmul.f32 %v495, %v901
        %v927 = vmul.f32 %v496, %v901
        %v928 = vmul.f32 %v497, %v901
        %v929 = vmul.f32 %v499, %v901
        %v930 = vmul.f32 %v500, %v901
        %v931 = vmul.f32 %v501, %v901
        %v932 = vmul.f32 %v503, %v901
        %v933 = vmul.f32 %v504, %v901
        %v934 = vmul.f32 %v505, %v901
        %v935 = vmul.f32 %v507, %v901
        %v936 = vmul.f32 %v508, %v901
        %v937 = vmul.f32 %v509, %v901
        %v938 = vmul.f32 %v511, %v901
        %v939 = vmul.f32 %v512, %v901
        %v940 = vmul.f32 %v513, %v901
        %v941 = vmul.f32 %v515, %v901
        %v942 = vmul.f32 %v516, %v901
        %v943 = vmul.f32 %v517, %v901
        %v944 = vmul.f32 %v519, %v901
        %v945 = vmul.f32 %v520, %v901
        %v946 = vmul.f32 %v521, %v901
        %v947 = vmul.f32 %v523, %v901
        %v948 = vmul.f32 %v524, %v901
        %v949 = vmul.f32 %v525, %v901
        %vm998 = vcmask 1045504
        %v999 = vrot.slane %v902, 2
        %v1000 = vrot.slane %v903, 2
        %v1001 = vsel %vm998, %v999, %v1000
        %v1002 = vrot.slane %v904, 2
        %v1003 = vsel %vm998, %v1000, %v1002
        %v1004 = vrot.slane %v905, 2
        %v1005 = vrot.slane %v906, 2
        %v1006 = vsel %vm998, %v1004, %v1005
        %v1007 = vrot.slane %v907, 2
        %v1008 = vsel %vm998, %v1005, %v1007
        %v1009 = vrot.slane %v908, 2
        %v1010 = vrot.slane %v909, 2
        %v1011 = vsel %vm998, %v1009, %v1010
        %v1012 = vrot.slane %v910, 2
        %v1013 = vsel %vm998, %v1010, %v1012
        %v1014 = vrot.slane %v911, 2
        %v1015 = vrot.slane %v912, 2
        %v1016 = vsel %vm998, %v1014, %v1015
        %v1017 = vrot.slane %v913, 2
        %v1018 = vsel %vm998, %v1015, %v1017
        %v1019 = vrot.slane %v914, 2
        %v1020 = vrot.slane %v915, 2
        %v1021 = vsel %vm998, %v1019, %v1020
        %v1022 = vrot.slane %v916, 2
        %v1023 = vsel %vm998, %v1020, %v1022
        %v1024 = vrot.slane %v917, 2
        %v1025 = vrot.slane %v918, 2
        %v1026 = vsel %vm998, %v1024, %v1025
        %v1027 = vrot.slane %v919, 2
        %v1028 = vsel %vm998, %v1025, %v1027
        %v1029 = vrot.slane %v920, 2
        %v1030 = vrot.slane %v921, 2
        %v1031 = vsel %vm998, %v1029, %v1030
        %v1032 = vrot.slane %v922, 2
        %v1033 = vsel %vm998, %v1030, %v1032
        %v1034 = vrot.slane %v923, 2
        %v1035 = vrot.slane %v924, 2
        %v1036 = vsel %vm998, %v1034, %v1035
        %v1037 = vrot.slane %v925, 2
        %v1038 = vsel %vm998, %v1035, %v1037
        %v1039 = vrot.slane %v926, 2
        %v1040 = vrot.slane %v927, 2
        %v1041 = vsel %vm998, %v1039, %v1040
        %v1042 = vrot.slane %v928, 2
        %v1043 = vsel %vm998, %v1040, %v1042
        %v1044 = vrot.slane %v929, 2
        %v1045 = vrot.slane %v930, 2
        %v1046 = vsel %vm998, %v1044, %v1045
        %v1047 = vrot.slane %v931, 2
        %v1048 = vsel %vm998, %v1045, %v1047
        %v1049 = vrot.slane %v932, 2
        %v1050 = vrot.slane %v933, 2
        %v1051 = vsel %vm998, %v1049, %v1050
        %v1052 = vrot.slane %v934, 2
        %v1053 = vsel %vm998, %v1050, %v1052
        %v1054 = vrot.slane %v935, 2
        %v1055 = vrot.slane %v936, 2
        %v1056 = vsel %vm998, %v1054, %v1055
        %v1057 = vrot.slane %v937, 2
        %v1058 = vsel %vm998, %v1055, %v1057
        %v1059 = vrot.slane %v938, 2
        %v1060 = vrot.slane %v939, 2
        %v1061 = vsel %vm998, %v1059, %v1060
        %v1062 = vrot.slane %v940, 2
        %v1063 = vsel %vm998, %v1060, %v1062
        %v1064 = vrot.slane %v941, 2
        %v1065 = vrot.slane %v942, 2
        %v1066 = vsel %vm998, %v1064, %v1065
        %v1067 = vrot.slane %v943, 2
        %v1068 = vsel %vm998, %v1065, %v1067
        %v1069 = vrot.slane %v944, 2
        %v1070 = vrot.slane %v945, 2
        %v1071 = vsel %vm998, %v1069, %v1070
        %v1072 = vrot.slane %v946, 2
        %v1073 = vsel %vm998, %v1070, %v1072
        %v1074 = vrot.slane %v947, 2
        %v1075 = vrot.slane %v948, 2
        %v1076 = vsel %vm998, %v1074, %v1075
        %v1077 = vrot.slane %v949, 2
        %v1078 = vsel %vm998, %v1075, %v1077
        %v1127 = vadd.f32 %v852, %v1001
        %v1128 = vadd.f32 %v853, %v1003
        %v1129 = vadd.f32 %v854, %v1002
        %v1130 = vadd.f32 %v855, %v1006
        %v1131 = vadd.f32 %v856, %v1008
        %v1132 = vadd.f32 %v857, %v1007
        %v1133 = vadd.f32 %v858, %v1011
        %v1134 = vadd.f32 %v859, %v1013
        %v1135 = vadd.f32 %v860, %v1012
        %v1136 = vadd.f32 %v861, %v1016
        %v1137 = vadd.f32 %v862, %v1018
        %v1138 = vadd.f32 %v863, %v1017
        %v1139 = vadd.f32 %v864, %v1021
        %v1140 = vadd.f32 %v865, %v1023
        %v1141 = vadd.f32 %v866, %v1022
        %v1142 = vadd.f32 %v867, %v1026
        %v1143 = vadd.f32 %v868, %v1028
        %v1144 = vadd.f32 %v869, %v1027
        %v1145 = vadd.f32 %v870, %v1031
        %v1146 = vadd.f32 %v871, %v1033
        %v1147 = vadd.f32 %v872, %v1032
        %v1148 = vadd.f32 %v873, %v1036
        %v1149 = vadd.f32 %v874, %v1038
        %v1150 = vadd.f32 %v875, %v1037
        %v1151 = vadd.f32 %v876, %v1041
        %v1152 = vadd.f32 %v877, %v1043
        %v1153 = vadd.f32 %v878, %v1042
        %v1154 = vadd.f32 %v879, %v1046
        %v1155 = vadd.f32 %v880, %v1048
        %v1156 = vadd.f32 %v881, %v1047
        %v1157 = vadd.f32 %v882, %v1051
        %v1158 = vadd.f32 %v883, %v1053
        %v1159 = vadd.f32 %v884, %v1052
        %v1160 = vadd.f32 %v885, %v1056
        %v1161 = vadd.f32 %v886, %v1058
        %v1162 = vadd.f32 %v887, %v1057
        %v1163 = vadd.f32 %v888, %v1061
        %v1164 = vadd.f32 %v889, %v1063
        %v1165 = vadd.f32 %v890, %v1062
        %v1166 = vadd.f32 %v891, %v1066
        %v1167 = vadd.f32 %v892, %v1068
        %v1168 = vadd.f32 %v893, %v1067
        %v1169 = vadd.f32 %v894, %v1071
        %v1170 = vadd.f32 %v895, %v1073
        %v1171 = vadd.f32 %v896, %v1072
        %v1172 = vadd.f32 %v897, %v1076
        %v1173 = vadd.f32 %v898, %v1078
        %v1174 = vadd.f32 %v899, %v1077
        %v1175 = vld [vmem:[%s1 + $0x3] sm:$0x1]
        %v1176 = vperm.slane %v1175, 0
        %v1177 = vmul.f32 %v464, %v1176
        %v1178 = vmul.f32 %v465, %v1176
        %v1179 = vmul.f32 %v468, %v1176
        %v1180 = vmul.f32 %v469, %v1176
        %v1181 = vmul.f32 %v472, %v1176
        %v1182 = vmul.f32 %v473, %v1176
        %v1183 = vmul.f32 %v476, %v1176
        %v1184 = vmul.f32 %v477, %v1176
        %v1185 = vmul.f32 %v480, %v1176
        %v1186 = vmul.f32 %v481, %v1176
        %v1187 = vmul.f32 %v484, %v1176
        %v1188 = vmul.f32 %v485, %v1176
        %v1189 = vmul.f32 %v488, %v1176
        %v1190 = vmul.f32 %v489, %v1176
        %v1191 = vmul.f32 %v492, %v1176
        %v1192 = vmul.f32 %v493, %v1176
        %v1193 = vmul.f32 %v496, %v1176
        %v1194 = vmul.f32 %v497, %v1176
        %v1195 = vmul.f32 %v500, %v1176
        %v1196 = vmul.f32 %v501, %v1176
        %v1197 = vmul.f32 %v504, %v1176
        %v1198 = vmul.f32 %v505, %v1176
        %v1199 = vmul.f32 %v508, %v1176
        %v1200 = vmul.f32 %v509, %v1176
        %v1201 = vmul.f32 %v512, %v1176
        %v1202 = vmul.f32 %v513, %v1176
        %v1203 = vmul.f32 %v516, %v1176
        %v1204 = vmul.f32 %v517, %v1176
        %v1205 = vmul.f32 %v520, %v1176
        %v1206 = vmul.f32 %v521, %v1176
        %v1207 = vmul.f32 %v524, %v1176
        %v1208 = vmul.f32 %v525, %v1176
        %vm1241 = vcmask 1044480
        %v1242 = vrot.slane %v1177, 3
        %v1243 = vrot.slane %v1178, 3
        %v1244 = vsel %vm1241, %v1242, %v1243
        %v1245 = vrot.slane %v1179, 3
        %v1246 = vrot.slane %v1180, 3
        %v1247 = vsel %vm1241, %v1245, %v1246
        %v1248 = vrot.slane %v1181, 3
        %v1249 = vrot.slane %v1182, 3
        %v1250 = vsel %vm1241, %v1248, %v1249
        %v1251 = vrot.slane %v1183, 3
        %v1252 = vrot.slane %v1184, 3
        %v1253 = vsel %vm1241, %v1251, %v1252
        %v1254 = vrot.slane %v1185, 3
        %v1255 = vrot.slane %v1186, 3
        %v1256 = vsel %vm1241, %v1254, %v1255
        %v1257 = vrot.slane %v1187, 3
        %v1258 = vrot.slane %v1188, 3
        %v1259 = vsel %vm1241, %v1257, %v1258
        %v1260 = vrot.slane %v1189, 3
        %v1261 = vrot.slane %v1190, 3
        %v1262 = vsel %vm1241, %v1260, %v1261
        %v1263 = vrot.slane %v1191, 3
        %v1264 = vrot.slane %v1192, 3
        %v1265 = vsel %vm1241, %v1263, %v1264
        %v1266 = vrot.slane %v1193, 3
        %v1267 = vrot.slane %v1194, 3
        %v1268 = vsel %vm1241, %v1266, %v1267
        %v1269 = vrot.slane %v1195, 3
        %v1270 = vrot.slane %v1196, 3
        %v1271 = vsel %vm1241, %v1269, %v1270
        %v1272 = vrot.slane %v1197, 3
        %v1273 = vrot.slane %v1198, 3
        %v1274 = vsel %vm1241, %v1272, %v1273
        %v1275 = vrot.slane %v1199, 3
        %v1276 = vrot.slane %v1200, 3
        %v1277 = vsel %vm1241, %v1275, %v1276
        %v1278 = vrot.slane %v1201, 3
        %v1279 = vrot.slane %v1202, 3
        %v1280 = vsel %vm1241, %v1278, %v1279
        %v1281 = vrot.slane %v1203, 3
        %v1282 = vrot.slane %v1204, 3
        %v1283 = vsel %vm1241, %v1281, %v1282
        %v1284 = vrot.slane %v1205, 3
        %v1285 = vrot.slane %v1206, 3
        %v1286 = vsel %vm1241, %v1284, %v1285
        %v1287 = vrot.slane %v1207, 3
        %v1288 = vrot.slane %v1208, 3
        %v1289 = vsel %vm1241, %v1287, %v1288
        %v1338 = vadd.f32 %v1127, %v1242
        %v1339 = vadd.f32 %v1128, %v1244
        %v1340 = vadd.f32 %v1129, %v1243
        %v1341 = vadd.f32 %v1130, %v1245
        %v1342 = vadd.f32 %v1131, %v1247
        %v1343 = vadd.f32 %v1132, %v1246
        %v1344 = vadd.f32 %v1133, %v1248
        %v1345 = vadd.f32 %v1134, %v1250
        %v1346 = vadd.f32 %v1135, %v1249
        %v1347 = vadd.f32 %v1136, %v1251
        %v1348 = vadd.f32 %v1137, %v1253
        %v1349 = vadd.f32 %v1138, %v1252
        %v1350 = vadd.f32 %v1139, %v1254
        %v1351 = vadd.f32 %v1140, %v1256
        %v1352 = vadd.f32 %v1141, %v1255
        %v1353 = vadd.f32 %v1142, %v1257
        %v1354 = vadd.f32 %v1143, %v1259
        %v1355 = vadd.f32 %v1144, %v1258
        %v1356 = vadd.f32 %v1145, %v1260
        %v1357 = vadd.f32 %v1146, %v1262
        %v1358 = vadd.f32 %v1147, %v1261
        %v1359 = vadd.f32 %v1148, %v1263
        %v1360 = vadd.f32 %v1149, %v1265
        %v1361 = vadd.f32 %v1150, %v1264
        %v1362 = vadd.f32 %v1151, %v1266
        %v1363 = vadd.f32 %v1152, %v1268
        %v1364 = vadd.f32 %v1153, %v1267
        %v1365 = vadd.f32 %v1154, %v1269
        %v1366 = vadd.f32 %v1155, %v1271
        %v1367 = vadd.f32 %v1156, %v1270
        %v1368 = vadd.f32 %v1157, %v1272
        %v1369 = vadd.f32 %v1158, %v1274
        %v1370 = vadd.f32 %v1159, %v1273
        %v1371 = vadd.f32 %v1160, %v1275
        %v1372 = vadd.f32 %v1161, %v1277
        %v1373 = vadd.f32 %v1162, %v1276
        %v1374 = vadd.f32 %v1163, %v1278
        %v1375 = vadd.f32 %v1164, %v1280
        %v1376 = vadd.f32 %v1165, %v1279
        %v1377 = vadd.f32 %v1166, %v1281
        %v1378 = vadd.f32 %v1167, %v1283
        %v1379 = vadd.f32 %v1168, %v1282
        %v1380 = vadd.f32 %v1169, %v1284
        %v1381 = vadd.f32 %v1170, %v1286
        %v1382 = vadd.f32 %v1171, %v1285
        %v1383 = vadd.f32 %v1172, %v1287
        %v1384 = vadd.f32 %v1173, %v1289
        %v1385 = vadd.f32 %v1174, %v1288
        %v1386 = vld [vmem:[%s1 + $0x4] sm:$0x1]
        %v1387 = vperm.slane %v1386, 0
        %v1388 = vmul.f32 %v464, %v1387
        %v1389 = vmul.f32 %v465, %v1387
        %v1390 = vmul.f32 %v466, %v1387
        %v1391 = vmul.f32 %v468, %v1387
        %v1392 = vmul.f32 %v469, %v1387
        %v1393 = vmul.f32 %v470, %v1387
        %v1394 = vmul.f32 %v472, %v1387
        %v1395 = vmul.f32 %v473, %v1387
        %v1396 = vmul.f32 %v474, %v1387
        %v1397 = vmul.f32 %v476, %v1387
        %v1398 = vmul.f32 %v477, %v1387
        %v1399 = vmul.f32 %v478, %v1387
        %v1400 = vmul.f32 %v480, %v1387
        %v1401 = vmul.f32 %v481, %v1387
        %v1402 = vmul.f32 %v482, %v1387
        %v1403 = vmul.f32 %v484, %v1387
        %v1404 = vmul.f32 %v485, %v1387
        %v1405 = vmul.f32 %v486, %v1387
        %v1406 = vmul.f32 %v488, %v1387
        %v1407 = vmul.f32 %v489, %v1387
        %v1408 = vmul.f32 %v490, %v1387
        %v1409 = vmul.f32 %v492, %v1387
        %v1410 = vmul.f32 %v493, %v1387
        %v1411 = vmul.f32 %v494, %v1387
        %v1412 = vmul.f32 %v496, %v1387
        %v1413 = vmul.f32 %v497, %v1387
        %v1414 = vmul.f32 %v498, %v1387
        %v1415 = vmul.f32 %v500, %v1387
        %v1416 = vmul.f32 %v501, %v1387
        %v1417 = vmul.f32 %v502, %v1387
        %v1418 = vmul.f32 %v504, %v1387
        %v1419 = vmul.f32 %v505, %v1387
        %v1420 = vmul.f32 %v506, %v1387
        %v1421 = vmul.f32 %v508, %v1387
        %v1422 = vmul.f32 %v509, %v1387
        %v1423 = vmul.f32 %v510, %v1387
        %v1424 = vmul.f32 %v512, %v1387
        %v1425 = vmul.f32 %v513, %v1387
        %v1426 = vmul.f32 %v514, %v1387
        %v1427 = vmul.f32 %v516, %v1387
        %v1428 = vmul.f32 %v517, %v1387
        %v1429 = vmul.f32 %v518, %v1387
        %v1430 = vmul.f32 %v520, %v1387
        %v1431 = vmul.f32 %v521, %v1387
        %v1432 = vmul.f32 %v522, %v1387
        %v1433 = vmul.f32 %v524, %v1387
        %v1434 = vmul.f32 %v525, %v1387
        %v1435 = vmul.f32 %v526, %v1387
        %vm1484 = vcmask 1043456
        %v1485 = vrot.slane %v1388, 4
        %v1486 = vrot.slane %v1389, 4
        %v1487 = vsel %vm1484, %v1485, %v1486
        %v1488 = vrot.slane %v1390, 4
        %v1489 = vsel %vm1484, %v1486, %v1488
        %v1490 = vrot.slane %v1391, 4
        %v1491 = vrot.slane %v1392, 4
        %v1492 = vsel %vm1484, %v1490, %v1491
        %v1493 = vrot.slane %v1393, 4
        %v1494 = vsel %vm1484, %v1491, %v1493
        %v1495 = vrot.slane %v1394, 4
        %v1496 = vrot.slane %v1395, 4
        %v1497 = vsel %vm1484, %v1495, %v1496
        %v1498 = vrot.slane %v1396, 4
        %v1499 = vsel %vm1484, %v1496, %v1498
        %v1500 = vrot.slane %v1397, 4
        %v1501 = vrot.slane %v1398, 4
        %v1502 = vsel %vm1484, %v1500, %v1501
        %v1503 = vrot.slane %v1399, 4
        %v1504 = vsel %vm1484, %v1501, %v1503
        %v1505 = vrot.slane %v1400, 4
        %v1506 = vrot.slane %v1401, 4
        %v1507 = vsel %vm1484, %v1505, %v1506
        %v1508 = vrot.slane %v1402, 4
        %v1509 = vsel %vm1484, %v1506, %v1508
        %v1510 = vrot.slane %v1403, 4
        %v1511 = vrot.slane %v1404, 4
        %v1512 = vsel %vm1484, %v1510, %v1511
        %v1513 = vrot.slane %v1405, 4
        %v1514 = vsel %vm1484, %v1511, %v1513
        %v1515 = vrot.slane %v1406, 4
        %v1516 = vrot.slane %v1407, 4
        %v1517 = vsel %vm1484, %v1515, %v1516
        %v1518 = vrot.slane %v1408, 4
        %v1519 = vsel %vm1484, %v1516, %v1518
        %v1520 = vrot.slane %v1409, 4
        %v1521 = vrot.slane %v1410, 4
        %v1522 = vsel %vm1484, %v1520, %v1521
        %v1523 = vrot.slane %v1411, 4
        %v1524 = vsel %vm1484, %v1521, %v1523
        %v1525 = vrot.slane %v1412, 4
        %v1526 = vrot.slane %v1413, 4
        %v1527 = vsel %vm1484, %v1525, %v1526
        %v1528 = vrot.slane %v1414, 4
        %v1529 = vsel %vm1484, %v1526, %v1528
        %v1530 = vrot.slane %v1415, 4
        %v1531 = vrot.slane %v1416, 4
        %v1532 = vsel %vm1484, %v1530, %v1531
        %v1533 = vrot.slane %v1417, 4
        %v1534 = vsel %vm1484, %v1531, %v1533
        %v1535 = vrot.slane %v1418, 4
        %v1536 = vrot.slane %v1419, 4
        %v1537 = vsel %vm1484, %v1535, %v1536
        %v1538 = vrot.slane %v1420, 4
        %v1539 = vsel %vm1484, %v1536, %v1538
        %v1540 = vrot.slane %v1421, 4
        %v1541 = vrot.slane %v1422, 4
        %v1542 = vsel %vm1484, %v1540, %v1541
        %v1543 = vrot.slane %v1423, 4
        %v1544 = vsel %vm1484, %v1541, %v1543
        %v1545 = vrot.slane %v1424, 4
        %v1546 = vrot.slane %v1425, 4
        %v1547 = vsel %vm1484, %v1545, %v1546
        %v1548 = vrot.slane %v1426, 4
        %v1549 = vsel %vm1484, %v1546, %v1548
        %v1550 = vrot.slane %v1427, 4
        %v1551 = vrot.slane %v1428, 4
        %v1552 = vsel %vm1484, %v1550, %v1551
        %v1553 = vrot.slane %v1429, 4
        %v1554 = vsel %vm1484, %v1551, %v1553
        %v1555 = vrot.slane %v1430, 4
        %v1556 = vrot.slane %v1431, 4
        %v1557 = vsel %vm1484, %v1555, %v1556
        %v1558 = vrot.slane %v1432, 4
        %v1559 = vsel %vm1484, %v1556, %v1558
        %v1560 = vrot.slane %v1433, 4
        %v1561 = vrot.slane %v1434, 4
        %v1562 = vsel %vm1484, %v1560, %v1561
        %v1563 = vrot.slane %v1435, 4
        %v1564 = vsel %vm1484, %v1561, %v1563
        %v1613 = vadd.f32 %v1338, %v1485
        %v1614 = vadd.f32 %v1339, %v1487
        %v1615 = vadd.f32 %v1340, %v1489
        %v1616 = vadd.f32 %v1341, %v1490
        %v1617 = vadd.f32 %v1342, %v1492
        %v1618 = vadd.f32 %v1343, %v1494
        %v1619 = vadd.f32 %v1344, %v1495
        %v1620 = vadd.f32 %v1345, %v1497
        %v1621 = vadd.f32 %v1346, %v1499
        %v1622 = vadd.f32 %v1347, %v1500
        %v1623 = vadd.f32 %v1348, %v1502
        %v1624 = vadd.f32 %v1349, %v1504
        %v1625 = vadd.f32 %v1350, %v1505
        %v1626 = vadd.f32 %v1351, %v1507
        %v1627 = vadd.f32 %v1352, %v1509
        %v1628 = vadd.f32 %v1353, %v1510
        %v1629 = vadd.f32 %v1354, %v1512
        %v1630 = vadd.f32 %v1355, %v1514
        %v1631 = vadd.f32 %v1356, %v1515
        %v1632 = vadd.f32 %v1357, %v1517
        %v1633 = vadd.f32 %v1358, %v1519
        %v1634 = vadd.f32 %v1359, %v1520
        %v1635 = vadd.f32 %v1360, %v1522
        %v1636 = vadd.f32 %v1361, %v1524
        %v1637 = vadd.f32 %v1362, %v1525
        %v1638 = vadd.f32 %v1363, %v1527
        %v1639 = vadd.f32 %v1364, %v1529
        %v1640 = vadd.f32 %v1365, %v1530
        %v1641 = vadd.f32 %v1366, %v1532
        %v1642 = vadd.f32 %v1367, %v1534
        %v1643 = vadd.f32 %v1368, %v1535
        %v1644 = vadd.f32 %v1369, %v1537
        %v1645 = vadd.f32 %v1370, %v1539
        %v1646 = vadd.f32 %v1371, %v1540
        %v1647 = vadd.f32 %v1372, %v1542
        %v1648 = vadd.f32 %v1373, %v1544
        %v1649 = vadd.f32 %v1374, %v1545
        %v1650 = vadd.f32 %v1375, %v1547
        %v1651 = vadd.f32 %v1376, %v1549
        %v1652 = vadd.f32 %v1377, %v1550
        %v1653 = vadd.f32 %v1378, %v1552
        %v1654 = vadd.f32 %v1379, %v1554
        %v1655 = vadd.f32 %v1380, %v1555
        %v1656 = vadd.f32 %v1381, %v1557
        %v1657 = vadd.f32 %v1382, %v1559
        %v1658 = vadd.f32 %v1383, %v1560
        %v1659 = vadd.f32 %v1384, %v1562
        %v1660 = vadd.f32 %v1385, %v1564
        %v1661 = vld [vmem:[%s1 + $0x5] sm:$0x1]
        %v1662 = vperm.slane %v1661, 0
        %v1663 = vmul.f32 %v464, %v1662
        %v1664 = vmul.f32 %v465, %v1662
        %v1665 = vmul.f32 %v466, %v1662
        %v1666 = vmul.f32 %v468, %v1662
        %v1667 = vmul.f32 %v469, %v1662
        %v1668 = vmul.f32 %v470, %v1662
        %v1669 = vmul.f32 %v472, %v1662
        %v1670 = vmul.f32 %v473, %v1662
        %v1671 = vmul.f32 %v474, %v1662
        %v1672 = vmul.f32 %v476, %v1662
        %v1673 = vmul.f32 %v477, %v1662
        %v1674 = vmul.f32 %v478, %v1662
        %v1675 = vmul.f32 %v480, %v1662
        %v1676 = vmul.f32 %v481, %v1662
        %v1677 = vmul.f32 %v482, %v1662
        %v1678 = vmul.f32 %v484, %v1662
        %v1679 = vmul.f32 %v485, %v1662
        %v1680 = vmul.f32 %v486, %v1662
        %v1681 = vmul.f32 %v488, %v1662
        %v1682 = vmul.f32 %v489, %v1662
        %v1683 = vmul.f32 %v490, %v1662
        %v1684 = vmul.f32 %v492, %v1662
        %v1685 = vmul.f32 %v493, %v1662
        %v1686 = vmul.f32 %v494, %v1662
        %v1687 = vmul.f32 %v496, %v1662
        %v1688 = vmul.f32 %v497, %v1662
        %v1689 = vmul.f32 %v498, %v1662
        %v1690 = vmul.f32 %v500, %v1662
        %v1691 = vmul.f32 %v501, %v1662
        %v1692 = vmul.f32 %v502, %v1662
        %v1693 = vmul.f32 %v504, %v1662
        %v1694 = vmul.f32 %v505, %v1662
        %v1695 = vmul.f32 %v506, %v1662
        %v1696 = vmul.f32 %v508, %v1662
        %v1697 = vmul.f32 %v509, %v1662
        %v1698 = vmul.f32 %v510, %v1662
        %v1699 = vmul.f32 %v512, %v1662
        %v1700 = vmul.f32 %v513, %v1662
        %v1701 = vmul.f32 %v514, %v1662
        %v1702 = vmul.f32 %v516, %v1662
        %v1703 = vmul.f32 %v517, %v1662
        %v1704 = vmul.f32 %v518, %v1662
        %v1705 = vmul.f32 %v520, %v1662
        %v1706 = vmul.f32 %v521, %v1662
        %v1707 = vmul.f32 %v522, %v1662
        %v1708 = vmul.f32 %v524, %v1662
        %v1709 = vmul.f32 %v525, %v1662
        %v1710 = vmul.f32 %v526, %v1662
        %vm1759 = vcmask 1042432
        %v1760 = vrot.slane %v1663, 5
        %v1761 = vrot.slane %v1664, 5
        %v1762 = vsel %vm1759, %v1760, %v1761
        %v1763 = vrot.slane %v1665, 5
        %v1764 = vsel %vm1759, %v1761, %v1763
        %v1765 = vrot.slane %v1666, 5
        %v1766 = vrot.slane %v1667, 5
        %v1767 = vsel %vm1759, %v1765, %v1766
        %v1768 = vrot.slane %v1668, 5
        %v1769 = vsel %vm1759, %v1766, %v1768
        %v1770 = vrot.slane %v1669, 5
        %v1771 = vrot.slane %v1670, 5
        %v1772 = vsel %vm1759, %v1770, %v1771
        %v1773 = vrot.slane %v1671, 5
        %v1774 = vsel %vm1759, %v1771, %v1773
        %v1775 = vrot.slane %v1672, 5
        %v1776 = vrot.slane %v1673, 5
        %v1777 = vsel %vm1759, %v1775, %v1776
        %v1778 = vrot.slane %v1674, 5
        %v1779 = vsel %vm1759, %v1776, %v1778
        %v1780 = vrot.slane %v1675, 5
        %v1781 = vrot.slane %v1676, 5
        %v1782 = vsel %vm1759, %v1780, %v1781
        %v1783 = vrot.slane %v1677, 5
        %v1784 = vsel %vm1759, %v1781, %v1783
        %v1785 = vrot.slane %v1678, 5
        %v1786 = vrot.slane %v1679, 5
        %v1787 = vsel %vm1759, %v1785, %v1786
        %v1788 = vrot.slane %v1680, 5
        %v1789 = vsel %vm1759, %v1786, %v1788
        %v1790 = vrot.slane %v1681, 5
        %v1791 = vrot.slane %v1682, 5
        %v1792 = vsel %vm1759, %v1790, %v1791
        %v1793 = vrot.slane %v1683, 5
        %v1794 = vsel %vm1759, %v1791, %v1793
        %v1795 = vrot.slane %v1684, 5
        %v1796 = vrot.slane %v1685, 5
        %v1797 = vsel %vm1759, %v1795, %v1796
        %v1798 = vrot.slane %v1686, 5
        %v1799 = vsel %vm1759, %v1796, %v1798
        %v1800 = vrot.slane %v1687, 5
        %v1801 = vrot.slane %v1688, 5
        %v1802 = vsel %vm1759, %v1800, %v1801
        %v1803 = vrot.slane %v1689, 5
        %v1804 = vsel %vm1759, %v1801, %v1803
        %v1805 = vrot.slane %v1690, 5
        %v1806 = vrot.slane %v1691, 5
        %v1807 = vsel %vm1759, %v1805, %v1806
        %v1808 = vrot.slane %v1692, 5
        %v1809 = vsel %vm1759, %v1806, %v1808
        %v1810 = vrot.slane %v1693, 5
        %v1811 = vrot.slane %v1694, 5
        %v1812 = vsel %vm1759, %v1810, %v1811
        %v1813 = vrot.slane %v1695, 5
        %v1814 = vsel %vm1759, %v1811, %v1813
        %v1815 = vrot.slane %v1696, 5
        %v1816 = vrot.slane %v1697, 5
        %v1817 = vsel %vm1759, %v1815, %v1816
        %v1818 = vrot.slane %v1698, 5
        %v1819 = vsel %vm1759, %v1816, %v1818
        %v1820 = vrot.slane %v1699, 5
        %v1821 = vrot.slane %v1700, 5
        %v1822 = vsel %vm1759, %v1820, %v1821
        %v1823 = vrot.slane %v1701, 5
        %v1824 = vsel %vm1759, %v1821, %v1823
        %v1825 = vrot.slane %v1702, 5
        %v1826 = vrot.slane %v1703, 5
        %v1827 = vsel %vm1759, %v1825, %v1826
        %v1828 = vrot.slane %v1704, 5
        %v1829 = vsel %vm1759, %v1826, %v1828
        %v1830 = vrot.slane %v1705, 5
        %v1831 = vrot.slane %v1706, 5
        %v1832 = vsel %vm1759, %v1830, %v1831
        %v1833 = vrot.slane %v1707, 5
        %v1834 = vsel %vm1759, %v1831, %v1833
        %v1835 = vrot.slane %v1708, 5
        %v1836 = vrot.slane %v1709, 5
        %v1837 = vsel %vm1759, %v1835, %v1836
        %v1838 = vrot.slane %v1710, 5
        %v1839 = vsel %vm1759, %v1836, %v1838
        %v1888 = vadd.f32 %v1613, %v1760
        %v1889 = vadd.f32 %v1614, %v1762
        %v1890 = vadd.f32 %v1615, %v1764
        %v1891 = vadd.f32 %v1616, %v1765
        %v1892 = vadd.f32 %v1617, %v1767
        %v1893 = vadd.f32 %v1618, %v1769
        %v1894 = vadd.f32 %v1619, %v1770
        %v1895 = vadd.f32 %v1620, %v1772
        %v1896 = vadd.f32 %v1621, %v1774
        %v1897 = vadd.f32 %v1622, %v1775
        %v1898 = vadd.f32 %v1623, %v1777
        %v1899 = vadd.f32 %v1624, %v1779
        %v1900 = vadd.f32 %v1625, %v1780
        %v1901 = vadd.f32 %v1626, %v1782
        %v1902 = vadd.f32 %v1627, %v1784
        %v1903 = vadd.f32 %v1628, %v1785
        %v1904 = vadd.f32 %v1629, %v1787
        %v1905 = vadd.f32 %v1630, %v1789
        %v1906 = vadd.f32 %v1631, %v1790
        %v1907 = vadd.f32 %v1632, %v1792
        %v1908 = vadd.f32 %v1633, %v1794
        %v1909 = vadd.f32 %v1634, %v1795
        %v1910 = vadd.f32 %v1635, %v1797
        %v1911 = vadd.f32 %v1636, %v1799
        %v1912 = vadd.f32 %v1637, %v1800
        %v1913 = vadd.f32 %v1638, %v1802
        %v1914 = vadd.f32 %v1639, %v1804
        %v1915 = vadd.f32 %v1640, %v1805
        %v1916 = vadd.f32 %v1641, %v1807
        %v1917 = vadd.f32 %v1642, %v1809
        %v1918 = vadd.f32 %v1643, %v1810
        %v1919 = vadd.f32 %v1644, %v1812
        %v1920 = vadd.f32 %v1645, %v1814
        %v1921 = vadd.f32 %v1646, %v1815
        %v1922 = vadd.f32 %v1647, %v1817
        %v1923 = vadd.f32 %v1648, %v1819
        %v1924 = vadd.f32 %v1649, %v1820
        %v1925 = vadd.f32 %v1650, %v1822
        %v1926 = vadd.f32 %v1651, %v1824
        %v1927 = vadd.f32 %v1652, %v1825
        %v1928 = vadd.f32 %v1653, %v1827
        %v1929 = vadd.f32 %v1654, %v1829
        %v1930 = vadd.f32 %v1655, %v1830
        %v1931 = vadd.f32 %v1656, %v1832
        %v1932 = vadd.f32 %v1657, %v1834
        %v1933 = vadd.f32 %v1658, %v1835
        %v1934 = vadd.f32 %v1659, %v1837
        %v1935 = vadd.f32 %v1660, %v1839
        %v1936 = vld [vmem:[%s1 + $0x6] sm:$0x1]
        %v1937 = vperm.slane %v1936, 0
        %v1938 = vmul.f32 %v464, %v1937
        %v1939 = vmul.f32 %v465, %v1937
        %v1940 = vmul.f32 %v466, %v1937
        %v1941 = vmul.f32 %v468, %v1937
        %v1942 = vmul.f32 %v469, %v1937
        %v1943 = vmul.f32 %v470, %v1937
        %v1944 = vmul.f32 %v472, %v1937
        %v1945 = vmul.f32 %v473, %v1937
        %v1946 = vmul.f32 %v474, %v1937
        %v1947 = vmul.f32 %v476, %v1937
        %v1948 = vmul.f32 %v477, %v1937
        %v1949 = vmul.f32 %v478, %v1937
        %v1950 = vmul.f32 %v480, %v1937
        %v1951 = vmul.f32 %v481, %v1937
        %v1952 = vmul.f32 %v482, %v1937
        %v1953 = vmul.f32 %v484, %v1937
        %v1954 = vmul.f32 %v485, %v1937
        %v1955 = vmul.f32 %v486, %v1937
        %v1956 = vmul.f32 %v488, %v1937
        %v1957 = vmul.f32 %v489, %v1937
        %v1958 = vmul.f32 %v490, %v1937
        %v1959 = vmul.f32 %v492, %v1937
        %v1960 = vmul.f32 %v493, %v1937
        %v1961 = vmul.f32 %v494, %v1937
        %v1962 = vmul.f32 %v496, %v1937
        %v1963 = vmul.f32 %v497, %v1937
        %v1964 = vmul.f32 %v498, %v1937
        %v1965 = vmul.f32 %v500, %v1937
        %v1966 = vmul.f32 %v501, %v1937
        %v1967 = vmul.f32 %v502, %v1937
        %v1968 = vmul.f32 %v504, %v1937
        %v1969 = vmul.f32 %v505, %v1937
        %v1970 = vmul.f32 %v506, %v1937
        %v1971 = vmul.f32 %v508, %v1937
        %v1972 = vmul.f32 %v509, %v1937
        %v1973 = vmul.f32 %v510, %v1937
        %v1974 = vmul.f32 %v512, %v1937
        %v1975 = vmul.f32 %v513, %v1937
        %v1976 = vmul.f32 %v514, %v1937
        %v1977 = vmul.f32 %v516, %v1937
        %v1978 = vmul.f32 %v517, %v1937
        %v1979 = vmul.f32 %v518, %v1937
        %v1980 = vmul.f32 %v520, %v1937
        %v1981 = vmul.f32 %v521, %v1937
        %v1982 = vmul.f32 %v522, %v1937
        %v1983 = vmul.f32 %v524, %v1937
        %v1984 = vmul.f32 %v525, %v1937
        %v1985 = vmul.f32 %v526, %v1937
        %vm2034 = vcmask 1041408
        %v2035 = vrot.slane %v1938, 6
        %v2036 = vrot.slane %v1939, 6
        %v2037 = vsel %vm2034, %v2035, %v2036
        %v2038 = vrot.slane %v1940, 6
        %v2039 = vsel %vm2034, %v2036, %v2038
        %v2040 = vrot.slane %v1941, 6
        %v2041 = vrot.slane %v1942, 6
        %v2042 = vsel %vm2034, %v2040, %v2041
        %v2043 = vrot.slane %v1943, 6
        %v2044 = vsel %vm2034, %v2041, %v2043
        %v2045 = vrot.slane %v1944, 6
        %v2046 = vrot.slane %v1945, 6
        %v2047 = vsel %vm2034, %v2045, %v2046
        %v2048 = vrot.slane %v1946, 6
        %v2049 = vsel %vm2034, %v2046, %v2048
        %v2050 = vrot.slane %v1947, 6
        %v2051 = vrot.slane %v1948, 6
        %v2052 = vsel %vm2034, %v2050, %v2051
        %v2053 = vrot.slane %v1949, 6
        %v2054 = vsel %vm2034, %v2051, %v2053
        %v2055 = vrot.slane %v1950, 6
        %v2056 = vrot.slane %v1951, 6
        %v2057 = vsel %vm2034, %v2055, %v2056
        %v2058 = vrot.slane %v1952, 6
        %v2059 = vsel %vm2034, %v2056, %v2058
        %v2060 = vrot.slane %v1953, 6
        %v2061 = vrot.slane %v1954, 6
        %v2062 = vsel %vm2034, %v2060, %v2061
        %v2063 = vrot.slane %v1955, 6
        %v2064 = vsel %vm2034, %v2061, %v2063
        %v2065 = vrot.slane %v1956, 6
        %v2066 = vrot.slane %v1957, 6
        %v2067 = vsel %vm2034, %v2065, %v2066
        %v2068 = vrot.slane %v1958, 6
        %v2069 = vsel %vm2034, %v2066, %v2068
        %v2070 = vrot.slane %v1959, 6
        %v2071 = vrot.slane %v1960, 6
        %v2072 = vsel %vm2034, %v2070, %v2071
        %v2073 = vrot.slane %v1961, 6
        %v2074 = vsel %vm2034, %v2071, %v2073
        %v2075 = vrot.slane %v1962, 6
        %v2076 = vrot.slane %v1963, 6
        %v2077 = vsel %vm2034, %v2075, %v2076
        %v2078 = vrot.slane %v1964, 6
        %v2079 = vsel %vm2034, %v2076, %v2078
        %v2080 = vrot.slane %v1965, 6
        %v2081 = vrot.slane %v1966, 6
        %v2082 = vsel %vm2034, %v2080, %v2081
        %v2083 = vrot.slane %v1967, 6
        %v2084 = vsel %vm2034, %v2081, %v2083
        %v2085 = vrot.slane %v1968, 6
        %v2086 = vrot.slane %v1969, 6
        %v2087 = vsel %vm2034, %v2085, %v2086
        %v2088 = vrot.slane %v1970, 6
        %v2089 = vsel %vm2034, %v2086, %v2088
        %v2090 = vrot.slane %v1971, 6
        %v2091 = vrot.slane %v1972, 6
        %v2092 = vsel %vm2034, %v2090, %v2091
        %v2093 = vrot.slane %v1973, 6
        %v2094 = vsel %vm2034, %v2091, %v2093
        %v2095 = vrot.slane %v1974, 6
        %v2096 = vrot.slane %v1975, 6
        %v2097 = vsel %vm2034, %v2095, %v2096
        %v2098 = vrot.slane %v1976, 6
        %v2099 = vsel %vm2034, %v2096, %v2098
        %v2100 = vrot.slane %v1977, 6
        %v2101 = vrot.slane %v1978, 6
        %v2102 = vsel %vm2034, %v2100, %v2101
        %v2103 = vrot.slane %v1979, 6
        %v2104 = vsel %vm2034, %v2101, %v2103
        %v2105 = vrot.slane %v1980, 6
        %v2106 = vrot.slane %v1981, 6
        %v2107 = vsel %vm2034, %v2105, %v2106
        %v2108 = vrot.slane %v1982, 6
        %v2109 = vsel %vm2034, %v2106, %v2108
        %v2110 = vrot.slane %v1983, 6
        %v2111 = vrot.slane %v1984, 6
        %v2112 = vsel %vm2034, %v2110, %v2111
        %v2113 = vrot.slane %v1985, 6
        %v2114 = vsel %vm2034, %v2111, %v2113
        %v2163 = vadd.f32 %v1888, %v2035
        %v2164 = vadd.f32 %v1889, %v2037
        %v2165 = vadd.f32 %v1890, %v2039
        %v2166 = vadd.f32 %v1891, %v2040
        %v2167 = vadd.f32 %v1892, %v2042
        %v2168 = vadd.f32 %v1893, %v2044
        %v2169 = vadd.f32 %v1894, %v2045
        %v2170 = vadd.f32 %v1895, %v2047
        %v2171 = vadd.f32 %v1896, %v2049
        %v2172 = vadd.f32 %v1897, %v2050
        %v2173 = vadd.f32 %v1898, %v2052
        %v2174 = vadd.f32 %v1899, %v2054
        %v2175 = vadd.f32 %v1900, %v2055
        %v2176 = vadd.f32 %v1901, %v2057
        %v2177 = vadd.f32 %v1902, %v2059
        %v2178 = vadd.f32 %v1903, %v2060
        %v2179 = vadd.f32 %v1904, %v2062
        %v2180 = vadd.f32 %v1905, %v2064
        %v2181 = vadd.f32 %v1906, %v2065
        %v2182 = vadd.f32 %v1907, %v2067
        %v2183 = vadd.f32 %v1908, %v2069
        %v2184 = vadd.f32 %v1909, %v2070
        %v2185 = vadd.f32 %v1910, %v2072
        %v2186 = vadd.f32 %v1911, %v2074
        %v2187 = vadd.f32 %v1912, %v2075
        %v2188 = vadd.f32 %v1913, %v2077
        %v2189 = vadd.f32 %v1914, %v2079
        %v2190 = vadd.f32 %v1915, %v2080
        %v2191 = vadd.f32 %v1916, %v2082
        %v2192 = vadd.f32 %v1917, %v2084
        %v2193 = vadd.f32 %v1918, %v2085
        %v2194 = vadd.f32 %v1919, %v2087
        %v2195 = vadd.f32 %v1920, %v2089
        %v2196 = vadd.f32 %v1921, %v2090
        %v2197 = vadd.f32 %v1922, %v2092
        %v2198 = vadd.f32 %v1923, %v2094
        %v2199 = vadd.f32 %v1924, %v2095
        %v2200 = vadd.f32 %v1925, %v2097
        %v2201 = vadd.f32 %v1926, %v2099
        %v2202 = vadd.f32 %v1927, %v2100
        %v2203 = vadd.f32 %v1928, %v2102
        %v2204 = vadd.f32 %v1929, %v2104
        %v2205 = vadd.f32 %v1930, %v2105
        %v2206 = vadd.f32 %v1931, %v2107
        %v2207 = vadd.f32 %v1932, %v2109
        %v2208 = vadd.f32 %v1933, %v2110
        %v2209 = vadd.f32 %v1934, %v2112
        %v2210 = vadd.f32 %v1935, %v2114
        %s2211 = scalar_lea.vmem [#allocation2], 32
        %v2212 = vld [vmem:[%s2211] sm:$0xff]
        %v2213 = vld [vmem:[%s2211 + $0x8] sm:$0xff]
        %v2214 = vld [vmem:[%s2211 + $0x10] sm:$0xff]
        %v2215 = vld [vmem:[%s2211 + $0x18] sm:$0x7]
        %v2216 = vld [vmem:[%s2211 + $0x20] sm:$0xff]
        %v2217 = vld [vmem:[%s2211 + $0x28] sm:$0xff]
        %v2218 = vld [vmem:[%s2211 + $0x30] sm:$0xff]
        %v2219 = vld [vmem:[%s2211 + $0x38] sm:$0x7]
        %v2220 = vld [vmem:[%s2211 + $0x40] sm:$0xff]
        %v2221 = vld [vmem:[%s2211 + $0x48] sm:$0xff]
        %v2222 = vld [vmem:[%s2211 + $0x50] sm:$0xff]
        %v2223 = vld [vmem:[%s2211 + $0x58] sm:$0x7]
        %v2224 = vld [vmem:[%s2211 + $0x60] sm:$0xff]
        %v2225 = vld [vmem:[%s2211 + $0x68] sm:$0xff]
        %v2226 = vld [vmem:[%s2211 + $0x70] sm:$0xff]
        %v2227 = vld [vmem:[%s2211 + $0x78] sm:$0x7]
        %v2228 = vld [vmem:[%s2211 + $0x80] sm:$0xff]
        %v2229 = vld [vmem:[%s2211 + $0x88] sm:$0xff]
        %v2230 = vld [vmem:[%s2211 + $0x90] sm:$0xff]
        %v2231 = vld [vmem:[%s2211 + $0x98] sm:$0x7]
        %v2232 = vld [vmem:[%s2211 + $0xa0] sm:$0xff]
        %v2233 = vld [vmem:[%s2211 + $0xa8] sm:$0xff]
        %v2234 = vld [vmem:[%s2211 + $0xb0] sm:$0xff]
        %v2235 = vld [vmem:[%s2211 + $0xb8] sm:$0x7]
        %v2236 = vld [vmem:[%s2211 + $0xc0] sm:$0xff]
        %v2237 = vld [vmem:[%s2211 + $0xc8] sm:$0xff]
        %v2238 = vld [vmem:[%s2211 + $0xd0] sm:$0xff]
        %v2239 = vld [vmem:[%s2211 + $0xd8] sm:$0x7]
        %v2240 = vld [vmem:[%s2211 + $0xe0] sm:$0xff]
        %v2241 = vld [vmem:[%s2211 + $0xe8] sm:$0xff]
        %v2242 = vld [vmem:[%s2211 + $0xf0] sm:$0xff]
        %v2243 = vld [vmem:[%s2211 + $0xf8] sm:$0x7]
        %v2244 = vld [vmem:[%s2211 + $0x100] sm:$0xff]
        %v2245 = vld [vmem:[%s2211 + $0x108] sm:$0xff]
        %v2246 = vld [vmem:[%s2211 + $0x110] sm:$0xff]
        %v2247 = vld [vmem:[%s2211 + $0x118] sm:$0x7]
        %v2248 = vld [vmem:[%s2211 + $0x120] sm:$0xff]
        %v2249 = vld [vmem:[%s2211 + $0x128] sm:$0xff]
        %v2250 = vld [vmem:[%s2211 + $0x130] sm:$0xff]
        %v2251 = vld [vmem:[%s2211 + $0x138] sm:$0x7]
        %v2252 = vld [vmem:[%s2211 + $0x140] sm:$0xff]
        %v2253 = vld [vmem:[%s2211 + $0x148] sm:$0xff]
        %v2254 = vld [vmem:[%s2211 + $0x150] sm:$0xff]
        %v2255 = vld [vmem:[%s2211 + $0x158] sm:$0x7]
        %v2256 = vld [vmem:[%s2211 + $0x160] sm:$0xff]
        %v2257 = vld [vmem:[%s2211 + $0x168] sm:$0xff]
        %v2258 = vld [vmem:[%s2211 + $0x170] sm:$0xff]
        %v2259 = vld [vmem:[%s2211 + $0x178] sm:$0x7]
        %v2260 = vld [vmem:[%s2211 + $0x180] sm:$0xff]
        %v2261 = vld [vmem:[%s2211 + $0x188] sm:$0xff]
        %v2262 = vld [vmem:[%s2211 + $0x190] sm:$0xff]
        %v2263 = vld [vmem:[%s2211 + $0x198] sm:$0x7]
        %v2264 = vld [vmem:[%s2211 + $0x1a0] sm:$0xff]
        %v2265 = vld [vmem:[%s2211 + $0x1a8] sm:$0xff]
        %v2266 = vld [vmem:[%s2211 + $0x1b0] sm:$0xff]
        %v2267 = vld [vmem:[%s2211 + $0x1b8] sm:$0x7]
        %v2268 = vld [vmem:[%s2211 + $0x1c0] sm:$0xff]
        %v2269 = vld [vmem:[%s2211 + $0x1c8] sm:$0xff]
        %v2270 = vld [vmem:[%s2211 + $0x1d0] sm:$0xff]
        %v2271 = vld [vmem:[%s2211 + $0x1d8] sm:$0x7]
        %v2272 = vld [vmem:[%s2211 + $0x1e0] sm:$0xff]
        %v2273 = vld [vmem:[%s2211 + $0x1e8] sm:$0xff]
        %v2274 = vld [vmem:[%s2211 + $0x1f0] sm:$0xff]
        %v2275 = vld [vmem:[%s2211 + $0x1f8] sm:$0x7]
        %v2276 = vld [vmem:[%s1 + $0x7] sm:$0x1]
        %v2277 = vperm.slane %v2276, 0
        %v2278 = vmul.f32 %v2212, %v2277
        %v2279 = vmul.f32 %v2213, %v2277
        %v2280 = vmul.f32 %v2214, %v2277
        %v2281 = vmul.f32 %v2216, %v2277
        %v2282 = vmul.f32 %v2217, %v2277
        %v2283 = vmul.f32 %v2218, %v2277
        %v2284 = vmul.f32 %v2220, %v2277
        %v2285 = vmul.f32 %v2221, %v2277
        %v2286 = vmul.f32 %v2222, %v2277
        %v2287 = vmul.f32 %v2224, %v2277
        %v2288 = vmul.f32 %v2225, %v2277
        %v2289 = vmul.f32 %v2226, %v2277
        %v2290 = vmul.f32 %v2228, %v2277
        %v2291 = vmul.f32 %v2229, %v2277
        %v2292 = vmul.f32 %v2230, %v2277
        %v2293 = vmul.f32 %v2232, %v2277
        %v2294 = vmul.f32 %v2233, %v2277
        %v2295 = vmul.f32 %v2234, %v2277
        %v2296 = vmul.f32 %v2236, %v2277
        %v2297 = vmul.f32 %v2237, %v2277
        %v2298 = vmul.f32 %v2238, %v2277
        %v2299 = vmul.f32 %v2240, %v2277
        %v2300 = vmul.f32 %v2241, %v2277
        %v2301 = vmul.f32 %v2242, %v2277
        %v2302 = vmul.f32 %v2244, %v2277
        %v2303 = vmul.f32 %v2245, %v2277
        %v2304 = vmul.f32 %v2246, %v2277
        %v2305 = vmul.f32 %v2248, %v2277
        %v2306 = vmul.f32 %v2249, %v2277
        %v2307 = vmul.f32 %v2250, %v2277
        %v2308 = vmul.f32 %v2252, %v2277
        %v2309 = vmul.f32 %v2253, %v2277
        %v2310 = vmul.f32 %v2254, %v2277
        %v2311 = vmul.f32 %v2256, %v2277
        %v2312 = vmul.f32 %v2257, %v2277
        %v2313 = vmul.f32 %v2258, %v2277
        %v2314 = vmul.f32 %v2260, %v2277
        %v2315 = vmul.f32 %v2261, %v2277
        %v2316 = vmul.f32 %v2262, %v2277
        %v2317 = vmul.f32 %v2264, %v2277
        %v2318 = vmul.f32 %v2265, %v2277
        %v2319 = vmul.f32 %v2266, %v2277
        %v2320 = vmul.f32 %v2268, %v2277
        %v2321 = vmul.f32 %v2269, %v2277
        %v2322 = vmul.f32 %v2270, %v2277
        %v2323 = vmul.f32 %v2272, %v2277
        %v2324 = vmul.f32 %v2273, %v2277
        %v2325 = vmul.f32 %v2274, %v2277
        %v2326 = vadd.f32 %v2163, %v2278
        %v2327 = vadd.f32 %v2164, %v2279
        %v2328 = vadd.f32 %v2165, %v2280
        %v2329 = vadd.f32 %v2166, %v2281
        %v2330 = vadd.f32 %v2167, %v2282
        %v2331 = vadd.f32 %v2168, %v2283
        %v2332 = vadd.f32 %v2169, %v2284
        %v2333 = vadd.f32 %v2170, %v2285
        %v2334 = vadd.f32 %v2171, %v2286
        %v2335 = vadd.f32 %v2172, %v2287
        %v2336 = vadd.f32 %v2173, %v2288
        %v2337 = vadd.f32 %v2174, %v2289
        %v2338 = vadd.f32 %v2175, %v2290
        %v2339 = vadd.f32 %v2176, %v2291
        %v2340 = vadd.f32 %v2177, %v2292
        %v2341 = vadd.f32 %v2178, %v2293
        %v2342 = vadd.f32 %v2179, %v2294
        %v2343 = vadd.f32 %v2180, %v2295
        %v2344 = vadd.f32 %v2181, %v2296
        %v2345 = vadd.f32 %v2182, %v2297
        %v2346 = vadd.f32 %v2183, %v2298
        %v2347 = vadd.f32 %v2184, %v2299
        %v2348 = vadd.f32 %v2185, %v2300
        %v2349 = vadd.f32 %v2186, %v2301
        %v2350 = vadd.f32 %v2187, %v2302
        %v2351 = vadd.f32 %v2188, %v2303
        %v2352 = vadd.f32 %v2189, %v2304
        %v2353 = vadd.f32 %v2190, %v2305
        %v2354 = vadd.f32 %v2191, %v2306
        %v2355 = vadd.f32 %v2192, %v2307
        %v2356 = vadd.f32 %v2193, %v2308
        %v2357 = vadd.f32 %v2194, %v2309
        %v2358 = vadd.f32 %v2195, %v2310
        %v2359 = vadd.f32 %v2196, %v2311
        %v2360 = vadd.f32 %v2197, %v2312
        %v2361 = vadd.f32 %v2198, %v2313
        %v2362 = vadd.f32 %v2199, %v2314
        %v2363 = vadd.f32 %v2200, %v2315
        %v2364 = vadd.f32 %v2201, %v2316
        %v2365 = vadd.f32 %v2202, %v2317
        %v2366 = vadd.f32 %v2203, %v2318
        %v2367 = vadd.f32 %v2204, %v2319
        %v2368 = vadd.f32 %v2205, %v2320
        %v2369 = vadd.f32 %v2206, %v2321
        %v2370 = vadd.f32 %v2207, %v2322
        %v2371 = vadd.f32 %v2208, %v2323
        %v2372 = vadd.f32 %v2209, %v2324
        %v2373 = vadd.f32 %v2210, %v2325
        %v2374 = vld [vmem:[%s1 + $0x8] sm:$0x1]
        %v2375 = vperm.slane %v2374, 0
        %v2376 = vmul.f32 %v2212, %v2375
        %v2377 = vmul.f32 %v2213, %v2375
        %v2378 = vmul.f32 %v2214, %v2375
        %v2379 = vmul.f32 %v2216, %v2375
        %v2380 = vmul.f32 %v2217, %v2375
        %v2381 = vmul.f32 %v2218, %v2375
        %v2382 = vmul.f32 %v2220, %v2375
        %v2383 = vmul.f32 %v2221, %v2375
        %v2384 = vmul.f32 %v2222, %v2375
        %v2385 = vmul.f32 %v2224, %v2375
        %v2386 = vmul.f32 %v2225, %v2375
        %v2387 = vmul.f32 %v2226, %v2375
        %v2388 = vmul.f32 %v2228, %v2375
        %v2389 = vmul.f32 %v2229, %v2375
        %v2390 = vmul.f32 %v2230, %v2375
        %v2391 = vmul.f32 %v2232, %v2375
        %v2392 = vmul.f32 %v2233, %v2375
        %v2393 = vmul.f32 %v2234, %v2375
        %v2394 = vmul.f32 %v2236, %v2375
        %v2395 = vmul.f32 %v2237, %v2375
        %v2396 = vmul.f32 %v2238, %v2375
        %v2397 = vmul.f32 %v2240, %v2375
        %v2398 = vmul.f32 %v2241, %v2375
        %v2399 = vmul.f32 %v2242, %v2375
        %v2400 = vmul.f32 %v2244, %v2375
        %v2401 = vmul.f32 %v2245, %v2375
        %v2402 = vmul.f32 %v2246, %v2375
        %v2403 = vmul.f32 %v2248, %v2375
        %v2404 = vmul.f32 %v2249, %v2375
        %v2405 = vmul.f32 %v2250, %v2375
        %v2406 = vmul.f32 %v2252, %v2375
        %v2407 = vmul.f32 %v2253, %v2375
        %v2408 = vmul.f32 %v2254, %v2375
        %v2409 = vmul.f32 %v2256, %v2375
        %v2410 = vmul.f32 %v2257, %v2375
        %v2411 = vmul.f32 %v2258, %v2375
        %v2412 = vmul.f32 %v2260, %v2375
        %v2413 = vmul.f32 %v2261, %v2375
        %v2414 = vmul.f32 %v2262, %v2375
        %v2415 = vmul.f32 %v2264, %v2375
        %v2416 = vmul.f32 %v2265, %v2375
        %v2417 = vmul.f32 %v2266, %v2375
        %v2418 = vmul.f32 %v2268, %v2375
        %v2419 = vmul.f32 %v2269, %v2375
        %v2420 = vmul.f32 %v2270, %v2375
        %v2421 = vmul.f32 %v2272, %v2375
        %v2422 = vmul.f32 %v2273, %v2375
        %v2423 = vmul.f32 %v2274, %v2375
        %v2472 = vrot.slane %v2376, 1
        %v2473 = vrot.slane %v2377, 1
        %v2474 = vsel %vm723, %v2472, %v2473
        %v2475 = vrot.slane %v2378, 1
        %v2476 = vsel %vm723, %v2473, %v2475
        %v2477 = vrot.slane %v2379, 1
        %v2478 = vrot.slane %v2380, 1
        %v2479 = vsel %vm723, %v2477, %v2478
        %v2480 = vrot.slane %v2381, 1
        %v2481 = vsel %vm723, %v2478, %v2480
        %v2482 = vrot.slane %v2382, 1
        %v2483 = vrot.slane %v2383, 1
        %v2484 = vsel %vm723, %v2482, %v2483
        %v2485 = vrot.slane %v2384, 1
        %v2486 = vsel %vm723, %v2483, %v2485
        %v2487 = vrot.slane %v2385, 1
        %v2488 = vrot.slane %v2386, 1
        %v2489 = vsel %vm723, %v2487, %v2488
        %v2490 = vrot.slane %v2387, 1
        %v2491 = vsel %vm723, %v2488, %v2490
        %v2492 = vrot.slane %v2388, 1
        %v2493 = vrot.slane %v2389, 1
        %v2494 = vsel %vm723, %v2492, %v2493
        %v2495 = vrot.slane %v2390, 1
        %v2496 = vsel %vm723, %v2493, %v2495
        %v2497 = vrot.slane %v2391, 1
        %v2498 = vrot.slane %v2392, 1
        %v2499 = vsel %vm723, %v2497, %v2498
        %v2500 = vrot.slane %v2393, 1
        %v2501 = vsel %vm723, %v2498, %v2500
        %v2502 = vrot.slane %v2394, 1
        %v2503 = vrot.slane %v2395, 1
        %v2504 = vsel %vm723, %v2502, %v2503
        %v2505 = vrot.slane %v2396, 1
        %v2506 = vsel %vm723, %v2503, %v2505
        %v2507 = vrot.slane %v2397, 1
        %v2508 = vrot.slane %v2398, 1
        %v2509 = vsel %vm723, %v2507, %v2508
        %v2510 = vrot.slane %v2399, 1
        %v2511 = vsel %vm723, %v2508, %v2510
        %v2512 = vrot.slane %v2400, 1
        %v2513 = vrot.slane %v2401, 1
        %v2514 = vsel %vm723, %v2512, %v2513
        %v2515 = vrot.slane %v2402, 1
        %v2516 = vsel %vm723, %v2513, %v2515
        %v2517 = vrot.slane %v2403, 1
        %v2518 = vrot.slane %v2404, 1
        %v2519 = vsel %vm723, %v2517, %v2518
        %v2520 = vrot.slane %v2405, 1
        %v2521 = vsel %vm723, %v2518, %v2520
        %v2522 = vrot.slane %v2406, 1
        %v2523 = vrot.slane %v2407, 1
        %v2524 = vsel %vm723, %v2522, %v2523
        %v2525 = vrot.slane %v2408, 1
        %v2526 = vsel %vm723, %v2523, %v2525
        %v2527 = vrot.slane %v2409, 1
        %v2528 = vrot.slane %v2410, 1
        %v2529 = vsel %vm723, %v2527, %v2528
        %v2530 = vrot.slane %v2411, 1
        %v2531 = vsel %vm723, %v2528, %v2530
        %v2532 = vrot.slane %v2412, 1
        %v2533 = vrot.slane %v2413, 1
        %v2534 = vsel %vm723, %v2532, %v2533
        %v2535 = vrot.slane %v2414, 1
        %v2536 = vsel %vm723, %v2533, %v2535
        %v2537 = vrot.slane %v2415, 1
        %v2538 = vrot.slane %v2416, 1
        %v2539 = vsel %vm723, %v2537, %v2538
        %v2540 = vrot.slane %v2417, 1
        %v2541 = vsel %vm723, %v2538, %v2540
        %v2542 = vrot.slane %v2418, 1
        %v2543 = vrot.slane %v2419, 1
        %v2544 = vsel %vm723, %v2542, %v2543
        %v2545 = vrot.slane %v2420, 1
        %v2546 = vsel %vm723, %v2543, %v2545
        %v2547 = vrot.slane %v2421, 1
        %v2548 = vrot.slane %v2422, 1
        %v2549 = vsel %vm723, %v2547, %v2548
        %v2550 = vrot.slane %v2423, 1
        %v2551 = vsel %vm723, %v2548, %v2550
        %v2600 = vadd.f32 %v2326, %v2474
        %v2601 = vadd.f32 %v2327, %v2476
        %v2602 = vadd.f32 %v2328, %v2475
        %v2603 = vadd.f32 %v2329, %v2479
        %v2604 = vadd.f32 %v2330, %v2481
        %v2605 = vadd.f32 %v2331, %v2480
        %v2606 = vadd.f32 %v2332, %v2484
        %v2607 = vadd.f32 %v2333, %v2486
        %v2608 = vadd.f32 %v2334, %v2485
        %v2609 = vadd.f32 %v2335, %v2489
        %v2610 = vadd.f32 %v2336, %v2491
        %v2611 = vadd.f32 %v2337, %v2490
        %v2612 = vadd.f32 %v2338, %v2494
        %v2613 = vadd.f32 %v2339, %v2496
        %v2614 = vadd.f32 %v2340, %v2495
        %v2615 = vadd.f32 %v2341, %v2499
        %v2616 = vadd.f32 %v2342, %v2501
        %v2617 = vadd.f32 %v2343, %v2500
        %v2618 = vadd.f32 %v2344, %v2504
        %v2619 = vadd.f32 %v2345, %v2506
        %v2620 = vadd.f32 %v2346, %v2505
        %v2621 = vadd.f32 %v2347, %v2509
        %v2622 = vadd.f32 %v2348, %v2511
        %v2623 = vadd.f32 %v2349, %v2510
        %v2624 = vadd.f32 %v2350, %v2514
        %v2625 = vadd.f32 %v2351, %v2516
        %v2626 = vadd.f32 %v2352, %v2515
        %v2627 = vadd.f32 %v2353, %v2519
        %v2628 = vadd.f32 %v2354, %v2521
        %v2629 = vadd.f32 %v2355, %v2520
        %v2630 = vadd.f32 %v2356, %v2524
        %v2631 = vadd.f32 %v2357, %v2526
        %v2632 = vadd.f32 %v2358, %v2525
        %v2633 = vadd.f32 %v2359, %v2529
        %v2634 = vadd.f32 %v2360, %v2531
        %v2635 = vadd.f32 %v2361, %v2530
        %v2636 = vadd.f32 %v2362, %v2534
        %v2637 = vadd.f32 %v2363, %v2536
        %v2638 = vadd.f32 %v2364, %v2535
        %v2639 = vadd.f32 %v2365, %v2539
        %v2640 = vadd.f32 %v2366, %v2541
        %v2641 = vadd.f32 %v2367, %v2540
        %v2642 = vadd.f32 %v2368, %v2544
        %v2643 = vadd.f32 %v2369, %v2546
        %v2644 = vadd.f32 %v2370, %v2545
        %v2645 = vadd.f32 %v2371, %v2549
        %v2646 = vadd.f32 %v2372, %v2551
        %v2647 = vadd.f32 %v2373, %v2550
        %v2648 = vld [vmem:[%s1 + $0x9] sm:$0x1]
        %v2649 = vperm.slane %v2648, 0
        %v2650 = vmul.f32 %v2212, %v2649
        %v2651 = vmul.f32 %v2213, %v2649
        %v2652 = vmul.f32 %v2214, %v2649
        %v2653 = vmul.f32 %v2216, %v2649
        %v2654 = vmul.f32 %v2217, %v2649
        %v2655 = vmul.f32 %v2218, %v2649
        %v2656 = vmul.f32 %v2220, %v2649
        %v2657 = vmul.f32 %v2221, %v2649
        %v2658 = vmul.f32 %v2222, %v2649
        %v2659 = vmul.f32 %v2224, %v2649
        %v2660 = vmul.f32 %v2225, %v2649
        %v2661 = vmul.f32 %v2226, %v2649
        %v2662 = vmul.f32 %v2228, %v2649
        %v2663 = vmul.f32 %v2229, %v2649
        %v2664 = vmul.f32 %v2230, %v2649
        %v2665 = vmul.f32 %v2232, %v2649
        %v2666 = vmul.f32 %v2233, %v2649
        %v2667 = vmul.f32 %v2234, %v2649
        %v2668 = vmul.f32 %v2236, %v2649
        %v2669 = vmul.f32 %v2237, %v2649
        %v2670 = vmul.f32 %v2238, %v2649
        %v2671 = vmul.f32 %v2240, %v2649
        %v2672 = vmul.f32 %v2241, %v2649
        %v2673 = vmul.f32 %v2242, %v2649
        %v2674 = vmul.f32 %v2244, %v2649
        %v2675 = vmul.f32 %v2245, %v2649
        %v2676 = vmul.f32 %v2246, %v2649
        %v2677 = vmul.f32 %v2248, %v2649
        %v2678 = vmul.f32 %v2249, %v2649
        %v2679 = vmul.f32 %v2250, %v2649
        %v2680 = vmul.f32 %v2252, %v2649
        %v2681 = vmul.f32 %v2253, %v2649
        %v2682 = vmul.f32 %v2254, %v2649
        %v2683 = vmul.f32 %v2256, %v2649
        %v2684 = vmul.f32 %v2257, %v2649
        %v2685 = vmul.f32 %v2258, %v2649
        %v2686 = vmul.f32 %v2260, %v2649
        %v2687 = vmul.f32 %v2261, %v2649
        %v2688 = vmul.f32 %v2262, %v2649
        %v2689 = vmul.f32 %v2264, %v2649
        %v2690 = vmul.f32 %v2265, %v2649
        %v2691 = vmul.f32 %v2266, %v2649
        %v2692 = vmul.f32 %v2268, %v2649
        %v2693 = vmul.f32 %v2269, %v2649
        %v2694 = vmul.f32 %v2270, %v2649
        %v2695 = vmul.f32 %v2272, %v2649
        %v2696 = vmul.f32 %v2273, %v2649
        %v2697 = vmul.f32 %v2274, %v2649
        %v2746 = vrot.slane %v2650, 2
        %v2747 = vrot.slane %v2651, 2
        %v2748 = vsel %vm998, %v2746, %v2747
        %v2749 = vrot.slane %v2652, 2
        %v2750 = vsel %vm998, %v2747, %v2749
        %v2751 = vrot.slane %v2653, 2
        %v2752 = vrot.slane %v2654, 2
        %v2753 = vsel %vm998, %v2751, %v2752
        %v2754 = vrot.slane %v2655, 2
        %v2755 = vsel %vm998, %v2752, %v2754
        %v2756 = vrot.slane %v2656, 2
        %v2757 = vrot.slane %v2657, 2
        %v2758 = vsel %vm998, %v2756, %v2757
        %v2759 = vrot.slane %v2658, 2
        %v2760 = vsel %vm998, %v2757, %v2759
        %v2761 = vrot.slane %v2659, 2
        %v2762 = vrot.slane %v2660, 2
        %v2763 = vsel %vm998, %v2761, %v2762
        %v2764 = vrot.slane %v2661, 2
        %v2765 = vsel %vm998, %v2762, %v2764
        %v2766 = vrot.slane %v2662, 2
        %v2767 = vrot.slane %v2663, 2
        %v2768 = vsel %vm998, %v2766, %v2767
        %v2769 = vrot.slane %v2664, 2
        %v2770 = vsel %vm998, %v2767, %v2769
        %v2771 = vrot.slane %v2665, 2
        %v2772 = vrot.slane %v2666, 2
        %v2773 = vsel %vm998, %v2771, %v2772
        %v2774 = vrot.slane %v2667, 2
        %v2775 = vsel %vm998, %v2772, %v2774
        %v2776 = vrot.slane %v2668, 2
        %v2777 = vrot.slane %v2669, 2
        %v2778 = vsel %vm998, %v2776, %v2777
        %v2779 = vrot.slane %v2670, 2
        %v2780 = vsel %vm998, %v2777, %v2779
        %v2781 = vrot.slane %v2671, 2
        %v2782 = vrot.slane %v2672, 2
        %v2783 = vsel %vm998, %v2781, %v2782
        %v2784 = vrot.slane %v2673, 2
        %v2785 = vsel %vm998, %v2782, %v2784
        %v2786 = vrot.slane %v2674, 2
        %v2787 = vrot.slane %v2675, 2
        %v2788 = vsel %vm998, %v2786, %v2787
        %v2789 = vrot.slane %v2676, 2
        %v2790 = vsel %vm998, %v2787, %v2789
        %v2791 = vrot.slane %v2677, 2
        %v2792 = vrot.slane %v2678, 2
        %v2793 = vsel %vm998, %v2791, %v2792
        %v2794 = vrot.slane %v2679, 2
        %v2795 = vsel %vm998, %v2792, %v2794
        %v2796 = vrot.slane %v2680, 2
        %v2797 = vrot.slane %v2681, 2
        %v2798 = vsel %vm998, %v2796, %v2797
        %v2799 = vrot.slane %v2682, 2
        %v2800 = vsel %vm998, %v2797, %v2799
        %v2801 = vrot.slane %v2683, 2
        %v2802 = vrot.slane %v2684, 2
        %v2803 = vsel %vm998, %v2801, %v2802
        %v2804 = vrot.slane %v2685, 2
        %v2805 = vsel %vm998, %v2802, %v2804
        %v2806 = vrot.slane %v2686, 2
        %v2807 = vrot.slane %v2687, 2
        %v2808 = vsel %vm998, %v2806, %v2807
        %v2809 = vrot.slane %v2688, 2
        %v2810 = vsel %vm998, %v2807, %v2809
        %v2811 = vrot.slane %v2689, 2
        %v2812 = vrot.slane %v2690, 2
        %v2813 = vsel %vm998, %v2811, %v2812
        %v2814 = vrot.slane %v2691, 2
        %v2815 = vsel %vm998, %v2812, %v2814
        %v2816 = vrot.slane %v2692, 2
        %v2817 = vrot.slane %v2693, 2
        %v2818 = vsel %vm998, %v2816, %v2817
        %v2819 = vrot.slane %v2694, 2
        %v2820 = vsel %vm998, %v2817, %v2819
        %v2821 = vrot.slane %v2695, 2
        %v2822 = vrot.slane %v2696, 2
        %v2823 = vsel %vm998, %v2821, %v2822
        %v2824 = vrot.slane %v2697, 2
        %v2825 = vsel %vm998, %v2822, %v2824
        %v2874 = vadd.f32 %v2600, %v2748
        %v2875 = vadd.f32 %v2601, %v2750
        %v2876 = vadd.f32 %v2602, %v2749
        %v2877 = vadd.f32 %v2603, %v2753
        %v2878 = vadd.f32 %v2604, %v2755
        %v2879 = vadd.f32 %v2605, %v2754
        %v2880 = vadd.f32 %v2606, %v2758
        %v2881 = vadd.f32 %v2607, %v2760
        %v2882 = vadd.f32 %v2608, %v2759
        %v2883 = vadd.f32 %v2609, %v2763
        %v2884 = vadd.f32 %v2610, %v2765
        %v2885 = vadd.f32 %v2611, %v2764
        %v2886 = vadd.f32 %v2612, %v2768
        %v2887 = vadd.f32 %v2613, %v2770
        %v2888 = vadd.f32 %v2614, %v2769
        %v2889 = vadd.f32 %v2615, %v2773
        %v2890 = vadd.f32 %v2616, %v2775
        %v2891 = vadd.f32 %v2617, %v2774
        %v2892 = vadd.f32 %v2618, %v2778
        %v2893 = vadd.f32 %v2619, %v2780
        %v2894 = vadd.f32 %v2620, %v2779
        %v2895 = vadd.f32 %v2621, %v2783
        %v2896 = vadd.f32 %v2622, %v2785
        %v2897 = vadd.f32 %v2623, %v2784
        %v2898 = vadd.f32 %v2624, %v2788
        %v2899 = vadd.f32 %v2625, %v2790
        %v2900 = vadd.f32 %v2626, %v2789
        %v2901 = vadd.f32 %v2627, %v2793
        %v2902 = vadd.f32 %v2628, %v2795
        %v2903 = vadd.f32 %v2629, %v2794
        %v2904 = vadd.f32 %v2630, %v2798
        %v2905 = vadd.f32 %v2631, %v2800
        %v2906 = vadd.f32 %v2632, %v2799
        %v2907 = vadd.f32 %v2633, %v2803
        %v2908 = vadd.f32 %v2634, %v2805
        %v2909 = vadd.f32 %v2635, %v2804
        %v2910 = vadd.f32 %v2636, %v2808
        %v2911 = vadd.f32 %v2637, %v2810
        %v2912 = vadd.f32 %v2638, %v2809
        %v2913 = vadd.f32 %v2639, %v2813
        %v2914 = vadd.f32 %v2640, %v2815
        %v2915 = vadd.f32 %v2641, %v2814
        %v2916 = vadd.f32 %v2642, %v2818
        %v2917 = vadd.f32 %v2643, %v2820
        %v2918 = vadd.f32 %v2644, %v2819
        %v2919 = vadd.f32 %v2645, %v2823
        %v2920 = vadd.f32 %v2646, %v2825
        %v2921 = vadd.f32 %v2647, %v2824
        %v2922 = vld [vmem:[%s1 + $0xa] sm:$0x1]
        %v2923 = vperm.slane %v2922, 0
        %v2924 = vmul.f32 %v2213, %v2923
        %v2925 = vmul.f32 %v2214, %v2923
        %v2926 = vmul.f32 %v2217, %v2923
        %v2927 = vmul.f32 %v2218, %v2923
        %v2928 = vmul.f32 %v2221, %v2923
        %v2929 = vmul.f32 %v2222, %v2923
        %v2930 = vmul.f32 %v2225, %v2923
        %v2931 = vmul.f32 %v2226, %v2923
        %v2932 = vmul.f32 %v2229, %v2923
        %v2933 = vmul.f32 %v2230, %v2923
        %v2934 = vmul.f32 %v2233, %v2923
        %v2935 = vmul.f32 %v2234, %v2923
        %v2936 = vmul.f32 %v2237, %v2923
        %v2937 = vmul.f32 %v2238, %v2923
        %v2938 = vmul.f32 %v2241, %v2923
        %v2939 = vmul.f32 %v2242, %v2923
        %v2940 = vmul.f32 %v2245, %v2923
        %v2941 = vmul.f32 %v2246, %v2923
        %v2942 = vmul.f32 %v2249, %v2923
        %v2943 = vmul.f32 %v2250, %v2923
        %v2944 = vmul.f32 %v2253, %v2923
        %v2945 = vmul.f32 %v2254, %v2923
        %v2946 = vmul.f32 %v2257, %v2923
        %v2947 = vmul.f32 %v2258, %v2923
        %v2948 = vmul.f32 %v2261, %v2923
        %v2949 = vmul.f32 %v2262, %v2923
        %v2950 = vmul.f32 %v2265, %v2923
        %v2951 = vmul.f32 %v2266, %v2923
        %v2952 = vmul.f32 %v2269, %v2923
        %v2953 = vmul.f32 %v2270, %v2923
        %v2954 = vmul.f32 %v2273, %v2923
        %v2955 = vmul.f32 %v2274, %v2923
        %v2988 = vrot.slane %v2924, 3
        %v2989 = vrot.slane %v2925, 3
        %v2990 = vsel %vm1241, %v2988, %v2989
        %v2991 = vrot.slane %v2926, 3
        %v2992 = vrot.slane %v2927, 3
        %v2993 = vsel %vm1241, %v2991, %v2992
        %v2994 = vrot.slane %v2928, 3
        %v2995 = vrot.slane %v2929, 3
        %v2996 = vsel %vm1241, %v2994, %v2995
        %v2997 = vrot.slane %v2930, 3
        %v2998 = vrot.slane %v2931, 3
        %v2999 = vsel %vm1241, %v2997, %v2998
        %v3000 = vrot.slane %v2932, 3
        %v3001 = vrot.slane %v2933, 3
        %v3002 = vsel %vm1241, %v3000, %v3001
        %v3003 = vrot.slane %v2934, 3
        %v3004 = vrot.slane %v2935, 3
        %v3005 = vsel %vm1241, %v3003, %v3004
        %v3006 = vrot.slane %v2936, 3
        %v3007 = vrot.slane %v2937, 3
        %v3008 = vsel %vm1241, %v3006, %v3007
        %v3009 = vrot.slane %v2938, 3
        %v3010 = vrot.slane %v2939, 3
        %v3011 = vsel %vm1241, %v3009, %v3010
        %v3012 = vrot.slane %v2940, 3
        %v3013 = vrot.slane %v2941, 3
        %v3014 = vsel %vm1241, %v3012, %v3013
        %v3015 = vrot.slane %v2942, 3
        %v3016 = vrot.slane %v2943, 3
        %v3017 = vsel %vm1241, %v3015, %v3016
        %v3018 = vrot.slane %v2944, 3
        %v3019 = vrot.slane %v2945, 3
        %v3020 = vsel %vm1241, %v3018, %v3019
        %v3021 = vrot.slane %v2946, 3
        %v3022 = vrot.slane %v2947, 3
        %v3023 = vsel %vm1241, %v3021, %v3022
        %v3024 = vrot.slane %v2948, 3
        %v3025 = vrot.slane %v2949, 3
        %v3026 = vsel %vm1241, %v3024, %v3025
        %v3027 = vrot.slane %v2950, 3
        %v3028 = vrot.slane %v2951, 3
        %v3029 = vsel %vm1241, %v3027, %v3028
        %v3030 = vrot.slane %v2952, 3
        %v3031 = vrot.slane %v2953, 3
        %v3032 = vsel %vm1241, %v3030, %v3031
        %v3033 = vrot.slane %v2954, 3
        %v3034 = vrot.slane %v2955, 3
        %v3035 = vsel %vm1241, %v3033, %v3034
        %v3084 = vadd.f32 %v2874, %v2988
        %v3085 = vadd.f32 %v2875, %v2990
        %v3086 = vadd.f32 %v2876, %v2989
        %v3087 = vadd.f32 %v2877, %v2991
        %v3088 = vadd.f32 %v2878, %v2993
        %v3089 = vadd.f32 %v2879, %v2992
        %v3090 = vadd.f32 %v2880, %v2994
        %v3091 = vadd.f32 %v2881, %v2996
        %v3092 = vadd.f32 %v2882, %v2995
        %v3093 = vadd.f32 %v2883, %v2997
        %v3094 = vadd.f32 %v2884, %v2999
        %v3095 = vadd.f32 %v2885, %v2998
        %v3096 = vadd.f32 %v2886, %v3000
        %v3097 = vadd.f32 %v2887, %v3002
        %v3098 = vadd.f32 %v2888, %v3001
        %v3099 = vadd.f32 %v2889, %v3003
        %v3100 = vadd.f32 %v2890, %v3005
        %v3101 = vadd.f32 %v2891, %v3004
        %v3102 = vadd.f32 %v2892, %v3006
        %v3103 = vadd.f32 %v2893, %v3008
        %v3104 = vadd.f32 %v2894, %v3007
        %v3105 = vadd.f32 %v2895, %v3009
        %v3106 = vadd.f32 %v2896, %v3011
        %v3107 = vadd.f32 %v2897, %v3010
        %v3108 = vadd.f32 %v2898, %v3012
        %v3109 = vadd.f32 %v2899, %v3014
        %v3110 = vadd.f32 %v2900, %v3013
        %v3111 = vadd.f32 %v2901, %v3015
        %v3112 = vadd.f32 %v2902, %v3017
        %v3113 = vadd.f32 %v2903, %v3016
        %v3114 = vadd.f32 %v2904, %v3018
        %v3115 = vadd.f32 %v2905, %v3020
        %v3116 = vadd.f32 %v2906, %v3019
        %v3117 = vadd.f32 %v2907, %v3021
        %v3118 = vadd.f32 %v2908, %v3023
        %v3119 = vadd.f32 %v2909, %v3022
        %v3120 = vadd.f32 %v2910, %v3024
        %v3121 = vadd.f32 %v2911, %v3026
        %v3122 = vadd.f32 %v2912, %v3025
        %v3123 = vadd.f32 %v2913, %v3027
        %v3124 = vadd.f32 %v2914, %v3029
        %v3125 = vadd.f32 %v2915, %v3028
        %v3126 = vadd.f32 %v2916, %v3030
        %v3127 = vadd.f32 %v2917, %v3032
        %v3128 = vadd.f32 %v2918, %v3031
        %v3129 = vadd.f32 %v2919, %v3033
        %v3130 = vadd.f32 %v2920, %v3035
        %v3131 = vadd.f32 %v2921, %v3034
        %v3132 = vld [vmem:[%s1 + $0xb] sm:$0x1]
        %v3133 = vperm.slane %v3132, 0
        %v3134 = vmul.f32 %v2213, %v3133
        %v3135 = vmul.f32 %v2214, %v3133
        %v3136 = vmul.f32 %v2215, %v3133
        %v3137 = vmul.f32 %v2217, %v3133
        %v3138 = vmul.f32 %v2218, %v3133
        %v3139 = vmul.f32 %v2219, %v3133
        %v3140 = vmul.f32 %v2221, %v3133
        %v3141 = vmul.f32 %v2222, %v3133
        %v3142 = vmul.f32 %v2223, %v3133
        %v3143 = vmul.f32 %v2225, %v3133
        %v3144 = vmul.f32 %v2226, %v3133
        %v3145 = vmul.f32 %v2227, %v3133
        %v3146 = vmul.f32 %v2229, %v3133
        %v3147 = vmul.f32 %v2230, %v3133
        %v3148 = vmul.f32 %v2231, %v3133
        %v3149 = vmul.f32 %v2233, %v3133
        %v3150 = vmul.f32 %v2234, %v3133
        %v3151 = vmul.f32 %v2235, %v3133
        %v3152 = vmul.f32 %v2237, %v3133
        %v3153 = vmul.f32 %v2238, %v3133
        %v3154 = vmul.f32 %v2239, %v3133
        %v3155 = vmul.f32 %v2241, %v3133
        %v3156 = vmul.f32 %v2242, %v3133
        %v3157 = vmul.f32 %v2243, %v3133
        %v3158 = vmul.f32 %v2245, %v3133
        %v3159 = vmul.f32 %v2246, %v3133
        %v3160 = vmul.f32 %v2247, %v3133
        %v3161 = vmul.f32 %v2249, %v3133
        %v3162 = vmul.f32 %v2250, %v3133
        %v3163 = vmul.f32 %v2251, %v3133
        %v3164 = vmul.f32 %v2253, %v3133
        %v3165 = vmul.f32 %v2254, %v3133
        %v3166 = vmul.f32 %v2255, %v3133
        %v3167 = vmul.f32 %v2257, %v3133
        %v3168 = vmul.f32 %v2258, %v3133
        %v3169 = vmul.f32 %v2259, %v3133
        %v3170 = vmul.f32 %v2261, %v3133
        %v3171 = vmul.f32 %v2262, %v3133
        %v3172 = vmul.f32 %v2263, %v3133
        %v3173 = vmul.f32 %v2265, %v3133
        %v3174 = vmul.f32 %v2266, %v3133
        %v3175 = vmul.f32 %v2267, %v3133
        %v3176 = vmul.f32 %v2269, %v3133
        %v3177 = vmul.f32 %v2270, %v3133
        %v3178 = vmul.f32 %v2271, %v3133
        %v3179 = vmul.f32 %v2273, %v3133
        %v3180 = vmul.f32 %v2274, %v3133
        %v3181 = vmul.f32 %v2275, %v3133
        %v3230 = vrot.slane %v3134, 4
        %v3231 = vrot.slane %v3135, 4
        %v3232 = vsel %vm1484, %v3230, %v3231
        %v3233 = vrot.slane %v3136, 4
        %v3234 = vsel %vm1484, %v3231, %v3233
        %v3235 = vrot.slane %v3137, 4
        %v3236 = vrot.slane %v3138, 4
        %v3237 = vsel %vm1484, %v3235, %v3236
        %v3238 = vrot.slane %v3139, 4
        %v3239 = vsel %vm1484, %v3236, %v3238
        %v3240 = vrot.slane %v3140, 4
        %v3241 = vrot.slane %v3141, 4
        %v3242 = vsel %vm1484, %v3240, %v3241
        %v3243 = vrot.slane %v3142, 4
        %v3244 = vsel %vm1484, %v3241, %v3243
        %v3245 = vrot.slane %v3143, 4
        %v3246 = vrot.slane %v3144, 4
        %v3247 = vsel %vm1484, %v3245, %v3246
        %v3248 = vrot.slane %v3145, 4
        %v3249 = vsel %vm1484, %v3246, %v3248
        %v3250 = vrot.slane %v3146, 4
        %v3251 = vrot.slane %v3147, 4
        %v3252 = vsel %vm1484, %v3250, %v3251
        %v3253 = vrot.slane %v3148, 4
        %v3254 = vsel %vm1484, %v3251, %v3253
        %v3255 = vrot.slane %v3149, 4
        %v3256 = vrot.slane %v3150, 4
        %v3257 = vsel %vm1484, %v3255, %v3256
        %v3258 = vrot.slane %v3151, 4
        %v3259 = vsel %vm1484, %v3256, %v3258
        %v3260 = vrot.slane %v3152, 4
        %v3261 = vrot.slane %v3153, 4
        %v3262 = vsel %vm1484, %v3260, %v3261
        %v3263 = vrot.slane %v3154, 4
        %v3264 = vsel %vm1484, %v3261, %v3263
        %v3265 = vrot.slane %v3155, 4
        %v3266 = vrot.slane %v3156, 4
        %v3267 = vsel %vm1484, %v3265, %v3266
        %v3268 = vrot.slane %v3157, 4
        %v3269 = vsel %vm1484, %v3266, %v3268
        %v3270 = vrot.slane %v3158, 4
        %v3271 = vrot.slane %v3159, 4
        %v3272 = vsel %vm1484, %v3270, %v3271
        %v3273 = vrot.slane %v3160, 4
        %v3274 = vsel %vm1484, %v3271, %v3273
        %v3275 = vrot.slane %v3161, 4
        %v3276 = vrot.slane %v3162, 4
        %v3277 = vsel %vm1484, %v3275, %v3276
        %v3278 = vrot.slane %v3163, 4
        %v3279 = vsel %vm1484, %v3276, %v3278
        %v3280 = vrot.slane %v3164, 4
        %v3281 = vrot.slane %v3165, 4
        %v3282 = vsel %vm1484, %v3280, %v3281
        %v3283 = vrot.slane %v3166, 4
        %v3284 = vsel %vm1484, %v3281, %v3283
        %v3285 = vrot.slane %v3167, 4
        %v3286 = vrot.slane %v3168, 4
        %v3287 = vsel %vm1484, %v3285, %v3286
        %v3288 = vrot.slane %v3169, 4
        %v3289 = vsel %vm1484, %v3286, %v3288
        %v3290 = vrot.slane %v3170, 4
        %v3291 = vrot.slane %v3171, 4
        %v3292 = vsel %vm1484, %v3290, %v3291
        %v3293 = vrot.slane %v3172, 4
        %v3294 = vsel %vm1484, %v3291, %v3293
        %v3295 = vrot.slane %v3173, 4
        %v3296 = vrot.slane %v3174, 4
        %v3297 = vsel %vm1484, %v3295, %v3296
        %v3298 = vrot.slane %v3175, 4
        %v3299 = vsel %vm1484, %v3296, %v3298
        %v3300 = vrot.slane %v3176, 4
        %v3301 = vrot.slane %v3177, 4
        %v3302 = vsel %vm1484, %v3300, %v3301
        %v3303 = vrot.slane %v3178, 4
        %v3304 = vsel %vm1484, %v3301, %v3303
        %v3305 = vrot.slane %v3179, 4
        %v3306 = vrot.slane %v3180, 4
        %v3307 = vsel %vm1484, %v3305, %v3306
        %v3308 = vrot.slane %v3181, 4
        %v3309 = vsel %vm1484, %v3306, %v3308
        %v3358 = vadd.f32 %v3084, %v3230
        %v3359 = vadd.f32 %v3085, %v3232
        %v3360 = vadd.f32 %v3086, %v3234
        %v3361 = vadd.f32 %v3087, %v3235
        %v3362 = vadd.f32 %v3088, %v3237
        %v3363 = vadd.f32 %v3089, %v3239
        %v3364 = vadd.f32 %v3090, %v3240
        %v3365 = vadd.f32 %v3091, %v3242
        %v3366 = vadd.f32 %v3092, %v3244
        %v3367 = vadd.f32 %v3093, %v3245
        %v3368 = vadd.f32 %v3094, %v3247
        %v3369 = vadd.f32 %v3095, %v3249
        %v3370 = vadd.f32 %v3096, %v3250
        %v3371 = vadd.f32 %v3097, %v3252
        %v3372 = vadd.f32 %v3098, %v3254
        %v3373 = vadd.f32 %v3099, %v3255
        %v3374 = vadd.f32 %v3100, %v3257
        %v3375 = vadd.f32 %v3101, %v3259
        %v3376 = vadd.f32 %v3102, %v3260
        %v3377 = vadd.f32 %v3103, %v3262
        %v3378 = vadd.f32 %v3104, %v3264
        %v3379 = vadd.f32 %v3105, %v3265
        %v3380 = vadd.f32 %v3106, %v3267
        %v3381 = vadd.f32 %v3107, %v3269
        %v3382 = vadd.f32 %v3108, %v3270
        %v3383 = vadd.f32 %v3109, %v3272
        %v3384 = vadd.f32 %v3110, %v3274
        %v3385 = vadd.f32 %v3111, %v3275
        %v3386 = vadd.f32 %v3112, %v3277
        %v3387 = vadd.f32 %v3113, %v3279
        %v3388 = vadd.f32 %v3114, %v3280
        %v3389 = vadd.f32 %v3115, %v3282
        %v3390 = vadd.f32 %v3116, %v3284
        %v3391 = vadd.f32 %v3117, %v3285
        %v3392 = vadd.f32 %v3118, %v3287
        %v3393 = vadd.f32 %v3119, %v3289
        %v3394 = vadd.f32 %v3120, %v3290
        %v3395 = vadd.f32 %v3121, %v3292
        %v3396 = vadd.f32 %v3122, %v3294
        %v3397 = vadd.f32 %v3123, %v3295
        %v3398 = vadd.f32 %v3124, %v3297
        %v3399 = vadd.f32 %v3125, %v3299
        %v3400 = vadd.f32 %v3126, %v3300
        %v3401 = vadd.f32 %v3127, %v3302
        %v3402 = vadd.f32 %v3128, %v3304
        %v3403 = vadd.f32 %v3129, %v3305
        %v3404 = vadd.f32 %v3130, %v3307
        %v3405 = vadd.f32 %v3131, %v3309
        %v3406 = vld [vmem:[%s1 + $0xc] sm:$0x1]
        %v3407 = vperm.slane %v3406, 0
        %v3408 = vmul.f32 %v2213, %v3407
        %v3409 = vmul.f32 %v2214, %v3407
        %v3410 = vmul.f32 %v2215, %v3407
        %v3411 = vmul.f32 %v2217, %v3407
        %v3412 = vmul.f32 %v2218, %v3407
        %v3413 = vmul.f32 %v2219, %v3407
        %v3414 = vmul.f32 %v2221, %v3407
        %v3415 = vmul.f32 %v2222, %v3407
        %v3416 = vmul.f32 %v2223, %v3407
        %v3417 = vmul.f32 %v2225, %v3407
        %v3418 = vmul.f32 %v2226, %v3407
        %v3419 = vmul.f32 %v2227, %v3407
        %v3420 = vmul.f32 %v2229, %v3407
        %v3421 = vmul.f32 %v2230, %v3407
        %v3422 = vmul.f32 %v2231, %v3407
        %v3423 = vmul.f32 %v2233, %v3407
        %v3424 = vmul.f32 %v2234, %v3407
        %v3425 = vmul.f32 %v2235, %v3407
        %v3426 = vmul.f32 %v2237, %v3407
        %v3427 = vmul.f32 %v2238, %v3407
        %v3428 = vmul.f32 %v2239, %v3407
        %v3429 = vmul.f32 %v2241, %v3407
        %v3430 = vmul.f32 %v2242, %v3407
        %v3431 = vmul.f32 %v2243, %v3407
        %v3432 = vmul.f32 %v2245, %v3407
        %v3433 = vmul.f32 %v2246, %v3407
        %v3434 = vmul.f32 %v2247, %v3407
        %v3435 = vmul.f32 %v2249, %v3407
        %v3436 = vmul.f32 %v2250, %v3407
        %v3437 = vmul.f32 %v2251, %v3407
        %v3438 = vmul.f32 %v2253, %v3407
        %v3439 = vmul.f32 %v2254, %v3407
        %v3440 = vmul.f32 %v2255, %v3407
        %v3441 = vmul.f32 %v2257, %v3407
        %v3442 = vmul.f32 %v2258, %v3407
        %v3443 = vmul.f32 %v2259, %v3407
        %v3444 = vmul.f32 %v2261, %v3407
        %v3445 = vmul.f32 %v2262, %v3407
        %v3446 = vmul.f32 %v2263, %v3407
        %v3447 = vmul.f32 %v2265, %v3407
        %v3448 = vmul.f32 %v2266, %v3407
        %v3449 = vmul.f32 %v2267, %v3407
        %v3450 = vmul.f32 %v2269, %v3407
        %v3451 = vmul.f32 %v2270, %v3407
        %v3452 = vmul.f32 %v2271, %v3407
        %v3453 = vmul.f32 %v2273, %v3407
        %v3454 = vmul.f32 %v2274, %v3407
        %v3455 = vmul.f32 %v2275, %v3407
        %v3504 = vrot.slane %v3408, 5
        %v3505 = vrot.slane %v3409, 5
        %v3506 = vsel %vm1759, %v3504, %v3505
        %v3507 = vrot.slane %v3410, 5
        %v3508 = vsel %vm1759, %v3505, %v3507
        %v3509 = vrot.slane %v3411, 5
        %v3510 = vrot.slane %v3412, 5
        %v3511 = vsel %vm1759, %v3509, %v3510
        %v3512 = vrot.slane %v3413, 5
        %v3513 = vsel %vm1759, %v3510, %v3512
        %v3514 = vrot.slane %v3414, 5
        %v3515 = vrot.slane %v3415, 5
        %v3516 = vsel %vm1759, %v3514, %v3515
        %v3517 = vrot.slane %v3416, 5
        %v3518 = vsel %vm1759, %v3515, %v3517
        %v3519 = vrot.slane %v3417, 5
        %v3520 = vrot.slane %v3418, 5
        %v3521 = vsel %vm1759, %v3519, %v3520
        %v3522 = vrot.slane %v3419, 5
        %v3523 = vsel %vm1759, %v3520, %v3522
        %v3524 = vrot.slane %v3420, 5
        %v3525 = vrot.slane %v3421, 5
        %v3526 = vsel %vm1759, %v3524, %v3525
        %v3527 = vrot.slane %v3422, 5
        %v3528 = vsel %vm1759, %v3525, %v3527
        %v3529 = vrot.slane %v3423, 5
        %v3530 = vrot.slane %v3424, 5
        %v3531 = vsel %vm1759, %v3529, %v3530
        %v3532 = vrot.slane %v3425, 5
        %v3533 = vsel %vm1759, %v3530, %v3532
        %v3534 = vrot.slane %v3426, 5
        %v3535 = vrot.slane %v3427, 5
        %v3536 = vsel %vm1759, %v3534, %v3535
        %v3537 = vrot.slane %v3428, 5
        %v3538 = vsel %vm1759, %v3535, %v3537
        %v3539 = vrot.slane %v3429, 5
        %v3540 = vrot.slane %v3430, 5
        %v3541 = vsel %vm1759, %v3539, %v3540
        %v3542 = vrot.slane %v3431, 5
        %v3543 = vsel %vm1759, %v3540, %v3542
        %v3544 = vrot.slane %v3432, 5
        %v3545 = vrot.slane %v3433, 5
        %v3546 = vsel %vm1759, %v3544, %v3545
        %v3547 = vrot.slane %v3434, 5
        %v3548 = vsel %vm1759, %v3545, %v3547
        %v3549 = vrot.slane %v3435, 5
        %v3550 = vrot.slane %v3436, 5
        %v3551 = vsel %vm1759, %v3549, %v3550
        %v3552 = vrot.slane %v3437, 5
        %v3553 = vsel %vm1759, %v3550, %v3552
        %v3554 = vrot.slane %v3438, 5
        %v3555 = vrot.slane %v3439, 5
        %v3556 = vsel %vm1759, %v3554, %v3555
        %v3557 = vrot.slane %v3440, 5
        %v3558 = vsel %vm1759, %v3555, %v3557
        %v3559 = vrot.slane %v3441, 5
        %v3560 = vrot.slane %v3442, 5
        %v3561 = vsel %vm1759, %v3559, %v3560
        %v3562 = vrot.slane %v3443, 5
        %v3563 = vsel %vm1759, %v3560, %v3562
        %v3564 = vrot.slane %v3444, 5
        %v3565 = vrot.slane %v3445, 5
        %v3566 = vsel %vm1759, %v3564, %v3565
        %v3567 = vrot.slane %v3446, 5
        %v3568 = vsel %vm1759, %v3565, %v3567
        %v3569 = vrot.slane %v3447, 5
        %v3570 = vrot.slane %v3448, 5
        %v3571 = vsel %vm1759, %v3569, %v3570
        %v3572 = vrot.slane %v3449, 5
        %v3573 = vsel %vm1759, %v3570, %v3572
        %v3574 = vrot.slane %v3450, 5
        %v3575 = vrot.slane %v3451, 5
        %v3576 = vsel %vm1759, %v3574, %v3575
        %v3577 = vrot.slane %v3452, 5
        %v3578 = vsel %vm1759, %v3575, %v3577
        %v3579 = vrot.slane %v3453, 5
        %v3580 = vrot.slane %v3454, 5
        %v3581 = vsel %vm1759, %v3579, %v3580
        %v3582 = vrot.slane %v3455, 5
        %v3583 = vsel %vm1759, %v3580, %v3582
        %v3632 = vadd.f32 %v3358, %v3504
        %v3633 = vadd.f32 %v3359, %v3506
        %v3634 = vadd.f32 %v3360, %v3508
        %v3635 = vadd.f32 %v3361, %v3509
        %v3636 = vadd.f32 %v3362, %v3511
        %v3637 = vadd.f32 %v3363, %v3513
        %v3638 = vadd.f32 %v3364, %v3514
        %v3639 = vadd.f32 %v3365, %v3516
        %v3640 = vadd.f32 %v3366, %v3518
        %v3641 = vadd.f32 %v3367, %v3519
        %v3642 = vadd.f32 %v3368, %v3521
        %v3643 = vadd.f32 %v3369, %v3523
        %v3644 = vadd.f32 %v3370, %v3524
        %v3645 = vadd.f32 %v3371, %v3526
        %v3646 = vadd.f32 %v3372, %v3528
        %v3647 = vadd.f32 %v3373, %v3529
        %v3648 = vadd.f32 %v3374, %v3531
        %v3649 = vadd.f32 %v3375, %v3533
        %v3650 = vadd.f32 %v3376, %v3534
        %v3651 = vadd.f32 %v3377, %v3536
        %v3652 = vadd.f32 %v3378, %v3538
        %v3653 = vadd.f32 %v3379, %v3539
        %v3654 = vadd.f32 %v3380, %v3541
        %v3655 = vadd.f32 %v3381, %v3543
        %v3656 = vadd.f32 %v3382, %v3544
        %v3657 = vadd.f32 %v3383, %v3546
        %v3658 = vadd.f32 %v3384, %v3548
        %v3659 = vadd.f32 %v3385, %v3549
        %v3660 = vadd.f32 %v3386, %v3551
        %v3661 = vadd.f32 %v3387, %v3553
        %v3662 = vadd.f32 %v3388, %v3554
        %v3663 = vadd.f32 %v3389, %v3556
        %v3664 = vadd.f32 %v3390, %v3558
        %v3665 = vadd.f32 %v3391, %v3559
        %v3666 = vadd.f32 %v3392, %v3561
        %v3667 = vadd.f32 %v3393, %v3563
        %v3668 = vadd.f32 %v3394, %v3564
        %v3669 = vadd.f32 %v3395, %v3566
        %v3670 = vadd.f32 %v3396, %v3568
        %v3671 = vadd.f32 %v3397, %v3569
        %v3672 = vadd.f32 %v3398, %v3571
        %v3673 = vadd.f32 %v3399, %v3573
        %v3674 = vadd.f32 %v3400, %v3574
        %v3675 = vadd.f32 %v3401, %v3576
        %v3676 = vadd.f32 %v3402, %v3578
        %v3677 = vadd.f32 %v3403, %v3579
        %v3678 = vadd.f32 %v3404, %v3581
        %v3679 = vadd.f32 %v3405, %v3583
        %v3680 = vld [vmem:[%s1 + $0xd] sm:$0x1]
        %v3681 = vperm.slane %v3680, 0
        %v3682 = vmul.f32 %v2213, %v3681
        %v3683 = vmul.f32 %v2214, %v3681
        %v3684 = vmul.f32 %v2215, %v3681
        %v3685 = vmul.f32 %v2217, %v3681
        %v3686 = vmul.f32 %v2218, %v3681
        %v3687 = vmul.f32 %v2219, %v3681
        %v3688 = vmul.f32 %v2221, %v3681
        %v3689 = vmul.f32 %v2222, %v3681
        %v3690 = vmul.f32 %v2223, %v3681
        %v3691 = vmul.f32 %v2225, %v3681
        %v3692 = vmul.f32 %v2226, %v3681
        %v3693 = vmul.f32 %v2227, %v3681
        %v3694 = vmul.f32 %v2229, %v3681
        %v3695 = vmul.f32 %v2230, %v3681
        %v3696 = vmul.f32 %v2231, %v3681
        %v3697 = vmul.f32 %v2233, %v3681
        %v3698 = vmul.f32 %v2234, %v3681
        %v3699 = vmul.f32 %v2235, %v3681
        %v3700 = vmul.f32 %v2237, %v3681
        %v3701 = vmul.f32 %v2238, %v3681
        %v3702 = vmul.f32 %v2239, %v3681
        %v3703 = vmul.f32 %v2241, %v3681
        %v3704 = vmul.f32 %v2242, %v3681
        %v3705 = vmul.f32 %v2243, %v3681
        %v3706 = vmul.f32 %v2245, %v3681
        %v3707 = vmul.f32 %v2246, %v3681
        %v3708 = vmul.f32 %v2247, %v3681
        %v3709 = vmul.f32 %v2249, %v3681
        %v3710 = vmul.f32 %v2250, %v3681
        %v3711 = vmul.f32 %v2251, %v3681
        %v3712 = vmul.f32 %v2253, %v3681
        %v3713 = vmul.f32 %v2254, %v3681
        %v3714 = vmul.f32 %v2255, %v3681
        %v3715 = vmul.f32 %v2257, %v3681
        %v3716 = vmul.f32 %v2258, %v3681
        %v3717 = vmul.f32 %v2259, %v3681
        %v3718 = vmul.f32 %v2261, %v3681
        %v3719 = vmul.f32 %v2262, %v3681
        %v3720 = vmul.f32 %v2263, %v3681
        %v3721 = vmul.f32 %v2265, %v3681
        %v3722 = vmul.f32 %v2266, %v3681
        %v3723 = vmul.f32 %v2267, %v3681
        %v3724 = vmul.f32 %v2269, %v3681
        %v3725 = vmul.f32 %v2270, %v3681
        %v3726 = vmul.f32 %v2271, %v3681
        %v3727 = vmul.f32 %v2273, %v3681
        %v3728 = vmul.f32 %v2274, %v3681
        %v3729 = vmul.f32 %v2275, %v3681
        %v3778 = vrot.slane %v3682, 6
        %v3779 = vrot.slane %v3683, 6
        %v3780 = vsel %vm2034, %v3778, %v3779
        %v3781 = vrot.slane %v3684, 6
        %v3782 = vsel %vm2034, %v3779, %v3781
        %v3783 = vrot.slane %v3685, 6
        %v3784 = vrot.slane %v3686, 6
        %v3785 = vsel %vm2034, %v3783, %v3784
        %v3786 = vrot.slane %v3687, 6
        %v3787 = vsel %vm2034, %v3784, %v3786
        %v3788 = vrot.slane %v3688, 6
        %v3789 = vrot.slane %v3689, 6
        %v3790 = vsel %vm2034, %v3788, %v3789
        %v3791 = vrot.slane %v3690, 6
        %v3792 = vsel %vm2034, %v3789, %v3791
        %v3793 = vrot.slane %v3691, 6
        %v3794 = vrot.slane %v3692, 6
        %v3795 = vsel %vm2034, %v3793, %v3794
        %v3796 = vrot.slane %v3693, 6
        %v3797 = vsel %vm2034, %v3794, %v3796
        %v3798 = vrot.slane %v3694, 6
        %v3799 = vrot.slane %v3695, 6
        %v3800 = vsel %vm2034, %v3798, %v3799
        %v3801 = vrot.slane %v3696, 6
        %v3802 = vsel %vm2034, %v3799, %v3801
        %v3803 = vrot.slane %v3697, 6
        %v3804 = vrot.slane %v3698, 6
        %v3805 = vsel %vm2034, %v3803, %v3804
        %v3806 = vrot.slane %v3699, 6
        %v3807 = vsel %vm2034, %v3804, %v3806
        %v3808 = vrot.slane %v3700, 6
        %v3809 = vrot.slane %v3701, 6
        %v3810 = vsel %vm2034, %v3808, %v3809
        %v3811 = vrot.slane %v3702, 6
        %v3812 = vsel %vm2034, %v3809, %v3811
        %v3813 = vrot.slane %v3703, 6
        %v3814 = vrot.slane %v3704, 6
        %v3815 = vsel %vm2034, %v3813, %v3814
        %v3816 = vrot.slane %v3705, 6
        %v3817 = vsel %vm2034, %v3814, %v3816
        %v3818 = vrot.slane %v3706, 6
        %v3819 = vrot.slane %v3707, 6
        %v3820 = vsel %vm2034, %v3818, %v3819
        %v3821 = vrot.slane %v3708, 6
        %v3822 = vsel %vm2034, %v3819, %v3821
        %v3823 = vrot.slane %v3709, 6
        %v3824 = vrot.slane %v3710, 6
        %v3825 = vsel %vm2034, %v3823, %v3824
        %v3826 = vrot.slane %v3711, 6
        %v3827 = vsel %vm2034, %v3824, %v3826
        %v3828 = vrot.slane %v3712, 6
        %v3829 = vrot.slane %v3713, 6
        %v3830 = vsel %vm2034, %v3828, %v3829
        %v3831 = vrot.slane %v3714, 6
        %v3832 = vsel %vm2034, %v3829, %v3831
        %v3833 = vrot.slane %v3715, 6
        %v3834 = vrot.slane %v3716, 6
        %v3835 = vsel %vm2034, %v3833, %v3834
        %v3836 = vrot.slane %v3717, 6
        %v3837 = vsel %vm2034, %v3834, %v3836
        %v3838 = vrot.slane %v3718, 6
        %v3839 = vrot.slane %v3719, 6
        %v3840 = vsel %vm2034, %v3838, %v3839
        %v3841 = vrot.slane %v3720, 6
        %v3842 = vsel %vm2034, %v3839, %v3841
        %v3843 = vrot.slane %v3721, 6
        %v3844 = vrot.slane %v3722, 6
        %v3845 = vsel %vm2034, %v3843, %v3844
        %v3846 = vrot.slane %v3723, 6
        %v3847 = vsel %vm2034, %v3844, %v3846
        %v3848 = vrot.slane %v3724, 6
        %v3849 = vrot.slane %v3725, 6
        %v3850 = vsel %vm2034, %v3848, %v3849
        %v3851 = vrot.slane %v3726, 6
        %v3852 = vsel %vm2034, %v3849, %v3851
        %v3853 = vrot.slane %v3727, 6
        %v3854 = vrot.slane %v3728, 6
        %v3855 = vsel %vm2034, %v3853, %v3854
        %v3856 = vrot.slane %v3729, 6
        %v3857 = vsel %vm2034, %v3854, %v3856
        %v3906 = vadd.f32 %v3632, %v3778
        %v3907 = vadd.f32 %v3633, %v3780
        %v3908 = vadd.f32 %v3634, %v3782
        %v3909 = vadd.f32 %v3635, %v3783
        %v3910 = vadd.f32 %v3636, %v3785
        %v3911 = vadd.f32 %v3637, %v3787
        %v3912 = vadd.f32 %v3638, %v3788
        %v3913 = vadd.f32 %v3639, %v3790
        %v3914 = vadd.f32 %v3640, %v3792
        %v3915 = vadd.f32 %v3641, %v3793
        %v3916 = vadd.f32 %v3642, %v3795
        %v3917 = vadd.f32 %v3643, %v3797
        %v3918 = vadd.f32 %v3644, %v3798
        %v3919 = vadd.f32 %v3645, %v3800
        %v3920 = vadd.f32 %v3646, %v3802
        %v3921 = vadd.f32 %v3647, %v3803
        %v3922 = vadd.f32 %v3648, %v3805
        %v3923 = vadd.f32 %v3649, %v3807
        %v3924 = vadd.f32 %v3650, %v3808
        %v3925 = vadd.f32 %v3651, %v3810
        %v3926 = vadd.f32 %v3652, %v3812
        %v3927 = vadd.f32 %v3653, %v3813
        %v3928 = vadd.f32 %v3654, %v3815
        %v3929 = vadd.f32 %v3655, %v3817
        %v3930 = vadd.f32 %v3656, %v3818
        %v3931 = vadd.f32 %v3657, %v3820
        %v3932 = vadd.f32 %v3658, %v3822
        %v3933 = vadd.f32 %v3659, %v3823
        %v3934 = vadd.f32 %v3660, %v3825
        %v3935 = vadd.f32 %v3661, %v3827
        %v3936 = vadd.f32 %v3662, %v3828
        %v3937 = vadd.f32 %v3663, %v3830
        %v3938 = vadd.f32 %v3664, %v3832
        %v3939 = vadd.f32 %v3665, %v3833
        %v3940 = vadd.f32 %v3666, %v3835
        %v3941 = vadd.f32 %v3667, %v3837
        %v3942 = vadd.f32 %v3668, %v3838
        %v3943 = vadd.f32 %v3669, %v3840
        %v3944 = vadd.f32 %v3670, %v3842
        %v3945 = vadd.f32 %v3671, %v3843
        %v3946 = vadd.f32 %v3672, %v3845
        %v3947 = vadd.f32 %v3673, %v3847
        %v3948 = vadd.f32 %v3674, %v3848
        %v3949 = vadd.f32 %v3675, %v3850
        %v3950 = vadd.f32 %v3676, %v3852
        %v3951 = vadd.f32 %v3677, %v3853
        %v3952 = vadd.f32 %v3678, %v3855
        %v3953 = vadd.f32 %v3679, %v3857
        %s3954 = scalar_lea.vmem [#allocation2], 64
        %v3955 = vld [vmem:[%s3954] sm:$0xff]
        %v3956 = vld [vmem:[%s3954 + $0x8] sm:$0xff]
        %v3957 = vld [vmem:[%s3954 + $0x10] sm:$0xff]
        %v3958 = vld [vmem:[%s3954 + $0x18] sm:$0x7]
        %v3959 = vld [vmem:[%s3954 + $0x20] sm:$0xff]
        %v3960 = vld [vmem:[%s3954 + $0x28] sm:$0xff]
        %v3961 = vld [vmem:[%s3954 + $0x30] sm:$0xff]
        %v3962 = vld [vmem:[%s3954 + $0x38] sm:$0x7]
        %v3963 = vld [vmem:[%s3954 + $0x40] sm:$0xff]
        %v3964 = vld [vmem:[%s3954 + $0x48] sm:$0xff]
        %v3965 = vld [vmem:[%s3954 + $0x50] sm:$0xff]
        %v3966 = vld [vmem:[%s3954 + $0x58] sm:$0x7]
        %v3967 = vld [vmem:[%s3954 + $0x60] sm:$0xff]
        %v3968 = vld [vmem:[%s3954 + $0x68] sm:$0xff]
        %v3969 = vld [vmem:[%s3954 + $0x70] sm:$0xff]
        %v3970 = vld [vmem:[%s3954 + $0x78] sm:$0x7]
        %v3971 = vld [vmem:[%s3954 + $0x80] sm:$0xff]
        %v3972 = vld [vmem:[%s3954 + $0x88] sm:$0xff]
        %v3973 = vld [vmem:[%s3954 + $0x90] sm:$0xff]
        %v3974 = vld [vmem:[%s3954 + $0x98] sm:$0x7]
        %v3975 = vld [vmem:[%s3954 + $0xa0] sm:$0xff]
        %v3976 = vld [vmem:[%s3954 + $0xa8] sm:$0xff]
        %v3977 = vld [vmem:[%s3954 + $0xb0] sm:$0xff]
        %v3978 = vld [vmem:[%s3954 + $0xb8] sm:$0x7]
        %v3979 = vld [vmem:[%s3954 + $0xc0] sm:$0xff]
        %v3980 = vld [vmem:[%s3954 + $0xc8] sm:$0xff]
        %v3981 = vld [vmem:[%s3954 + $0xd0] sm:$0xff]
        %v3982 = vld [vmem:[%s3954 + $0xd8] sm:$0x7]
        %v3983 = vld [vmem:[%s3954 + $0xe0] sm:$0xff]
        %v3984 = vld [vmem:[%s3954 + $0xe8] sm:$0xff]
        %v3985 = vld [vmem:[%s3954 + $0xf0] sm:$0xff]
        %v3986 = vld [vmem:[%s3954 + $0xf8] sm:$0x7]
        %v3987 = vld [vmem:[%s3954 + $0x100] sm:$0xff]
        %v3988 = vld [vmem:[%s3954 + $0x108] sm:$0xff]
        %v3989 = vld [vmem:[%s3954 + $0x110] sm:$0xff]
        %v3990 = vld [vmem:[%s3954 + $0x118] sm:$0x7]
        %v3991 = vld [vmem:[%s3954 + $0x120] sm:$0xff]
        %v3992 = vld [vmem:[%s3954 + $0x128] sm:$0xff]
        %v3993 = vld [vmem:[%s3954 + $0x130] sm:$0xff]
        %v3994 = vld [vmem:[%s3954 + $0x138] sm:$0x7]
        %v3995 = vld [vmem:[%s3954 + $0x140] sm:$0xff]
        %v3996 = vld [vmem:[%s3954 + $0x148] sm:$0xff]
        %v3997 = vld [vmem:[%s3954 + $0x150] sm:$0xff]
        %v3998 = vld [vmem:[%s3954 + $0x158] sm:$0x7]
        %v3999 = vld [vmem:[%s3954 + $0x160] sm:$0xff]
        %v4000 = vld [vmem:[%s3954 + $0x168] sm:$0xff]
        %v4001 = vld [vmem:[%s3954 + $0x170] sm:$0xff]
        %v4002 = vld [vmem:[%s3954 + $0x178] sm:$0x7]
        %v4003 = vld [vmem:[%s3954 + $0x180] sm:$0xff]
        %v4004 = vld [vmem:[%s3954 + $0x188] sm:$0xff]
        %v4005 = vld [vmem:[%s3954 + $0x190] sm:$0xff]
        %v4006 = vld [vmem:[%s3954 + $0x198] sm:$0x7]
        %v4007 = vld [vmem:[%s3954 + $0x1a0] sm:$0xff]
        %v4008 = vld [vmem:[%s3954 + $0x1a8] sm:$0xff]
        %v4009 = vld [vmem:[%s3954 + $0x1b0] sm:$0xff]
        %v4010 = vld [vmem:[%s3954 + $0x1b8] sm:$0x7]
        %v4011 = vld [vmem:[%s3954 + $0x1c0] sm:$0xff]
        %v4012 = vld [vmem:[%s3954 + $0x1c8] sm:$0xff]
        %v4013 = vld [vmem:[%s3954 + $0x1d0] sm:$0xff]
        %v4014 = vld [vmem:[%s3954 + $0x1d8] sm:$0x7]
        %v4015 = vld [vmem:[%s3954 + $0x1e0] sm:$0xff]
        %v4016 = vld [vmem:[%s3954 + $0x1e8] sm:$0xff]
        %v4017 = vld [vmem:[%s3954 + $0x1f0] sm:$0xff]
        %v4018 = vld [vmem:[%s3954 + $0x1f8] sm:$0x7]
        %v4019 = vld [vmem:[%s1 + $0xe] sm:$0x1]
        %v4020 = vperm.slane %v4019, 0
        %v4021 = vmul.f32 %v3955, %v4020
        %v4022 = vmul.f32 %v3956, %v4020
        %v4023 = vmul.f32 %v3957, %v4020
        %v4024 = vmul.f32 %v3959, %v4020
        %v4025 = vmul.f32 %v3960, %v4020
        %v4026 = vmul.f32 %v3961, %v4020
        %v4027 = vmul.f32 %v3963, %v4020
        %v4028 = vmul.f32 %v3964, %v4020
        %v4029 = vmul.f32 %v3965, %v4020
        %v4030 = vmul.f32 %v3967, %v4020
        %v4031 = vmul.f32 %v3968, %v4020
        %v4032 = vmul.f32 %v3969, %v4020
        %v4033 = vmul.f32 %v3971, %v4020
        %v4034 = vmul.f32 %v3972, %v4020
        %v4035 = vmul.f32 %v3973, %v4020
        %v4036 = vmul.f32 %v3975, %v4020
        %v4037 = vmul.f32 %v3976, %v4020
        %v4038 = vmul.f32 %v3977, %v4020
        %v4039 = vmul.f32 %v3979, %v4020
        %v4040 = vmul.f32 %v3980, %v4020
        %v4041 = vmul.f32 %v3981, %v4020
        %v4042 = vmul.f32 %v3983, %v4020
        %v4043 = vmul.f32 %v3984, %v4020
        %v4044 = vmul.f32 %v3985, %v4020
        %v4045 = vmul.f32 %v3987, %v4020
        %v4046 = vmul.f32 %v3988, %v4020
        %v4047 = vmul.f32 %v3989, %v4020
        %v4048 = vmul.f32 %v3991, %v4020
        %v4049 = vmul.f32 %v3992, %v4020
        %v4050 = vmul.f32 %v3993, %v4020
        %v4051 = vmul.f32 %v3995, %v4020
        %v4052 = vmul.f32 %v3996, %v4020
        %v4053 = vmul.f32 %v3997, %v4020
        %v4054 = vmul.f32 %v3999, %v4020
        %v4055 = vmul.f32 %v4000, %v4020
        %v4056 = vmul.f32 %v4001, %v4020
        %v4057 = vmul.f32 %v4003, %v4020
        %v4058 = vmul.f32 %v4004, %v4020
        %v4059 = vmul.f32 %v4005, %v4020
        %v4060 = vmul.f32 %v4007, %v4020
        %v4061 = vmul.f32 %v4008, %v4020
        %v4062 = vmul.f32 %v4009, %v4020
        %v4063 = vmul.f32 %v4011, %v4020
        %v4064 = vmul.f32 %v4012, %v4020
        %v4065 = vmul.f32 %v4013, %v4020
        %v4066 = vmul.f32 %v4015, %v4020
        %v4067 = vmul.f32 %v4016, %v4020
        %v4068 = vmul.f32 %v4017, %v4020
        %v4069 = vadd.f32 %v3906, %v4021
        %v4070 = vadd.f32 %v3907, %v4022
        %v4071 = vadd.f32 %v3908, %v4023
        %v4072 = vadd.f32 %v3909, %v4024
        %v4073 = vadd.f32 %v3910, %v4025
        %v4074 = vadd.f32 %v3911, %v4026
        %v4075 = vadd.f32 %v3912, %v4027
        %v4076 = vadd.f32 %v3913, %v4028
        %v4077 = vadd.f32 %v3914, %v4029
        %v4078 = vadd.f32 %v3915, %v4030
        %v4079 = vadd.f32 %v3916, %v4031
        %v4080 = vadd.f32 %v3917, %v4032
        %v4081 = vadd.f32 %v3918, %v4033
        %v4082 = vadd.f32 %v3919, %v4034
        %v4083 = vadd.f32 %v3920, %v4035
        %v4084 = vadd.f32 %v3921, %v4036
        %v4085 = vadd.f32 %v3922, %v4037
        %v4086 = vadd.f32 %v3923, %v4038
        %v4087 = vadd.f32 %v3924, %v4039
        %v4088 = vadd.f32 %v3925, %v4040
        %v4089 = vadd.f32 %v3926, %v4041
        %v4090 = vadd.f32 %v3927, %v4042
        %v4091 = vadd.f32 %v3928, %v4043
        %v4092 = vadd.f32 %v3929, %v4044
        %v4093 = vadd.f32 %v3930, %v4045
        %v4094 = vadd.f32 %v3931, %v4046
        %v4095 = vadd.f32 %v3932, %v4047
        %v4096 = vadd.f32 %v3933, %v4048
        %v4097 = vadd.f32 %v3934, %v4049
        %v4098 = vadd.f32 %v3935, %v4050
        %v4099 = vadd.f32 %v3936, %v4051
        %v4100 = vadd.f32 %v3937, %v4052
        %v4101 = vadd.f32 %v3938, %v4053
        %v4102 = vadd.f32 %v3939, %v4054
        %v4103 = vadd.f32 %v3940, %v4055
        %v4104 = vadd.f32 %v3941, %v4056
        %v4105 = vadd.f32 %v3942, %v4057
        %v4106 = vadd.f32 %v3943, %v4058
        %v4107 = vadd.f32 %v3944, %v4059
        %v4108 = vadd.f32 %v3945, %v4060
        %v4109 = vadd.f32 %v3946, %v4061
        %v4110 = vadd.f32 %v3947, %v4062
        %v4111 = vadd.f32 %v3948, %v4063
        %v4112 = vadd.f32 %v3949, %v4064
        %v4113 = vadd.f32 %v3950, %v4065
        %v4114 = vadd.f32 %v3951, %v4066
        %v4115 = vadd.f32 %v3952, %v4067
        %v4116 = vadd.f32 %v3953, %v4068
        %v4117 = vld [vmem:[%s1 + $0xf] sm:$0x1]
        %v4118 = vperm.slane %v4117, 0
        %v4119 = vmul.f32 %v3955, %v4118
        %v4120 = vmul.f32 %v3956, %v4118
        %v4121 = vmul.f32 %v3957, %v4118
        %v4122 = vmul.f32 %v3959, %v4118
        %v4123 = vmul.f32 %v3960, %v4118
        %v4124 = vmul.f32 %v3961, %v4118
        %v4125 = vmul.f32 %v3963, %v4118
        %v4126 = vmul.f32 %v3964, %v4118
        %v4127 = vmul.f32 %v3965, %v4118
        %v4128 = vmul.f32 %v3967, %v4118
        %v4129 = vmul.f32 %v3968, %v4118
        %v4130 = vmul.f32 %v3969, %v4118
        %v4131 = vmul.f32 %v3971, %v4118
        %v4132 = vmul.f32 %v3972, %v4118
        %v4133 = vmul.f32 %v3973, %v4118
        %v4134 = vmul.f32 %v3975, %v4118
        %v4135 = vmul.f32 %v3976, %v4118
        %v4136 = vmul.f32 %v3977, %v4118
        %v4137 = vmul.f32 %v3979, %v4118
        %v4138 = vmul.f32 %v3980, %v4118
        %v4139 = vmul.f32 %v3981, %v4118
        %v4140 = vmul.f32 %v3983, %v4118
        %v4141 = vmul.f32 %v3984, %v4118
        %v4142 = vmul.f32 %v3985, %v4118
        %v4143 = vmul.f32 %v3987, %v4118
        %v4144 = vmul.f32 %v3988, %v4118
        %v4145 = vmul.f32 %v3989, %v4118
        %v4146 = vmul.f32 %v3991, %v4118
        %v4147 = vmul.f32 %v3992, %v4118
        %v4148 = vmul.f32 %v3993, %v4118
        %v4149 = vmul.f32 %v3995, %v4118
        %v4150 = vmul.f32 %v3996, %v4118
        %v4151 = vmul.f32 %v3997, %v4118
        %v4152 = vmul.f32 %v3999, %v4118
        %v4153 = vmul.f32 %v4000, %v4118
        %v4154 = vmul.f32 %v4001, %v4118
        %v4155 = vmul.f32 %v4003, %v4118
        %v4156 = vmul.f32 %v4004, %v4118
        %v4157 = vmul.f32 %v4005, %v4118
        %v4158 = vmul.f32 %v4007, %v4118
        %v4159 = vmul.f32 %v4008, %v4118
        %v4160 = vmul.f32 %v4009, %v4118
        %v4161 = vmul.f32 %v4011, %v4118
        %v4162 = vmul.f32 %v4012, %v4118
        %v4163 = vmul.f32 %v4013, %v4118
        %v4164 = vmul.f32 %v4015, %v4118
        %v4165 = vmul.f32 %v4016, %v4118
        %v4166 = vmul.f32 %v4017, %v4118
        %v4215 = vrot.slane %v4119, 1
        %v4216 = vrot.slane %v4120, 1
        %v4217 = vsel %vm723, %v4215, %v4216
        %v4218 = vrot.slane %v4121, 1
        %v4219 = vsel %vm723, %v4216, %v4218
        %v4220 = vrot.slane %v4122, 1
        %v4221 = vrot.slane %v4123, 1
        %v4222 = vsel %vm723, %v4220, %v4221
        %v4223 = vrot.slane %v4124, 1
        %v4224 = vsel %vm723, %v4221, %v4223
        %v4225 = vrot.slane %v4125, 1
        %v4226 = vrot.slane %v4126, 1
        %v4227 = vsel %vm723, %v4225, %v4226
        %v4228 = vrot.slane %v4127, 1
        %v4229 = vsel %vm723, %v4226, %v4228
        %v4230 = vrot.slane %v4128, 1
        %v4231 = vrot.slane %v4129, 1
        %v4232 = vsel %vm723, %v4230, %v4231
        %v4233 = vrot.slane %v4130, 1
        %v4234 = vsel %vm723, %v4231, %v4233
        %v4235 = vrot.slane %v4131, 1
        %v4236 = vrot.slane %v4132, 1
        %v4237 = vsel %vm723, %v4235, %v4236
        %v4238 = vrot.slane %v4133, 1
        %v4239 = vsel %vm723, %v4236, %v4238
        %v4240 = vrot.slane %v4134, 1
        %v4241 = vrot.slane %v4135, 1
        %v4242 = vsel %vm723, %v4240, %v4241
        %v4243 = vrot.slane %v4136, 1
        %v4244 = vsel %vm723, %v4241, %v4243
        %v4245 = vrot.slane %v4137, 1
        %v4246 = vrot.slane %v4138, 1
        %v4247 = vsel %vm723, %v4245, %v4246
        %v4248 = vrot.slane %v4139, 1
        %v4249 = vsel %vm723, %v4246, %v4248
        %v4250 = vrot.slane %v4140, 1
        %v4251 = vrot.slane %v4141, 1
        %v4252 = vsel %vm723, %v4250, %v4251
        %v4253 = vrot.slane %v4142, 1
        %v4254 = vsel %vm723, %v4251, %v4253
        %v4255 = vrot.slane %v4143, 1
        %v4256 = vrot.slane %v4144, 1
        %v4257 = vsel %vm723, %v4255, %v4256
        %v4258 = vrot.slane %v4145, 1
        %v4259 = vsel %vm723, %v4256, %v4258
        %v4260 = vrot.slane %v4146, 1
        %v4261 = vrot.slane %v4147, 1
        %v4262 = vsel %vm723, %v4260, %v4261
        %v4263 = vrot.slane %v4148, 1
        %v4264 = vsel %vm723, %v4261, %v4263
        %v4265 = vrot.slane %v4149, 1
        %v4266 = vrot.slane %v4150, 1
        %v4267 = vsel %vm723, %v4265, %v4266
        %v4268 = vrot.slane %v4151, 1
        %v4269 = vsel %vm723, %v4266, %v4268
        %v4270 = vrot.slane %v4152, 1
        %v4271 = vrot.slane %v4153, 1
        %v4272 = vsel %vm723, %v4270, %v4271
        %v4273 = vrot.slane %v4154, 1
        %v4274 = vsel %vm723, %v4271, %v4273
        %v4275 = vrot.slane %v4155, 1
        %v4276 = vrot.slane %v4156, 1
        %v4277 = vsel %vm723, %v4275, %v4276
        %v4278 = vrot.slane %v4157, 1
        %v4279 = vsel %vm723, %v4276, %v4278
        %v4280 = vrot.slane %v4158, 1
        %v4281 = vrot.slane %v4159, 1
        %v4282 = vsel %vm723, %v4280, %v4281
        %v4283 = vrot.slane %v4160, 1
        %v4284 = vsel %vm723, %v4281, %v4283
        %v4285 = vrot.slane %v4161, 1
        %v4286 = vrot.slane %v4162, 1
        %v4287 = vsel %vm723, %v4285, %v4286
        %v4288 = vrot.slane %v4163, 1
        %v4289 = vsel %vm723, %v4286, %v4288
        %v4290 = vrot.slane %v4164, 1
        %v4291 = vrot.slane %v4165, 1
        %v4292 = vsel %vm723, %v4290, %v4291
        %v4293 = vrot.slane %v4166, 1
        %v4294 = vsel %vm723, %v4291, %v4293
        %v4343 = vadd.f32 %v4069, %v4217
        %v4344 = vadd.f32 %v4070, %v4219
        %v4345 = vadd.f32 %v4071, %v4218
        %v4346 = vadd.f32 %v4072, %v4222
        %v4347 = vadd.f32 %v4073, %v4224
        %v4348 = vadd.f32 %v4074, %v4223
        %v4349 = vadd.f32 %v4075, %v4227
        %v4350 = vadd.f32 %v4076, %v4229
        %v4351 = vadd.f32 %v4077, %v4228
        %v4352 = vadd.f32 %v4078, %v4232
        %v4353 = vadd.f32 %v4079, %v4234
        %v4354 = vadd.f32 %v4080, %v4233
        %v4355 = vadd.f32 %v4081, %v4237
        %v4356 = vadd.f32 %v4082, %v4239
        %v4357 = vadd.f32 %v4083, %v4238
        %v4358 = vadd.f32 %v4084, %v4242
        %v4359 = vadd.f32 %v4085, %v4244
        %v4360 = vadd.f32 %v4086, %v4243
        %v4361 = vadd.f32 %v4087, %v4247
        %v4362 = vadd.f32 %v4088, %v4249
        %v4363 = vadd.f32 %v4089, %v4248
        %v4364 = vadd.f32 %v4090, %v4252
        %v4365 = vadd.f32 %v4091, %v4254
        %v4366 = vadd.f32 %v4092, %v4253
        %v4367 = vadd.f32 %v4093, %v4257
        %v4368 = vadd.f32 %v4094, %v4259
        %v4369 = vadd.f32 %v4095, %v4258
        %v4370 = vadd.f32 %v4096, %v4262
        %v4371 = vadd.f32 %v4097, %v4264
        %v4372 = vadd.f32 %v4098, %v4263
        %v4373 = vadd.f32 %v4099, %v4267
        %v4374 = vadd.f32 %v4100, %v4269
        %v4375 = vadd.f32 %v4101, %v4268
        %v4376 = vadd.f32 %v4102, %v4272
        %v4377 = vadd.f32 %v4103, %v4274
        %v4378 = vadd.f32 %v4104, %v4273
        %v4379 = vadd.f32 %v4105, %v4277
        %v4380 = vadd.f32 %v4106, %v4279
        %v4381 = vadd.f32 %v4107, %v4278
        %v4382 = vadd.f32 %v4108, %v4282
        %v4383 = vadd.f32 %v4109, %v4284
        %v4384 = vadd.f32 %v4110, %v4283
        %v4385 = vadd.f32 %v4111, %v4287
        %v4386 = vadd.f32 %v4112, %v4289
        %v4387 = vadd.f32 %v4113, %v4288
        %v4388 = vadd.f32 %v4114, %v4292
        %v4389 = vadd.f32 %v4115, %v4294
        %v4390 = vadd.f32 %v4116, %v4293
        %v4391 = vld [vmem:[%s1 + $0x10] sm:$0x1]
        %v4392 = vperm.slane %v4391, 0
        %v4393 = vmul.f32 %v3955, %v4392
        %v4394 = vmul.f32 %v3956, %v4392
        %v4395 = vmul.f32 %v3957, %v4392
        %v4396 = vmul.f32 %v3959, %v4392
        %v4397 = vmul.f32 %v3960, %v4392
        %v4398 = vmul.f32 %v3961, %v4392
        %v4399 = vmul.f32 %v3963, %v4392
        %v4400 = vmul.f32 %v3964, %v4392
        %v4401 = vmul.f32 %v3965, %v4392
        %v4402 = vmul.f32 %v3967, %v4392
        %v4403 = vmul.f32 %v3968, %v4392
        %v4404 = vmul.f32 %v3969, %v4392
        %v4405 = vmul.f32 %v3971, %v4392
        %v4406 = vmul.f32 %v3972, %v4392
        %v4407 = vmul.f32 %v3973, %v4392
        %v4408 = vmul.f32 %v3975, %v4392
        %v4409 = vmul.f32 %v3976, %v4392
        %v4410 = vmul.f32 %v3977, %v4392
        %v4411 = vmul.f32 %v3979, %v4392
        %v4412 = vmul.f32 %v3980, %v4392
        %v4413 = vmul.f32 %v3981, %v4392
        %v4414 = vmul.f32 %v3983, %v4392
        %v4415 = vmul.f32 %v3984, %v4392
        %v4416 = vmul.f32 %v3985, %v4392
        %v4417 = vmul.f32 %v3987, %v4392
        %v4418 = vmul.f32 %v3988, %v4392
        %v4419 = vmul.f32 %v3989, %v4392
        %v4420 = vmul.f32 %v3991, %v4392
        %v4421 = vmul.f32 %v3992, %v4392
        %v4422 = vmul.f32 %v3993, %v4392
        %v4423 = vmul.f32 %v3995, %v4392
        %v4424 = vmul.f32 %v3996, %v4392
        %v4425 = vmul.f32 %v3997, %v4392
        %v4426 = vmul.f32 %v3999, %v4392
        %v4427 = vmul.f32 %v4000, %v4392
        %v4428 = vmul.f32 %v4001, %v4392
        %v4429 = vmul.f32 %v4003, %v4392
        %v4430 = vmul.f32 %v4004, %v4392
        %v4431 = vmul.f32 %v4005, %v4392
        %v4432 = vmul.f32 %v4007, %v4392
        %v4433 = vmul.f32 %v4008, %v4392
        %v4434 = vmul.f32 %v4009, %v4392
        %v4435 = vmul.f32 %v4011, %v4392
        %v4436 = vmul.f32 %v4012, %v4392
        %v4437 = vmul.f32 %v4013, %v4392
        %v4438 = vmul.f32 %v4015, %v4392
        %v4439 = vmul.f32 %v4016, %v4392
        %v4440 = vmul.f32 %v4017, %v4392
        %v4489 = vrot.slane %v4393, 2
        %v4490 = vrot.slane %v4394, 2
        %v4491 = vsel %vm998, %v4489, %v4490
        %v4492 = vrot.slane %v4395, 2
        %v4493 = vsel %vm998, %v4490, %v4492
        %v4494 = vrot.slane %v4396, 2
        %v4495 = vrot.slane %v4397, 2
        %v4496 = vsel %vm998, %v4494, %v4495
        %v4497 = vrot.slane %v4398, 2
        %v4498 = vsel %vm998, %v4495, %v4497
        %v4499 = vrot.slane %v4399, 2
        %v4500 = vrot.slane %v4400, 2
        %v4501 = vsel %vm998, %v4499, %v4500
        %v4502 = vrot.slane %v4401, 2
        %v4503 = vsel %vm998, %v4500, %v4502
        %v4504 = vrot.slane %v4402, 2
        %v4505 = vrot.slane %v4403, 2
        %v4506 = vsel %vm998, %v4504, %v4505
        %v4507 = vrot.slane %v4404, 2
        %v4508 = vsel %vm998, %v4505, %v4507
        %v4509 = vrot.slane %v4405, 2
        %v4510 = vrot.slane %v4406, 2
        %v4511 = vsel %vm998, %v4509, %v4510
        %v4512 = vrot.slane %v4407, 2
        %v4513 = vsel %vm998, %v4510, %v4512
        %v4514 = vrot.slane %v4408, 2
        %v4515 = vrot.slane %v4409, 2
        %v4516 = vsel %vm998, %v4514, %v4515
        %v4517 = vrot.slane %v4410, 2
        %v4518 = vsel %vm998, %v4515, %v4517
        %v4519 = vrot.slane %v4411, 2
        %v4520 = vrot.slane %v4412, 2
        %v4521 = vsel %vm998, %v4519, %v4520
        %v4522 = vrot.slane %v4413, 2
        %v4523 = vsel %vm998, %v4520, %v4522
        %v4524 = vrot.slane %v4414, 2
        %v4525 = vrot.slane %v4415, 2
        %v4526 = vsel %vm998, %v4524, %v4525
        %v4527 = vrot.slane %v4416, 2
        %v4528 = vsel %vm998, %v4525, %v4527
        %v4529 = vrot.slane %v4417, 2
        %v4530 = vrot.slane %v4418, 2
        %v4531 = vsel %vm998, %v4529, %v4530
        %v4532 = vrot.slane %v4419, 2
        %v4533 = vsel %vm998, %v4530, %v4532
        %v4534 = vrot.slane %v4420, 2
        %v4535 = vrot.slane %v4421, 2
        %v4536 = vsel %vm998, %v4534, %v4535
        %v4537 = vrot.slane %v4422, 2
        %v4538 = vsel %vm998, %v4535, %v4537
        %v4539 = vrot.slane %v4423, 2
        %v4540 = vrot.slane %v4424, 2
        %v4541 = vsel %vm998, %v4539, %v4540
        %v4542 = vrot.slane %v4425, 2
        %v4543 = vsel %vm998, %v4540, %v4542
        %v4544 = vrot.slane %v4426, 2
        %v4545 = vrot.slane %v4427, 2
        %v4546 = vsel %vm998, %v4544, %v4545
        %v4547 = vrot.slane %v4428, 2
        %v4548 = vsel %vm998, %v4545, %v4547
        %v4549 = vrot.slane %v4429, 2
        %v4550 = vrot.slane %v4430, 2
        %v4551 = vsel %vm998, %v4549, %v4550
        %v4552 = vrot.slane %v4431, 2
        %v4553 = vsel %vm998, %v4550, %v4552
        %v4554 = vrot.slane %v4432, 2
        %v4555 = vrot.slane %v4433, 2
        %v4556 = vsel %vm998, %v4554, %v4555
        %v4557 = vrot.slane %v4434, 2
        %v4558 = vsel %vm998, %v4555, %v4557
        %v4559 = vrot.slane %v4435, 2
        %v4560 = vrot.slane %v4436, 2
        %v4561 = vsel %vm998, %v4559, %v4560
        %v4562 = vrot.slane %v4437, 2
        %v4563 = vsel %vm998, %v4560, %v4562
        %v4564 = vrot.slane %v4438, 2
        %v4565 = vrot.slane %v4439, 2
        %v4566 = vsel %vm998, %v4564, %v4565
        %v4567 = vrot.slane %v4440, 2
        %v4568 = vsel %vm998, %v4565, %v4567
        %v4617 = vadd.f32 %v4343, %v4491
        %v4618 = vadd.f32 %v4344, %v4493
        %v4619 = vadd.f32 %v4345, %v4492
        %v4620 = vadd.f32 %v4346, %v4496
        %v4621 = vadd.f32 %v4347, %v4498
        %v4622 = vadd.f32 %v4348, %v4497
        %v4623 = vadd.f32 %v4349, %v4501
        %v4624 = vadd.f32 %v4350, %v4503
        %v4625 = vadd.f32 %v4351, %v4502
        %v4626 = vadd.f32 %v4352, %v4506
        %v4627 = vadd.f32 %v4353, %v4508
        %v4628 = vadd.f32 %v4354, %v4507
        %v4629 = vadd.f32 %v4355, %v4511
        %v4630 = vadd.f32 %v4356, %v4513
        %v4631 = vadd.f32 %v4357, %v4512
        %v4632 = vadd.f32 %v4358, %v4516
        %v4633 = vadd.f32 %v4359, %v4518
        %v4634 = vadd.f32 %v4360, %v4517
        %v4635 = vadd.f32 %v4361, %v4521
        %v4636 = vadd.f32 %v4362, %v4523
        %v4637 = vadd.f32 %v4363, %v4522
        %v4638 = vadd.f32 %v4364, %v4526
        %v4639 = vadd.f32 %v4365, %v4528
        %v4640 = vadd.f32 %v4366, %v4527
        %v4641 = vadd.f32 %v4367, %v4531
        %v4642 = vadd.f32 %v4368, %v4533
        %v4643 = vadd.f32 %v4369, %v4532
        %v4644 = vadd.f32 %v4370, %v4536
        %v4645 = vadd.f32 %v4371, %v4538
        %v4646 = vadd.f32 %v4372, %v4537
        %v4647 = vadd.f32 %v4373, %v4541
        %v4648 = vadd.f32 %v4374, %v4543
        %v4649 = vadd.f32 %v4375, %v4542
        %v4650 = vadd.f32 %v4376, %v4546
        %v4651 = vadd.f32 %v4377, %v4548
        %v4652 = vadd.f32 %v4378, %v4547
        %v4653 = vadd.f32 %v4379, %v4551
        %v4654 = vadd.f32 %v4380, %v4553
        %v4655 = vadd.f32 %v4381, %v4552
        %v4656 = vadd.f32 %v4382, %v4556
        %v4657 = vadd.f32 %v4383, %v4558
        %v4658 = vadd.f32 %v4384, %v4557
        %v4659 = vadd.f32 %v4385, %v4561
        %v4660 = vadd.f32 %v4386, %v4563
        %v4661 = vadd.f32 %v4387, %v4562
        %v4662 = vadd.f32 %v4388, %v4566
        %v4663 = vadd.f32 %v4389, %v4568
        %v4664 = vadd.f32 %v4390, %v4567
        %v4665 = vld [vmem:[%s1 + $0x11] sm:$0x1]
        %v4666 = vperm.slane %v4665, 0
        %v4667 = vmul.f32 %v3956, %v4666
        %v4668 = vmul.f32 %v3957, %v4666
        %v4669 = vmul.f32 %v3960, %v4666
        %v4670 = vmul.f32 %v3961, %v4666
        %v4671 = vmul.f32 %v3964, %v4666
        %v4672 = vmul.f32 %v3965, %v4666
        %v4673 = vmul.f32 %v3968, %v4666
        %v4674 = vmul.f32 %v3969, %v4666
        %v4675 = vmul.f32 %v3972, %v4666
        %v4676 = vmul.f32 %v3973, %v4666
        %v4677 = vmul.f32 %v3976, %v4666
        %v4678 = vmul.f32 %v3977, %v4666
        %v4679 = vmul.f32 %v3980, %v4666
        %v4680 = vmul.f32 %v3981, %v4666
        %v4681 = vmul.f32 %v3984, %v4666
        %v4682 = vmul.f32 %v3985, %v4666
        %v4683 = vmul.f32 %v3988, %v4666
        %v4684 = vmul.f32 %v3989, %v4666
        %v4685 = vmul.f32 %v3992, %v4666
        %v4686 = vmul.f32 %v3993, %v4666
        %v4687 = vmul.f32 %v3996, %v4666
        %v4688 = vmul.f32 %v3997, %v4666
        %v4689 = vmul.f32 %v4000, %v4666
        %v4690 = vmul.f32 %v4001, %v4666
        %v4691 = vmul.f32 %v4004, %v4666
        %v4692 = vmul.f32 %v4005, %v4666
        %v4693 = vmul.f32 %v4008, %v4666
        %v4694 = vmul.f32 %v4009, %v4666
        %v4695 = vmul.f32 %v4012, %v4666
        %v4696 = vmul.f32 %v4013, %v4666
        %v4697 = vmul.f32 %v4016, %v4666
        %v4698 = vmul.f32 %v4017, %v4666
        %v4731 = vrot.slane %v4667, 3
        %v4732 = vrot.slane %v4668, 3
        %v4733 = vsel %vm1241, %v4731, %v4732
        %v4734 = vrot.slane %v4669, 3
        %v4735 = vrot.slane %v4670, 3
        %v4736 = vsel %vm1241, %v4734, %v4735
        %v4737 = vrot.slane %v4671, 3
        %v4738 = vrot.slane %v4672, 3
        %v4739 = vsel %vm1241, %v4737, %v4738
        %v4740 = vrot.slane %v4673, 3
        %v4741 = vrot.slane %v4674, 3
        %v4742 = vsel %vm1241, %v4740, %v4741
        %v4743 = vrot.slane %v4675, 3
        %v4744 = vrot.slane %v4676, 3
        %v4745 = vsel %vm1241, %v4743, %v4744
        %v4746 = vrot.slane %v4677, 3
        %v4747 = vrot.slane %v4678, 3
        %v4748 = vsel %vm1241, %v4746, %v4747
        %v4749 = vrot.slane %v4679, 3
        %v4750 = vrot.slane %v4680, 3
        %v4751 = vsel %vm1241, %v4749, %v4750
        %v4752 = vrot.slane %v4681, 3
        %v4753 = vrot.slane %v4682, 3
        %v4754 = vsel %vm1241, %v4752, %v4753
        %v4755 = vrot.slane %v4683, 3
        %v4756 = vrot.slane %v4684, 3
        %v4757 = vsel %vm1241, %v4755, %v4756
        %v4758 = vrot.slane %v4685, 3
        %v4759 = vrot.slane %v4686, 3
        %v4760 = vsel %vm1241, %v4758, %v4759
        %v4761 = vrot.slane %v4687, 3
        %v4762 = vrot.slane %v4688, 3
        %v4763 = vsel %vm1241, %v4761, %v4762
        %v4764 = vrot.slane %v4689, 3
        %v4765 = vrot.slane %v4690, 3
        %v4766 = vsel %vm1241, %v4764, %v4765
        %v4767 = vrot.slane %v4691, 3
        %v4768 = vrot.slane %v4692, 3
        %v4769 = vsel %vm1241, %v4767, %v4768
        %v4770 = vrot.slane %v4693, 3
        %v4771 = vrot.slane %v4694, 3
        %v4772 = vsel %vm1241, %v4770, %v4771
        %v4773 = vrot.slane %v4695, 3
        %v4774 = vrot.slane %v4696, 3
        %v4775 = vsel %vm1241, %v4773, %v4774
        %v4776 = vrot.slane %v4697, 3
        %v4777 = vrot.slane %v4698, 3
        %v4778 = vsel %vm1241, %v4776, %v4777
        %v4827 = vadd.f32 %v4617, %v4731
        %v4828 = vadd.f32 %v4618, %v4733
        %v4829 = vadd.f32 %v4619, %v4732
        %v4830 = vadd.f32 %v4620, %v4734
        %v4831 = vadd.f32 %v4621, %v4736
        %v4832 = vadd.f32 %v4622, %v4735
        %v4833 = vadd.f32 %v4623, %v4737
        %v4834 = vadd.f32 %v4624, %v4739
        %v4835 = vadd.f32 %v4625, %v4738
        %v4836 = vadd.f32 %v4626, %v4740
        %v4837 = vadd.f32 %v4627, %v4742
        %v4838 = vadd.f32 %v4628, %v4741
        %v4839 = vadd.f32 %v4629, %v4743
        %v4840 = vadd.f32 %v4630, %v4745
        %v4841 = vadd.f32 %v4631, %v4744
        %v4842 = vadd.f32 %v4632, %v4746
        %v4843 = vadd.f32 %v4633, %v4748
        %v4844 = vadd.f32 %v4634, %v4747
        %v4845 = vadd.f32 %v4635, %v4749
        %v4846 = vadd.f32 %v4636, %v4751
        %v4847 = vadd.f32 %v4637, %v4750
        %v4848 = vadd.f32 %v4638, %v4752
        %v4849 = vadd.f32 %v4639, %v4754
        %v4850 = vadd.f32 %v4640, %v4753
        %v4851 = vadd.f32 %v4641, %v4755
        %v4852 = vadd.f32 %v4642, %v4757
        %v4853 = vadd.f32 %v4643, %v4756
        %v4854 = vadd.f32 %v4644, %v4758
        %v4855 = vadd.f32 %v4645, %v4760
        %v4856 = vadd.f32 %v4646, %v4759
        %v4857 = vadd.f32 %v4647, %v4761
        %v4858 = vadd.f32 %v4648, %v4763
        %v4859 = vadd.f32 %v4649, %v4762
        %v4860 = vadd.f32 %v4650, %v4764
        %v4861 = vadd.f32 %v4651, %v4766
        %v4862 = vadd.f32 %v4652, %v4765
        %v4863 = vadd.f32 %v4653, %v4767
        %v4864 = vadd.f32 %v4654, %v4769
        %v4865 = vadd.f32 %v4655, %v4768
        %v4866 = vadd.f32 %v4656, %v4770
        %v4867 = vadd.f32 %v4657, %v4772
        %v4868 = vadd.f32 %v4658, %v4771
        %v4869 = vadd.f32 %v4659, %v4773
        %v4870 = vadd.f32 %v4660, %v4775
        %v4871 = vadd.f32 %v4661, %v4774
        %v4872 = vadd.f32 %v4662, %v4776
        %v4873 = vadd.f32 %v4663, %v4778
        %v4874 = vadd.f32 %v4664, %v4777
        %v4875 = vld [vmem:[%s1 + $0x12] sm:$0x1]
        %v4876 = vperm.slane %v4875, 0
        %v4877 = vmul.f32 %v3956, %v4876
        %v4878 = vmul.f32 %v3957, %v4876
        %v4879 = vmul.f32 %v3958, %v4876
        %v4880 = vmul.f32 %v3960, %v4876
        %v4881 = vmul.f32 %v3961, %v4876
        %v4882 = vmul.f32 %v3962, %v4876
        %v4883 = vmul.f32 %v3964, %v4876
        %v4884 = vmul.f32 %v3965, %v4876
        %v4885 = vmul.f32 %v3966, %v4876
        %v4886 = vmul.f32 %v3968, %v4876
        %v4887 = vmul.f32 %v3969, %v4876
        %v4888 = vmul.f32 %v3970, %v4876
        %v4889 = vmul.f32 %v3972, %v4876
        %v4890 = vmul.f32 %v3973, %v4876
        %v4891 = vmul.f32 %v3974, %v4876
        %v4892 = vmul.f32 %v3976, %v4876
        %v4893 = vmul.f32 %v3977, %v4876
        %v4894 = vmul.f32 %v3978, %v4876
        %v4895 = vmul.f32 %v3980, %v4876
        %v4896 = vmul.f32 %v3981, %v4876
        %v4897 = vmul.f32 %v3982, %v4876
        %v4898 = vmul.f32 %v3984, %v4876
        %v4899 = vmul.f32 %v3985, %v4876
        %v4900 = vmul.f32 %v3986, %v4876
        %v4901 = vmul.f32 %v3988, %v4876
        %v4902 = vmul.f32 %v3989, %v4876
        %v4903 = vmul.f32 %v3990, %v4876
        %v4904 = vmul.f32 %v3992, %v4876
        %v4905 = vmul.f32 %v3993, %v4876
        %v4906 = vmul.f32 %v3994, %v4876
        %v4907 = vmul.f32 %v3996, %v4876
        %v4908 = vmul.f32 %v3997, %v4876
        %v4909 = vmul.f32 %v3998, %v4876
        %v4910 = vmul.f32 %v4000, %v4876
        %v4911 = vmul.f32 %v4001, %v4876
        %v4912 = vmul.f32 %v4002, %v4876
        %v4913 = vmul.f32 %v4004, %v4876
        %v4914 = vmul.f32 %v4005, %v4876
        %v4915 = vmul.f32 %v4006, %v4876
        %v4916 = vmul.f32 %v4008, %v4876
        %v4917 = vmul.f32 %v4009, %v4876
        %v4918 = vmul.f32 %v4010, %v4876
        %v4919 = vmul.f32 %v4012, %v4876
        %v4920 = vmul.f32 %v4013, %v4876
        %v4921 = vmul.f32 %v4014, %v4876
        %v4922 = vmul.f32 %v4016, %v4876
        %v4923 = vmul.f32 %v4017, %v4876
        %v4924 = vmul.f32 %v4018, %v4876
        %v4973 = vrot.slane %v4877, 4
        %v4974 = vrot.slane %v4878, 4
        %v4975 = vsel %vm1484, %v4973, %v4974
        %v4976 = vrot.slane %v4879, 4
        %v4977 = vsel %vm1484, %v4974, %v4976
        %v4978 = vrot.slane %v4880, 4
        %v4979 = vrot.slane %v4881, 4
        %v4980 = vsel %vm1484, %v4978, %v4979
        %v4981 = vrot.slane %v4882, 4
        %v4982 = vsel %vm1484, %v4979, %v4981
        %v4983 = vrot.slane %v4883, 4
        %v4984 = vrot.slane %v4884, 4
        %v4985 = vsel %vm1484, %v4983, %v4984
        %v4986 = vrot.slane %v4885, 4
        %v4987 = vsel %vm1484, %v4984, %v4986
        %v4988 = vrot.slane %v4886, 4
        %v4989 = vrot.slane %v4887, 4
        %v4990 = vsel %vm1484, %v4988, %v4989
        %v4991 = vrot.slane %v4888, 4
        %v4992 = vsel %vm1484, %v4989, %v4991
        %v4993 = vrot.slane %v4889, 4
        %v4994 = vrot.slane %v4890, 4
        %v4995 = vsel %vm1484, %v4993, %v4994
        %v4996 = vrot.slane %v4891, 4
        %v4997 = vsel %vm1484, %v4994, %v4996
        %v4998 = vrot.slane %v4892, 4
        %v4999 = vrot.slane %v4893, 4
        %v5000 = vsel %vm1484, %v4998, %v4999
        %v5001 = vrot.slane %v4894, 4
        %v5002 = vsel %vm1484, %v4999, %v5001
        %v5003 = vrot.slane %v4895, 4
        %v5004 = vrot.slane %v4896, 4
        %v5005 = vsel %vm1484, %v5003, %v5004
        %v5006 = vrot.slane %v4897, 4
        %v5007 = vsel %vm1484, %v5004, %v5006
        %v5008 = vrot.slane %v4898, 4
        %v5009 = vrot.slane %v4899, 4
        %v5010 = vsel %vm1484, %v5008, %v5009
        %v5011 = vrot.slane %v4900, 4
        %v5012 = vsel %vm1484, %v5009, %v5011
        %v5013 = vrot.slane %v4901, 4
        %v5014 = vrot.slane %v4902, 4
        %v5015 = vsel %vm1484, %v5013, %v5014
        %v5016 = vrot.slane %v4903, 4
        %v5017 = vsel %vm1484, %v5014, %v5016
        %v5018 = vrot.slane %v4904, 4
        %v5019 = vrot.slane %v4905, 4
        %v5020 = vsel %vm1484, %v5018, %v5019
        %v5021 = vrot.slane %v4906, 4
        %v5022 = vsel %vm1484, %v5019, %v5021
        %v5023 = vrot.slane %v4907, 4
        %v5024 = vrot.slane %v4908, 4
        %v5025 = vsel %vm1484, %v5023, %v5024
        %v5026 = vrot.slane %v4909, 4
        %v5027 = vsel %vm1484, %v5024, %v5026
        %v5028 = vrot.slane %v4910, 4
        %v5029 = vrot.slane %v4911, 4
        %v5030 = vsel %vm1484, %v5028, %v5029
        %v5031 = vrot.slane %v4912, 4
        %v5032 = vsel %vm1484, %v5029, %v5031
        %v5033 = vrot.slane %v4913, 4
        %v5034 = vrot.slane %v4914, 4
        %v5035 = vsel %vm1484, %v5033, %v5034
        %v5036 = vrot.slane %v4915, 4
        %v5037 = vsel %vm1484, %v5034, %v5036
        %v5038 = vrot.slane %v4916, 4
        %v5039 = vrot.slane %v4917, 4
        %v5040 = vsel %vm1484, %v5038, %v5039
        %v5041 = vrot.slane %v4918, 4
        %v5042 = vsel %vm1484, %v5039, %v5041
        %v5043 = vrot.slane %v4919, 4
        %v5044 = vrot.slane %v4920, 4
        %v5045 = vsel %vm1484, %v5043, %v5044
        %v5046 = vrot.slane %v4921, 4
        %v5047 = vsel %vm1484, %v5044, %v5046
        %v5048 = vrot.slane %v4922, 4
        %v5049 = vrot.slane %v4923, 4
        %v5050 = vsel %vm1484, %v5048, %v5049
        %v5051 = vrot.slane %v4924, 4
        %v5052 = vsel %vm1484, %v5049, %v5051
        %v5101 = vadd.f32 %v4827, %v4973
        %v5102 = vadd.f32 %v4828, %v4975
        %v5103 = vadd.f32 %v4829, %v4977
        %v5104 = vadd.f32 %v4830, %v4978
        %v5105 = vadd.f32 %v4831, %v4980
        %v5106 = vadd.f32 %v4832, %v4982
        %v5107 = vadd.f32 %v4833, %v4983
        %v5108 = vadd.f32 %v4834, %v4985
        %v5109 = vadd.f32 %v4835, %v4987
        %v5110 = vadd.f32 %v4836, %v4988
        %v5111 = vadd.f32 %v4837, %v4990
        %v5112 = vadd.f32 %v4838, %v4992
        %v5113 = vadd.f32 %v4839, %v4993
        %v5114 = vadd.f32 %v4840, %v4995
        %v5115 = vadd.f32 %v4841, %v4997
        %v5116 = vadd.f32 %v4842, %v4998
        %v5117 = vadd.f32 %v4843, %v5000
        %v5118 = vadd.f32 %v4844, %v5002
        %v5119 = vadd.f32 %v4845, %v5003
        %v5120 = vadd.f32 %v4846, %v5005
        %v5121 = vadd.f32 %v4847, %v5007
        %v5122 = vadd.f32 %v4848, %v5008
        %v5123 = vadd.f32 %v4849, %v5010
        %v5124 = vadd.f32 %v4850, %v5012
        %v5125 = vadd.f32 %v4851, %v5013
        %v5126 = vadd.f32 %v4852, %v5015
        %v5127 = vadd.f32 %v4853, %v5017
        %v5128 = vadd.f32 %v4854, %v5018
        %v5129 = vadd.f32 %v4855, %v5020
        %v5130 = vadd.f32 %v4856, %v5022
        %v5131 = vadd.f32 %v4857, %v5023
        %v5132 = vadd.f32 %v4858, %v5025
        %v5133 = vadd.f32 %v4859, %v5027
        %v5134 = vadd.f32 %v4860, %v5028
        %v5135 = vadd.f32 %v4861, %v5030
        %v5136 = vadd.f32 %v4862, %v5032
        %v5137 = vadd.f32 %v4863, %v5033
        %v5138 = vadd.f32 %v4864, %v5035
        %v5139 = vadd.f32 %v4865, %v5037
        %v5140 = vadd.f32 %v4866, %v5038
        %v5141 = vadd.f32 %v4867, %v5040
        %v5142 = vadd.f32 %v4868, %v5042
        %v5143 = vadd.f32 %v4869, %v5043
        %v5144 = vadd.f32 %v4870, %v5045
        %v5145 = vadd.f32 %v4871, %v5047
        %v5146 = vadd.f32 %v4872, %v5048
        %v5147 = vadd.f32 %v4873, %v5050
        %v5148 = vadd.f32 %v4874, %v5052
        %v5149 = vld [vmem:[%s1 + $0x13] sm:$0x1]
        %v5150 = vperm.slane %v5149, 0
        %v5151 = vmul.f32 %v3956, %v5150
        %v5152 = vmul.f32 %v3957, %v5150
        %v5153 = vmul.f32 %v3958, %v5150
        %v5154 = vmul.f32 %v3960, %v5150
        %v5155 = vmul.f32 %v3961, %v5150
        %v5156 = vmul.f32 %v3962, %v5150
        %v5157 = vmul.f32 %v3964, %v5150
        %v5158 = vmul.f32 %v3965, %v5150
        %v5159 = vmul.f32 %v3966, %v5150
        %v5160 = vmul.f32 %v3968, %v5150
        %v5161 = vmul.f32 %v3969, %v5150
        %v5162 = vmul.f32 %v3970, %v5150
        %v5163 = vmul.f32 %v3972, %v5150
        %v5164 = vmul.f32 %v3973, %v5150
        %v5165 = vmul.f32 %v3974, %v5150
        %v5166 = vmul.f32 %v3976, %v5150
        %v5167 = vmul.f32 %v3977, %v5150
        %v5168 = vmul.f32 %v3978, %v5150
        %v5169 = vmul.f32 %v3980, %v5150
        %v5170 = vmul.f32 %v3981, %v5150
        %v5171 = vmul.f32 %v3982, %v5150
        %v5172 = vmul.f32 %v3984, %v5150
        %v5173 = vmul.f32 %v3985, %v5150
        %v5174 = vmul.f32 %v3986, %v5150
        %v5175 = vmul.f32 %v3988, %v5150
        %v5176 = vmul.f32 %v3989, %v5150
        %v5177 = vmul.f32 %v3990, %v5150
        %v5178 = vmul.f32 %v3992, %v5150
        %v5179 = vmul.f32 %v3993, %v5150
        %v5180 = vmul.f32 %v3994, %v5150
        %v5181 = vmul.f32 %v3996, %v5150
        %v5182 = vmul.f32 %v3997, %v5150
        %v5183 = vmul.f32 %v3998, %v5150
        %v5184 = vmul.f32 %v4000, %v5150
        %v5185 = vmul.f32 %v4001, %v5150
        %v5186 = vmul.f32 %v4002, %v5150
        %v5187 = vmul.f32 %v4004, %v5150
        %v5188 = vmul.f32 %v4005, %v5150
        %v5189 = vmul.f32 %v4006, %v5150
        %v5190 = vmul.f32 %v4008, %v5150
        %v5191 = vmul.f32 %v4009, %v5150
        %v5192 = vmul.f32 %v4010, %v5150
        %v5193 = vmul.f32 %v4012, %v5150
        %v5194 = vmul.f32 %v4013, %v5150
        %v5195 = vmul.f32 %v4014, %v5150
        %v5196 = vmul.f32 %v4016, %v5150
        %v5197 = vmul.f32 %v4017, %v5150
        %v5198 = vmul.f32 %v4018, %v5150
        %v5247 = vrot.slane %v5151, 5
        %v5248 = vrot.slane %v5152, 5
        %v5249 = vsel %vm1759, %v5247, %v5248
        %v5250 = vrot.slane %v5153, 5
        %v5251 = vsel %vm1759, %v5248, %v5250
        %v5252 = vrot.slane %v5154, 5
        %v5253 = vrot.slane %v5155, 5
        %v5254 = vsel %vm1759, %v5252, %v5253
        %v5255 = vrot.slane %v5156, 5
        %v5256 = vsel %vm1759, %v5253, %v5255
        %v5257 = vrot.slane %v5157, 5
        %v5258 = vrot.slane %v5158, 5
        %v5259 = vsel %vm1759, %v5257, %v5258
        %v5260 = vrot.slane %v5159, 5
        %v5261 = vsel %vm1759, %v5258, %v5260
        %v5262 = vrot.slane %v5160, 5
        %v5263 = vrot.slane %v5161, 5
        %v5264 = vsel %vm1759, %v5262, %v5263
        %v5265 = vrot.slane %v5162, 5
        %v5266 = vsel %vm1759, %v5263, %v5265
        %v5267 = vrot.slane %v5163, 5
        %v5268 = vrot.slane %v5164, 5
        %v5269 = vsel %vm1759, %v5267, %v5268
        %v5270 = vrot.slane %v5165, 5
        %v5271 = vsel %vm1759, %v5268, %v5270
        %v5272 = vrot.slane %v5166, 5
        %v5273 = vrot.slane %v5167, 5
        %v5274 = vsel %vm1759, %v5272, %v5273
        %v5275 = vrot.slane %v5168, 5
        %v5276 = vsel %vm1759, %v5273, %v5275
        %v5277 = vrot.slane %v5169, 5
        %v5278 = vrot.slane %v5170, 5
        %v5279 = vsel %vm1759, %v5277, %v5278
        %v5280 = vrot.slane %v5171, 5
        %v5281 = vsel %vm1759, %v5278, %v5280
        %v5282 = vrot.slane %v5172, 5
        %v5283 = vrot.slane %v5173, 5
        %v5284 = vsel %vm1759, %v5282, %v5283
        %v5285 = vrot.slane %v5174, 5
        %v5286 = vsel %vm1759, %v5283, %v5285
        %v5287 = vrot.slane %v5175, 5
        %v5288 = vrot.slane %v5176, 5
        %v5289 = vsel %vm1759, %v5287, %v5288
        %v5290 = vrot.slane %v5177, 5
        %v5291 = vsel %vm1759, %v5288, %v5290
        %v5292 = vrot.slane %v5178, 5
        %v5293 = vrot.slane %v5179, 5
        %v5294 = vsel %vm1759, %v5292, %v5293
        %v5295 = vrot.slane %v5180, 5
        %v5296 = vsel %vm1759, %v5293, %v5295
        %v5297 = vrot.slane %v5181, 5
        %v5298 = vrot.slane %v5182, 5
        %v5299 = vsel %vm1759, %v5297, %v5298
        %v5300 = vrot.slane %v5183, 5
        %v5301 = vsel %vm1759, %v5298, %v5300
        %v5302 = vrot.slane %v5184, 5
        %v5303 = vrot.slane %v5185, 5
        %v5304 = vsel %vm1759, %v5302, %v5303
        %v5305 = vrot.slane %v5186, 5
        %v5306 = vsel %vm1759, %v5303, %v5305
        %v5307 = vrot.slane %v5187, 5
        %v5308 = vrot.slane %v5188, 5
        %v5309 = vsel %vm1759, %v5307, %v5308
        %v5310 = vrot.slane %v5189, 5
        %v5311 = vsel %vm1759, %v5308, %v5310
        %v5312 = vrot.slane %v5190, 5
        %v5313 = vrot.slane %v5191, 5
        %v5314 = vsel %vm1759, %v5312, %v5313
        %v5315 = vrot.slane %v5192, 5
        %v5316 = vsel %vm1759, %v5313, %v5315
        %v5317 = vrot.slane %v5193, 5
        %v5318 = vrot.slane %v5194, 5
        %v5319 = vsel %vm1759, %v5317, %v5318
        %v5320 = vrot.slane %v5195, 5
        %v5321 = vsel %vm1759, %v5318, %v5320
        %v5322 = vrot.slane %v5196, 5
        %v5323 = vrot.slane %v5197, 5
        %v5324 = vsel %vm1759, %v5322, %v5323
        %v5325 = vrot.slane %v5198, 5
        %v5326 = vsel %vm1759, %v5323, %v5325
        %v5375 = vadd.f32 %v5101, %v5247
        %v5376 = vadd.f32 %v5102, %v5249
        %v5377 = vadd.f32 %v5103, %v5251
        %v5378 = vadd.f32 %v5104, %v5252
        %v5379 = vadd.f32 %v5105, %v5254
        %v5380 = vadd.f32 %v5106, %v5256
        %v5381 = vadd.f32 %v5107, %v5257
        %v5382 = vadd.f32 %v5108, %v5259
        %v5383 = vadd.f32 %v5109, %v5261
        %v5384 = vadd.f32 %v5110, %v5262
        %v5385 = vadd.f32 %v5111, %v5264
        %v5386 = vadd.f32 %v5112, %v5266
        %v5387 = vadd.f32 %v5113, %v5267
        %v5388 = vadd.f32 %v5114, %v5269
        %v5389 = vadd.f32 %v5115, %v5271
        %v5390 = vadd.f32 %v5116, %v5272
        %v5391 = vadd.f32 %v5117, %v5274
        %v5392 = vadd.f32 %v5118, %v5276
        %v5393 = vadd.f32 %v5119, %v5277
        %v5394 = vadd.f32 %v5120, %v5279
        %v5395 = vadd.f32 %v5121, %v5281
        %v5396 = vadd.f32 %v5122, %v5282
        %v5397 = vadd.f32 %v5123, %v5284
        %v5398 = vadd.f32 %v5124, %v5286
        %v5399 = vadd.f32 %v5125, %v5287
        %v5400 = vadd.f32 %v5126, %v5289
        %v5401 = vadd.f32 %v5127, %v5291
        %v5402 = vadd.f32 %v5128, %v5292
        %v5403 = vadd.f32 %v5129, %v5294
        %v5404 = vadd.f32 %v5130, %v5296
        %v5405 = vadd.f32 %v5131, %v5297
        %v5406 = vadd.f32 %v5132, %v5299
        %v5407 = vadd.f32 %v5133, %v5301
        %v5408 = vadd.f32 %v5134, %v5302
        %v5409 = vadd.f32 %v5135, %v5304
        %v5410 = vadd.f32 %v5136, %v5306
        %v5411 = vadd.f32 %v5137, %v5307
        %v5412 = vadd.f32 %v5138, %v5309
        %v5413 = vadd.f32 %v5139, %v5311
        %v5414 = vadd.f32 %v5140, %v5312
        %v5415 = vadd.f32 %v5141, %v5314
        %v5416 = vadd.f32 %v5142, %v5316
        %v5417 = vadd.f32 %v5143, %v5317
        %v5418 = vadd.f32 %v5144, %v5319
        %v5419 = vadd.f32 %v5145, %v5321
        %v5420 = vadd.f32 %v5146, %v5322
        %v5421 = vadd.f32 %v5147, %v5324
        %v5422 = vadd.f32 %v5148, %v5326
        %v5423 = vld [vmem:[%s1 + $0x14] sm:$0x1]
        %v5424 = vperm.slane %v5423, 0
        %v5425 = vmul.f32 %v3956, %v5424
        %v5426 = vmul.f32 %v3957, %v5424
        %v5427 = vmul.f32 %v3958, %v5424
        %v5428 = vmul.f32 %v3960, %v5424
        %v5429 = vmul.f32 %v3961, %v5424
        %v5430 = vmul.f32 %v3962, %v5424
        %v5431 = vmul.f32 %v3964, %v5424
        %v5432 = vmul.f32 %v3965, %v5424
        %v5433 = vmul.f32 %v3966, %v5424
        %v5434 = vmul.f32 %v3968, %v5424
        %v5435 = vmul.f32 %v3969, %v5424
        %v5436 = vmul.f32 %v3970, %v5424
        %v5437 = vmul.f32 %v3972, %v5424
        %v5438 = vmul.f32 %v3973, %v5424
        %v5439 = vmul.f32 %v3974, %v5424
        %v5440 = vmul.f32 %v3976, %v5424
        %v5441 = vmul.f32 %v3977, %v5424
        %v5442 = vmul.f32 %v3978, %v5424
        %v5443 = vmul.f32 %v3980, %v5424
        %v5444 = vmul.f32 %v3981, %v5424
        %v5445 = vmul.f32 %v3982, %v5424
        %v5446 = vmul.f32 %v3984, %v5424
        %v5447 = vmul.f32 %v3985, %v5424
        %v5448 = vmul.f32 %v3986, %v5424
        %v5449 = vmul.f32 %v3988, %v5424
        %v5450 = vmul.f32 %v3989, %v5424
        %v5451 = vmul.f32 %v3990, %v5424
        %v5452 = vmul.f32 %v3992, %v5424
        %v5453 = vmul.f32 %v3993, %v5424
        %v5454 = vmul.f32 %v3994, %v5424
        %v5455 = vmul.f32 %v3996, %v5424
        %v5456 = vmul.f32 %v3997, %v5424
        %v5457 = vmul.f32 %v3998, %v5424
        %v5458 = vmul.f32 %v4000, %v5424
        %v5459 = vmul.f32 %v4001, %v5424
        %v5460 = vmul.f32 %v4002, %v5424
        %v5461 = vmul.f32 %v4004, %v5424
        %v5462 = vmul.f32 %v4005, %v5424
        %v5463 = vmul.f32 %v4006, %v5424
        %v5464 = vmul.f32 %v4008, %v5424
        %v5465 = vmul.f32 %v4009, %v5424
        %v5466 = vmul.f32 %v4010, %v5424
        %v5467 = vmul.f32 %v4012, %v5424
        %v5468 = vmul.f32 %v4013, %v5424
        %v5469 = vmul.f32 %v4014, %v5424
        %v5470 = vmul.f32 %v4016, %v5424
        %v5471 = vmul.f32 %v4017, %v5424
        %v5472 = vmul.f32 %v4018, %v5424
        %v5521 = vrot.slane %v5425, 6
        %v5522 = vrot.slane %v5426, 6
        %v5523 = vsel %vm2034, %v5521, %v5522
        %v5524 = vrot.slane %v5427, 6
        %v5525 = vsel %vm2034, %v5522, %v5524
        %v5526 = vrot.slane %v5428, 6
        %v5527 = vrot.slane %v5429, 6
        %v5528 = vsel %vm2034, %v5526, %v5527
        %v5529 = vrot.slane %v5430, 6
        %v5530 = vsel %vm2034, %v5527, %v5529
        %v5531 = vrot.slane %v5431, 6
        %v5532 = vrot.slane %v5432, 6
        %v5533 = vsel %vm2034, %v5531, %v5532
        %v5534 = vrot.slane %v5433, 6
        %v5535 = vsel %vm2034, %v5532, %v5534
        %v5536 = vrot.slane %v5434, 6
        %v5537 = vrot.slane %v5435, 6
        %v5538 = vsel %vm2034, %v5536, %v5537
        %v5539 = vrot.slane %v5436, 6
        %v5540 = vsel %vm2034, %v5537, %v5539
        %v5541 = vrot.slane %v5437, 6
        %v5542 = vrot.slane %v5438, 6
        %v5543 = vsel %vm2034, %v5541, %v5542
        %v5544 = vrot.slane %v5439, 6
        %v5545 = vsel %vm2034, %v5542, %v5544
        %v5546 = vrot.slane %v5440, 6
        %v5547 = vrot.slane %v5441, 6
        %v5548 = vsel %vm2034, %v5546, %v5547
        %v5549 = vrot.slane %v5442, 6
        %v5550 = vsel %vm2034, %v5547, %v5549
        %v5551 = vrot.slane %v5443, 6
        %v5552 = vrot.slane %v5444, 6
        %v5553 = vsel %vm2034, %v5551, %v5552
        %v5554 = vrot.slane %v5445, 6
        %v5555 = vsel %vm2034, %v5552, %v5554
        %v5556 = vrot.slane %v5446, 6
        %v5557 = vrot.slane %v5447, 6
        %v5558 = vsel %vm2034, %v5556, %v5557
        %v5559 = vrot.slane %v5448, 6
        %v5560 = vsel %vm2034, %v5557, %v5559
        %v5561 = vrot.slane %v5449, 6
        %v5562 = vrot.slane %v5450, 6
        %v5563 = vsel %vm2034, %v5561, %v5562
        %v5564 = vrot.slane %v5451, 6
        %v5565 = vsel %vm2034, %v5562, %v5564
        %v5566 = vrot.slane %v5452, 6
        %v5567 = vrot.slane %v5453, 6
        %v5568 = vsel %vm2034, %v5566, %v5567
        %v5569 = vrot.slane %v5454, 6
        %v5570 = vsel %vm2034, %v5567, %v5569
        %v5571 = vrot.slane %v5455, 6
        %v5572 = vrot.slane %v5456, 6
        %v5573 = vsel %vm2034, %v5571, %v5572
        %v5574 = vrot.slane %v5457, 6
        %v5575 = vsel %vm2034, %v5572, %v5574
        %v5576 = vrot.slane %v5458, 6
        %v5577 = vrot.slane %v5459, 6
        %v5578 = vsel %vm2034, %v5576, %v5577
        %v5579 = vrot.slane %v5460, 6
        %v5580 = vsel %vm2034, %v5577, %v5579
        %v5581 = vrot.slane %v5461, 6
        %v5582 = vrot.slane %v5462, 6
        %v5583 = vsel %vm2034, %v5581, %v5582
        %v5584 = vrot.slane %v5463, 6
        %v5585 = vsel %vm2034, %v5582, %v5584
        %v5586 = vrot.slane %v5464, 6
        %v5587 = vrot.slane %v5465, 6
        %v5588 = vsel %vm2034, %v5586, %v5587
        %v5589 = vrot.slane %v5466, 6
        %v5590 = vsel %vm2034, %v5587, %v5589
        %v5591 = vrot.slane %v5467, 6
        %v5592 = vrot.slane %v5468, 6
        %v5593 = vsel %vm2034, %v5591, %v5592
        %v5594 = vrot.slane %v5469, 6
        %v5595 = vsel %vm2034, %v5592, %v5594
        %v5596 = vrot.slane %v5470, 6
        %v5597 = vrot.slane %v5471, 6
        %v5598 = vsel %vm2034, %v5596, %v5597
        %v5599 = vrot.slane %v5472, 6
        %v5600 = vsel %vm2034, %v5597, %v5599
        %v5649 = vadd.f32 %v5375, %v5521
        %v5650 = vadd.f32 %v5376, %v5523
        %v5651 = vadd.f32 %v5377, %v5525
        %v5652 = vadd.f32 %v5378, %v5526
        %v5653 = vadd.f32 %v5379, %v5528
        %v5654 = vadd.f32 %v5380, %v5530
        %v5655 = vadd.f32 %v5381, %v5531
        %v5656 = vadd.f32 %v5382, %v5533
        %v5657 = vadd.f32 %v5383, %v5535
        %v5658 = vadd.f32 %v5384, %v5536
        %v5659 = vadd.f32 %v5385, %v5538
        %v5660 = vadd.f32 %v5386, %v5540
        %v5661 = vadd.f32 %v5387, %v5541
        %v5662 = vadd.f32 %v5388, %v5543
        %v5663 = vadd.f32 %v5389, %v5545
        %v5664 = vadd.f32 %v5390, %v5546
        %v5665 = vadd.f32 %v5391, %v5548
        %v5666 = vadd.f32 %v5392, %v5550
        %v5667 = vadd.f32 %v5393, %v5551
        %v5668 = vadd.f32 %v5394, %v5553
        %v5669 = vadd.f32 %v5395, %v5555
        %v5670 = vadd.f32 %v5396, %v5556
        %v5671 = vadd.f32 %v5397, %v5558
        %v5672 = vadd.f32 %v5398, %v5560
        %v5673 = vadd.f32 %v5399, %v5561
        %v5674 = vadd.f32 %v5400, %v5563
        %v5675 = vadd.f32 %v5401, %v5565
        %v5676 = vadd.f32 %v5402, %v5566
        %v5677 = vadd.f32 %v5403, %v5568
        %v5678 = vadd.f32 %v5404, %v5570
        %v5679 = vadd.f32 %v5405, %v5571
        %v5680 = vadd.f32 %v5406, %v5573
        %v5681 = vadd.f32 %v5407, %v5575
        %v5682 = vadd.f32 %v5408, %v5576
        %v5683 = vadd.f32 %v5409, %v5578
        %v5684 = vadd.f32 %v5410, %v5580
        %v5685 = vadd.f32 %v5411, %v5581
        %v5686 = vadd.f32 %v5412, %v5583
        %v5687 = vadd.f32 %v5413, %v5585
        %v5688 = vadd.f32 %v5414, %v5586
        %v5689 = vadd.f32 %v5415, %v5588
        %v5690 = vadd.f32 %v5416, %v5590
        %v5691 = vadd.f32 %v5417, %v5591
        %v5692 = vadd.f32 %v5418, %v5593
        %v5693 = vadd.f32 %v5419, %v5595
        %v5694 = vadd.f32 %v5420, %v5596
        %v5695 = vadd.f32 %v5421, %v5598
        %v5696 = vadd.f32 %v5422, %v5600
        %v5697 = vld [vmem:[%s368] sm:$0xff]
        %v5698 = vld [vmem:[%s368 + $0x8] sm:$0xff]
        %v5699 = vld [vmem:[%s368 + $0x10] sm:$0xff]
        %v5700 = vld [vmem:[%s368 + $0x18] sm:$0x7]
        %v5701 = vld [vmem:[%s368 + $0x20] sm:$0xff]
        %v5702 = vld [vmem:[%s368 + $0x28] sm:$0xff]
        %v5703 = vld [vmem:[%s368 + $0x30] sm:$0xff]
        %v5704 = vld [vmem:[%s368 + $0x38] sm:$0x7]
        %v5705 = vld [vmem:[%s368 + $0x40] sm:$0xff]
        %v5706 = vld [vmem:[%s368 + $0x48] sm:$0xff]
        %v5707 = vld [vmem:[%s368 + $0x50] sm:$0xff]
        %v5708 = vld [vmem:[%s368 + $0x58] sm:$0x7]
        %v5709 = vld [vmem:[%s368 + $0x60] sm:$0xff]
        %v5710 = vld [vmem:[%s368 + $0x68] sm:$0xff]
        %v5711 = vld [vmem:[%s368 + $0x70] sm:$0xff]
        %v5712 = vld [vmem:[%s368 + $0x78] sm:$0x7]
        %v5713 = vld [vmem:[%s368 + $0x80] sm:$0xff]
        %v5714 = vld [vmem:[%s368 + $0x88] sm:$0xff]
        %v5715 = vld [vmem:[%s368 + $0x90] sm:$0xff]
        %v5716 = vld [vmem:[%s368 + $0x98] sm:$0x7]
        %v5717 = vld [vmem:[%s368 + $0xa0] sm:$0xff]
        %v5718 = vld [vmem:[%s368 + $0xa8] sm:$0xff]
        %v5719 = vld [vmem:[%s368 + $0xb0] sm:$0xff]
        %v5720 = vld [vmem:[%s368 + $0xb8] sm:$0x7]
        %v5721 = vld [vmem:[%s368 + $0xc0] sm:$0xff]
        %v5722 = vld [vmem:[%s368 + $0xc8] sm:$0xff]
        %v5723 = vld [vmem:[%s368 + $0xd0] sm:$0xff]
        %v5724 = vld [vmem:[%s368 + $0xd8] sm:$0x7]
        %v5725 = vld [vmem:[%s368 + $0xe0] sm:$0xff]
        %v5726 = vld [vmem:[%s368 + $0xe8] sm:$0xff]
        %v5727 = vld [vmem:[%s368 + $0xf0] sm:$0xff]
        %v5728 = vld [vmem:[%s368 + $0xf8] sm:$0x7]
        %v5729 = vld [vmem:[%s368 + $0x100] sm:$0xff]
        %v5730 = vld [vmem:[%s368 + $0x108] sm:$0xff]
        %v5731 = vld [vmem:[%s368 + $0x110] sm:$0xff]
        %v5732 = vld [vmem:[%s368 + $0x118] sm:$0x7]
        %v5733 = vld [vmem:[%s368 + $0x120] sm:$0xff]
        %v5734 = vld [vmem:[%s368 + $0x128] sm:$0xff]
        %v5735 = vld [vmem:[%s368 + $0x130] sm:$0xff]
        %v5736 = vld [vmem:[%s368 + $0x138] sm:$0x7]
        %v5737 = vld [vmem:[%s368 + $0x140] sm:$0xff]
        %v5738 = vld [vmem:[%s368 + $0x148] sm:$0xff]
        %v5739 = vld [vmem:[%s368 + $0x150] sm:$0xff]
        %v5740 = vld [vmem:[%s368 + $0x158] sm:$0x7]
        %v5741 = vld [vmem:[%s368 + $0x160] sm:$0xff]
        %v5742 = vld [vmem:[%s368 + $0x168] sm:$0xff]
        %v5743 = vld [vmem:[%s368 + $0x170] sm:$0xff]
        %v5744 = vld [vmem:[%s368 + $0x178] sm:$0x7]
        %v5745 = vld [vmem:[%s368 + $0x180] sm:$0xff]
        %v5746 = vld [vmem:[%s368 + $0x188] sm:$0xff]
        %v5747 = vld [vmem:[%s368 + $0x190] sm:$0xff]
        %v5748 = vld [vmem:[%s368 + $0x198] sm:$0x7]
        %v5749 = vld [vmem:[%s368 + $0x1a0] sm:$0xff]
        %v5750 = vld [vmem:[%s368 + $0x1a8] sm:$0xff]
        %v5751 = vld [vmem:[%s368 + $0x1b0] sm:$0xff]
        %v5752 = vld [vmem:[%s368 + $0x1b8] sm:$0x7]
        %v5753 = vld [vmem:[%s368 + $0x1c0] sm:$0xff]
        %v5754 = vld [vmem:[%s368 + $0x1c8] sm:$0xff]
        %v5755 = vld [vmem:[%s368 + $0x1d0] sm:$0xff]
        %v5756 = vld [vmem:[%s368 + $0x1d8] sm:$0x7]
        %v5757 = vld [vmem:[%s368 + $0x1e0] sm:$0xff]
        %v5758 = vld [vmem:[%s368 + $0x1e8] sm:$0xff]
        %v5759 = vld [vmem:[%s368 + $0x1f0] sm:$0xff]
        %v5760 = vld [vmem:[%s368 + $0x1f8] sm:$0x7]
        %v5761 = vld [vmem:[%s1 + $0x15] sm:$0x1]
        %v5762 = vperm.slane %v5761, 0
        %v5763 = vmul.f32 %v5697, %v5762
        %v5764 = vmul.f32 %v5698, %v5762
        %v5765 = vmul.f32 %v5699, %v5762
        %v5766 = vmul.f32 %v5701, %v5762
        %v5767 = vmul.f32 %v5702, %v5762
        %v5768 = vmul.f32 %v5703, %v5762
        %v5769 = vmul.f32 %v5705, %v5762
        %v5770 = vmul.f32 %v5706, %v5762
        %v5771 = vmul.f32 %v5707, %v5762
        %v5772 = vmul.f32 %v5709, %v5762
        %v5773 = vmul.f32 %v5710, %v5762
        %v5774 = vmul.f32 %v5711, %v5762
        %v5775 = vmul.f32 %v5713, %v5762
        %v5776 = vmul.f32 %v5714, %v5762
        %v5777 = vmul.f32 %v5715, %v5762
        %v5778 = vmul.f32 %v5717, %v5762
        %v5779 = vmul.f32 %v5718, %v5762
        %v5780 = vmul.f32 %v5719, %v5762
        %v5781 = vmul.f32 %v5721, %v5762
        %v5782 = vmul.f32 %v5722, %v5762
        %v5783 = vmul.f32 %v5723, %v5762
        %v5784 = vmul.f32 %v5725, %v5762
        %v5785 = vmul.f32 %v5726, %v5762
        %v5786 = vmul.f32 %v5727, %v5762
        %v5787 = vmul.f32 %v5729, %v5762
        %v5788 = vmul.f32 %v5730, %v5762
        %v5789 = vmul.f32 %v5731, %v5762
        %v5790 = vmul.f32 %v5733, %v5762
        %v5791 = vmul.f32 %v5734, %v5762
        %v5792 = vmul.f32 %v5735, %v5762
        %v5793 = vmul.f32 %v5737, %v5762
        %v5794 = vmul.f32 %v5738, %v5762
        %v5795 = vmul.f32 %v5739, %v5762
        %v5796 = vmul.f32 %v5741, %v5762
        %v5797 = vmul.f32 %v5742, %v5762
        %v5798 = vmul.f32 %v5743, %v5762
        %v5799 = vmul.f32 %v5745, %v5762
        %v5800 = vmul.f32 %v5746, %v5762
        %v5801 = vmul.f32 %v5747, %v5762
        %v5802 = vmul.f32 %v5749, %v5762
        %v5803 = vmul.f32 %v5750, %v5762
        %v5804 = vmul.f32 %v5751, %v5762
        %v5805 = vmul.f32 %v5753, %v5762
        %v5806 = vmul.f32 %v5754, %v5762
        %v5807 = vmul.f32 %v5755, %v5762
        %v5808 = vmul.f32 %v5757, %v5762
        %v5809 = vmul.f32 %v5758, %v5762
        %v5810 = vmul.f32 %v5759, %v5762
        %v5811 = vadd.f32 %v5649, %v5763
        %v5812 = vadd.f32 %v5650, %v5764
        %v5813 = vadd.f32 %v5651, %v5765
        %v5814 = vadd.f32 %v5652, %v5766
        %v5815 = vadd.f32 %v5653, %v5767
        %v5816 = vadd.f32 %v5654, %v5768
        %v5817 = vadd.f32 %v5655, %v5769
        %v5818 = vadd.f32 %v5656, %v5770
        %v5819 = vadd.f32 %v5657, %v5771
        %v5820 = vadd.f32 %v5658, %v5772
        %v5821 = vadd.f32 %v5659, %v5773
        %v5822 = vadd.f32 %v5660, %v5774
        %v5823 = vadd.f32 %v5661, %v5775
        %v5824 = vadd.f32 %v5662, %v5776
        %v5825 = vadd.f32 %v5663, %v5777
        %v5826 = vadd.f32 %v5664, %v5778
        %v5827 = vadd.f32 %v5665, %v5779
        %v5828 = vadd.f32 %v5666, %v5780
        %v5829 = vadd.f32 %v5667, %v5781
        %v5830 = vadd.f32 %v5668, %v5782
        %v5831 = vadd.f32 %v5669, %v5783
        %v5832 = vadd.f32 %v5670, %v5784
        %v5833 = vadd.f32 %v5671, %v5785
        %v5834 = vadd.f32 %v5672, %v5786
        %v5835 = vadd.f32 %v5673, %v5787
        %v5836 = vadd.f32 %v5674, %v5788
        %v5837 = vadd.f32 %v5675, %v5789
        %v5838 = vadd.f32 %v5676, %v5790
        %v5839 = vadd.f32 %v5677, %v5791
        %v5840 = vadd.f32 %v5678, %v5792
        %v5841 = vadd.f32 %v5679, %v5793
        %v5842 = vadd.f32 %v5680, %v5794
        %v5843 = vadd.f32 %v5681, %v5795
        %v5844 = vadd.f32 %v5682, %v5796
        %v5845 = vadd.f32 %v5683, %v5797
        %v5846 = vadd.f32 %v5684, %v5798
        %v5847 = vadd.f32 %v5685, %v5799
        %v5848 = vadd.f32 %v5686, %v5800
        %v5849 = vadd.f32 %v5687, %v5801
        %v5850 = vadd.f32 %v5688, %v5802
        %v5851 = vadd.f32 %v5689, %v5803
        %v5852 = vadd.f32 %v5690, %v5804
        %v5853 = vadd.f32 %v5691, %v5805
        %v5854 = vadd.f32 %v5692, %v5806
        %v5855 = vadd.f32 %v5693, %v5807
        %v5856 = vadd.f32 %v5694, %v5808
        %v5857 = vadd.f32 %v5695, %v5809
        %v5858 = vadd.f32 %v5696, %v5810
        %v5859 = vld [vmem:[%s1 + $0x16] sm:$0x1]
        %v5860 = vperm.slane %v5859, 0
        %v5861 = vmul.f32 %v5697, %v5860
        %v5862 = vmul.f32 %v5698, %v5860
        %v5863 = vmul.f32 %v5699, %v5860
        %v5864 = vmul.f32 %v5701, %v5860
        %v5865 = vmul.f32 %v5702, %v5860
        %v5866 = vmul.f32 %v5703, %v5860
        %v5867 = vmul.f32 %v5705, %v5860
        %v5868 = vmul.f32 %v5706, %v5860
        %v5869 = vmul.f32 %v5707, %v5860
        %v5870 = vmul.f32 %v5709, %v5860
        %v5871 = vmul.f32 %v5710, %v5860
        %v5872 = vmul.f32 %v5711, %v5860
        %v5873 = vmul.f32 %v5713, %v5860
        %v5874 = vmul.f32 %v5714, %v5860
        %v5875 = vmul.f32 %v5715, %v5860
        %v5876 = vmul.f32 %v5717, %v5860
        %v5877 = vmul.f32 %v5718, %v5860
        %v5878 = vmul.f32 %v5719, %v5860
        %v5879 = vmul.f32 %v5721, %v5860
        %v5880 = vmul.f32 %v5722, %v5860
        %v5881 = vmul.f32 %v5723, %v5860
        %v5882 = vmul.f32 %v5725, %v5860
        %v5883 = vmul.f32 %v5726, %v5860
        %v5884 = vmul.f32 %v5727, %v5860
        %v5885 = vmul.f32 %v5729, %v5860
        %v5886 = vmul.f32 %v5730, %v5860
        %v5887 = vmul.f32 %v5731, %v5860
        %v5888 = vmul.f32 %v5733, %v5860
        %v5889 = vmul.f32 %v5734, %v5860
        %v5890 = vmul.f32 %v5735, %v5860
        %v5891 = vmul.f32 %v5737, %v5860
        %v5892 = vmul.f32 %v5738, %v5860
        %v5893 = vmul.f32 %v5739, %v5860
        %v5894 = vmul.f32 %v5741, %v5860
        %v5895 = vmul.f32 %v5742, %v5860
        %v5896 = vmul.f32 %v5743, %v5860
        %v5897 = vmul.f32 %v5745, %v5860
        %v5898 = vmul.f32 %v5746, %v5860
        %v5899 = vmul.f32 %v5747, %v5860
        %v5900 = vmul.f32 %v5749, %v5860
        %v5901 = vmul.f32 %v5750, %v5860
        %v5902 = vmul.f32 %v5751, %v5860
        %v5903 = vmul.f32 %v5753, %v5860
        %v5904 = vmul.f32 %v5754, %v5860
        %v5905 = vmul.f32 %v5755, %v5860
        %v5906 = vmul.f32 %v5757, %v5860
        %v5907 = vmul.f32 %v5758, %v5860
        %v5908 = vmul.f32 %v5759, %v5860
        %v5957 = vrot.slane %v5861, 1
        %v5958 = vrot.slane %v5862, 1
        %v5959 = vsel %vm723, %v5957, %v5958
        %v5960 = vrot.slane %v5863, 1
        %v5961 = vsel %vm723, %v5958, %v5960
        %v5962 = vrot.slane %v5864, 1
        %v5963 = vrot.slane %v5865, 1
        %v5964 = vsel %vm723, %v5962, %v5963
        %v5965 = vrot.slane %v5866, 1
        %v5966 = vsel %vm723, %v5963, %v5965
        %v5967 = vrot.slane %v5867, 1
        %v5968 = vrot.slane %v5868, 1
        %v5969 = vsel %vm723, %v5967, %v5968
        %v5970 = vrot.slane %v5869, 1
        %v5971 = vsel %vm723, %v5968, %v5970
        %v5972 = vrot.slane %v5870, 1
        %v5973 = vrot.slane %v5871, 1
        %v5974 = vsel %vm723, %v5972, %v5973
        %v5975 = vrot.slane %v5872, 1
        %v5976 = vsel %vm723, %v5973, %v5975
        %v5977 = vrot.slane %v5873, 1
        %v5978 = vrot.slane %v5874, 1
        %v5979 = vsel %vm723, %v5977, %v5978
        %v5980 = vrot.slane %v5875, 1
        %v5981 = vsel %vm723, %v5978, %v5980
        %v5982 = vrot.slane %v5876, 1
        %v5983 = vrot.slane %v5877, 1
        %v5984 = vsel %vm723, %v5982, %v5983
        %v5985 = vrot.slane %v5878, 1
        %v5986 = vsel %vm723, %v5983, %v5985
        %v5987 = vrot.slane %v5879, 1
        %v5988 = vrot.slane %v5880, 1
        %v5989 = vsel %vm723, %v5987, %v5988
        %v5990 = vrot.slane %v5881, 1
        %v5991 = vsel %vm723, %v5988, %v5990
        %v5992 = vrot.slane %v5882, 1
        %v5993 = vrot.slane %v5883, 1
        %v5994 = vsel %vm723, %v5992, %v5993
        %v5995 = vrot.slane %v5884, 1
        %v5996 = vsel %vm723, %v5993, %v5995
        %v5997 = vrot.slane %v5885, 1
        %v5998 = vrot.slane %v5886, 1
        %v5999 = vsel %vm723, %v5997, %v5998
        %v6000 = vrot.slane %v5887, 1
        %v6001 = vsel %vm723, %v5998, %v6000
        %v6002 = vrot.slane %v5888, 1
        %v6003 = vrot.slane %v5889, 1
        %v6004 = vsel %vm723, %v6002, %v6003
        %v6005 = vrot.slane %v5890, 1
        %v6006 = vsel %vm723, %v6003, %v6005
        %v6007 = vrot.slane %v5891, 1
        %v6008 = vrot.slane %v5892, 1
        %v6009 = vsel %vm723, %v6007, %v6008
        %v6010 = vrot.slane %v5893, 1
        %v6011 = vsel %vm723, %v6008, %v6010
        %v6012 = vrot.slane %v5894, 1
        %v6013 = vrot.slane %v5895, 1
        %v6014 = vsel %vm723, %v6012, %v6013
        %v6015 = vrot.slane %v5896, 1
        %v6016 = vsel %vm723, %v6013, %v6015
        %v6017 = vrot.slane %v5897, 1
        %v6018 = vrot.slane %v5898, 1
        %v6019 = vsel %vm723, %v6017, %v6018
        %v6020 = vrot.slane %v5899, 1
        %v6021 = vsel %vm723, %v6018, %v6020
        %v6022 = vrot.slane %v5900, 1
        %v6023 = vrot.slane %v5901, 1
        %v6024 = vsel %vm723, %v6022, %v6023
        %v6025 = vrot.slane %v5902, 1
        %v6026 = vsel %vm723, %v6023, %v6025
        %v6027 = vrot.slane %v5903, 1
        %v6028 = vrot.slane %v5904, 1
        %v6029 = vsel %vm723, %v6027, %v6028
        %v6030 = vrot.slane %v5905, 1
        %v6031 = vsel %vm723, %v6028, %v6030
        %v6032 = vrot.slane %v5906, 1
        %v6033 = vrot.slane %v5907, 1
        %v6034 = vsel %vm723, %v6032, %v6033
        %v6035 = vrot.slane %v5908, 1
        %v6036 = vsel %vm723, %v6033, %v6035
        %v6085 = vadd.f32 %v5811, %v5959
        %v6086 = vadd.f32 %v5812, %v5961
        %v6087 = vadd.f32 %v5813, %v5960
        %v6088 = vadd.f32 %v5814, %v5964
        %v6089 = vadd.f32 %v5815, %v5966
        %v6090 = vadd.f32 %v5816, %v5965
        %v6091 = vadd.f32 %v5817, %v5969
        %v6092 = vadd.f32 %v5818, %v5971
        %v6093 = vadd.f32 %v5819, %v5970
        %v6094 = vadd.f32 %v5820, %v5974
        %v6095 = vadd.f32 %v5821, %v5976
        %v6096 = vadd.f32 %v5822, %v5975
        %v6097 = vadd.f32 %v5823, %v5979
        %v6098 = vadd.f32 %v5824, %v5981
        %v6099 = vadd.f32 %v5825, %v5980
        %v6100 = vadd.f32 %v5826, %v5984
        %v6101 = vadd.f32 %v5827, %v5986
        %v6102 = vadd.f32 %v5828, %v5985
        %v6103 = vadd.f32 %v5829, %v5989
        %v6104 = vadd.f32 %v5830, %v5991
        %v6105 = vadd.f32 %v5831, %v5990
        %v6106 = vadd.f32 %v5832, %v5994
        %v6107 = vadd.f32 %v5833, %v5996
        %v6108 = vadd.f32 %v5834, %v5995
        %v6109 = vadd.f32 %v5835, %v5999
        %v6110 = vadd.f32 %v5836, %v6001
        %v6111 = vadd.f32 %v5837, %v6000
        %v6112 = vadd.f32 %v5838, %v6004
        %v6113 = vadd.f32 %v5839, %v6006
        %v6114 = vadd.f32 %v5840, %v6005
        %v6115 = vadd.f32 %v5841, %v6009
        %v6116 = vadd.f32 %v5842, %v6011
        %v6117 = vadd.f32 %v5843, %v6010
        %v6118 = vadd.f32 %v5844, %v6014
        %v6119 = vadd.f32 %v5845, %v6016
        %v6120 = vadd.f32 %v5846, %v6015
        %v6121 = vadd.f32 %v5847, %v6019
        %v6122 = vadd.f32 %v5848, %v6021
        %v6123 = vadd.f32 %v5849, %v6020
        %v6124 = vadd.f32 %v5850, %v6024
        %v6125 = vadd.f32 %v5851, %v6026
        %v6126 = vadd.f32 %v5852, %v6025
        %v6127 = vadd.f32 %v5853, %v6029
        %v6128 = vadd.f32 %v5854, %v6031
        %v6129 = vadd.f32 %v5855, %v6030
        %v6130 = vadd.f32 %v5856, %v6034
        %v6131 = vadd.f32 %v5857, %v6036
        %v6132 = vadd.f32 %v5858, %v6035
        %v6133 = vld [vmem:[%s1 + $0x17] sm:$0x1]
        %v6134 = vperm.slane %v6133, 0
        %v6135 = vmul.f32 %v5697, %v6134
        %v6136 = vmul.f32 %v5698, %v6134
        %v6137 = vmul.f32 %v5699, %v6134
        %v6138 = vmul.f32 %v5701, %v6134
        %v6139 = vmul.f32 %v5702, %v6134
        %v6140 = vmul.f32 %v5703, %v6134
        %v6141 = vmul.f32 %v5705, %v6134
        %v6142 = vmul.f32 %v5706, %v6134
        %v6143 = vmul.f32 %v5707, %v6134
        %v6144 = vmul.f32 %v5709, %v6134
        %v6145 = vmul.f32 %v5710, %v6134
        %v6146 = vmul.f32 %v5711, %v6134
        %v6147 = vmul.f32 %v5713, %v6134
        %v6148 = vmul.f32 %v5714, %v6134
        %v6149 = vmul.f32 %v5715, %v6134
        %v6150 = vmul.f32 %v5717, %v6134
        %v6151 = vmul.f32 %v5718, %v6134
        %v6152 = vmul.f32 %v5719, %v6134
        %v6153 = vmul.f32 %v5721, %v6134
        %v6154 = vmul.f32 %v5722, %v6134
        %v6155 = vmul.f32 %v5723, %v6134
        %v6156 = vmul.f32 %v5725, %v6134
        %v6157 = vmul.f32 %v5726, %v6134
        %v6158 = vmul.f32 %v5727, %v6134
        %v6159 = vmul.f32 %v5729, %v6134
        %v6160 = vmul.f32 %v5730, %v6134
        %v6161 = vmul.f32 %v5731, %v6134
        %v6162 = vmul.f32 %v5733, %v6134
        %v6163 = vmul.f32 %v5734, %v6134
        %v6164 = vmul.f32 %v5735, %v6134
        %v6165 = vmul.f32 %v5737, %v6134
        %v6166 = vmul.f32 %v5738, %v6134
        %v6167 = vmul.f32 %v5739, %v6134
        %v6168 = vmul.f32 %v5741, %v6134
        %v6169 = vmul.f32 %v5742, %v6134
        %v6170 = vmul.f32 %v5743, %v6134
        %v6171 = vmul.f32 %v5745, %v6134
        %v6172 = vmul.f32 %v5746, %v6134
        %v6173 = vmul.f32 %v5747, %v6134
        %v6174 = vmul.f32 %v5749, %v6134
        %v6175 = vmul.f32 %v5750, %v6134
        %v6176 = vmul.f32 %v5751, %v6134
        %v6177 = vmul.f32 %v5753, %v6134
        %v6178 = vmul.f32 %v5754, %v6134
        %v6179 = vmul.f32 %v5755, %v6134
        %v6180 = vmul.f32 %v5757, %v6134
        %v6181 = vmul.f32 %v5758, %v6134
        %v6182 = vmul.f32 %v5759, %v6134
        %v6231 = vrot.slane %v6135, 2
        %v6232 = vrot.slane %v6136, 2
        %v6233 = vsel %vm998, %v6231, %v6232
        %v6234 = vrot.slane %v6137, 2
        %v6235 = vsel %vm998, %v6232, %v6234
        %v6236 = vrot.slane %v6138, 2
        %v6237 = vrot.slane %v6139, 2
        %v6238 = vsel %vm998, %v6236, %v6237
        %v6239 = vrot.slane %v6140, 2
        %v6240 = vsel %vm998, %v6237, %v6239
        %v6241 = vrot.slane %v6141, 2
        %v6242 = vrot.slane %v6142, 2
        %v6243 = vsel %vm998, %v6241, %v6242
        %v6244 = vrot.slane %v6143, 2
        %v6245 = vsel %vm998, %v6242, %v6244
        %v6246 = vrot.slane %v6144, 2
        %v6247 = vrot.slane %v6145, 2
        %v6248 = vsel %vm998, %v6246, %v6247
        %v6249 = vrot.slane %v6146, 2
        %v6250 = vsel %vm998, %v6247, %v6249
        %v6251 = vrot.slane %v6147, 2
        %v6252 = vrot.slane %v6148, 2
        %v6253 = vsel %vm998, %v6251, %v6252
        %v6254 = vrot.slane %v6149, 2
        %v6255 = vsel %vm998, %v6252, %v6254
        %v6256 = vrot.slane %v6150, 2
        %v6257 = vrot.slane %v6151, 2
        %v6258 = vsel %vm998, %v6256, %v6257
        %v6259 = vrot.slane %v6152, 2
        %v6260 = vsel %vm998, %v6257, %v6259
        %v6261 = vrot.slane %v6153, 2
        %v6262 = vrot.slane %v6154, 2
        %v6263 = vsel %vm998, %v6261, %v6262
        %v6264 = vrot.slane %v6155, 2
        %v6265 = vsel %vm998, %v6262, %v6264
        %v6266 = vrot.slane %v6156, 2
        %v6267 = vrot.slane %v6157, 2
        %v6268 = vsel %vm998, %v6266, %v6267
        %v6269 = vrot.slane %v6158, 2
        %v6270 = vsel %vm998, %v6267, %v6269
        %v6271 = vrot.slane %v6159, 2
        %v6272 = vrot.slane %v6160, 2
        %v6273 = vsel %vm998, %v6271, %v6272
        %v6274 = vrot.slane %v6161, 2
        %v6275 = vsel %vm998, %v6272, %v6274
        %v6276 = vrot.slane %v6162, 2
        %v6277 = vrot.slane %v6163, 2
        %v6278 = vsel %vm998, %v6276, %v6277
        %v6279 = vrot.slane %v6164, 2
        %v6280 = vsel %vm998, %v6277, %v6279
        %v6281 = vrot.slane %v6165, 2
        %v6282 = vrot.slane %v6166, 2
        %v6283 = vsel %vm998, %v6281, %v6282
        %v6284 = vrot.slane %v6167, 2
        %v6285 = vsel %vm998, %v6282, %v6284
        %v6286 = vrot.slane %v6168, 2
        %v6287 = vrot.slane %v6169, 2
        %v6288 = vsel %vm998, %v6286, %v6287
        %v6289 = vrot.slane %v6170, 2
        %v6290 = vsel %vm998, %v6287, %v6289
        %v6291 = vrot.slane %v6171, 2
        %v6292 = vrot.slane %v6172, 2
        %v6293 = vsel %vm998, %v6291, %v6292
        %v6294 = vrot.slane %v6173, 2
        %v6295 = vsel %vm998, %v6292, %v6294
        %v6296 = vrot.slane %v6174, 2
        %v6297 = vrot.slane %v6175, 2
        %v6298 = vsel %vm998, %v6296, %v6297
        %v6299 = vrot.slane %v6176, 2
        %v6300 = vsel %vm998, %v6297, %v6299
        %v6301 = vrot.slane %v6177, 2
        %v6302 = vrot.slane %v6178, 2
        %v6303 = vsel %vm998, %v6301, %v6302
        %v6304 = vrot.slane %v6179, 2
        %v6305 = vsel %vm998, %v6302, %v6304
        %v6306 = vrot.slane %v6180, 2
        %v6307 = vrot.slane %v6181, 2
        %v6308 = vsel %vm998, %v6306, %v6307
        %v6309 = vrot.slane %v6182, 2
        %v6310 = vsel %vm998, %v6307, %v6309
        %v6359 = vadd.f32 %v6085, %v6233
        %v6360 = vadd.f32 %v6086, %v6235
        %v6361 = vadd.f32 %v6087, %v6234
        %v6362 = vadd.f32 %v6088, %v6238
        %v6363 = vadd.f32 %v6089, %v6240
        %v6364 = vadd.f32 %v6090, %v6239
        %v6365 = vadd.f32 %v6091, %v6243
        %v6366 = vadd.f32 %v6092, %v6245
        %v6367 = vadd.f32 %v6093, %v6244
        %v6368 = vadd.f32 %v6094, %v6248
        %v6369 = vadd.f32 %v6095, %v6250
        %v6370 = vadd.f32 %v6096, %v6249
        %v6371 = vadd.f32 %v6097, %v6253
        %v6372 = vadd.f32 %v6098, %v6255
        %v6373 = vadd.f32 %v6099, %v6254
        %v6374 = vadd.f32 %v6100, %v6258
        %v6375 = vadd.f32 %v6101, %v6260
        %v6376 = vadd.f32 %v6102, %v6259
        %v6377 = vadd.f32 %v6103, %v6263
        %v6378 = vadd.f32 %v6104, %v6265
        %v6379 = vadd.f32 %v6105, %v6264
        %v6380 = vadd.f32 %v6106, %v6268
        %v6381 = vadd.f32 %v6107, %v6270
        %v6382 = vadd.f32 %v6108, %v6269
        %v6383 = vadd.f32 %v6109, %v6273
        %v6384 = vadd.f32 %v6110, %v6275
        %v6385 = vadd.f32 %v6111, %v6274
        %v6386 = vadd.f32 %v6112, %v6278
        %v6387 = vadd.f32 %v6113, %v6280
        %v6388 = vadd.f32 %v6114, %v6279
        %v6389 = vadd.f32 %v6115, %v6283
        %v6390 = vadd.f32 %v6116, %v6285
        %v6391 = vadd.f32 %v6117, %v6284
        %v6392 = vadd.f32 %v6118, %v6288
        %v6393 = vadd.f32 %v6119, %v6290
        %v6394 = vadd.f32 %v6120, %v6289
        %v6395 = vadd.f32 %v6121, %v6293
        %v6396 = vadd.f32 %v6122, %v6295
        %v6397 = vadd.f32 %v6123, %v6294
        %v6398 = vadd.f32 %v6124, %v6298
        %v6399 = vadd.f32 %v6125, %v6300
        %v6400 = vadd.f32 %v6126, %v6299
        %v6401 = vadd.f32 %v6127, %v6303
        %v6402 = vadd.f32 %v6128, %v6305
        %v6403 = vadd.f32 %v6129, %v6304
        %v6404 = vadd.f32 %v6130, %v6308
        %v6405 = vadd.f32 %v6131, %v6310
        %v6406 = vadd.f32 %v6132, %v6309
        %v6407 = vld [vmem:[%s1 + $0x18] sm:$0x1]
        %v6408 = vperm.slane %v6407, 0
        %v6409 = vmul.f32 %v5698, %v6408
        %v6410 = vmul.f32 %v5699, %v6408
        %v6411 = vmul.f32 %v5702, %v6408
        %v6412 = vmul.f32 %v5703, %v6408
        %v6413 = vmul.f32 %v5706, %v6408
        %v6414 = vmul.f32 %v5707, %v6408
        %v6415 = vmul.f32 %v5710, %v6408
        %v6416 = vmul.f32 %v5711, %v6408
        %v6417 = vmul.f32 %v5714, %v6408
        %v6418 = vmul.f32 %v5715, %v6408
        %v6419 = vmul.f32 %v5718, %v6408
        %v6420 = vmul.f32 %v5719, %v6408
        %v6421 = vmul.f32 %v5722, %v6408
        %v6422 = vmul.f32 %v5723, %v6408
        %v6423 = vmul.f32 %v5726, %v6408
        %v6424 = vmul.f32 %v5727, %v6408
        %v6425 = vmul.f32 %v5730, %v6408
        %v6426 = vmul.f32 %v5731, %v6408
        %v6427 = vmul.f32 %v5734, %v6408
        %v6428 = vmul.f32 %v5735, %v6408
        %v6429 = vmul.f32 %v5738, %v6408
        %v6430 = vmul.f32 %v5739, %v6408
        %v6431 = vmul.f32 %v5742, %v6408
        %v6432 = vmul.f32 %v5743, %v6408
        %v6433 = vmul.f32 %v5746, %v6408
        %v6434 = vmul.f32 %v5747, %v6408
        %v6435 = vmul.f32 %v5750, %v6408
        %v6436 = vmul.f32 %v5751, %v6408
        %v6437 = vmul.f32 %v5754, %v6408
        %v6438 = vmul.f32 %v5755, %v6408
        %v6439 = vmul.f32 %v5758, %v6408
        %v6440 = vmul.f32 %v5759, %v6408
        %v6473 = vrot.slane %v6409, 3
        %v6474 = vrot.slane %v6410, 3
        %v6475 = vsel %vm1241, %v6473, %v6474
        %v6476 = vrot.slane %v6411, 3
        %v6477 = vrot.slane %v6412, 3
        %v6478 = vsel %vm1241, %v6476, %v6477
        %v6479 = vrot.slane %v6413, 3
        %v6480 = vrot.slane %v6414, 3
        %v6481 = vsel %vm1241, %v6479, %v6480
        %v6482 = vrot.slane %v6415, 3
        %v6483 = vrot.slane %v6416, 3
        %v6484 = vsel %vm1241, %v6482, %v6483
        %v6485 = vrot.slane %v6417, 3
        %v6486 = vrot.slane %v6418, 3
        %v6487 = vsel %vm1241, %v6485, %v6486
        %v6488 = vrot.slane %v6419, 3
        %v6489 = vrot.slane %v6420, 3
        %v6490 = vsel %vm1241, %v6488, %v6489
        %v6491 = vrot.slane %v6421, 3
        %v6492 = vrot.slane %v6422, 3
        %v6493 = vsel %vm1241, %v6491, %v6492
        %v6494 = vrot.slane %v6423, 3
        %v6495 = vrot.slane %v6424, 3
        %v6496 = vsel %vm1241, %v6494, %v6495
        %v6497 = vrot.slane %v6425, 3
        %v6498 = vrot.slane %v6426, 3
        %v6499 = vsel %vm1241, %v6497, %v6498
        %v6500 = vrot.slane %v6427, 3
        %v6501 = vrot.slane %v6428, 3
        %v6502 = vsel %vm1241, %v6500, %v6501
        %v6503 = vrot.slane %v6429, 3
        %v6504 = vrot.slane %v6430, 3
        %v6505 = vsel %vm1241, %v6503, %v6504
        %v6506 = vrot.slane %v6431, 3
        %v6507 = vrot.slane %v6432, 3
        %v6508 = vsel %vm1241, %v6506, %v6507
        %v6509 = vrot.slane %v6433, 3
        %v6510 = vrot.slane %v6434, 3
        %v6511 = vsel %vm1241, %v6509, %v6510
        %v6512 = vrot.slane %v6435, 3
        %v6513 = vrot.slane %v6436, 3
        %v6514 = vsel %vm1241, %v6512, %v6513
        %v6515 = vrot.slane %v6437, 3
        %v6516 = vrot.slane %v6438, 3
        %v6517 = vsel %vm1241, %v6515, %v6516
        %v6518 = vrot.slane %v6439, 3
        %v6519 = vrot.slane %v6440, 3
        %v6520 = vsel %vm1241, %v6518, %v6519
        %v6569 = vadd.f32 %v6359, %v6473
        %v6570 = vadd.f32 %v6360, %v6475
        %v6571 = vadd.f32 %v6361, %v6474
        %v6572 = vadd.f32 %v6362, %v6476
        %v6573 = vadd.f32 %v6363, %v6478
        %v6574 = vadd.f32 %v6364, %v6477
        %v6575 = vadd.f32 %v6365, %v6479
        %v6576 = vadd.f32 %v6366, %v6481
        %v6577 = vadd.f32 %v6367, %v6480
        %v6578 = vadd.f32 %v6368, %v6482
        %v6579 = vadd.f32 %v6369, %v6484
        %v6580 = vadd.f32 %v6370, %v6483
        %v6581 = vadd.f32 %v6371, %v6485
        %v6582 = vadd.f32 %v6372, %v6487
        %v6583 = vadd.f32 %v6373, %v6486
        %v6584 = vadd.f32 %v6374, %v6488
        %v6585 = vadd.f32 %v6375, %v6490
        %v6586 = vadd.f32 %v6376, %v6489
        %v6587 = vadd.f32 %v6377, %v6491
        %v6588 = vadd.f32 %v6378, %v6493
        %v6589 = vadd.f32 %v6379, %v6492
        %v6590 = vadd.f32 %v6380, %v6494
        %v6591 = vadd.f32 %v6381, %v6496
        %v6592 = vadd.f32 %v6382, %v6495
        %v6593 = vadd.f32 %v6383, %v6497
        %v6594 = vadd.f32 %v6384, %v6499
        %v6595 = vadd.f32 %v6385, %v6498
        %v6596 = vadd.f32 %v6386, %v6500
        %v6597 = vadd.f32 %v6387, %v6502
        %v6598 = vadd.f32 %v6388, %v6501
        %v6599 = vadd.f32 %v6389, %v6503
        %v6600 = vadd.f32 %v6390, %v6505
        %v6601 = vadd.f32 %v6391, %v6504
        %v6602 = vadd.f32 %v6392, %v6506
        %v6603 = vadd.f32 %v6393, %v6508
        %v6604 = vadd.f32 %v6394, %v6507
        %v6605 = vadd.f32 %v6395, %v6509
        %v6606 = vadd.f32 %v6396, %v6511
        %v6607 = vadd.f32 %v6397, %v6510
        %v6608 = vadd.f32 %v6398, %v6512
        %v6609 = vadd.f32 %v6399, %v6514
        %v6610 = vadd.f32 %v6400, %v6513
        %v6611 = vadd.f32 %v6401, %v6515
        %v6612 = vadd.f32 %v6402, %v6517
        %v6613 = vadd.f32 %v6403, %v6516
        %v6614 = vadd.f32 %v6404, %v6518
        %v6615 = vadd.f32 %v6405, %v6520
        %v6616 = vadd.f32 %v6406, %v6519
        %v6617 = vld [vmem:[%s1 + $0x19] sm:$0x1]
        %v6618 = vperm.slane %v6617, 0
        %v6619 = vmul.f32 %v5698, %v6618
        %v6620 = vmul.f32 %v5699, %v6618
        %v6621 = vmul.f32 %v5700, %v6618
        %v6622 = vmul.f32 %v5702, %v6618
        %v6623 = vmul.f32 %v5703, %v6618
        %v6624 = vmul.f32 %v5704, %v6618
        %v6625 = vmul.f32 %v5706, %v6618
        %v6626 = vmul.f32 %v5707, %v6618
        %v6627 = vmul.f32 %v5708, %v6618
        %v6628 = vmul.f32 %v5710, %v6618
        %v6629 = vmul.f32 %v5711, %v6618
        %v6630 = vmul.f32 %v5712, %v6618
        %v6631 = vmul.f32 %v5714, %v6618
        %v6632 = vmul.f32 %v5715, %v6618
        %v6633 = vmul.f32 %v5716, %v6618
        %v6634 = vmul.f32 %v5718, %v6618
        %v6635 = vmul.f32 %v5719, %v6618
        %v6636 = vmul.f32 %v5720, %v6618
        %v6637 = vmul.f32 %v5722, %v6618
        %v6638 = vmul.f32 %v5723, %v6618
        %v6639 = vmul.f32 %v5724, %v6618
        %v6640 = vmul.f32 %v5726, %v6618
        %v6641 = vmul.f32 %v5727, %v6618
        %v6642 = vmul.f32 %v5728, %v6618
        %v6643 = vmul.f32 %v5730, %v6618
        %v6644 = vmul.f32 %v5731, %v6618
        %v6645 = vmul.f32 %v5732, %v6618
        %v6646 = vmul.f32 %v5734, %v6618
        %v6647 = vmul.f32 %v5735, %v6618
        %v6648 = vmul.f32 %v5736, %v6618
        %v6649 = vmul.f32 %v5738, %v6618
        %v6650 = vmul.f32 %v5739, %v6618
        %v6651 = vmul.f32 %v5740, %v6618
        %v6652 = vmul.f32 %v5742, %v6618
        %v6653 = vmul.f32 %v5743, %v6618
        %v6654 = vmul.f32 %v5744, %v6618
        %v6655 = vmul.f32 %v5746, %v6618
        %v6656 = vmul.f32 %v5747, %v6618
        %v6657 = vmul.f32 %v5748, %v6618
        %v6658 = vmul.f32 %v5750, %v6618
        %v6659 = vmul.f32 %v5751, %v6618
        %v6660 = vmul.f32 %v5752, %v6618
        %v6661 = vmul.f32 %v5754, %v6618
        %v6662 = vmul.f32 %v5755, %v6618
        %v6663 = vmul.f32 %v5756, %v6618
        %v6664 = vmul.f32 %v5758, %v6618
        %v6665 = vmul.f32 %v5759, %v6618
        %v6666 = vmul.f32 %v5760, %v6618
        %v6715 = vrot.slane %v6619, 4
        %v6716 = vrot.slane %v6620, 4
        %v6717 = vsel %vm1484, %v6715, %v6716
        %v6718 = vrot.slane %v6621, 4
        %v6719 = vsel %vm1484, %v6716, %v6718
        %v6720 = vrot.slane %v6622, 4
        %v6721 = vrot.slane %v6623, 4
        %v6722 = vsel %vm1484, %v6720, %v6721
        %v6723 = vrot.slane %v6624, 4
        %v6724 = vsel %vm1484, %v6721, %v6723
        %v6725 = vrot.slane %v6625, 4
        %v6726 = vrot.slane %v6626, 4
        %v6727 = vsel %vm1484, %v6725, %v6726
        %v6728 = vrot.slane %v6627, 4
        %v6729 = vsel %vm1484, %v6726, %v6728
        %v6730 = vrot.slane %v6628, 4
        %v6731 = vrot.slane %v6629, 4
        %v6732 = vsel %vm1484, %v6730, %v6731
        %v6733 = vrot.slane %v6630, 4
        %v6734 = vsel %vm1484, %v6731, %v6733
        %v6735 = vrot.slane %v6631, 4
        %v6736 = vrot.slane %v6632, 4
        %v6737 = vsel %vm1484, %v6735, %v6736
        %v6738 = vrot.slane %v6633, 4
        %v6739 = vsel %vm1484, %v6736, %v6738
        %v6740 = vrot.slane %v6634, 4
        %v6741 = vrot.slane %v6635, 4
        %v6742 = vsel %vm1484, %v6740, %v6741
        %v6743 = vrot.slane %v6636, 4
        %v6744 = vsel %vm1484, %v6741, %v6743
        %v6745 = vrot.slane %v6637, 4
        %v6746 = vrot.slane %v6638, 4
        %v6747 = vsel %vm1484, %v6745, %v6746
        %v6748 = vrot.slane %v6639, 4
        %v6749 = vsel %vm1484, %v6746, %v6748
        %v6750 = vrot.slane %v6640, 4
        %v6751 = vrot.slane %v6641, 4
        %v6752 = vsel %vm1484, %v6750, %v6751
        %v6753 = vrot.slane %v6642, 4
        %v6754 = vsel %vm1484, %v6751, %v6753
        %v6755 = vrot.slane %v6643, 4
        %v6756 = vrot.slane %v6644, 4
        %v6757 = vsel %vm1484, %v6755, %v6756
        %v6758 = vrot.slane %v6645, 4
        %v6759 = vsel %vm1484, %v6756, %v6758
        %v6760 = vrot.slane %v6646, 4
        %v6761 = vrot.slane %v6647, 4
        %v6762 = vsel %vm1484, %v6760, %v6761
        %v6763 = vrot.slane %v6648, 4
        %v6764 = vsel %vm1484, %v6761, %v6763
        %v6765 = vrot.slane %v6649, 4
        %v6766 = vrot.slane %v6650, 4
        %v6767 = vsel %vm1484, %v6765, %v6766
        %v6768 = vrot.slane %v6651, 4
        %v6769 = vsel %vm1484, %v6766, %v6768
        %v6770 = vrot.slane %v6652, 4
        %v6771 = vrot.slane %v6653, 4
        %v6772 = vsel %vm1484, %v6770, %v6771
        %v6773 = vrot.slane %v6654, 4
        %v6774 = vsel %vm1484, %v6771, %v6773
        %v6775 = vrot.slane %v6655, 4
        %v6776 = vrot.slane %v6656, 4
        %v6777 = vsel %vm1484, %v6775, %v6776
        %v6778 = vrot.slane %v6657, 4
        %v6779 = vsel %vm1484, %v6776, %v6778
        %v6780 = vrot.slane %v6658, 4
        %v6781 = vrot.slane %v6659, 4
        %v6782 = vsel %vm1484, %v6780, %v6781
        %v6783 = vrot.slane %v6660, 4
        %v6784 = vsel %vm1484, %v6781, %v6783
        %v6785 = vrot.slane %v6661, 4
        %v6786 = vrot.slane %v6662, 4
        %v6787 = vsel %vm1484, %v6785, %v6786
        %v6788 = vrot.slane %v6663, 4
        %v6789 = vsel %vm1484, %v6786, %v6788
        %v6790 = vrot.slane %v6664, 4
        %v6791 = vrot.slane %v6665, 4
        %v6792 = vsel %vm1484, %v6790, %v6791
        %v6793 = vrot.slane %v6666, 4
        %v6794 = vsel %vm1484, %v6791, %v6793
        %v6843 = vadd.f32 %v6569, %v6715
        %v6844 = vadd.f32 %v6570, %v6717
        %v6845 = vadd.f32 %v6571, %v6719
        %v6846 = vadd.f32 %v6572, %v6720
        %v6847 = vadd.f32 %v6573, %v6722
        %v6848 = vadd.f32 %v6574, %v6724
        %v6849 = vadd.f32 %v6575, %v6725
        %v6850 = vadd.f32 %v6576, %v6727
        %v6851 = vadd.f32 %v6577, %v6729
        %v6852 = vadd.f32 %v6578, %v6730
        %v6853 = vadd.f32 %v6579, %v6732
        %v6854 = vadd.f32 %v6580, %v6734
        %v6855 = vadd.f32 %v6581, %v6735
        %v6856 = vadd.f32 %v6582, %v6737
        %v6857 = vadd.f32 %v6583, %v6739
        %v6858 = vadd.f32 %v6584, %v6740
        %v6859 = vadd.f32 %v6585, %v6742
        %v6860 = vadd.f32 %v6586, %v6744
        %v6861 = vadd.f32 %v6587, %v6745
        %v6862 = vadd.f32 %v6588, %v6747
        %v6863 = vadd.f32 %v6589, %v6749
        %v6864 = vadd.f32 %v6590, %v6750
        %v6865 = vadd.f32 %v6591, %v6752
        %v6866 = vadd.f32 %v6592, %v6754
        %v6867 = vadd.f32 %v6593, %v6755
        %v6868 = vadd.f32 %v6594, %v6757
        %v6869 = vadd.f32 %v6595, %v6759
        %v6870 = vadd.f32 %v6596, %v6760
        %v6871 = vadd.f32 %v6597, %v6762
        %v6872 = vadd.f32 %v6598, %v6764
        %v6873 = vadd.f32 %v6599, %v6765
        %v6874 = vadd.f32 %v6600, %v6767
        %v6875 = vadd.f32 %v6601, %v6769
        %v6876 = vadd.f32 %v6602, %v6770
        %v6877 = vadd.f32 %v6603, %v6772
        %v6878 = vadd.f32 %v6604, %v6774
        %v6879 = vadd.f32 %v6605, %v6775
        %v6880 = vadd.f32 %v6606, %v6777
        %v6881 = vadd.f32 %v6607, %v6779
        %v6882 = vadd.f32 %v6608, %v6780
        %v6883 = vadd.f32 %v6609, %v6782
        %v6884 = vadd.f32 %v6610, %v6784
        %v6885 = vadd.f32 %v6611, %v6785
        %v6886 = vadd.f32 %v6612, %v6787
        %v6887 = vadd.f32 %v6613, %v6789
        %v6888 = vadd.f32 %v6614, %v6790
        %v6889 = vadd.f32 %v6615, %v6792
        %v6890 = vadd.f32 %v6616, %v6794
        %v6891 = vld [vmem:[%s1 + $0x1a] sm:$0x1]
        %v6892 = vperm.slane %v6891, 0
        %v6893 = vmul.f32 %v5698, %v6892
        %v6894 = vmul.f32 %v5699, %v6892
        %v6895 = vmul.f32 %v5700, %v6892
        %v6896 = vmul.f32 %v5702, %v6892
        %v6897 = vmul.f32 %v5703, %v6892
        %v6898 = vmul.f32 %v5704, %v6892
        %v6899 = vmul.f32 %v5706, %v6892
        %v6900 = vmul.f32 %v5707, %v6892
        %v6901 = vmul.f32 %v5708, %v6892
        %v6902 = vmul.f32 %v5710, %v6892
        %v6903 = vmul.f32 %v5711, %v6892
        %v6904 = vmul.f32 %v5712, %v6892
        %v6905 = vmul.f32 %v5714, %v6892
        %v6906 = vmul.f32 %v5715, %v6892
        %v6907 = vmul.f32 %v5716, %v6892
        %v6908 = vmul.f32 %v5718, %v6892
        %v6909 = vmul.f32 %v5719, %v6892
        %v6910 = vmul.f32 %v5720, %v6892
        %v6911 = vmul.f32 %v5722, %v6892
        %v6912 = vmul.f32 %v5723, %v6892
        %v6913 = vmul.f32 %v5724, %v6892
        %v6914 = vmul.f32 %v5726, %v6892
        %v6915 = vmul.f32 %v5727, %v6892
        %v6916 = vmul.f32 %v5728, %v6892
        %v6917 = vmul.f32 %v5730, %v6892
        %v6918 = vmul.f32 %v5731, %v6892
        %v6919 = vmul.f32 %v5732, %v6892
        %v6920 = vmul.f32 %v5734, %v6892
        %v6921 = vmul.f32 %v5735, %v6892
        %v6922 = vmul.f32 %v5736, %v6892
        %v6923 = vmul.f32 %v5738, %v6892
        %v6924 = vmul.f32 %v5739, %v6892
        %v6925 = vmul.f32 %v5740, %v6892
        %v6926 = vmul.f32 %v5742, %v6892
        %v6927 = vmul.f32 %v5743, %v6892
        %v6928 = vmul.f32 %v5744, %v6892
        %v6929 = vmul.f32 %v5746, %v6892
        %v6930 = vmul.f32 %v5747, %v6892
        %v6931 = vmul.f32 %v5748, %v6892
        %v6932 = vmul.f32 %v5750, %v6892
        %v6933 = vmul.f32 %v5751, %v6892
        %v6934 = vmul.f32 %v5752, %v6892
        %v6935 = vmul.f32 %v5754, %v6892
        %v6936 = vmul.f32 %v5755, %v6892
        %v6937 = vmul.f32 %v5756, %v6892
        %v6938 = vmul.f32 %v5758, %v6892
        %v6939 = vmul.f32 %v5759, %v6892
        %v6940 = vmul.f32 %v5760, %v6892
        %v6989 = vrot.slane %v6893, 5
        %v6990 = vrot.slane %v6894, 5
        %v6991 = vsel %vm1759, %v6989, %v6990
        %v6992 = vrot.slane %v6895, 5
        %v6993 = vsel %vm1759, %v6990, %v6992
        %v6994 = vrot.slane %v6896, 5
        %v6995 = vrot.slane %v6897, 5
        %v6996 = vsel %vm1759, %v6994, %v6995
        %v6997 = vrot.slane %v6898, 5
        %v6998 = vsel %vm1759, %v6995, %v6997
        %v6999 = vrot.slane %v6899, 5
        %v7000 = vrot.slane %v6900, 5
        %v7001 = vsel %vm1759, %v6999, %v7000
        %v7002 = vrot.slane %v6901, 5
        %v7003 = vsel %vm1759, %v7000, %v7002
        %v7004 = vrot.slane %v6902, 5
        %v7005 = vrot.slane %v6903, 5
        %v7006 = vsel %vm1759, %v7004, %v7005
        %v7007 = vrot.slane %v6904, 5
        %v7008 = vsel %vm1759, %v7005, %v7007
        %v7009 = vrot.slane %v6905, 5
        %v7010 = vrot.slane %v6906, 5
        %v7011 = vsel %vm1759, %v7009, %v7010
        %v7012 = vrot.slane %v6907, 5
        %v7013 = vsel %vm1759, %v7010, %v7012
        %v7014 = vrot.slane %v6908, 5
        %v7015 = vrot.slane %v6909, 5
        %v7016 = vsel %vm1759, %v7014, %v7015
        %v7017 = vrot.slane %v6910, 5
        %v7018 = vsel %vm1759, %v7015, %v7017
        %v7019 = vrot.slane %v6911, 5
        %v7020 = vrot.slane %v6912, 5
        %v7021 = vsel %vm1759, %v7019, %v7020
        %v7022 = vrot.slane %v6913, 5
        %v7023 = vsel %vm1759, %v7020, %v7022
        %v7024 = vrot.slane %v6914, 5
        %v7025 = vrot.slane %v6915, 5
        %v7026 = vsel %vm1759, %v7024, %v7025
        %v7027 = vrot.slane %v6916, 5
        %v7028 = vsel %vm1759, %v7025, %v7027
        %v7029 = vrot.slane %v6917, 5
        %v7030 = vrot.slane %v6918, 5
        %v7031 = vsel %vm1759, %v7029, %v7030
        %v7032 = vrot.slane %v6919, 5
        %v7033 = vsel %vm1759, %v7030, %v7032
        %v7034 = vrot.slane %v6920, 5
        %v7035 = vrot.slane %v6921, 5
        %v7036 = vsel %vm1759, %v7034, %v7035
        %v7037 = vrot.slane %v6922, 5
        %v7038 = vsel %vm1759, %v7035, %v7037
        %v7039 = vrot.slane %v6923, 5
        %v7040 = vrot.slane %v6924, 5
        %v7041 = vsel %vm1759, %v7039, %v7040
        %v7042 = vrot.slane %v6925, 5
        %v7043 = vsel %vm1759, %v7040, %v7042
        %v7044 = vrot.slane %v6926, 5
        %v7045 = vrot.slane %v6927, 5
        %v7046 = vsel %vm1759, %v7044, %v7045
        %v7047 = vrot.slane %v6928, 5
        %v7048 = vsel %vm1759, %v7045, %v7047
        %v7049 = vrot.slane %v6929, 5
        %v7050 = vrot.slane %v6930, 5
        %v7051 = vsel %vm1759, %v7049, %v7050
        %v7052 = vrot.slane %v6931, 5
        %v7053 = vsel %vm1759, %v7050, %v7052
        %v7054 = vrot.slane %v6932, 5
        %v7055 = vrot.slane %v6933, 5
        %v7056 = vsel %vm1759, %v7054, %v7055
        %v7057 = vrot.slane %v6934, 5
        %v7058 = vsel %vm1759, %v7055, %v7057
        %v7059 = vrot.slane %v6935, 5
        %v7060 = vrot.slane %v6936, 5
        %v7061 = vsel %vm1759, %v7059, %v7060
        %v7062 = vrot.slane %v6937, 5
        %v7063 = vsel %vm1759, %v7060, %v7062
        %v7064 = vrot.slane %v6938, 5
        %v7065 = vrot.slane %v6939, 5
        %v7066 = vsel %vm1759, %v7064, %v7065
        %v7067 = vrot.slane %v6940, 5
        %v7068 = vsel %vm1759, %v7065, %v7067
        %v7117 = vadd.f32 %v6843, %v6989
        %v7118 = vadd.f32 %v6844, %v6991
        %v7119 = vadd.f32 %v6845, %v6993
        %v7120 = vadd.f32 %v6846, %v6994
        %v7121 = vadd.f32 %v6847, %v6996
        %v7122 = vadd.f32 %v6848, %v6998
        %v7123 = vadd.f32 %v6849, %v6999
        %v7124 = vadd.f32 %v6850, %v7001
        %v7125 = vadd.f32 %v6851, %v7003
        %v7126 = vadd.f32 %v6852, %v7004
        %v7127 = vadd.f32 %v6853, %v7006
        %v7128 = vadd.f32 %v6854, %v7008
        %v7129 = vadd.f32 %v6855, %v7009
        %v7130 = vadd.f32 %v6856, %v7011
        %v7131 = vadd.f32 %v6857, %v7013
        %v7132 = vadd.f32 %v6858, %v7014
        %v7133 = vadd.f32 %v6859, %v7016
        %v7134 = vadd.f32 %v6860, %v7018
        %v7135 = vadd.f32 %v6861, %v7019
        %v7136 = vadd.f32 %v6862, %v7021
        %v7137 = vadd.f32 %v6863, %v7023
        %v7138 = vadd.f32 %v6864, %v7024
        %v7139 = vadd.f32 %v6865, %v7026
        %v7140 = vadd.f32 %v6866, %v7028
        %v7141 = vadd.f32 %v6867, %v7029
        %v7142 = vadd.f32 %v6868, %v7031
        %v7143 = vadd.f32 %v6869, %v7033
        %v7144 = vadd.f32 %v6870, %v7034
        %v7145 = vadd.f32 %v6871, %v7036
        %v7146 = vadd.f32 %v6872, %v7038
        %v7147 = vadd.f32 %v6873, %v7039
        %v7148 = vadd.f32 %v6874, %v7041
        %v7149 = vadd.f32 %v6875, %v7043
        %v7150 = vadd.f32 %v6876, %v7044
        %v7151 = vadd.f32 %v6877, %v7046
        %v7152 = vadd.f32 %v6878, %v7048
        %v7153 = vadd.f32 %v6879, %v7049
        %v7154 = vadd.f32 %v6880, %v7051
        %v7155 = vadd.f32 %v6881, %v7053
        %v7156 = vadd.f32 %v6882, %v7054
        %v7157 = vadd.f32 %v6883, %v7056
        %v7158 = vadd.f32 %v6884, %v7058
        %v7159 = vadd.f32 %v6885, %v7059
        %v7160 = vadd.f32 %v6886, %v7061
        %v7161 = vadd.f32 %v6887, %v7063
        %v7162 = vadd.f32 %v6888, %v7064
        %v7163 = vadd.f32 %v6889, %v7066
        %v7164 = vadd.f32 %v6890, %v7068
        %v7165 = vld [vmem:[%s1 + $0x1b] sm:$0x1]
        %v7166 = vperm.slane %v7165, 0
        %v7167 = vmul.f32 %v5698, %v7166
        %v7168 = vmul.f32 %v5699, %v7166
        %v7169 = vmul.f32 %v5700, %v7166
        %v7170 = vmul.f32 %v5702, %v7166
        %v7171 = vmul.f32 %v5703, %v7166
        %v7172 = vmul.f32 %v5704, %v7166
        %v7173 = vmul.f32 %v5706, %v7166
        %v7174 = vmul.f32 %v5707, %v7166
        %v7175 = vmul.f32 %v5708, %v7166
        %v7176 = vmul.f32 %v5710, %v7166
        %v7177 = vmul.f32 %v5711, %v7166
        %v7178 = vmul.f32 %v5712, %v7166
        %v7179 = vmul.f32 %v5714, %v7166
        %v7180 = vmul.f32 %v5715, %v7166
        %v7181 = vmul.f32 %v5716, %v7166
        %v7182 = vmul.f32 %v5718, %v7166
        %v7183 = vmul.f32 %v5719, %v7166
        %v7184 = vmul.f32 %v5720, %v7166
        %v7185 = vmul.f32 %v5722, %v7166
        %v7186 = vmul.f32 %v5723, %v7166
        %v7187 = vmul.f32 %v5724, %v7166
        %v7188 = vmul.f32 %v5726, %v7166
        %v7189 = vmul.f32 %v5727, %v7166
        %v7190 = vmul.f32 %v5728, %v7166
        %v7191 = vmul.f32 %v5730, %v7166
        %v7192 = vmul.f32 %v5731, %v7166
        %v7193 = vmul.f32 %v5732, %v7166
        %v7194 = vmul.f32 %v5734, %v7166
        %v7195 = vmul.f32 %v5735, %v7166
        %v7196 = vmul.f32 %v5736, %v7166
        %v7197 = vmul.f32 %v5738, %v7166
        %v7198 = vmul.f32 %v5739, %v7166
        %v7199 = vmul.f32 %v5740, %v7166
        %v7200 = vmul.f32 %v5742, %v7166
        %v7201 = vmul.f32 %v5743, %v7166
        %v7202 = vmul.f32 %v5744, %v7166
        %v7203 = vmul.f32 %v5746, %v7166
        %v7204 = vmul.f32 %v5747, %v7166
        %v7205 = vmul.f32 %v5748, %v7166
        %v7206 = vmul.f32 %v5750, %v7166
        %v7207 = vmul.f32 %v5751, %v7166
        %v7208 = vmul.f32 %v5752, %v7166
        %v7209 = vmul.f32 %v5754, %v7166
        %v7210 = vmul.f32 %v5755, %v7166
        %v7211 = vmul.f32 %v5756, %v7166
        %v7212 = vmul.f32 %v5758, %v7166
        %v7213 = vmul.f32 %v5759, %v7166
        %v7214 = vmul.f32 %v5760, %v7166
        %v7263 = vrot.slane %v7167, 6
        %v7264 = vrot.slane %v7168, 6
        %v7265 = vsel %vm2034, %v7263, %v7264
        %v7266 = vrot.slane %v7169, 6
        %v7267 = vsel %vm2034, %v7264, %v7266
        %v7268 = vrot.slane %v7170, 6
        %v7269 = vrot.slane %v7171, 6
        %v7270 = vsel %vm2034, %v7268, %v7269
        %v7271 = vrot.slane %v7172, 6
        %v7272 = vsel %vm2034, %v7269, %v7271
        %v7273 = vrot.slane %v7173, 6
        %v7274 = vrot.slane %v7174, 6
        %v7275 = vsel %vm2034, %v7273, %v7274
        %v7276 = vrot.slane %v7175, 6
        %v7277 = vsel %vm2034, %v7274, %v7276
        %v7278 = vrot.slane %v7176, 6
        %v7279 = vrot.slane %v7177, 6
        %v7280 = vsel %vm2034, %v7278, %v7279
        %v7281 = vrot.slane %v7178, 6
        %v7282 = vsel %vm2034, %v7279, %v7281
        %v7283 = vrot.slane %v7179, 6
        %v7284 = vrot.slane %v7180, 6
        %v7285 = vsel %vm2034, %v7283, %v7284
        %v7286 = vrot.slane %v7181, 6
        %v7287 = vsel %vm2034, %v7284, %v7286
        %v7288 = vrot.slane %v7182, 6
        %v7289 = vrot.slane %v7183, 6
        %v7290 = vsel %vm2034, %v7288, %v7289
        %v7291 = vrot.slane %v7184, 6
        %v7292 = vsel %vm2034, %v7289, %v7291
        %v7293 = vrot.slane %v7185, 6
        %v7294 = vrot.slane %v7186, 6
        %v7295 = vsel %vm2034, %v7293, %v7294
        %v7296 = vrot.slane %v7187, 6
        %v7297 = vsel %vm2034, %v7294, %v7296
        %v7298 = vrot.slane %v7188, 6
        %v7299 = vrot.slane %v7189, 6
        %v7300 = vsel %vm2034, %v7298, %v7299
        %v7301 = vrot.slane %v7190, 6
        %v7302 = vsel %vm2034, %v7299, %v7301
        %v7303 = vrot.slane %v7191, 6
        %v7304 = vrot.slane %v7192, 6
        %v7305 = vsel %vm2034, %v7303, %v7304
        %v7306 = vrot.slane %v7193, 6
        %v7307 = vsel %vm2034, %v7304, %v7306
        %v7308 = vrot.slane %v7194, 6
        %v7309 = vrot.slane %v7195, 6
        %v7310 = vsel %vm2034, %v7308, %v7309
        %v7311 = vrot.slane %v7196, 6
        %v7312 = vsel %vm2034, %v7309, %v7311
        %v7313 = vrot.slane %v7197, 6
        %v7314 = vrot.slane %v7198, 6
        %v7315 = vsel %vm2034, %v7313, %v7314
        %v7316 = vrot.slane %v7199, 6
        %v7317 = vsel %vm2034, %v7314, %v7316
        %v7318 = vrot.slane %v7200, 6
        %v7319 = vrot.slane %v7201, 6
        %v7320 = vsel %vm2034, %v7318, %v7319
        %v7321 = vrot.slane %v7202, 6
        %v7322 = vsel %vm2034, %v7319, %v7321
        %v7323 = vrot.slane %v7203, 6
        %v7324 = vrot.slane %v7204, 6
        %v7325 = vsel %vm2034, %v7323, %v7324
        %v7326 = vrot.slane %v7205, 6
        %v7327 = vsel %vm2034, %v7324, %v7326
        %v7328 = vrot.slane %v7206, 6
        %v7329 = vrot.slane %v7207, 6
        %v7330 = vsel %vm2034, %v7328, %v7329
        %v7331 = vrot.slane %v7208, 6
        %v7332 = vsel %vm2034, %v7329, %v7331
        %v7333 = vrot.slane %v7209, 6
        %v7334 = vrot.slane %v7210, 6
        %v7335 = vsel %vm2034, %v7333, %v7334
        %v7336 = vrot.slane %v7211, 6
        %v7337 = vsel %vm2034, %v7334, %v7336
        %v7338 = vrot.slane %v7212, 6
        %v7339 = vrot.slane %v7213, 6
        %v7340 = vsel %vm2034, %v7338, %v7339
        %v7341 = vrot.slane %v7214, 6
        %v7342 = vsel %vm2034, %v7339, %v7341
        %v7391 = vadd.f32 %v7117, %v7263
        %v7392 = vadd.f32 %v7118, %v7265
        %v7393 = vadd.f32 %v7119, %v7267
        %v7394 = vadd.f32 %v7120, %v7268
        %v7395 = vadd.f32 %v7121, %v7270
        %v7396 = vadd.f32 %v7122, %v7272
        %v7397 = vadd.f32 %v7123, %v7273
        %v7398 = vadd.f32 %v7124, %v7275
        %v7399 = vadd.f32 %v7125, %v7277
        %v7400 = vadd.f32 %v7126, %v7278
        %v7401 = vadd.f32 %v7127, %v7280
        %v7402 = vadd.f32 %v7128, %v7282
        %v7403 = vadd.f32 %v7129, %v7283
        %v7404 = vadd.f32 %v7130, %v7285
        %v7405 = vadd.f32 %v7131, %v7287
        %v7406 = vadd.f32 %v7132, %v7288
        %v7407 = vadd.f32 %v7133, %v7290
        %v7408 = vadd.f32 %v7134, %v7292
        %v7409 = vadd.f32 %v7135, %v7293
        %v7410 = vadd.f32 %v7136, %v7295
        %v7411 = vadd.f32 %v7137, %v7297
        %v7412 = vadd.f32 %v7138, %v7298
        %v7413 = vadd.f32 %v7139, %v7300
        %v7414 = vadd.f32 %v7140, %v7302
        %v7415 = vadd.f32 %v7141, %v7303
        %v7416 = vadd.f32 %v7142, %v7305
        %v7417 = vadd.f32 %v7143, %v7307
        %v7418 = vadd.f32 %v7144, %v7308
        %v7419 = vadd.f32 %v7145, %v7310
        %v7420 = vadd.f32 %v7146, %v7312
        %v7421 = vadd.f32 %v7147, %v7313
        %v7422 = vadd.f32 %v7148, %v7315
        %v7423 = vadd.f32 %v7149, %v7317
        %v7424 = vadd.f32 %v7150, %v7318
        %v7425 = vadd.f32 %v7151, %v7320
        %v7426 = vadd.f32 %v7152, %v7322
        %v7427 = vadd.f32 %v7153, %v7323
        %v7428 = vadd.f32 %v7154, %v7325
        %v7429 = vadd.f32 %v7155, %v7327
        %v7430 = vadd.f32 %v7156, %v7328
        %v7431 = vadd.f32 %v7157, %v7330
        %v7432 = vadd.f32 %v7158, %v7332
        %v7433 = vadd.f32 %v7159, %v7333
        %v7434 = vadd.f32 %v7160, %v7335
        %v7435 = vadd.f32 %v7161, %v7337
        %v7436 = vadd.f32 %v7162, %v7338
        %v7437 = vadd.f32 %v7163, %v7340
        %v7438 = vadd.f32 %v7164, %v7342
        %s7439 = scalar_lea.vmem [#allocation2], 128
        %v7440 = vld [vmem:[%s7439] sm:$0xff]
        %v7441 = vld [vmem:[%s7439 + $0x8] sm:$0xff]
        %v7442 = vld [vmem:[%s7439 + $0x10] sm:$0xff]
        %v7443 = vld [vmem:[%s7439 + $0x18] sm:$0x7]
        %v7444 = vld [vmem:[%s7439 + $0x20] sm:$0xff]
        %v7445 = vld [vmem:[%s7439 + $0x28] sm:$0xff]
        %v7446 = vld [vmem:[%s7439 + $0x30] sm:$0xff]
        %v7447 = vld [vmem:[%s7439 + $0x38] sm:$0x7]
        %v7448 = vld [vmem:[%s7439 + $0x40] sm:$0xff]
        %v7449 = vld [vmem:[%s7439 + $0x48] sm:$0xff]
        %v7450 = vld [vmem:[%s7439 + $0x50] sm:$0xff]
        %v7451 = vld [vmem:[%s7439 + $0x58] sm:$0x7]
        %v7452 = vld [vmem:[%s7439 + $0x60] sm:$0xff]
        %v7453 = vld [vmem:[%s7439 + $0x68] sm:$0xff]
        %v7454 = vld [vmem:[%s7439 + $0x70] sm:$0xff]
        %v7455 = vld [vmem:[%s7439 + $0x78] sm:$0x7]
        %v7456 = vld [vmem:[%s7439 + $0x80] sm:$0xff]
        %v7457 = vld [vmem:[%s7439 + $0x88] sm:$0xff]
        %v7458 = vld [vmem:[%s7439 + $0x90] sm:$0xff]
        %v7459 = vld [vmem:[%s7439 + $0x98] sm:$0x7]
        %v7460 = vld [vmem:[%s7439 + $0xa0] sm:$0xff]
        %v7461 = vld [vmem:[%s7439 + $0xa8] sm:$0xff]
        %v7462 = vld [vmem:[%s7439 + $0xb0] sm:$0xff]
        %v7463 = vld [vmem:[%s7439 + $0xb8] sm:$0x7]
        %v7464 = vld [vmem:[%s7439 + $0xc0] sm:$0xff]
        %v7465 = vld [vmem:[%s7439 + $0xc8] sm:$0xff]
        %v7466 = vld [vmem:[%s7439 + $0xd0] sm:$0xff]
        %v7467 = vld [vmem:[%s7439 + $0xd8] sm:$0x7]
        %v7468 = vld [vmem:[%s7439 + $0xe0] sm:$0xff]
        %v7469 = vld [vmem:[%s7439 + $0xe8] sm:$0xff]
        %v7470 = vld [vmem:[%s7439 + $0xf0] sm:$0xff]
        %v7471 = vld [vmem:[%s7439 + $0xf8] sm:$0x7]
        %v7472 = vld [vmem:[%s7439 + $0x100] sm:$0xff]
        %v7473 = vld [vmem:[%s7439 + $0x108] sm:$0xff]
        %v7474 = vld [vmem:[%s7439 + $0x110] sm:$0xff]
        %v7475 = vld [vmem:[%s7439 + $0x118] sm:$0x7]
        %v7476 = vld [vmem:[%s7439 + $0x120] sm:$0xff]
        %v7477 = vld [vmem:[%s7439 + $0x128] sm:$0xff]
        %v7478 = vld [vmem:[%s7439 + $0x130] sm:$0xff]
        %v7479 = vld [vmem:[%s7439 + $0x138] sm:$0x7]
        %v7480 = vld [vmem:[%s7439 + $0x140] sm:$0xff]
        %v7481 = vld [vmem:[%s7439 + $0x148] sm:$0xff]
        %v7482 = vld [vmem:[%s7439 + $0x150] sm:$0xff]
        %v7483 = vld [vmem:[%s7439 + $0x158] sm:$0x7]
        %v7484 = vld [vmem:[%s7439 + $0x160] sm:$0xff]
        %v7485 = vld [vmem:[%s7439 + $0x168] sm:$0xff]
        %v7486 = vld [vmem:[%s7439 + $0x170] sm:$0xff]
        %v7487 = vld [vmem:[%s7439 + $0x178] sm:$0x7]
        %v7488 = vld [vmem:[%s7439 + $0x180] sm:$0xff]
        %v7489 = vld [vmem:[%s7439 + $0x188] sm:$0xff]
        %v7490 = vld [vmem:[%s7439 + $0x190] sm:$0xff]
        %v7491 = vld [vmem:[%s7439 + $0x198] sm:$0x7]
        %v7492 = vld [vmem:[%s7439 + $0x1a0] sm:$0xff]
        %v7493 = vld [vmem:[%s7439 + $0x1a8] sm:$0xff]
        %v7494 = vld [vmem:[%s7439 + $0x1b0] sm:$0xff]
        %v7495 = vld [vmem:[%s7439 + $0x1b8] sm:$0x7]
        %v7496 = vld [vmem:[%s7439 + $0x1c0] sm:$0xff]
        %v7497 = vld [vmem:[%s7439 + $0x1c8] sm:$0xff]
        %v7498 = vld [vmem:[%s7439 + $0x1d0] sm:$0xff]
        %v7499 = vld [vmem:[%s7439 + $0x1d8] sm:$0x7]
        %v7500 = vld [vmem:[%s7439 + $0x1e0] sm:$0xff]
        %v7501 = vld [vmem:[%s7439 + $0x1e8] sm:$0xff]
        %v7502 = vld [vmem:[%s7439 + $0x1f0] sm:$0xff]
        %v7503 = vld [vmem:[%s7439 + $0x1f8] sm:$0x7]
        %v7504 = vld [vmem:[%s1 + $0x1c] sm:$0x1]
        %v7505 = vperm.slane %v7504, 0
        %v7506 = vmul.f32 %v7440, %v7505
        %v7507 = vmul.f32 %v7441, %v7505
        %v7508 = vmul.f32 %v7442, %v7505
        %v7509 = vmul.f32 %v7444, %v7505
        %v7510 = vmul.f32 %v7445, %v7505
        %v7511 = vmul.f32 %v7446, %v7505
        %v7512 = vmul.f32 %v7448, %v7505
        %v7513 = vmul.f32 %v7449, %v7505
        %v7514 = vmul.f32 %v7450, %v7505
        %v7515 = vmul.f32 %v7452, %v7505
        %v7516 = vmul.f32 %v7453, %v7505
        %v7517 = vmul.f32 %v7454, %v7505
        %v7518 = vmul.f32 %v7456, %v7505
        %v7519 = vmul.f32 %v7457, %v7505
        %v7520 = vmul.f32 %v7458, %v7505
        %v7521 = vmul.f32 %v7460, %v7505
        %v7522 = vmul.f32 %v7461, %v7505
        %v7523 = vmul.f32 %v7462, %v7505
        %v7524 = vmul.f32 %v7464, %v7505
        %v7525 = vmul.f32 %v7465, %v7505
        %v7526 = vmul.f32 %v7466, %v7505
        %v7527 = vmul.f32 %v7468, %v7505
        %v7528 = vmul.f32 %v7469, %v7505
        %v7529 = vmul.f32 %v7470, %v7505
        %v7530 = vmul.f32 %v7472, %v7505
        %v7531 = vmul.f32 %v7473, %v7505
        %v7532 = vmul.f32 %v7474, %v7505
        %v7533 = vmul.f32 %v7476, %v7505
        %v7534 = vmul.f32 %v7477, %v7505
        %v7535 = vmul.f32 %v7478, %v7505
        %v7536 = vmul.f32 %v7480, %v7505
        %v7537 = vmul.f32 %v7481, %v7505
        %v7538 = vmul.f32 %v7482, %v7505
        %v7539 = vmul.f32 %v7484, %v7505
        %v7540 = vmul.f32 %v7485, %v7505
        %v7541 = vmul.f32 %v7486, %v7505
        %v7542 = vmul.f32 %v7488, %v7505
        %v7543 = vmul.f32 %v7489, %v7505
        %v7544 = vmul.f32 %v7490, %v7505
        %v7545 = vmul.f32 %v7492, %v7505
        %v7546 = vmul.f32 %v7493, %v7505
        %v7547 = vmul.f32 %v7494, %v7505
        %v7548 = vmul.f32 %v7496, %v7505
        %v7549 = vmul.f32 %v7497, %v7505
        %v7550 = vmul.f32 %v7498, %v7505
        %v7551 = vmul.f32 %v7500, %v7505
        %v7552 = vmul.f32 %v7501, %v7505
        %v7553 = vmul.f32 %v7502, %v7505
        %v7554 = vadd.f32 %v7391, %v7506
        %v7555 = vadd.f32 %v7392, %v7507
        %v7556 = vadd.f32 %v7393, %v7508
        %v7557 = vadd.f32 %v7394, %v7509
        %v7558 = vadd.f32 %v7395, %v7510
        %v7559 = vadd.f32 %v7396, %v7511
        %v7560 = vadd.f32 %v7397, %v7512
        %v7561 = vadd.f32 %v7398, %v7513
        %v7562 = vadd.f32 %v7399, %v7514
        %v7563 = vadd.f32 %v7400, %v7515
        %v7564 = vadd.f32 %v7401, %v7516
        %v7565 = vadd.f32 %v7402, %v7517
        %v7566 = vadd.f32 %v7403, %v7518
        %v7567 = vadd.f32 %v7404, %v7519
        %v7568 = vadd.f32 %v7405, %v7520
        %v7569 = vadd.f32 %v7406, %v7521
        %v7570 = vadd.f32 %v7407, %v7522
        %v7571 = vadd.f32 %v7408, %v7523
        %v7572 = vadd.f32 %v7409, %v7524
        %v7573 = vadd.f32 %v7410, %v7525
        %v7574 = vadd.f32 %v7411, %v7526
        %v7575 = vadd.f32 %v7412, %v7527
        %v7576 = vadd.f32 %v7413, %v7528
        %v7577 = vadd.f32 %v7414, %v7529
        %v7578 = vadd.f32 %v7415, %v7530
        %v7579 = vadd.f32 %v7416, %v7531
        %v7580 = vadd.f32 %v7417, %v7532
        %v7581 = vadd.f32 %v7418, %v7533
        %v7582 = vadd.f32 %v7419, %v7534
        %v7583 = vadd.f32 %v7420, %v7535
        %v7584 = vadd.f32 %v7421, %v7536
        %v7585 = vadd.f32 %v7422, %v7537
        %v7586 = vadd.f32 %v7423, %v7538
        %v7587 = vadd.f32 %v7424, %v7539
        %v7588 = vadd.f32 %v7425, %v7540
        %v7589 = vadd.f32 %v7426, %v7541
        %v7590 = vadd.f32 %v7427, %v7542
        %v7591 = vadd.f32 %v7428, %v7543
        %v7592 = vadd.f32 %v7429, %v7544
        %v7593 = vadd.f32 %v7430, %v7545
        %v7594 = vadd.f32 %v7431, %v7546
        %v7595 = vadd.f32 %v7432, %v7547
        %v7596 = vadd.f32 %v7433, %v7548
        %v7597 = vadd.f32 %v7434, %v7549
        %v7598 = vadd.f32 %v7435, %v7550
        %v7599 = vadd.f32 %v7436, %v7551
        %v7600 = vadd.f32 %v7437, %v7552
        %v7601 = vadd.f32 %v7438, %v7553
        %v7602 = vld [vmem:[%s1 + $0x1d] sm:$0x1]
        %v7603 = vperm.slane %v7602, 0
        %v7604 = vmul.f32 %v7440, %v7603
        %v7605 = vmul.f32 %v7441, %v7603
        %v7606 = vmul.f32 %v7442, %v7603
        %v7607 = vmul.f32 %v7444, %v7603
        %v7608 = vmul.f32 %v7445, %v7603
        %v7609 = vmul.f32 %v7446, %v7603
        %v7610 = vmul.f32 %v7448, %v7603
        %v7611 = vmul.f32 %v7449, %v7603
        %v7612 = vmul.f32 %v7450, %v7603
        %v7613 = vmul.f32 %v7452, %v7603
        %v7614 = vmul.f32 %v7453, %v7603
        %v7615 = vmul.f32 %v7454, %v7603
        %v7616 = vmul.f32 %v7456, %v7603
        %v7617 = vmul.f32 %v7457, %v7603
        %v7618 = vmul.f32 %v7458, %v7603
        %v7619 = vmul.f32 %v7460, %v7603
        %v7620 = vmul.f32 %v7461, %v7603
        %v7621 = vmul.f32 %v7462, %v7603
        %v7622 = vmul.f32 %v7464, %v7603
        %v7623 = vmul.f32 %v7465, %v7603
        %v7624 = vmul.f32 %v7466, %v7603
        %v7625 = vmul.f32 %v7468, %v7603
        %v7626 = vmul.f32 %v7469, %v7603
        %v7627 = vmul.f32 %v7470, %v7603
        %v7628 = vmul.f32 %v7472, %v7603
        %v7629 = vmul.f32 %v7473, %v7603
        %v7630 = vmul.f32 %v7474, %v7603
        %v7631 = vmul.f32 %v7476, %v7603
        %v7632 = vmul.f32 %v7477, %v7603
        %v7633 = vmul.f32 %v7478, %v7603
        %v7634 = vmul.f32 %v7480, %v7603
        %v7635 = vmul.f32 %v7481, %v7603
        %v7636 = vmul.f32 %v7482, %v7603
        %v7637 = vmul.f32 %v7484, %v7603
        %v7638 = vmul.f32 %v7485, %v7603
        %v7639 = vmul.f32 %v7486, %v7603
        %v7640 = vmul.f32 %v7488, %v7603
        %v7641 = vmul.f32 %v7489, %v7603
        %v7642 = vmul.f32 %v7490, %v7603
        %v7643 = vmul.f32 %v7492, %v7603
        %v7644 = vmul.f32 %v7493, %v7603
        %v7645 = vmul.f32 %v7494, %v7603
        %v7646 = vmul.f32 %v7496, %v7603
        %v7647 = vmul.f32 %v7497, %v7603
        %v7648 = vmul.f32 %v7498, %v7603
        %v7649 = vmul.f32 %v7500, %v7603
        %v7650 = vmul.f32 %v7501, %v7603
        %v7651 = vmul.f32 %v7502, %v7603
        %v7700 = vrot.slane %v7604, 1
        %v7701 = vrot.slane %v7605, 1
        %v7702 = vsel %vm723, %v7700, %v7701
        %v7703 = vrot.slane %v7606, 1
        %v7704 = vsel %vm723, %v7701, %v7703
        %v7705 = vrot.slane %v7607, 1
        %v7706 = vrot.slane %v7608, 1
        %v7707 = vsel %vm723, %v7705, %v7706
        %v7708 = vrot.slane %v7609, 1
        %v7709 = vsel %vm723, %v7706, %v7708
        %v7710 = vrot.slane %v7610, 1
        %v7711 = vrot.slane %v7611, 1
        %v7712 = vsel %vm723, %v7710, %v7711
        %v7713 = vrot.slane %v7612, 1
        %v7714 = vsel %vm723, %v7711, %v7713
        %v7715 = vrot.slane %v7613, 1
        %v7716 = vrot.slane %v7614, 1
        %v7717 = vsel %vm723, %v7715, %v7716
        %v7718 = vrot.slane %v7615, 1
        %v7719 = vsel %vm723, %v7716, %v7718
        %v7720 = vrot.slane %v7616, 1
        %v7721 = vrot.slane %v7617, 1
        %v7722 = vsel %vm723, %v7720, %v7721
        %v7723 = vrot.slane %v7618, 1
        %v7724 = vsel %vm723, %v7721, %v7723
        %v7725 = vrot.slane %v7619, 1
        %v7726 = vrot.slane %v7620, 1
        %v7727 = vsel %vm723, %v7725, %v7726
        %v7728 = vrot.slane %v7621, 1
        %v7729 = vsel %vm723, %v7726, %v7728
        %v7730 = vrot.slane %v7622, 1
        %v7731 = vrot.slane %v7623, 1
        %v7732 = vsel %vm723, %v7730, %v7731
        %v7733 = vrot.slane %v7624, 1
        %v7734 = vsel %vm723, %v7731, %v7733
        %v7735 = vrot.slane %v7625, 1
        %v7736 = vrot.slane %v7626, 1
        %v7737 = vsel %vm723, %v7735, %v7736
        %v7738 = vrot.slane %v7627, 1
        %v7739 = vsel %vm723, %v7736, %v7738
        %v7740 = vrot.slane %v7628, 1
        %v7741 = vrot.slane %v7629, 1
        %v7742 = vsel %vm723, %v7740, %v7741
        %v7743 = vrot.slane %v7630, 1
        %v7744 = vsel %vm723, %v7741, %v7743
        %v7745 = vrot.slane %v7631, 1
        %v7746 = vrot.slane %v7632, 1
        %v7747 = vsel %vm723, %v7745, %v7746
        %v7748 = vrot.slane %v7633, 1
        %v7749 = vsel %vm723, %v7746, %v7748
        %v7750 = vrot.slane %v7634, 1
        %v7751 = vrot.slane %v7635, 1
        %v7752 = vsel %vm723, %v7750, %v7751
        %v7753 = vrot.slane %v7636, 1
        %v7754 = vsel %vm723, %v7751, %v7753
        %v7755 = vrot.slane %v7637, 1
        %v7756 = vrot.slane %v7638, 1
        %v7757 = vsel %vm723, %v7755, %v7756
        %v7758 = vrot.slane %v7639, 1
        %v7759 = vsel %vm723, %v7756, %v7758
        %v7760 = vrot.slane %v7640, 1
        %v7761 = vrot.slane %v7641, 1
        %v7762 = vsel %vm723, %v7760, %v7761
        %v7763 = vrot.slane %v7642, 1
        %v7764 = vsel %vm723, %v7761, %v7763
        %v7765 = vrot.slane %v7643, 1
        %v7766 = vrot.slane %v7644, 1
        %v7767 = vsel %vm723, %v7765, %v7766
        %v7768 = vrot.slane %v7645, 1
        %v7769 = vsel %vm723, %v7766, %v7768
        %v7770 = vrot.slane %v7646, 1
        %v7771 = vrot.slane %v7647, 1
        %v7772 = vsel %vm723, %v7770, %v7771
        %v7773 = vrot.slane %v7648, 1
        %v7774 = vsel %vm723, %v7771, %v7773
        %v7775 = vrot.slane %v7649, 1
        %v7776 = vrot.slane %v7650, 1
        %v7777 = vsel %vm723, %v7775, %v7776
        %v7778 = vrot.slane %v7651, 1
        %v7779 = vsel %vm723, %v7776, %v7778
        %v7828 = vadd.f32 %v7554, %v7702
        %v7829 = vadd.f32 %v7555, %v7704
        %v7830 = vadd.f32 %v7556, %v7703
        %v7831 = vadd.f32 %v7557, %v7707
        %v7832 = vadd.f32 %v7558, %v7709
        %v7833 = vadd.f32 %v7559, %v7708
        %v7834 = vadd.f32 %v7560, %v7712
        %v7835 = vadd.f32 %v7561, %v7714
        %v7836 = vadd.f32 %v7562, %v7713
        %v7837 = vadd.f32 %v7563, %v7717
        %v7838 = vadd.f32 %v7564, %v7719
        %v7839 = vadd.f32 %v7565, %v7718
        %v7840 = vadd.f32 %v7566, %v7722
        %v7841 = vadd.f32 %v7567, %v7724
        %v7842 = vadd.f32 %v7568, %v7723
        %v7843 = vadd.f32 %v7569, %v7727
        %v7844 = vadd.f32 %v7570, %v7729
        %v7845 = vadd.f32 %v7571, %v7728
        %v7846 = vadd.f32 %v7572, %v7732
        %v7847 = vadd.f32 %v7573, %v7734
        %v7848 = vadd.f32 %v7574, %v7733
        %v7849 = vadd.f32 %v7575, %v7737
        %v7850 = vadd.f32 %v7576, %v7739
        %v7851 = vadd.f32 %v7577, %v7738
        %v7852 = vadd.f32 %v7578, %v7742
        %v7853 = vadd.f32 %v7579, %v7744
        %v7854 = vadd.f32 %v7580, %v7743
        %v7855 = vadd.f32 %v7581, %v7747
        %v7856 = vadd.f32 %v7582, %v7749
        %v7857 = vadd.f32 %v7583, %v7748
        %v7858 = vadd.f32 %v7584, %v7752
        %v7859 = vadd.f32 %v7585, %v7754
        %v7860 = vadd.f32 %v7586, %v7753
        %v7861 = vadd.f32 %v7587, %v7757
        %v7862 = vadd.f32 %v7588, %v7759
        %v7863 = vadd.f32 %v7589, %v7758
        %v7864 = vadd.f32 %v7590, %v7762
        %v7865 = vadd.f32 %v7591, %v7764
        %v7866 = vadd.f32 %v7592, %v7763
        %v7867 = vadd.f32 %v7593, %v7767
        %v7868 = vadd.f32 %v7594, %v7769
        %v7869 = vadd.f32 %v7595, %v7768
        %v7870 = vadd.f32 %v7596, %v7772
        %v7871 = vadd.f32 %v7597, %v7774
        %v7872 = vadd.f32 %v7598, %v7773
        %v7873 = vadd.f32 %v7599, %v7777
        %v7874 = vadd.f32 %v7600, %v7779
        %v7875 = vadd.f32 %v7601, %v7778
        %v7876 = vld [vmem:[%s1 + $0x1e] sm:$0x1]
        %v7877 = vperm.slane %v7876, 0
        %v7878 = vmul.f32 %v7440, %v7877
        %v7879 = vmul.f32 %v7441, %v7877
        %v7880 = vmul.f32 %v7442, %v7877
        %v7881 = vmul.f32 %v7444, %v7877
        %v7882 = vmul.f32 %v7445, %v7877
        %v7883 = vmul.f32 %v7446, %v7877
        %v7884 = vmul.f32 %v7448, %v7877
        %v7885 = vmul.f32 %v7449, %v7877
        %v7886 = vmul.f32 %v7450, %v7877
        %v7887 = vmul.f32 %v7452, %v7877
        %v7888 = vmul.f32 %v7453, %v7877
        %v7889 = vmul.f32 %v7454, %v7877
        %v7890 = vmul.f32 %v7456, %v7877
        %v7891 = vmul.f32 %v7457, %v7877
        %v7892 = vmul.f32 %v7458, %v7877
        %v7893 = vmul.f32 %v7460, %v7877
        %v7894 = vmul.f32 %v7461, %v7877
        %v7895 = vmul.f32 %v7462, %v7877
        %v7896 = vmul.f32 %v7464, %v7877
        %v7897 = vmul.f32 %v7465, %v7877
        %v7898 = vmul.f32 %v7466, %v7877
        %v7899 = vmul.f32 %v7468, %v7877
        %v7900 = vmul.f32 %v7469, %v7877
        %v7901 = vmul.f32 %v7470, %v7877
        %v7902 = vmul.f32 %v7472, %v7877
        %v7903 = vmul.f32 %v7473, %v7877
        %v7904 = vmul.f32 %v7474, %v7877
        %v7905 = vmul.f32 %v7476, %v7877
        %v7906 = vmul.f32 %v7477, %v7877
        %v7907 = vmul.f32 %v7478, %v7877
        %v7908 = vmul.f32 %v7480, %v7877
        %v7909 = vmul.f32 %v7481, %v7877
        %v7910 = vmul.f32 %v7482, %v7877
        %v7911 = vmul.f32 %v7484, %v7877
        %v7912 = vmul.f32 %v7485, %v7877
        %v7913 = vmul.f32 %v7486, %v7877
        %v7914 = vmul.f32 %v7488, %v7877
        %v7915 = vmul.f32 %v7489, %v7877
        %v7916 = vmul.f32 %v7490, %v7877
        %v7917 = vmul.f32 %v7492, %v7877
        %v7918 = vmul.f32 %v7493, %v7877
        %v7919 = vmul.f32 %v7494, %v7877
        %v7920 = vmul.f32 %v7496, %v7877
        %v7921 = vmul.f32 %v7497, %v7877
        %v7922 = vmul.f32 %v7498, %v7877
        %v7923 = vmul.f32 %v7500, %v7877
        %v7924 = vmul.f32 %v7501, %v7877
        %v7925 = vmul.f32 %v7502, %v7877
        %v7974 = vrot.slane %v7878, 2
        %v7975 = vrot.slane %v7879, 2
        %v7976 = vsel %vm998, %v7974, %v7975
        %v7977 = vrot.slane %v7880, 2
        %v7978 = vsel %vm998, %v7975, %v7977
        %v7979 = vrot.slane %v7881, 2
        %v7980 = vrot.slane %v7882, 2
        %v7981 = vsel %vm998, %v7979, %v7980
        %v7982 = vrot.slane %v7883, 2
        %v7983 = vsel %vm998, %v7980, %v7982
        %v7984 = vrot.slane %v7884, 2
        %v7985 = vrot.slane %v7885, 2
        %v7986 = vsel %vm998, %v7984, %v7985
        %v7987 = vrot.slane %v7886, 2
        %v7988 = vsel %vm998, %v7985, %v7987
        %v7989 = vrot.slane %v7887, 2
        %v7990 = vrot.slane %v7888, 2
        %v7991 = vsel %vm998, %v7989, %v7990
        %v7992 = vrot.slane %v7889, 2
        %v7993 = vsel %vm998, %v7990, %v7992
        %v7994 = vrot.slane %v7890, 2
        %v7995 = vrot.slane %v7891, 2
        %v7996 = vsel %vm998, %v7994, %v7995
        %v7997 = vrot.slane %v7892, 2
        %v7998 = vsel %vm998, %v7995, %v7997
        %v7999 = vrot.slane %v7893, 2
        %v8000 = vrot.slane %v7894, 2
        %v8001 = vsel %vm998, %v7999, %v8000
        %v8002 = vrot.slane %v7895, 2
        %v8003 = vsel %vm998, %v8000, %v8002
        %v8004 = vrot.slane %v7896, 2
        %v8005 = vrot.slane %v7897, 2
        %v8006 = vsel %vm998, %v8004, %v8005
        %v8007 = vrot.slane %v7898, 2
        %v8008 = vsel %vm998, %v8005, %v8007
        %v8009 = vrot.slane %v7899, 2
        %v8010 = vrot.slane %v7900, 2
        %v8011 = vsel %vm998, %v8009, %v8010
        %v8012 = vrot.slane %v7901, 2
        %v8013 = vsel %vm998, %v8010, %v8012
        %v8014 = vrot.slane %v7902, 2
        %v8015 = vrot.slane %v7903, 2
        %v8016 = vsel %vm998, %v8014, %v8015
        %v8017 = vrot.slane %v7904, 2
        %v8018 = vsel %vm998, %v8015, %v8017
        %v8019 = vrot.slane %v7905, 2
        %v8020 = vrot.slane %v7906, 2
        %v8021 = vsel %vm998, %v8019, %v8020
        %v8022 = vrot.slane %v7907, 2
        %v8023 = vsel %vm998, %v8020, %v8022
        %v8024 = vrot.slane %v7908, 2
        %v8025 = vrot.slane %v7909, 2
        %v8026 = vsel %vm998, %v8024, %v8025
        %v8027 = vrot.slane %v7910, 2
        %v8028 = vsel %vm998, %v8025, %v8027
        %v8029 = vrot.slane %v7911, 2
        %v8030 = vrot.slane %v7912, 2
        %v8031 = vsel %vm998, %v8029, %v8030
        %v8032 = vrot.slane %v7913, 2
        %v8033 = vsel %vm998, %v8030, %v8032
        %v8034 = vrot.slane %v7914, 2
        %v8035 = vrot.slane %v7915, 2
        %v8036 = vsel %vm998, %v8034, %v8035
        %v8037 = vrot.slane %v7916, 2
        %v8038 = vsel %vm998, %v8035, %v8037
        %v8039 = vrot.slane %v7917, 2
        %v8040 = vrot.slane %v7918, 2
        %v8041 = vsel %vm998, %v8039, %v8040
        %v8042 = vrot.slane %v7919, 2
        %v8043 = vsel %vm998, %v8040, %v8042
        %v8044 = vrot.slane %v7920, 2
        %v8045 = vrot.slane %v7921, 2
        %v8046 = vsel %vm998, %v8044, %v8045
        %v8047 = vrot.slane %v7922, 2
        %v8048 = vsel %vm998, %v8045, %v8047
        %v8049 = vrot.slane %v7923, 2
        %v8050 = vrot.slane %v7924, 2
        %v8051 = vsel %vm998, %v8049, %v8050
        %v8052 = vrot.slane %v7925, 2
        %v8053 = vsel %vm998, %v8050, %v8052
        %v8102 = vadd.f32 %v7828, %v7976
        %v8103 = vadd.f32 %v7829, %v7978
        %v8104 = vadd.f32 %v7830, %v7977
        %v8105 = vadd.f32 %v7831, %v7981
        %v8106 = vadd.f32 %v7832, %v7983
        %v8107 = vadd.f32 %v7833, %v7982
        %v8108 = vadd.f32 %v7834, %v7986
        %v8109 = vadd.f32 %v7835, %v7988
        %v8110 = vadd.f32 %v7836, %v7987
        %v8111 = vadd.f32 %v7837, %v7991
        %v8112 = vadd.f32 %v7838, %v7993
        %v8113 = vadd.f32 %v7839, %v7992
        %v8114 = vadd.f32 %v7840, %v7996
        %v8115 = vadd.f32 %v7841, %v7998
        %v8116 = vadd.f32 %v7842, %v7997
        %v8117 = vadd.f32 %v7843, %v8001
        %v8118 = vadd.f32 %v7844, %v8003
        %v8119 = vadd.f32 %v7845, %v8002
        %v8120 = vadd.f32 %v7846, %v8006
        %v8121 = vadd.f32 %v7847, %v8008
        %v8122 = vadd.f32 %v7848, %v8007
        %v8123 = vadd.f32 %v7849, %v8011
        %v8124 = vadd.f32 %v7850, %v8013
        %v8125 = vadd.f32 %v7851, %v8012
        %v8126 = vadd.f32 %v7852, %v8016
        %v8127 = vadd.f32 %v7853, %v8018
        %v8128 = vadd.f32 %v7854, %v8017
        %v8129 = vadd.f32 %v7855, %v8021
        %v8130 = vadd.f32 %v7856, %v8023
        %v8131 = vadd.f32 %v7857, %v8022
        %v8132 = vadd.f32 %v7858, %v8026
        %v8133 = vadd.f32 %v7859, %v8028
        %v8134 = vadd.f32 %v7860, %v8027
        %v8135 = vadd.f32 %v7861, %v8031
        %v8136 = vadd.f32 %v7862, %v8033
        %v8137 = vadd.f32 %v7863, %v8032
        %v8138 = vadd.f32 %v7864, %v8036
        %v8139 = vadd.f32 %v7865, %v8038
        %v8140 = vadd.f32 %v7866, %v8037
        %v8141 = vadd.f32 %v7867, %v8041
        %v8142 = vadd.f32 %v7868, %v8043
        %v8143 = vadd.f32 %v7869, %v8042
        %v8144 = vadd.f32 %v7870, %v8046
        %v8145 = vadd.f32 %v7871, %v8048
        %v8146 = vadd.f32 %v7872, %v8047
        %v8147 = vadd.f32 %v7873, %v8051
        %v8148 = vadd.f32 %v7874, %v8053
        %v8149 = vadd.f32 %v7875, %v8052
        %v8150 = vld [vmem:[%s1 + $0x1f] sm:$0x1]
        %v8151 = vperm.slane %v8150, 0
        %v8152 = vmul.f32 %v7441, %v8151
        %v8153 = vmul.f32 %v7442, %v8151
        %v8154 = vmul.f32 %v7445, %v8151
        %v8155 = vmul.f32 %v7446, %v8151
        %v8156 = vmul.f32 %v7449, %v8151
        %v8157 = vmul.f32 %v7450, %v8151
        %v8158 = vmul.f32 %v7453, %v8151
        %v8159 = vmul.f32 %v7454, %v8151
        %v8160 = vmul.f32 %v7457, %v8151
        %v8161 = vmul.f32 %v7458, %v8151
        %v8162 = vmul.f32 %v7461, %v8151
        %v8163 = vmul.f32 %v7462, %v8151
        %v8164 = vmul.f32 %v7465, %v8151
        %v8165 = vmul.f32 %v7466, %v8151
        %v8166 = vmul.f32 %v7469, %v8151
        %v8167 = vmul.f32 %v7470, %v8151
        %v8168 = vmul.f32 %v7473, %v8151
        %v8169 = vmul.f32 %v7474, %v8151
        %v8170 = vmul.f32 %v7477, %v8151
        %v8171 = vmul.f32 %v7478, %v8151
        %v8172 = vmul.f32 %v7481, %v8151
        %v8173 = vmul.f32 %v7482, %v8151
        %v8174 = vmul.f32 %v7485, %v8151
        %v8175 = vmul.f32 %v7486, %v8151
        %v8176 = vmul.f32 %v7489, %v8151
        %v8177 = vmul.f32 %v7490, %v8151
        %v8178 = vmul.f32 %v7493, %v8151
        %v8179 = vmul.f32 %v7494, %v8151
        %v8180 = vmul.f32 %v7497, %v8151
        %v8181 = vmul.f32 %v7498, %v8151
        %v8182 = vmul.f32 %v7501, %v8151
        %v8183 = vmul.f32 %v7502, %v8151
        %v8216 = vrot.slane %v8152, 3
        %v8217 = vrot.slane %v8153, 3
        %v8218 = vsel %vm1241, %v8216, %v8217
        %v8219 = vrot.slane %v8154, 3
        %v8220 = vrot.slane %v8155, 3
        %v8221 = vsel %vm1241, %v8219, %v8220
        %v8222 = vrot.slane %v8156, 3
        %v8223 = vrot.slane %v8157, 3
        %v8224 = vsel %vm1241, %v8222, %v8223
        %v8225 = vrot.slane %v8158, 3
        %v8226 = vrot.slane %v8159, 3
        %v8227 = vsel %vm1241, %v8225, %v8226
        %v8228 = vrot.slane %v8160, 3
        %v8229 = vrot.slane %v8161, 3
        %v8230 = vsel %vm1241, %v8228, %v8229
        %v8231 = vrot.slane %v8162, 3
        %v8232 = vrot.slane %v8163, 3
        %v8233 = vsel %vm1241, %v8231, %v8232
        %v8234 = vrot.slane %v8164, 3
        %v8235 = vrot.slane %v8165, 3
        %v8236 = vsel %vm1241, %v8234, %v8235
        %v8237 = vrot.slane %v8166, 3
        %v8238 = vrot.slane %v8167, 3
        %v8239 = vsel %vm1241, %v8237, %v8238
        %v8240 = vrot.slane %v8168, 3
        %v8241 = vrot.slane %v8169, 3
        %v8242 = vsel %vm1241, %v8240, %v8241
        %v8243 = vrot.slane %v8170, 3
        %v8244 = vrot.slane %v8171, 3
        %v8245 = vsel %vm1241, %v8243, %v8244
        %v8246 = vrot.slane %v8172, 3
        %v8247 = vrot.slane %v8173, 3
        %v8248 = vsel %vm1241, %v8246, %v8247
        %v8249 = vrot.slane %v8174, 3
        %v8250 = vrot.slane %v8175, 3
        %v8251 = vsel %vm1241, %v8249, %v8250
        %v8252 = vrot.slane %v8176, 3
        %v8253 = vrot.slane %v8177, 3
        %v8254 = vsel %vm1241, %v8252, %v8253
        %v8255 = vrot.slane %v8178, 3
        %v8256 = vrot.slane %v8179, 3
        %v8257 = vsel %vm1241, %v8255, %v8256
        %v8258 = vrot.slane %v8180, 3
        %v8259 = vrot.slane %v8181, 3
        %v8260 = vsel %vm1241, %v8258, %v8259
        %v8261 = vrot.slane %v8182, 3
        %v8262 = vrot.slane %v8183, 3
        %v8263 = vsel %vm1241, %v8261, %v8262
        %v8312 = vadd.f32 %v8102, %v8216
        %v8313 = vadd.f32 %v8103, %v8218
        %v8314 = vadd.f32 %v8104, %v8217
        %v8315 = vadd.f32 %v8105, %v8219
        %v8316 = vadd.f32 %v8106, %v8221
        %v8317 = vadd.f32 %v8107, %v8220
        %v8318 = vadd.f32 %v8108, %v8222
        %v8319 = vadd.f32 %v8109, %v8224
        %v8320 = vadd.f32 %v8110, %v8223
        %v8321 = vadd.f32 %v8111, %v8225
        %v8322 = vadd.f32 %v8112, %v8227
        %v8323 = vadd.f32 %v8113, %v8226
        %v8324 = vadd.f32 %v8114, %v8228
        %v8325 = vadd.f32 %v8115, %v8230
        %v8326 = vadd.f32 %v8116, %v8229
        %v8327 = vadd.f32 %v8117, %v8231
        %v8328 = vadd.f32 %v8118, %v8233
        %v8329 = vadd.f32 %v8119, %v8232
        %v8330 = vadd.f32 %v8120, %v8234
        %v8331 = vadd.f32 %v8121, %v8236
        %v8332 = vadd.f32 %v8122, %v8235
        %v8333 = vadd.f32 %v8123, %v8237
        %v8334 = vadd.f32 %v8124, %v8239
        %v8335 = vadd.f32 %v8125, %v8238
        %v8336 = vadd.f32 %v8126, %v8240
        %v8337 = vadd.f32 %v8127, %v8242
        %v8338 = vadd.f32 %v8128, %v8241
        %v8339 = vadd.f32 %v8129, %v8243
        %v8340 = vadd.f32 %v8130, %v8245
        %v8341 = vadd.f32 %v8131, %v8244
        %v8342 = vadd.f32 %v8132, %v8246
        %v8343 = vadd.f32 %v8133, %v8248
        %v8344 = vadd.f32 %v8134, %v8247
        %v8345 = vadd.f32 %v8135, %v8249
        %v8346 = vadd.f32 %v8136, %v8251
        %v8347 = vadd.f32 %v8137, %v8250
        %v8348 = vadd.f32 %v8138, %v8252
        %v8349 = vadd.f32 %v8139, %v8254
        %v8350 = vadd.f32 %v8140, %v8253
        %v8351 = vadd.f32 %v8141, %v8255
        %v8352 = vadd.f32 %v8142, %v8257
        %v8353 = vadd.f32 %v8143, %v8256
        %v8354 = vadd.f32 %v8144, %v8258
        %v8355 = vadd.f32 %v8145, %v8260
        %v8356 = vadd.f32 %v8146, %v8259
        %v8357 = vadd.f32 %v8147, %v8261
        %v8358 = vadd.f32 %v8148, %v8263
        %v8359 = vadd.f32 %v8149, %v8262
        %v8360 = vld [vmem:[%s1 + $0x20] sm:$0x1]
        %v8361 = vperm.slane %v8360, 0
        %v8362 = vmul.f32 %v7441, %v8361
        %v8363 = vmul.f32 %v7442, %v8361
        %v8364 = vmul.f32 %v7443, %v8361
        %v8365 = vmul.f32 %v7445, %v8361
        %v8366 = vmul.f32 %v7446, %v8361
        %v8367 = vmul.f32 %v7447, %v8361
        %v8368 = vmul.f32 %v7449, %v8361
        %v8369 = vmul.f32 %v7450, %v8361
        %v8370 = vmul.f32 %v7451, %v8361
        %v8371 = vmul.f32 %v7453, %v8361
        %v8372 = vmul.f32 %v7454, %v8361
        %v8373 = vmul.f32 %v7455, %v8361
        %v8374 = vmul.f32 %v7457, %v8361
        %v8375 = vmul.f32 %v7458, %v8361
        %v8376 = vmul.f32 %v7459, %v8361
        %v8377 = vmul.f32 %v7461, %v8361
        %v8378 = vmul.f32 %v7462, %v8361
        %v8379 = vmul.f32 %v7463, %v8361
        %v8380 = vmul.f32 %v7465, %v8361
        %v8381 = vmul.f32 %v7466, %v8361
        %v8382 = vmul.f32 %v7467, %v8361
        %v8383 = vmul.f32 %v7469, %v8361
        %v8384 = vmul.f32 %v7470, %v8361
        %v8385 = vmul.f32 %v7471, %v8361
        %v8386 = vmul.f32 %v7473, %v8361
        %v8387 = vmul.f32 %v7474, %v8361
        %v8388 = vmul.f32 %v7475, %v8361
        %v8389 = vmul.f32 %v7477, %v8361
        %v8390 = vmul.f32 %v7478, %v8361
        %v8391 = vmul.f32 %v7479, %v8361
        %v8392 = vmul.f32 %v7481, %v8361
        %v8393 = vmul.f32 %v7482, %v8361
        %v8394 = vmul.f32 %v7483, %v8361
        %v8395 = vmul.f32 %v7485, %v8361
        %v8396 = vmul.f32 %v7486, %v8361
        %v8397 = vmul.f32 %v7487, %v8361
        %v8398 = vmul.f32 %v7489, %v8361
        %v8399 = vmul.f32 %v7490, %v8361
        %v8400 = vmul.f32 %v7491, %v8361
        %v8401 = vmul.f32 %v7493, %v8361
        %v8402 = vmul.f32 %v7494, %v8361
        %v8403 = vmul.f32 %v7495, %v8361
        %v8404 = vmul.f32 %v7497, %v8361
        %v8405 = vmul.f32 %v7498, %v8361
        %v8406 = vmul.f32 %v7499, %v8361
        %v8407 = vmul.f32 %v7501, %v8361
        %v8408 = vmul.f32 %v7502, %v8361
        %v8409 = vmul.f32 %v7503, %v8361
        %v8458 = vrot.slane %v8362, 4
        %v8459 = vrot.slane %v8363, 4
        %v8460 = vsel %vm1484, %v8458, %v8459
        %v8461 = vrot.slane %v8364, 4
        %v8462 = vsel %vm1484, %v8459, %v8461
        %v8463 = vrot.slane %v8365, 4
        %v8464 = vrot.slane %v8366, 4
        %v8465 = vsel %vm1484, %v8463, %v8464
        %v8466 = vrot.slane %v8367, 4
        %v8467 = vsel %vm1484, %v8464, %v8466
        %v8468 = vrot.slane %v8368, 4
        %v8469 = vrot.slane %v8369, 4
        %v8470 = vsel %vm1484, %v8468, %v8469
        %v8471 = vrot.slane %v8370, 4
        %v8472 = vsel %vm1484, %v8469, %v8471
        %v8473 = vrot.slane %v8371, 4
        %v8474 = vrot.slane %v8372, 4
        %v8475 = vsel %vm1484, %v8473, %v8474
        %v8476 = vrot.slane %v8373, 4
        %v8477 = vsel %vm1484, %v8474, %v8476
        %v8478 = vrot.slane %v8374, 4
        %v8479 = vrot.slane %v8375, 4
        %v8480 = vsel %vm1484, %v8478, %v8479
        %v8481 = vrot.slane %v8376, 4
        %v8482 = vsel %vm1484, %v8479, %v8481
        %v8483 = vrot.slane %v8377, 4
        %v8484 = vrot.slane %v8378, 4
        %v8485 = vsel %vm1484, %v8483, %v8484
        %v8486 = vrot.slane %v8379, 4
        %v8487 = vsel %vm1484, %v8484, %v8486
        %v8488 = vrot.slane %v8380, 4
        %v8489 = vrot.slane %v8381, 4
        %v8490 = vsel %vm1484, %v8488, %v8489
        %v8491 = vrot.slane %v8382, 4
        %v8492 = vsel %vm1484, %v8489, %v8491
        %v8493 = vrot.slane %v8383, 4
        %v8494 = vrot.slane %v8384, 4
        %v8495 = vsel %vm1484, %v8493, %v8494
        %v8496 = vrot.slane %v8385, 4
        %v8497 = vsel %vm1484, %v8494, %v8496
        %v8498 = vrot.slane %v8386, 4
        %v8499 = vrot.slane %v8387, 4
        %v8500 = vsel %vm1484, %v8498, %v8499
        %v8501 = vrot.slane %v8388, 4
        %v8502 = vsel %vm1484, %v8499, %v8501
        %v8503 = vrot.slane %v8389, 4
        %v8504 = vrot.slane %v8390, 4
        %v8505 = vsel %vm1484, %v8503, %v8504
        %v8506 = vrot.slane %v8391, 4
        %v8507 = vsel %vm1484, %v8504, %v8506
        %v8508 = vrot.slane %v8392, 4
        %v8509 = vrot.slane %v8393, 4
        %v8510 = vsel %vm1484, %v8508, %v8509
        %v8511 = vrot.slane %v8394, 4
        %v8512 = vsel %vm1484, %v8509, %v8511
        %v8513 = vrot.slane %v8395, 4
        %v8514 = vrot.slane %v8396, 4
        %v8515 = vsel %vm1484, %v8513, %v8514
        %v8516 = vrot.slane %v8397, 4
        %v8517 = vsel %vm1484, %v8514, %v8516
        %v8518 = vrot.slane %v8398, 4
        %v8519 = vrot.slane %v8399, 4
        %v8520 = vsel %vm1484, %v8518, %v8519
        %v8521 = vrot.slane %v8400, 4
        %v8522 = vsel %vm1484, %v8519, %v8521
        %v8523 = vrot.slane %v8401, 4
        %v8524 = vrot.slane %v8402, 4
        %v8525 = vsel %vm1484, %v8523, %v8524
        %v8526 = vrot.slane %v8403, 4
        %v8527 = vsel %vm1484, %v8524, %v8526
        %v8528 = vrot.slane %v8404, 4
        %v8529 = vrot.slane %v8405, 4
        %v8530 = vsel %vm1484, %v8528, %v8529
        %v8531 = vrot.slane %v8406, 4
        %v8532 = vsel %vm1484, %v8529, %v8531
        %v8533 = vrot.slane %v8407, 4
        %v8534 = vrot.slane %v8408, 4
        %v8535 = vsel %vm1484, %v8533, %v8534
        %v8536 = vrot.slane %v8409, 4
        %v8537 = vsel %vm1484, %v8534, %v8536
        %v8586 = vadd.f32 %v8312, %v8458
        %v8587 = vadd.f32 %v8313, %v8460
        %v8588 = vadd.f32 %v8314, %v8462
        %v8589 = vadd.f32 %v8315, %v8463
        %v8590 = vadd.f32 %v8316, %v8465
        %v8591 = vadd.f32 %v8317, %v8467
        %v8592 = vadd.f32 %v8318, %v8468
        %v8593 = vadd.f32 %v8319, %v8470
        %v8594 = vadd.f32 %v8320, %v8472
        %v8595 = vadd.f32 %v8321, %v8473
        %v8596 = vadd.f32 %v8322, %v8475
        %v8597 = vadd.f32 %v8323, %v8477
        %v8598 = vadd.f32 %v8324, %v8478
        %v8599 = vadd.f32 %v8325, %v8480
        %v8600 = vadd.f32 %v8326, %v8482
        %v8601 = vadd.f32 %v8327, %v8483
        %v8602 = vadd.f32 %v8328, %v8485
        %v8603 = vadd.f32 %v8329, %v8487
        %v8604 = vadd.f32 %v8330, %v8488
        %v8605 = vadd.f32 %v8331, %v8490
        %v8606 = vadd.f32 %v8332, %v8492
        %v8607 = vadd.f32 %v8333, %v8493
        %v8608 = vadd.f32 %v8334, %v8495
        %v8609 = vadd.f32 %v8335, %v8497
        %v8610 = vadd.f32 %v8336, %v8498
        %v8611 = vadd.f32 %v8337, %v8500
        %v8612 = vadd.f32 %v8338, %v8502
        %v8613 = vadd.f32 %v8339, %v8503
        %v8614 = vadd.f32 %v8340, %v8505
        %v8615 = vadd.f32 %v8341, %v8507
        %v8616 = vadd.f32 %v8342, %v8508
        %v8617 = vadd.f32 %v8343, %v8510
        %v8618 = vadd.f32 %v8344, %v8512
        %v8619 = vadd.f32 %v8345, %v8513
        %v8620 = vadd.f32 %v8346, %v8515
        %v8621 = vadd.f32 %v8347, %v8517
        %v8622 = vadd.f32 %v8348, %v8518
        %v8623 = vadd.f32 %v8349, %v8520
        %v8624 = vadd.f32 %v8350, %v8522
        %v8625 = vadd.f32 %v8351, %v8523
        %v8626 = vadd.f32 %v8352, %v8525
        %v8627 = vadd.f32 %v8353, %v8527
        %v8628 = vadd.f32 %v8354, %v8528
        %v8629 = vadd.f32 %v8355, %v8530
        %v8630 = vadd.f32 %v8356, %v8532
        %v8631 = vadd.f32 %v8357, %v8533
        %v8632 = vadd.f32 %v8358, %v8535
        %v8633 = vadd.f32 %v8359, %v8537
        %v8634 = vld [vmem:[%s1 + $0x21] sm:$0x1]
        %v8635 = vperm.slane %v8634, 0
        %v8636 = vmul.f32 %v7441, %v8635
        %v8637 = vmul.f32 %v7442, %v8635
        %v8638 = vmul.f32 %v7443, %v8635
        %v8639 = vmul.f32 %v7445, %v8635
        %v8640 = vmul.f32 %v7446, %v8635
        %v8641 = vmul.f32 %v7447, %v8635
        %v8642 = vmul.f32 %v7449, %v8635
        %v8643 = vmul.f32 %v7450, %v8635
        %v8644 = vmul.f32 %v7451, %v8635
        %v8645 = vmul.f32 %v7453, %v8635
        %v8646 = vmul.f32 %v7454, %v8635
        %v8647 = vmul.f32 %v7455, %v8635
        %v8648 = vmul.f32 %v7457, %v8635
        %v8649 = vmul.f32 %v7458, %v8635
        %v8650 = vmul.f32 %v7459, %v8635
        %v8651 = vmul.f32 %v7461, %v8635
        %v8652 = vmul.f32 %v7462, %v8635
        %v8653 = vmul.f32 %v7463, %v8635
        %v8654 = vmul.f32 %v7465, %v8635
        %v8655 = vmul.f32 %v7466, %v8635
        %v8656 = vmul.f32 %v7467, %v8635
        %v8657 = vmul.f32 %v7469, %v8635
        %v8658 = vmul.f32 %v7470, %v8635
        %v8659 = vmul.f32 %v7471, %v8635
        %v8660 = vmul.f32 %v7473, %v8635
        %v8661 = vmul.f32 %v7474, %v8635
        %v8662 = vmul.f32 %v7475, %v8635
        %v8663 = vmul.f32 %v7477, %v8635
        %v8664 = vmul.f32 %v7478, %v8635
        %v8665 = vmul.f32 %v7479, %v8635
        %v8666 = vmul.f32 %v7481, %v8635
        %v8667 = vmul.f32 %v7482, %v8635
        %v8668 = vmul.f32 %v7483, %v8635
        %v8669 = vmul.f32 %v7485, %v8635
        %v8670 = vmul.f32 %v7486, %v8635
        %v8671 = vmul.f32 %v7487, %v8635
        %v8672 = vmul.f32 %v7489, %v8635
        %v8673 = vmul.f32 %v7490, %v8635
        %v8674 = vmul.f32 %v7491, %v8635
        %v8675 = vmul.f32 %v7493, %v8635
        %v8676 = vmul.f32 %v7494, %v8635
        %v8677 = vmul.f32 %v7495, %v8635
        %v8678 = vmul.f32 %v7497, %v8635
        %v8679 = vmul.f32 %v7498, %v8635
        %v8680 = vmul.f32 %v7499, %v8635
        %v8681 = vmul.f32 %v7501, %v8635
        %v8682 = vmul.f32 %v7502, %v8635
        %v8683 = vmul.f32 %v7503, %v8635
        %v8732 = vrot.slane %v8636, 5
        %v8733 = vrot.slane %v8637, 5
        %v8734 = vsel %vm1759, %v8732, %v8733
        %v8735 = vrot.slane %v8638, 5
        %v8736 = vsel %vm1759, %v8733, %v8735
        %v8737 = vrot.slane %v8639, 5
        %v8738 = vrot.slane %v8640, 5
        %v8739 = vsel %vm1759, %v8737, %v8738
        %v8740 = vrot.slane %v8641, 5
        %v8741 = vsel %vm1759, %v8738, %v8740
        %v8742 = vrot.slane %v8642, 5
        %v8743 = vrot.slane %v8643, 5
        %v8744 = vsel %vm1759, %v8742, %v8743
        %v8745 = vrot.slane %v8644, 5
        %v8746 = vsel %vm1759, %v8743, %v8745
        %v8747 = vrot.slane %v8645, 5
        %v8748 = vrot.slane %v8646, 5
        %v8749 = vsel %vm1759, %v8747, %v8748
        %v8750 = vrot.slane %v8647, 5
        %v8751 = vsel %vm1759, %v8748, %v8750
        %v8752 = vrot.slane %v8648, 5
        %v8753 = vrot.slane %v8649, 5
        %v8754 = vsel %vm1759, %v8752, %v8753
        %v8755 = vrot.slane %v8650, 5
        %v8756 = vsel %vm1759, %v8753, %v8755
        %v8757 = vrot.slane %v8651, 5
        %v8758 = vrot.slane %v8652, 5
        %v8759 = vsel %vm1759, %v8757, %v8758
        %v8760 = vrot.slane %v8653, 5
        %v8761 = vsel %vm1759, %v8758, %v8760
        %v8762 = vrot.slane %v8654, 5
        %v8763 = vrot.slane %v8655, 5
        %v8764 = vsel %vm1759, %v8762, %v8763
        %v8765 = vrot.slane %v8656, 5
        %v8766 = vsel %vm1759, %v8763, %v8765
        %v8767 = vrot.slane %v8657, 5
        %v8768 = vrot.slane %v8658, 5
        %v8769 = vsel %vm1759, %v8767, %v8768
        %v8770 = vrot.slane %v8659, 5
        %v8771 = vsel %vm1759, %v8768, %v8770
        %v8772 = vrot.slane %v8660, 5
        %v8773 = vrot.slane %v8661, 5
        %v8774 = vsel %vm1759, %v8772, %v8773
        %v8775 = vrot.slane %v8662, 5
        %v8776 = vsel %vm1759, %v8773, %v8775
        %v8777 = vrot.slane %v8663, 5
        %v8778 = vrot.slane %v8664, 5
        %v8779 = vsel %vm1759, %v8777, %v8778
        %v8780 = vrot.slane %v8665, 5
        %v8781 = vsel %vm1759, %v8778, %v8780
        %v8782 = vrot.slane %v8666, 5
        %v8783 = vrot.slane %v8667, 5
        %v8784 = vsel %vm1759, %v8782, %v8783
        %v8785 = vrot.slane %v8668, 5
        %v8786 = vsel %vm1759, %v8783, %v8785
        %v8787 = vrot.slane %v8669, 5
        %v8788 = vrot.slane %v8670, 5
        %v8789 = vsel %vm1759, %v8787, %v8788
        %v8790 = vrot.slane %v8671, 5
        %v8791 = vsel %vm1759, %v8788, %v8790
        %v8792 = vrot.slane %v8672, 5
        %v8793 = vrot.slane %v8673, 5
        %v8794 = vsel %vm1759, %v8792, %v8793
        %v8795 = vrot.slane %v8674, 5
        %v8796 = vsel %vm1759, %v8793, %v8795
        %v8797 = vrot.slane %v8675, 5
        %v8798 = vrot.slane %v8676, 5
        %v8799 = vsel %vm1759, %v8797, %v8798
        %v8800 = vrot.slane %v8677, 5
        %v8801 = vsel %vm1759, %v8798, %v8800
        %v8802 = vrot.slane %v8678, 5
        %v8803 = vrot.slane %v8679, 5
        %v8804 = vsel %vm1759, %v8802, %v8803
        %v8805 = vrot.slane %v8680, 5
        %v8806 = vsel %vm1759, %v8803, %v8805
        %v8807 = vrot.slane %v8681, 5
        %v8808 = vrot.slane %v8682, 5
        %v8809 = vsel %vm1759, %v8807, %v8808
        %v8810 = vrot.slane %v8683, 5
        %v8811 = vsel %vm1759, %v8808, %v8810
        %v8860 = vadd.f32 %v8586, %v8732
        %v8861 = vadd.f32 %v8587, %v8734
        %v8862 = vadd.f32 %v8588, %v8736
        %v8863 = vadd.f32 %v8589, %v8737
        %v8864 = vadd.f32 %v8590, %v8739
        %v8865 = vadd.f32 %v8591, %v8741
        %v8866 = vadd.f32 %v8592, %v8742
        %v8867 = vadd.f32 %v8593, %v8744
        %v8868 = vadd.f32 %v8594, %v8746
        %v8869 = vadd.f32 %v8595, %v8747
        %v8870 = vadd.f32 %v8596, %v8749
        %v8871 = vadd.f32 %v8597, %v8751
        %v8872 = vadd.f32 %v8598, %v8752
        %v8873 = vadd.f32 %v8599, %v8754
        %v8874 = vadd.f32 %v8600, %v8756
        %v8875 = vadd.f32 %v8601, %v8757
        %v8876 = vadd.f32 %v8602, %v8759
        %v8877 = vadd.f32 %v8603, %v8761
        %v8878 = vadd.f32 %v8604, %v8762
        %v8879 = vadd.f32 %v8605, %v8764
        %v8880 = vadd.f32 %v8606, %v8766
        %v8881 = vadd.f32 %v8607, %v8767
        %v8882 = vadd.f32 %v8608, %v8769
        %v8883 = vadd.f32 %v8609, %v8771
        %v8884 = vadd.f32 %v8610, %v8772
        %v8885 = vadd.f32 %v8611, %v8774
        %v8886 = vadd.f32 %v8612, %v8776
        %v8887 = vadd.f32 %v8613, %v8777
        %v8888 = vadd.f32 %v8614, %v8779
        %v8889 = vadd.f32 %v8615, %v8781
        %v8890 = vadd.f32 %v8616, %v8782
        %v8891 = vadd.f32 %v8617, %v8784
        %v8892 = vadd.f32 %v8618, %v8786
        %v8893 = vadd.f32 %v8619, %v8787
        %v8894 = vadd.f32 %v8620, %v8789
        %v8895 = vadd.f32 %v8621, %v8791
        %v8896 = vadd.f32 %v8622, %v8792
        %v8897 = vadd.f32 %v8623, %v8794
        %v8898 = vadd.f32 %v8624, %v8796
        %v8899 = vadd.f32 %v8625, %v8797
        %v8900 = vadd.f32 %v8626, %v8799
        %v8901 = vadd.f32 %v8627, %v8801
        %v8902 = vadd.f32 %v8628, %v8802
        %v8903 = vadd.f32 %v8629, %v8804
        %v8904 = vadd.f32 %v8630, %v8806
        %v8905 = vadd.f32 %v8631, %v8807
        %v8906 = vadd.f32 %v8632, %v8809
        %v8907 = vadd.f32 %v8633, %v8811
        %v8908 = vld [vmem:[%s1 + $0x22] sm:$0x1]
        %v8909 = vperm.slane %v8908, 0
        %v8910 = vmul.f32 %v7441, %v8909
        %v8911 = vmul.f32 %v7442, %v8909
        %v8912 = vmul.f32 %v7443, %v8909
        %v8913 = vmul.f32 %v7445, %v8909
        %v8914 = vmul.f32 %v7446, %v8909
        %v8915 = vmul.f32 %v7447, %v8909
        %v8916 = vmul.f32 %v7449, %v8909
        %v8917 = vmul.f32 %v7450, %v8909
        %v8918 = vmul.f32 %v7451, %v8909
        %v8919 = vmul.f32 %v7453, %v8909
        %v8920 = vmul.f32 %v7454, %v8909
        %v8921 = vmul.f32 %v7455, %v8909
        %v8922 = vmul.f32 %v7457, %v8909
        %v8923 = vmul.f32 %v7458, %v8909
        %v8924 = vmul.f32 %v7459, %v8909
        %v8925 = vmul.f32 %v7461, %v8909
        %v8926 = vmul.f32 %v7462, %v8909
        %v8927 = vmul.f32 %v7463, %v8909
        %v8928 = vmul.f32 %v7465, %v8909
        %v8929 = vmul.f32 %v7466, %v8909
        %v8930 = vmul.f32 %v7467, %v8909
        %v8931 = vmul.f32 %v7469, %v8909
        %v8932 = vmul.f32 %v7470, %v8909
        %v8933 = vmul.f32 %v7471, %v8909
        %v8934 = vmul.f32 %v7473, %v8909
        %v8935 = vmul.f32 %v7474, %v8909
        %v8936 = vmul.f32 %v7475, %v8909
        %v8937 = vmul.f32 %v7477, %v8909
        %v8938 = vmul.f32 %v7478, %v8909
        %v8939 = vmul.f32 %v7479, %v8909
        %v8940 = vmul.f32 %v7481, %v8909
        %v8941 = vmul.f32 %v7482, %v8909
        %v8942 = vmul.f32 %v7483, %v8909
        %v8943 = vmul.f32 %v7485, %v8909
        %v8944 = vmul.f32 %v7486, %v8909
        %v8945 = vmul.f32 %v7487, %v8909
        %v8946 = vmul.f32 %v7489, %v8909
        %v8947 = vmul.f32 %v7490, %v8909
        %v8948 = vmul.f32 %v7491, %v8909
        %v8949 = vmul.f32 %v7493, %v8909
        %v8950 = vmul.f32 %v7494, %v8909
        %v8951 = vmul.f32 %v7495, %v8909
        %v8952 = vmul.f32 %v7497, %v8909
        %v8953 = vmul.f32 %v7498, %v8909
        %v8954 = vmul.f32 %v7499, %v8909
        %v8955 = vmul.f32 %v7501, %v8909
        %v8956 = vmul.f32 %v7502, %v8909
        %v8957 = vmul.f32 %v7503, %v8909
        %v9006 = vrot.slane %v8910, 6
        %v9007 = vrot.slane %v8911, 6
        %v9008 = vsel %vm2034, %v9006, %v9007
        %v9009 = vrot.slane %v8912, 6
        %v9010 = vsel %vm2034, %v9007, %v9009
        %v9011 = vrot.slane %v8913, 6
        %v9012 = vrot.slane %v8914, 6
        %v9013 = vsel %vm2034, %v9011, %v9012
        %v9014 = vrot.slane %v8915, 6
        %v9015 = vsel %vm2034, %v9012, %v9014
        %v9016 = vrot.slane %v8916, 6
        %v9017 = vrot.slane %v8917, 6
        %v9018 = vsel %vm2034, %v9016, %v9017
        %v9019 = vrot.slane %v8918, 6
        %v9020 = vsel %vm2034, %v9017, %v9019
        %v9021 = vrot.slane %v8919, 6
        %v9022 = vrot.slane %v8920, 6
        %v9023 = vsel %vm2034, %v9021, %v9022
        %v9024 = vrot.slane %v8921, 6
        %v9025 = vsel %vm2034, %v9022, %v9024
        %v9026 = vrot.slane %v8922, 6
        %v9027 = vrot.slane %v8923, 6
        %v9028 = vsel %vm2034, %v9026, %v9027
        %v9029 = vrot.slane %v8924, 6
        %v9030 = vsel %vm2034, %v9027, %v9029
        %v9031 = vrot.slane %v8925, 6
        %v9032 = vrot.slane %v8926, 6
        %v9033 = vsel %vm2034, %v9031, %v9032
        %v9034 = vrot.slane %v8927, 6
        %v9035 = vsel %vm2034, %v9032, %v9034
        %v9036 = vrot.slane %v8928, 6
        %v9037 = vrot.slane %v8929, 6
        %v9038 = vsel %vm2034, %v9036, %v9037
        %v9039 = vrot.slane %v8930, 6
        %v9040 = vsel %vm2034, %v9037, %v9039
        %v9041 = vrot.slane %v8931, 6
        %v9042 = vrot.slane %v8932, 6
        %v9043 = vsel %vm2034, %v9041, %v9042
        %v9044 = vrot.slane %v8933, 6
        %v9045 = vsel %vm2034, %v9042, %v9044
        %v9046 = vrot.slane %v8934, 6
        %v9047 = vrot.slane %v8935, 6
        %v9048 = vsel %vm2034, %v9046, %v9047
        %v9049 = vrot.slane %v8936, 6
        %v9050 = vsel %vm2034, %v9047, %v9049
        %v9051 = vrot.slane %v8937, 6
        %v9052 = vrot.slane %v8938, 6
        %v9053 = vsel %vm2034, %v9051, %v9052
        %v9054 = vrot.slane %v8939, 6
        %v9055 = vsel %vm2034, %v9052, %v9054
        %v9056 = vrot.slane %v8940, 6
        %v9057 = vrot.slane %v8941, 6
        %v9058 = vsel %vm2034, %v9056, %v9057
        %v9059 = vrot.slane %v8942, 6
        %v9060 = vsel %vm2034, %v9057, %v9059
        %v9061 = vrot.slane %v8943, 6
        %v9062 = vrot.slane %v8944, 6
        %v9063 = vsel %vm2034, %v9061, %v9062
        %v9064 = vrot.slane %v8945, 6
        %v9065 = vsel %vm2034, %v9062, %v9064
        %v9066 = vrot.slane %v8946, 6
        %v9067 = vrot.slane %v8947, 6
        %v9068 = vsel %vm2034, %v9066, %v9067
        %v9069 = vrot.slane %v8948, 6
        %v9070 = vsel %vm2034, %v9067, %v9069
        %v9071 = vrot.slane %v8949, 6
        %v9072 = vrot.slane %v8950, 6
        %v9073 = vsel %vm2034, %v9071, %v9072
        %v9074 = vrot.slane %v8951, 6
        %v9075 = vsel %vm2034, %v9072, %v9074
        %v9076 = vrot.slane %v8952, 6
        %v9077 = vrot.slane %v8953, 6
        %v9078 = vsel %vm2034, %v9076, %v9077
        %v9079 = vrot.slane %v8954, 6
        %v9080 = vsel %vm2034, %v9077, %v9079
        %v9081 = vrot.slane %v8955, 6
        %v9082 = vrot.slane %v8956, 6
        %v9083 = vsel %vm2034, %v9081, %v9082
        %v9084 = vrot.slane %v8957, 6
        %v9085 = vsel %vm2034, %v9082, %v9084
        %v9134 = vadd.f32 %v8860, %v9006
        %v9135 = vadd.f32 %v8861, %v9008
        %v9136 = vadd.f32 %v8862, %v9010
        %v9137 = vadd.f32 %v8863, %v9011
        %v9138 = vadd.f32 %v8864, %v9013
        %v9139 = vadd.f32 %v8865, %v9015
        %v9140 = vadd.f32 %v8866, %v9016
        %v9141 = vadd.f32 %v8867, %v9018
        %v9142 = vadd.f32 %v8868, %v9020
        %v9143 = vadd.f32 %v8869, %v9021
        %v9144 = vadd.f32 %v8870, %v9023
        %v9145 = vadd.f32 %v8871, %v9025
        %v9146 = vadd.f32 %v8872, %v9026
        %v9147 = vadd.f32 %v8873, %v9028
        %v9148 = vadd.f32 %v8874, %v9030
        %v9149 = vadd.f32 %v8875, %v9031
        %v9150 = vadd.f32 %v8876, %v9033
        %v9151 = vadd.f32 %v8877, %v9035
        %v9152 = vadd.f32 %v8878, %v9036
        %v9153 = vadd.f32 %v8879, %v9038
        %v9154 = vadd.f32 %v8880, %v9040
        %v9155 = vadd.f32 %v8881, %v9041
        %v9156 = vadd.f32 %v8882, %v9043
        %v9157 = vadd.f32 %v8883, %v9045
        %v9158 = vadd.f32 %v8884, %v9046
        %v9159 = vadd.f32 %v8885, %v9048
        %v9160 = vadd.f32 %v8886, %v9050
        %v9161 = vadd.f32 %v8887, %v9051
        %v9162 = vadd.f32 %v8888, %v9053
        %v9163 = vadd.f32 %v8889, %v9055
        %v9164 = vadd.f32 %v8890, %v9056
        %v9165 = vadd.f32 %v8891, %v9058
        %v9166 = vadd.f32 %v8892, %v9060
        %v9167 = vadd.f32 %v8893, %v9061
        %v9168 = vadd.f32 %v8894, %v9063
        %v9169 = vadd.f32 %v8895, %v9065
        %v9170 = vadd.f32 %v8896, %v9066
        %v9171 = vadd.f32 %v8897, %v9068
        %v9172 = vadd.f32 %v8898, %v9070
        %v9173 = vadd.f32 %v8899, %v9071
        %v9174 = vadd.f32 %v8900, %v9073
        %v9175 = vadd.f32 %v8901, %v9075
        %v9176 = vadd.f32 %v8902, %v9076
        %v9177 = vadd.f32 %v8903, %v9078
        %v9178 = vadd.f32 %v8904, %v9080
        %v9179 = vadd.f32 %v8905, %v9081
        %v9180 = vadd.f32 %v8906, %v9083
        %v9181 = vadd.f32 %v8907, %v9085
        %s9182 = scalar_lea.vmem [#allocation2], 160
        %v9183 = vld [vmem:[%s9182] sm:$0xff]
        %v9184 = vld [vmem:[%s9182 + $0x8] sm:$0xff]
        %v9185 = vld [vmem:[%s9182 + $0x10] sm:$0xff]
        %v9186 = vld [vmem:[%s9182 + $0x18] sm:$0x7]
        %v9187 = vld [vmem:[%s9182 + $0x20] sm:$0xff]
        %v9188 = vld [vmem:[%s9182 + $0x28] sm:$0xff]
        %v9189 = vld [vmem:[%s9182 + $0x30] sm:$0xff]
        %v9190 = vld [vmem:[%s9182 + $0x38] sm:$0x7]
        %v9191 = vld [vmem:[%s9182 + $0x40] sm:$0xff]
        %v9192 = vld [vmem:[%s9182 + $0x48] sm:$0xff]
        %v9193 = vld [vmem:[%s9182 + $0x50] sm:$0xff]
        %v9194 = vld [vmem:[%s9182 + $0x58] sm:$0x7]
        %v9195 = vld [vmem:[%s9182 + $0x60] sm:$0xff]
        %v9196 = vld [vmem:[%s9182 + $0x68] sm:$0xff]
        %v9197 = vld [vmem:[%s9182 + $0x70] sm:$0xff]
        %v9198 = vld [vmem:[%s9182 + $0x78] sm:$0x7]
        %v9199 = vld [vmem:[%s9182 + $0x80] sm:$0xff]
        %v9200 = vld [vmem:[%s9182 + $0x88] sm:$0xff]
        %v9201 = vld [vmem:[%s9182 + $0x90] sm:$0xff]
        %v9202 = vld [vmem:[%s9182 + $0x98] sm:$0x7]
        %v9203 = vld [vmem:[%s9182 + $0xa0] sm:$0xff]
        %v9204 = vld [vmem:[%s9182 + $0xa8] sm:$0xff]
        %v9205 = vld [vmem:[%s9182 + $0xb0] sm:$0xff]
        %v9206 = vld [vmem:[%s9182 + $0xb8] sm:$0x7]
        %v9207 = vld [vmem:[%s9182 + $0xc0] sm:$0xff]
        %v9208 = vld [vmem:[%s9182 + $0xc8] sm:$0xff]
        %v9209 = vld [vmem:[%s9182 + $0xd0] sm:$0xff]
        %v9210 = vld [vmem:[%s9182 + $0xd8] sm:$0x7]
        %v9211 = vld [vmem:[%s9182 + $0xe0] sm:$0xff]
        %v9212 = vld [vmem:[%s9182 + $0xe8] sm:$0xff]
        %v9213 = vld [vmem:[%s9182 + $0xf0] sm:$0xff]
        %v9214 = vld [vmem:[%s9182 + $0xf8] sm:$0x7]
        %v9215 = vld [vmem:[%s9182 + $0x100] sm:$0xff]
        %v9216 = vld [vmem:[%s9182 + $0x108] sm:$0xff]
        %v9217 = vld [vmem:[%s9182 + $0x110] sm:$0xff]
        %v9218 = vld [vmem:[%s9182 + $0x118] sm:$0x7]
        %v9219 = vld [vmem:[%s9182 + $0x120] sm:$0xff]
        %v9220 = vld [vmem:[%s9182 + $0x128] sm:$0xff]
        %v9221 = vld [vmem:[%s9182 + $0x130] sm:$0xff]
        %v9222 = vld [vmem:[%s9182 + $0x138] sm:$0x7]
        %v9223 = vld [vmem:[%s9182 + $0x140] sm:$0xff]
        %v9224 = vld [vmem:[%s9182 + $0x148] sm:$0xff]
        %v9225 = vld [vmem:[%s9182 + $0x150] sm:$0xff]
        %v9226 = vld [vmem:[%s9182 + $0x158] sm:$0x7]
        %v9227 = vld [vmem:[%s9182 + $0x160] sm:$0xff]
        %v9228 = vld [vmem:[%s9182 + $0x168] sm:$0xff]
        %v9229 = vld [vmem:[%s9182 + $0x170] sm:$0xff]
        %v9230 = vld [vmem:[%s9182 + $0x178] sm:$0x7]
        %v9231 = vld [vmem:[%s9182 + $0x180] sm:$0xff]
        %v9232 = vld [vmem:[%s9182 + $0x188] sm:$0xff]
        %v9233 = vld [vmem:[%s9182 + $0x190] sm:$0xff]
        %v9234 = vld [vmem:[%s9182 + $0x198] sm:$0x7]
        %v9235 = vld [vmem:[%s9182 + $0x1a0] sm:$0xff]
        %v9236 = vld [vmem:[%s9182 + $0x1a8] sm:$0xff]
        %v9237 = vld [vmem:[%s9182 + $0x1b0] sm:$0xff]
        %v9238 = vld [vmem:[%s9182 + $0x1b8] sm:$0x7]
        %v9239 = vld [vmem:[%s9182 + $0x1c0] sm:$0xff]
        %v9240 = vld [vmem:[%s9182 + $0x1c8] sm:$0xff]
        %v9241 = vld [vmem:[%s9182 + $0x1d0] sm:$0xff]
        %v9242 = vld [vmem:[%s9182 + $0x1d8] sm:$0x7]
        %v9243 = vld [vmem:[%s9182 + $0x1e0] sm:$0xff]
        %v9244 = vld [vmem:[%s9182 + $0x1e8] sm:$0xff]
        %v9245 = vld [vmem:[%s9182 + $0x1f0] sm:$0xff]
        %v9246 = vld [vmem:[%s9182 + $0x1f8] sm:$0x7]
        %v9247 = vld [vmem:[%s1 + $0x23] sm:$0x1]
        %v9248 = vperm.slane %v9247, 0
        %v9249 = vmul.f32 %v9183, %v9248
        %v9250 = vmul.f32 %v9184, %v9248
        %v9251 = vmul.f32 %v9185, %v9248
        %v9252 = vmul.f32 %v9187, %v9248
        %v9253 = vmul.f32 %v9188, %v9248
        %v9254 = vmul.f32 %v9189, %v9248
        %v9255 = vmul.f32 %v9191, %v9248
        %v9256 = vmul.f32 %v9192, %v9248
        %v9257 = vmul.f32 %v9193, %v9248
        %v9258 = vmul.f32 %v9195, %v9248
        %v9259 = vmul.f32 %v9196, %v9248
        %v9260 = vmul.f32 %v9197, %v9248
        %v9261 = vmul.f32 %v9199, %v9248
        %v9262 = vmul.f32 %v9200, %v9248
        %v9263 = vmul.f32 %v9201, %v9248
        %v9264 = vmul.f32 %v9203, %v9248
        %v9265 = vmul.f32 %v9204, %v9248
        %v9266 = vmul.f32 %v9205, %v9248
        %v9267 = vmul.f32 %v9207, %v9248
        %v9268 = vmul.f32 %v9208, %v9248
        %v9269 = vmul.f32 %v9209, %v9248
        %v9270 = vmul.f32 %v9211, %v9248
        %v9271 = vmul.f32 %v9212, %v9248
        %v9272 = vmul.f32 %v9213, %v9248
        %v9273 = vmul.f32 %v9215, %v9248
        %v9274 = vmul.f32 %v9216, %v9248
        %v9275 = vmul.f32 %v9217, %v9248
        %v9276 = vmul.f32 %v9219, %v9248
        %v9277 = vmul.f32 %v9220, %v9248
        %v9278 = vmul.f32 %v9221, %v9248
        %v9279 = vmul.f32 %v9223, %v9248
        %v9280 = vmul.f32 %v9224, %v9248
        %v9281 = vmul.f32 %v9225, %v9248
        %v9282 = vmul.f32 %v9227, %v9248
        %v9283 = vmul.f32 %v9228, %v9248
        %v9284 = vmul.f32 %v9229, %v9248
        %v9285 = vmul.f32 %v9231, %v9248
        %v9286 = vmul.f32 %v9232, %v9248
        %v9287 = vmul.f32 %v9233, %v9248
        %v9288 = vmul.f32 %v9235, %v9248
        %v9289 = vmul.f32 %v9236, %v9248
        %v9290 = vmul.f32 %v9237, %v9248
        %v9291 = vmul.f32 %v9239, %v9248
        %v9292 = vmul.f32 %v9240, %v9248
        %v9293 = vmul.f32 %v9241, %v9248
        %v9294 = vmul.f32 %v9243, %v9248
        %v9295 = vmul.f32 %v9244, %v9248
        %v9296 = vmul.f32 %v9245, %v9248
        %v9297 = vadd.f32 %v9134, %v9249
        %v9298 = vadd.f32 %v9135, %v9250
        %v9299 = vadd.f32 %v9136, %v9251
        %v9300 = vadd.f32 %v9137, %v9252
        %v9301 = vadd.f32 %v9138, %v9253
        %v9302 = vadd.f32 %v9139, %v9254
        %v9303 = vadd.f32 %v9140, %v9255
        %v9304 = vadd.f32 %v9141, %v9256
        %v9305 = vadd.f32 %v9142, %v9257
        %v9306 = vadd.f32 %v9143, %v9258
        %v9307 = vadd.f32 %v9144, %v9259
        %v9308 = vadd.f32 %v9145, %v9260
        %v9309 = vadd.f32 %v9146, %v9261
        %v9310 = vadd.f32 %v9147, %v9262
        %v9311 = vadd.f32 %v9148, %v9263
        %v9312 = vadd.f32 %v9149, %v9264
        %v9313 = vadd.f32 %v9150, %v9265
        %v9314 = vadd.f32 %v9151, %v9266
        %v9315 = vadd.f32 %v9152, %v9267
        %v9316 = vadd.f32 %v9153, %v9268
        %v9317 = vadd.f32 %v9154, %v9269
        %v9318 = vadd.f32 %v9155, %v9270
        %v9319 = vadd.f32 %v9156, %v9271
        %v9320 = vadd.f32 %v9157, %v9272
        %v9321 = vadd.f32 %v9158, %v9273
        %v9322 = vadd.f32 %v9159, %v9274
        %v9323 = vadd.f32 %v9160, %v9275
        %v9324 = vadd.f32 %v9161, %v9276
        %v9325 = vadd.f32 %v9162, %v9277
        %v9326 = vadd.f32 %v9163, %v9278
        %v9327 = vadd.f32 %v9164, %v9279
        %v9328 = vadd.f32 %v9165, %v9280
        %v9329 = vadd.f32 %v9166, %v9281
        %v9330 = vadd.f32 %v9167, %v9282
        %v9331 = vadd.f32 %v9168, %v9283
        %v9332 = vadd.f32 %v9169, %v9284
        %v9333 = vadd.f32 %v9170, %v9285
        %v9334 = vadd.f32 %v9171, %v9286
        %v9335 = vadd.f32 %v9172, %v9287
        %v9336 = vadd.f32 %v9173, %v9288
        %v9337 = vadd.f32 %v9174, %v9289
        %v9338 = vadd.f32 %v9175, %v9290
        %v9339 = vadd.f32 %v9176, %v9291
        %v9340 = vadd.f32 %v9177, %v9292
        %v9341 = vadd.f32 %v9178, %v9293
        %v9342 = vadd.f32 %v9179, %v9294
        %v9343 = vadd.f32 %v9180, %v9295
        %v9344 = vadd.f32 %v9181, %v9296
        %v9345 = vld [vmem:[%s1 + $0x24] sm:$0x1]
        %v9346 = vperm.slane %v9345, 0
        %v9347 = vmul.f32 %v9183, %v9346
        %v9348 = vmul.f32 %v9184, %v9346
        %v9349 = vmul.f32 %v9185, %v9346
        %v9350 = vmul.f32 %v9187, %v9346
        %v9351 = vmul.f32 %v9188, %v9346
        %v9352 = vmul.f32 %v9189, %v9346
        %v9353 = vmul.f32 %v9191, %v9346
        %v9354 = vmul.f32 %v9192, %v9346
        %v9355 = vmul.f32 %v9193, %v9346
        %v9356 = vmul.f32 %v9195, %v9346
        %v9357 = vmul.f32 %v9196, %v9346
        %v9358 = vmul.f32 %v9197, %v9346
        %v9359 = vmul.f32 %v9199, %v9346
        %v9360 = vmul.f32 %v9200, %v9346
        %v9361 = vmul.f32 %v9201, %v9346
        %v9362 = vmul.f32 %v9203, %v9346
        %v9363 = vmul.f32 %v9204, %v9346
        %v9364 = vmul.f32 %v9205, %v9346
        %v9365 = vmul.f32 %v9207, %v9346
        %v9366 = vmul.f32 %v9208, %v9346
        %v9367 = vmul.f32 %v9209, %v9346
        %v9368 = vmul.f32 %v9211, %v9346
        %v9369 = vmul.f32 %v9212, %v9346
        %v9370 = vmul.f32 %v9213, %v9346
        %v9371 = vmul.f32 %v9215, %v9346
        %v9372 = vmul.f32 %v9216, %v9346
        %v9373 = vmul.f32 %v9217, %v9346
        %v9374 = vmul.f32 %v9219, %v9346
        %v9375 = vmul.f32 %v9220, %v9346
        %v9376 = vmul.f32 %v9221, %v9346
        %v9377 = vmul.f32 %v9223, %v9346
        %v9378 = vmul.f32 %v9224, %v9346
        %v9379 = vmul.f32 %v9225, %v9346
        %v9380 = vmul.f32 %v9227, %v9346
        %v9381 = vmul.f32 %v9228, %v9346
        %v9382 = vmul.f32 %v9229, %v9346
        %v9383 = vmul.f32 %v9231, %v9346
        %v9384 = vmul.f32 %v9232, %v9346
        %v9385 = vmul.f32 %v9233, %v9346
        %v9386 = vmul.f32 %v9235, %v9346
        %v9387 = vmul.f32 %v9236, %v9346
        %v9388 = vmul.f32 %v9237, %v9346
        %v9389 = vmul.f32 %v9239, %v9346
        %v9390 = vmul.f32 %v9240, %v9346
        %v9391 = vmul.f32 %v9241, %v9346
        %v9392 = vmul.f32 %v9243, %v9346
        %v9393 = vmul.f32 %v9244, %v9346
        %v9394 = vmul.f32 %v9245, %v9346
        %v9443 = vrot.slane %v9347, 1
        %v9444 = vrot.slane %v9348, 1
        %v9445 = vsel %vm723, %v9443, %v9444
        %v9446 = vrot.slane %v9349, 1
        %v9447 = vsel %vm723, %v9444, %v9446
        %v9448 = vrot.slane %v9350, 1
        %v9449 = vrot.slane %v9351, 1
        %v9450 = vsel %vm723, %v9448, %v9449
        %v9451 = vrot.slane %v9352, 1
        %v9452 = vsel %vm723, %v9449, %v9451
        %v9453 = vrot.slane %v9353, 1
        %v9454 = vrot.slane %v9354, 1
        %v9455 = vsel %vm723, %v9453, %v9454
        %v9456 = vrot.slane %v9355, 1
        %v9457 = vsel %vm723, %v9454, %v9456
        %v9458 = vrot.slane %v9356, 1
        %v9459 = vrot.slane %v9357, 1
        %v9460 = vsel %vm723, %v9458, %v9459
        %v9461 = vrot.slane %v9358, 1
        %v9462 = vsel %vm723, %v9459, %v9461
        %v9463 = vrot.slane %v9359, 1
        %v9464 = vrot.slane %v9360, 1
        %v9465 = vsel %vm723, %v9463, %v9464
        %v9466 = vrot.slane %v9361, 1
        %v9467 = vsel %vm723, %v9464, %v9466
        %v9468 = vrot.slane %v9362, 1
        %v9469 = vrot.slane %v9363, 1
        %v9470 = vsel %vm723, %v9468, %v9469
        %v9471 = vrot.slane %v9364, 1
        %v9472 = vsel %vm723, %v9469, %v9471
        %v9473 = vrot.slane %v9365, 1
        %v9474 = vrot.slane %v9366, 1
        %v9475 = vsel %vm723, %v9473, %v9474
        %v9476 = vrot.slane %v9367, 1
        %v9477 = vsel %vm723, %v9474, %v9476
        %v9478 = vrot.slane %v9368, 1
        %v9479 = vrot.slane %v9369, 1
        %v9480 = vsel %vm723, %v9478, %v9479
        %v9481 = vrot.slane %v9370, 1
        %v9482 = vsel %vm723, %v9479, %v9481
        %v9483 = vrot.slane %v9371, 1
        %v9484 = vrot.slane %v9372, 1
        %v9485 = vsel %vm723, %v9483, %v9484
        %v9486 = vrot.slane %v9373, 1
        %v9487 = vsel %vm723, %v9484, %v9486
        %v9488 = vrot.slane %v9374, 1
        %v9489 = vrot.slane %v9375, 1
        %v9490 = vsel %vm723, %v9488, %v9489
        %v9491 = vrot.slane %v9376, 1
        %v9492 = vsel %vm723, %v9489, %v9491
        %v9493 = vrot.slane %v9377, 1
        %v9494 = vrot.slane %v9378, 1
        %v9495 = vsel %vm723, %v9493, %v9494
        %v9496 = vrot.slane %v9379, 1
        %v9497 = vsel %vm723, %v9494, %v9496
        %v9498 = vrot.slane %v9380, 1
        %v9499 = vrot.slane %v9381, 1
        %v9500 = vsel %vm723, %v9498, %v9499
        %v9501 = vrot.slane %v9382, 1
        %v9502 = vsel %vm723, %v9499, %v9501
        %v9503 = vrot.slane %v9383, 1
        %v9504 = vrot.slane %v9384, 1
        %v9505 = vsel %vm723, %v9503, %v9504
        %v9506 = vrot.slane %v9385, 1
        %v9507 = vsel %vm723, %v9504, %v9506
        %v9508 = vrot.slane %v9386, 1
        %v9509 = vrot.slane %v9387, 1
        %v9510 = vsel %vm723, %v9508, %v9509
        %v9511 = vrot.slane %v9388, 1
        %v9512 = vsel %vm723, %v9509, %v9511
        %v9513 = vrot.slane %v9389, 1
        %v9514 = vrot.slane %v9390, 1
        %v9515 = vsel %vm723, %v9513, %v9514
        %v9516 = vrot.slane %v9391, 1
        %v9517 = vsel %vm723, %v9514, %v9516
        %v9518 = vrot.slane %v9392, 1
        %v9519 = vrot.slane %v9393, 1
        %v9520 = vsel %vm723, %v9518, %v9519
        %v9521 = vrot.slane %v9394, 1
        %v9522 = vsel %vm723, %v9519, %v9521
        %v9571 = vadd.f32 %v9297, %v9445
        %v9572 = vadd.f32 %v9298, %v9447
        %v9573 = vadd.f32 %v9299, %v9446
        %v9574 = vadd.f32 %v9300, %v9450
        %v9575 = vadd.f32 %v9301, %v9452
        %v9576 = vadd.f32 %v9302, %v9451
        %v9577 = vadd.f32 %v9303, %v9455
        %v9578 = vadd.f32 %v9304, %v9457
        %v9579 = vadd.f32 %v9305, %v9456
        %v9580 = vadd.f32 %v9306, %v9460
        %v9581 = vadd.f32 %v9307, %v9462
        %v9582 = vadd.f32 %v9308, %v9461
        %v9583 = vadd.f32 %v9309, %v9465
        %v9584 = vadd.f32 %v9310, %v9467
        %v9585 = vadd.f32 %v9311, %v9466
        %v9586 = vadd.f32 %v9312, %v9470
        %v9587 = vadd.f32 %v9313, %v9472
        %v9588 = vadd.f32 %v9314, %v9471
        %v9589 = vadd.f32 %v9315, %v9475
        %v9590 = vadd.f32 %v9316, %v9477
        %v9591 = vadd.f32 %v9317, %v9476
        %v9592 = vadd.f32 %v9318, %v9480
        %v9593 = vadd.f32 %v9319, %v9482
        %v9594 = vadd.f32 %v9320, %v9481
        %v9595 = vadd.f32 %v9321, %v9485
        %v9596 = vadd.f32 %v9322, %v9487
        %v9597 = vadd.f32 %v9323, %v9486
        %v9598 = vadd.f32 %v9324, %v9490
        %v9599 = vadd.f32 %v9325, %v9492
        %v9600 = vadd.f32 %v9326, %v9491
        %v9601 = vadd.f32 %v9327, %v9495
        %v9602 = vadd.f32 %v9328, %v9497
        %v9603 = vadd.f32 %v9329, %v9496
        %v9604 = vadd.f32 %v9330, %v9500
        %v9605 = vadd.f32 %v9331, %v9502
        %v9606 = vadd.f32 %v9332, %v9501
        %v9607 = vadd.f32 %v9333, %v9505
        %v9608 = vadd.f32 %v9334, %v9507
        %v9609 = vadd.f32 %v9335, %v9506
        %v9610 = vadd.f32 %v9336, %v9510
        %v9611 = vadd.f32 %v9337, %v9512
        %v9612 = vadd.f32 %v9338, %v9511
        %v9613 = vadd.f32 %v9339, %v9515
        %v9614 = vadd.f32 %v9340, %v9517
        %v9615 = vadd.f32 %v9341, %v9516
        %v9616 = vadd.f32 %v9342, %v9520
        %v9617 = vadd.f32 %v9343, %v9522
        %v9618 = vadd.f32 %v9344, %v9521
        %v9619 = vld [vmem:[%s1 + $0x25] sm:$0x1]
        %v9620 = vperm.slane %v9619, 0
        %v9621 = vmul.f32 %v9183, %v9620
        %v9622 = vmul.f32 %v9184, %v9620
        %v9623 = vmul.f32 %v9185, %v9620
        %v9624 = vmul.f32 %v9187, %v9620
        %v9625 = vmul.f32 %v9188, %v9620
        %v9626 = vmul.f32 %v9189, %v9620
        %v9627 = vmul.f32 %v9191, %v9620
        %v9628 = vmul.f32 %v9192, %v9620
        %v9629 = vmul.f32 %v9193, %v9620
        %v9630 = vmul.f32 %v9195, %v9620
        %v9631 = vmul.f32 %v9196, %v9620
        %v9632 = vmul.f32 %v9197, %v9620
        %v9633 = vmul.f32 %v9199, %v9620
        %v9634 = vmul.f32 %v9200, %v9620
        %v9635 = vmul.f32 %v9201, %v9620
        %v9636 = vmul.f32 %v9203, %v9620
        %v9637 = vmul.f32 %v9204, %v9620
        %v9638 = vmul.f32 %v9205, %v9620
        %v9639 = vmul.f32 %v9207, %v9620
        %v9640 = vmul.f32 %v9208, %v9620
        %v9641 = vmul.f32 %v9209, %v9620
        %v9642 = vmul.f32 %v9211, %v9620
        %v9643 = vmul.f32 %v9212, %v9620
        %v9644 = vmul.f32 %v9213, %v9620
        %v9645 = vmul.f32 %v9215, %v9620
        %v9646 = vmul.f32 %v9216, %v9620
        %v9647 = vmul.f32 %v9217, %v9620
        %v9648 = vmul.f32 %v9219, %v9620
        %v9649 = vmul.f32 %v9220, %v9620
        %v9650 = vmul.f32 %v9221, %v9620
        %v9651 = vmul.f32 %v9223, %v9620
        %v9652 = vmul.f32 %v9224, %v9620
        %v9653 = vmul.f32 %v9225, %v9620
        %v9654 = vmul.f32 %v9227, %v9620
        %v9655 = vmul.f32 %v9228, %v9620
        %v9656 = vmul.f32 %v9229, %v9620
        %v9657 = vmul.f32 %v9231, %v9620
        %v9658 = vmul.f32 %v9232, %v9620
        %v9659 = vmul.f32 %v9233, %v9620
        %v9660 = vmul.f32 %v9235, %v9620
        %v9661 = vmul.f32 %v9236, %v9620
        %v9662 = vmul.f32 %v9237, %v9620
        %v9663 = vmul.f32 %v9239, %v9620
        %v9664 = vmul.f32 %v9240, %v9620
        %v9665 = vmul.f32 %v9241, %v9620
        %v9666 = vmul.f32 %v9243, %v9620
        %v9667 = vmul.f32 %v9244, %v9620
        %v9668 = vmul.f32 %v9245, %v9620
        %v9717 = vrot.slane %v9621, 2
        %v9718 = vrot.slane %v9622, 2
        %v9719 = vsel %vm998, %v9717, %v9718
        %v9720 = vrot.slane %v9623, 2
        %v9721 = vsel %vm998, %v9718, %v9720
        %v9722 = vrot.slane %v9624, 2
        %v9723 = vrot.slane %v9625, 2
        %v9724 = vsel %vm998, %v9722, %v9723
        %v9725 = vrot.slane %v9626, 2
        %v9726 = vsel %vm998, %v9723, %v9725
        %v9727 = vrot.slane %v9627, 2
        %v9728 = vrot.slane %v9628, 2
        %v9729 = vsel %vm998, %v9727, %v9728
        %v9730 = vrot.slane %v9629, 2
        %v9731 = vsel %vm998, %v9728, %v9730
        %v9732 = vrot.slane %v9630, 2
        %v9733 = vrot.slane %v9631, 2
        %v9734 = vsel %vm998, %v9732, %v9733
        %v9735 = vrot.slane %v9632, 2
        %v9736 = vsel %vm998, %v9733, %v9735
        %v9737 = vrot.slane %v9633, 2
        %v9738 = vrot.slane %v9634, 2
        %v9739 = vsel %vm998, %v9737, %v9738
        %v9740 = vrot.slane %v9635, 2
        %v9741 = vsel %vm998, %v9738, %v9740
        %v9742 = vrot.slane %v9636, 2
        %v9743 = vrot.slane %v9637, 2
        %v9744 = vsel %vm998, %v9742, %v9743
        %v9745 = vrot.slane %v9638, 2
        %v9746 = vsel %vm998, %v9743, %v9745
        %v9747 = vrot.slane %v9639, 2
        %v9748 = vrot.slane %v9640, 2
        %v9749 = vsel %vm998, %v9747, %v9748
        %v9750 = vrot.slane %v9641, 2
        %v9751 = vsel %vm998, %v9748, %v9750
        %v9752 = vrot.slane %v9642, 2
        %v9753 = vrot.slane %v9643, 2
        %v9754 = vsel %vm998, %v9752, %v9753
        %v9755 = vrot.slane %v9644, 2
        %v9756 = vsel %vm998, %v9753, %v9755
        %v9757 = vrot.slane %v9645, 2
        %v9758 = vrot.slane %v9646, 2
        %v9759 = vsel %vm998, %v9757, %v9758
        %v9760 = vrot.slane %v9647, 2
        %v9761 = vsel %vm998, %v9758, %v9760
        %v9762 = vrot.slane %v9648, 2
        %v9763 = vrot.slane %v9649, 2
        %v9764 = vsel %vm998, %v9762, %v9763
        %v9765 = vrot.slane %v9650, 2
        %v9766 = vsel %vm998, %v9763, %v9765
        %v9767 = vrot.slane %v9651, 2
        %v9768 = vrot.slane %v9652, 2
        %v9769 = vsel %vm998, %v9767, %v9768
        %v9770 = vrot.slane %v9653, 2
        %v9771 = vsel %vm998, %v9768, %v9770
        %v9772 = vrot.slane %v9654, 2
        %v9773 = vrot.slane %v9655, 2
        %v9774 = vsel %vm998, %v9772, %v9773
        %v9775 = vrot.slane %v9656, 2
        %v9776 = vsel %vm998, %v9773, %v9775
        %v9777 = vrot.slane %v9657, 2
        %v9778 = vrot.slane %v9658, 2
        %v9779 = vsel %vm998, %v9777, %v9778
        %v9780 = vrot.slane %v9659, 2
        %v9781 = vsel %vm998, %v9778, %v9780
        %v9782 = vrot.slane %v9660, 2
        %v9783 = vrot.slane %v9661, 2
        %v9784 = vsel %vm998, %v9782, %v9783
        %v9785 = vrot.slane %v9662, 2
        %v9786 = vsel %vm998, %v9783, %v9785
        %v9787 = vrot.slane %v9663, 2
        %v9788 = vrot.slane %v9664, 2
        %v9789 = vsel %vm998, %v9787, %v9788
        %v9790 = vrot.slane %v9665, 2
        %v9791 = vsel %vm998, %v9788, %v9790
        %v9792 = vrot.slane %v9666, 2
        %v9793 = vrot.slane %v9667, 2
        %v9794 = vsel %vm998, %v9792, %v9793
        %v9795 = vrot.slane %v9668, 2
        %v9796 = vsel %vm998, %v9793, %v9795
        %v9845 = vadd.f32 %v9571, %v9719
        %v9846 = vadd.f32 %v9572, %v9721
        %v9847 = vadd.f32 %v9573, %v9720
        %v9848 = vadd.f32 %v9574, %v9724
        %v9849 = vadd.f32 %v9575, %v9726
        %v9850 = vadd.f32 %v9576, %v9725
        %v9851 = vadd.f32 %v9577, %v9729
        %v9852 = vadd.f32 %v9578, %v9731
        %v9853 = vadd.f32 %v9579, %v9730
        %v9854 = vadd.f32 %v9580, %v9734
        %v9855 = vadd.f32 %v9581, %v9736
        %v9856 = vadd.f32 %v9582, %v9735
        %v9857 = vadd.f32 %v9583, %v9739
        %v9858 = vadd.f32 %v9584, %v9741
        %v9859 = vadd.f32 %v9585, %v9740
        %v9860 = vadd.f32 %v9586, %v9744
        %v9861 = vadd.f32 %v9587, %v9746
        %v9862 = vadd.f32 %v9588, %v9745
        %v9863 = vadd.f32 %v9589, %v9749
        %v9864 = vadd.f32 %v9590, %v9751
        %v9865 = vadd.f32 %v9591, %v9750
        %v9866 = vadd.f32 %v9592, %v9754
        %v9867 = vadd.f32 %v9593, %v9756
        %v9868 = vadd.f32 %v9594, %v9755
        %v9869 = vadd.f32 %v9595, %v9759
        %v9870 = vadd.f32 %v9596, %v9761
        %v9871 = vadd.f32 %v9597, %v9760
        %v9872 = vadd.f32 %v9598, %v9764
        %v9873 = vadd.f32 %v9599, %v9766
        %v9874 = vadd.f32 %v9600, %v9765
        %v9875 = vadd.f32 %v9601, %v9769
        %v9876 = vadd.f32 %v9602, %v9771
        %v9877 = vadd.f32 %v9603, %v9770
        %v9878 = vadd.f32 %v9604, %v9774
        %v9879 = vadd.f32 %v9605, %v9776
        %v9880 = vadd.f32 %v9606, %v9775
        %v9881 = vadd.f32 %v9607, %v9779
        %v9882 = vadd.f32 %v9608, %v9781
        %v9883 = vadd.f32 %v9609, %v9780
        %v9884 = vadd.f32 %v9610, %v9784
        %v9885 = vadd.f32 %v9611, %v9786
        %v9886 = vadd.f32 %v9612, %v9785
        %v9887 = vadd.f32 %v9613, %v9789
        %v9888 = vadd.f32 %v9614, %v9791
        %v9889 = vadd.f32 %v9615, %v9790
        %v9890 = vadd.f32 %v9616, %v9794
        %v9891 = vadd.f32 %v9617, %v9796
        %v9892 = vadd.f32 %v9618, %v9795
        %v9893 = vld [vmem:[%s1 + $0x26] sm:$0x1]
        %v9894 = vperm.slane %v9893, 0
        %v9895 = vmul.f32 %v9184, %v9894
        %v9896 = vmul.f32 %v9185, %v9894
        %v9897 = vmul.f32 %v9188, %v9894
        %v9898 = vmul.f32 %v9189, %v9894
        %v9899 = vmul.f32 %v9192, %v9894
        %v9900 = vmul.f32 %v9193, %v9894
        %v9901 = vmul.f32 %v9196, %v9894
        %v9902 = vmul.f32 %v9197, %v9894
        %v9903 = vmul.f32 %v9200, %v9894
        %v9904 = vmul.f32 %v9201, %v9894
        %v9905 = vmul.f32 %v9204, %v9894
        %v9906 = vmul.f32 %v9205, %v9894
        %v9907 = vmul.f32 %v9208, %v9894
        %v9908 = vmul.f32 %v9209, %v9894
        %v9909 = vmul.f32 %v9212, %v9894
        %v9910 = vmul.f32 %v9213, %v9894
        %v9911 = vmul.f32 %v9216, %v9894
        %v9912 = vmul.f32 %v9217, %v9894
        %v9913 = vmul.f32 %v9220, %v9894
        %v9914 = vmul.f32 %v9221, %v9894
        %v9915 = vmul.f32 %v9224, %v9894
        %v9916 = vmul.f32 %v9225, %v9894
        %v9917 = vmul.f32 %v9228, %v9894
        %v9918 = vmul.f32 %v9229, %v9894
        %v9919 = vmul.f32 %v9232, %v9894
        %v9920 = vmul.f32 %v9233, %v9894
        %v9921 = vmul.f32 %v9236, %v9894
        %v9922 = vmul.f32 %v9237, %v9894
        %v9923 = vmul.f32 %v9240, %v9894
        %v9924 = vmul.f32 %v9241, %v9894
        %v9925 = vmul.f32 %v9244, %v9894
        %v9926 = vmul.f32 %v9245, %v9894
        %v9959 = vrot.slane %v9895, 3
        %v9960 = vrot.slane %v9896, 3
        %v9961 = vsel %vm1241, %v9959, %v9960
        %v9962 = vrot.slane %v9897, 3
        %v9963 = vrot.slane %v9898, 3
        %v9964 = vsel %vm1241, %v9962, %v9963
        %v9965 = vrot.slane %v9899, 3
        %v9966 = vrot.slane %v9900, 3
        %v9967 = vsel %vm1241, %v9965, %v9966
        %v9968 = vrot.slane %v9901, 3
        %v9969 = vrot.slane %v9902, 3
        %v9970 = vsel %vm1241, %v9968, %v9969
        %v9971 = vrot.slane %v9903, 3
        %v9972 = vrot.slane %v9904, 3
        %v9973 = vsel %vm1241, %v9971, %v9972
        %v9974 = vrot.slane %v9905, 3
        %v9975 = vrot.slane %v9906, 3
        %v9976 = vsel %vm1241, %v9974, %v9975
        %v9977 = vrot.slane %v9907, 3
        %v9978 = vrot.slane %v9908, 3
        %v9979 = vsel %vm1241, %v9977, %v9978
        %v9980 = vrot.slane %v9909, 3
        %v9981 = vrot.slane %v9910, 3
        %v9982 = vsel %vm1241, %v9980, %v9981
        %v9983 = vrot.slane %v9911, 3
        %v9984 = vrot.slane %v9912, 3
        %v9985 = vsel %vm1241, %v9983, %v9984
        %v9986 = vrot.slane %v9913, 3
        %v9987 = vrot.slane %v9914, 3
        %v9988 = vsel %vm1241, %v9986, %v9987
        %v9989 = vrot.slane %v9915, 3
        %v9990 = vrot.slane %v9916, 3
        %v9991 = vsel %vm1241, %v9989, %v9990
        %v9992 = vrot.slane %v9917, 3
        %v9993 = vrot.slane %v9918, 3
        %v9994 = vsel %vm1241, %v9992, %v9993
        %v9995 = vrot.slane %v9919, 3
        %v9996 = vrot.slane %v9920, 3
        %v9997 = vsel %vm1241, %v9995, %v9996
        %v9998 = vrot.slane %v9921, 3
        %v9999 = vrot.slane %v9922, 3
        %v10000 = vsel %vm1241, %v9998, %v9999
        %v10001 = vrot.slane %v9923, 3
        %v10002 = vrot.slane %v9924, 3
        %v10003 = vsel %vm1241, %v10001, %v10002
        %v10004 = vrot.slane %v9925, 3
        %v10005 = vrot.slane %v9926, 3
        %v10006 = vsel %vm1241, %v10004, %v10005
        %v10055 = vadd.f32 %v9845, %v9959
        %v10056 = vadd.f32 %v9846, %v9961
        %v10057 = vadd.f32 %v9847, %v9960
        %v10058 = vadd.f32 %v9848, %v9962
        %v10059 = vadd.f32 %v9849, %v9964
        %v10060 = vadd.f32 %v9850, %v9963
        %v10061 = vadd.f32 %v9851, %v9965
        %v10062 = vadd.f32 %v9852, %v9967
        %v10063 = vadd.f32 %v9853, %v9966
        %v10064 = vadd.f32 %v9854, %v9968
        %v10065 = vadd.f32 %v9855, %v9970
        %v10066 = vadd.f32 %v9856, %v9969
        %v10067 = vadd.f32 %v9857, %v9971
        %v10068 = vadd.f32 %v9858, %v9973
        %v10069 = vadd.f32 %v9859, %v9972
        %v10070 = vadd.f32 %v9860, %v9974
        %v10071 = vadd.f32 %v9861, %v9976
        %v10072 = vadd.f32 %v9862, %v9975
        %v10073 = vadd.f32 %v9863, %v9977
        %v10074 = vadd.f32 %v9864, %v9979
        %v10075 = vadd.f32 %v9865, %v9978
        %v10076 = vadd.f32 %v9866, %v9980
        %v10077 = vadd.f32 %v9867, %v9982
        %v10078 = vadd.f32 %v9868, %v9981
        %v10079 = vadd.f32 %v9869, %v9983
        %v10080 = vadd.f32 %v9870, %v9985
        %v10081 = vadd.f32 %v9871, %v9984
        %v10082 = vadd.f32 %v9872, %v9986
        %v10083 = vadd.f32 %v9873, %v9988
        %v10084 = vadd.f32 %v9874, %v9987
        %v10085 = vadd.f32 %v9875, %v9989
        %v10086 = vadd.f32 %v9876, %v9991
        %v10087 = vadd.f32 %v9877, %v9990
        %v10088 = vadd.f32 %v9878, %v9992
        %v10089 = vadd.f32 %v9879, %v9994
        %v10090 = vadd.f32 %v9880, %v9993
        %v10091 = vadd.f32 %v9881, %v9995
        %v10092 = vadd.f32 %v9882, %v9997
        %v10093 = vadd.f32 %v9883, %v9996
        %v10094 = vadd.f32 %v9884, %v9998
        %v10095 = vadd.f32 %v9885, %v10000
        %v10096 = vadd.f32 %v9886, %v9999
        %v10097 = vadd.f32 %v9887, %v10001
        %v10098 = vadd.f32 %v9888, %v10003
        %v10099 = vadd.f32 %v9889, %v10002
        %v10100 = vadd.f32 %v9890, %v10004
        %v10101 = vadd.f32 %v9891, %v10006
        %v10102 = vadd.f32 %v9892, %v10005
        %v10103 = vld [vmem:[%s1 + $0x27] sm:$0x1]
        %v10104 = vperm.slane %v10103, 0
        %v10105 = vmul.f32 %v9184, %v10104
        %v10106 = vmul.f32 %v9185, %v10104
        %v10107 = vmul.f32 %v9186, %v10104
        %v10108 = vmul.f32 %v9188, %v10104
        %v10109 = vmul.f32 %v9189, %v10104
        %v10110 = vmul.f32 %v9190, %v10104
        %v10111 = vmul.f32 %v9192, %v10104
        %v10112 = vmul.f32 %v9193, %v10104
        %v10113 = vmul.f32 %v9194, %v10104
        %v10114 = vmul.f32 %v9196, %v10104
        %v10115 = vmul.f32 %v9197, %v10104
        %v10116 = vmul.f32 %v9198, %v10104
        %v10117 = vmul.f32 %v9200, %v10104
        %v10118 = vmul.f32 %v9201, %v10104
        %v10119 = vmul.f32 %v9202, %v10104
        %v10120 = vmul.f32 %v9204, %v10104
        %v10121 = vmul.f32 %v9205, %v10104
        %v10122 = vmul.f32 %v9206, %v10104
        %v10123 = vmul.f32 %v9208, %v10104
        %v10124 = vmul.f32 %v9209, %v10104
        %v10125 = vmul.f32 %v9210, %v10104
        %v10126 = vmul.f32 %v9212, %v10104
        %v10127 = vmul.f32 %v9213, %v10104
        %v10128 = vmul.f32 %v9214, %v10104
        %v10129 = vmul.f32 %v9216, %v10104
        %v10130 = vmul.f32 %v9217, %v10104
        %v10131 = vmul.f32 %v9218, %v10104
        %v10132 = vmul.f32 %v9220, %v10104
        %v10133 = vmul.f32 %v9221, %v10104
        %v10134 = vmul.f32 %v9222, %v10104
        %v10135 = vmul.f32 %v9224, %v10104
        %v10136 = vmul.f32 %v9225, %v10104
        %v10137 = vmul.f32 %v9226, %v10104
        %v10138 = vmul.f32 %v9228, %v10104
        %v10139 = vmul.f32 %v9229, %v10104
        %v10140 = vmul.f32 %v9230, %v10104
        %v10141 = vmul.f32 %v9232, %v10104
        %v10142 = vmul.f32 %v9233, %v10104
        %v10143 = vmul.f32 %v9234, %v10104
        %v10144 = vmul.f32 %v9236, %v10104
        %v10145 = vmul.f32 %v9237, %v10104
        %v10146 = vmul.f32 %v9238, %v10104
        %v10147 = vmul.f32 %v9240, %v10104
        %v10148 = vmul.f32 %v9241, %v10104
        %v10149 = vmul.f32 %v9242, %v10104
        %v10150 = vmul.f32 %v9244, %v10104
        %v10151 = vmul.f32 %v9245, %v10104
        %v10152 = vmul.f32 %v9246, %v10104
        %v10201 = vrot.slane %v10105, 4
        %v10202 = vrot.slane %v10106, 4
        %v10203 = vsel %vm1484, %v10201, %v10202
        %v10204 = vrot.slane %v10107, 4
        %v10205 = vsel %vm1484, %v10202, %v10204
        %v10206 = vrot.slane %v10108, 4
        %v10207 = vrot.slane %v10109, 4
        %v10208 = vsel %vm1484, %v10206, %v10207
        %v10209 = vrot.slane %v10110, 4
        %v10210 = vsel %vm1484, %v10207, %v10209
        %v10211 = vrot.slane %v10111, 4
        %v10212 = vrot.slane %v10112, 4
        %v10213 = vsel %vm1484, %v10211, %v10212
        %v10214 = vrot.slane %v10113, 4
        %v10215 = vsel %vm1484, %v10212, %v10214
        %v10216 = vrot.slane %v10114, 4
        %v10217 = vrot.slane %v10115, 4
        %v10218 = vsel %vm1484, %v10216, %v10217
        %v10219 = vrot.slane %v10116, 4
        %v10220 = vsel %vm1484, %v10217, %v10219
        %v10221 = vrot.slane %v10117, 4
        %v10222 = vrot.slane %v10118, 4
        %v10223 = vsel %vm1484, %v10221, %v10222
        %v10224 = vrot.slane %v10119, 4
        %v10225 = vsel %vm1484, %v10222, %v10224
        %v10226 = vrot.slane %v10120, 4
        %v10227 = vrot.slane %v10121, 4
        %v10228 = vsel %vm1484, %v10226, %v10227
        %v10229 = vrot.slane %v10122, 4
        %v10230 = vsel %vm1484, %v10227, %v10229
        %v10231 = vrot.slane %v10123, 4
        %v10232 = vrot.slane %v10124, 4
        %v10233 = vsel %vm1484, %v10231, %v10232
        %v10234 = vrot.slane %v10125, 4
        %v10235 = vsel %vm1484, %v10232, %v10234
        %v10236 = vrot.slane %v10126, 4
        %v10237 = vrot.slane %v10127, 4
        %v10238 = vsel %vm1484, %v10236, %v10237
        %v10239 = vrot.slane %v10128, 4
        %v10240 = vsel %vm1484, %v10237, %v10239
        %v10241 = vrot.slane %v10129, 4
        %v10242 = vrot.slane %v10130, 4
        %v10243 = vsel %vm1484, %v10241, %v10242
        %v10244 = vrot.slane %v10131, 4
        %v10245 = vsel %vm1484, %v10242, %v10244
        %v10246 = vrot.slane %v10132, 4
        %v10247 = vrot.slane %v10133, 4
        %v10248 = vsel %vm1484, %v10246, %v10247
        %v10249 = vrot.slane %v10134, 4
        %v10250 = vsel %vm1484, %v10247, %v10249
        %v10251 = vrot.slane %v10135, 4
        %v10252 = vrot.slane %v10136, 4
        %v10253 = vsel %vm1484, %v10251, %v10252
        %v10254 = vrot.slane %v10137, 4
        %v10255 = vsel %vm1484, %v10252, %v10254
        %v10256 = vrot.slane %v10138, 4
        %v10257 = vrot.slane %v10139, 4
        %v10258 = vsel %vm1484, %v10256, %v10257
        %v10259 = vrot.slane %v10140, 4
        %v10260 = vsel %vm1484, %v10257, %v10259
        %v10261 = vrot.slane %v10141, 4
        %v10262 = vrot.slane %v10142, 4
        %v10263 = vsel %vm1484, %v10261, %v10262
        %v10264 = vrot.slane %v10143, 4
        %v10265 = vsel %vm1484, %v10262, %v10264
        %v10266 = vrot.slane %v10144, 4
        %v10267 = vrot.slane %v10145, 4
        %v10268 = vsel %vm1484, %v10266, %v10267
        %v10269 = vrot.slane %v10146, 4
        %v10270 = vsel %vm1484, %v10267, %v10269
        %v10271 = vrot.slane %v10147, 4
        %v10272 = vrot.slane %v10148, 4
        %v10273 = vsel %vm1484, %v10271, %v10272
        %v10274 = vrot.slane %v10149, 4
        %v10275 = vsel %vm1484, %v10272, %v10274
        %v10276 = vrot.slane %v10150, 4
        %v10277 = vrot.slane %v10151, 4
        %v10278 = vsel %vm1484, %v10276, %v10277
        %v10279 = vrot.slane %v10152, 4
        %v10280 = vsel %vm1484, %v10277, %v10279
        %v10329 = vadd.f32 %v10055, %v10201
        %v10330 = vadd.f32 %v10056, %v10203
        %v10331 = vadd.f32 %v10057, %v10205
        %v10332 = vadd.f32 %v10058, %v10206
        %v10333 = vadd.f32 %v10059, %v10208
        %v10334 = vadd.f32 %v10060, %v10210
        %v10335 = vadd.f32 %v10061, %v10211
        %v10336 = vadd.f32 %v10062, %v10213
        %v10337 = vadd.f32 %v10063, %v10215
        %v10338 = vadd.f32 %v10064, %v10216
        %v10339 = vadd.f32 %v10065, %v10218
        %v10340 = vadd.f32 %v10066, %v10220
        %v10341 = vadd.f32 %v10067, %v10221
        %v10342 = vadd.f32 %v10068, %v10223
        %v10343 = vadd.f32 %v10069, %v10225
        %v10344 = vadd.f32 %v10070, %v10226
        %v10345 = vadd.f32 %v10071, %v10228
        %v10346 = vadd.f32 %v10072, %v10230
        %v10347 = vadd.f32 %v10073, %v10231
        %v10348 = vadd.f32 %v10074, %v10233
        %v10349 = vadd.f32 %v10075, %v10235
        %v10350 = vadd.f32 %v10076, %v10236
        %v10351 = vadd.f32 %v10077, %v10238
        %v10352 = vadd.f32 %v10078, %v10240
        %v10353 = vadd.f32 %v10079, %v10241
        %v10354 = vadd.f32 %v10080, %v10243
        %v10355 = vadd.f32 %v10081, %v10245
        %v10356 = vadd.f32 %v10082, %v10246
        %v10357 = vadd.f32 %v10083, %v10248
        %v10358 = vadd.f32 %v10084, %v10250
        %v10359 = vadd.f32 %v10085, %v10251
        %v10360 = vadd.f32 %v10086, %v10253
        %v10361 = vadd.f32 %v10087, %v10255
        %v10362 = vadd.f32 %v10088, %v10256
        %v10363 = vadd.f32 %v10089, %v10258
        %v10364 = vadd.f32 %v10090, %v10260
        %v10365 = vadd.f32 %v10091, %v10261
        %v10366 = vadd.f32 %v10092, %v10263
        %v10367 = vadd.f32 %v10093, %v10265
        %v10368 = vadd.f32 %v10094, %v10266
        %v10369 = vadd.f32 %v10095, %v10268
        %v10370 = vadd.f32 %v10096, %v10270
        %v10371 = vadd.f32 %v10097, %v10271
        %v10372 = vadd.f32 %v10098, %v10273
        %v10373 = vadd.f32 %v10099, %v10275
        %v10374 = vadd.f32 %v10100, %v10276
        %v10375 = vadd.f32 %v10101, %v10278
        %v10376 = vadd.f32 %v10102, %v10280
        %v10377 = vld [vmem:[%s1 + $0x28] sm:$0x1]
        %v10378 = vperm.slane %v10377, 0
        %v10379 = vmul.f32 %v9184, %v10378
        %v10380 = vmul.f32 %v9185, %v10378
        %v10381 = vmul.f32 %v9186, %v10378
        %v10382 = vmul.f32 %v9188, %v10378
        %v10383 = vmul.f32 %v9189, %v10378
        %v10384 = vmul.f32 %v9190, %v10378
        %v10385 = vmul.f32 %v9192, %v10378
        %v10386 = vmul.f32 %v9193, %v10378
        %v10387 = vmul.f32 %v9194, %v10378
        %v10388 = vmul.f32 %v9196, %v10378
        %v10389 = vmul.f32 %v9197, %v10378
        %v10390 = vmul.f32 %v9198, %v10378
        %v10391 = vmul.f32 %v9200, %v10378
        %v10392 = vmul.f32 %v9201, %v10378
        %v10393 = vmul.f32 %v9202, %v10378
        %v10394 = vmul.f32 %v9204, %v10378
        %v10395 = vmul.f32 %v9205, %v10378
        %v10396 = vmul.f32 %v9206, %v10378
        %v10397 = vmul.f32 %v9208, %v10378
        %v10398 = vmul.f32 %v9209, %v10378
        %v10399 = vmul.f32 %v9210, %v10378
        %v10400 = vmul.f32 %v9212, %v10378
        %v10401 = vmul.f32 %v9213, %v10378
        %v10402 = vmul.f32 %v9214, %v10378
        %v10403 = vmul.f32 %v9216, %v10378
        %v10404 = vmul.f32 %v9217, %v10378
        %v10405 = vmul.f32 %v9218, %v10378
        %v10406 = vmul.f32 %v9220, %v10378
        %v10407 = vmul.f32 %v9221, %v10378
        %v10408 = vmul.f32 %v9222, %v10378
        %v10409 = vmul.f32 %v9224, %v10378
        %v10410 = vmul.f32 %v9225, %v10378
        %v10411 = vmul.f32 %v9226, %v10378
        %v10412 = vmul.f32 %v9228, %v10378
        %v10413 = vmul.f32 %v9229, %v10378
        %v10414 = vmul.f32 %v9230, %v10378
        %v10415 = vmul.f32 %v9232, %v10378
        %v10416 = vmul.f32 %v9233, %v10378
        %v10417 = vmul.f32 %v9234, %v10378
        %v10418 = vmul.f32 %v9236, %v10378
        %v10419 = vmul.f32 %v9237, %v10378
        %v10420 = vmul.f32 %v9238, %v10378
        %v10421 = vmul.f32 %v9240, %v10378
        %v10422 = vmul.f32 %v9241, %v10378
        %v10423 = vmul.f32 %v9242, %v10378
        %v10424 = vmul.f32 %v9244, %v10378
        %v10425 = vmul.f32 %v9245, %v10378
        %v10426 = vmul.f32 %v9246, %v10378
        %v10475 = vrot.slane %v10379, 5
        %v10476 = vrot.slane %v10380, 5
        %v10477 = vsel %vm1759, %v10475, %v10476
        %v10478 = vrot.slane %v10381, 5
        %v10479 = vsel %vm1759, %v10476, %v10478
        %v10480 = vrot.slane %v10382, 5
        %v10481 = vrot.slane %v10383, 5
        %v10482 = vsel %vm1759, %v10480, %v10481
        %v10483 = vrot.slane %v10384, 5
        %v10484 = vsel %vm1759, %v10481, %v10483
        %v10485 = vrot.slane %v10385, 5
        %v10486 = vrot.slane %v10386, 5
        %v10487 = vsel %vm1759, %v10485, %v10486
        %v10488 = vrot.slane %v10387, 5
        %v10489 = vsel %vm1759, %v10486, %v10488
        %v10490 = vrot.slane %v10388, 5
        %v10491 = vrot.slane %v10389, 5
        %v10492 = vsel %vm1759, %v10490, %v10491
        %v10493 = vrot.slane %v10390, 5
        %v10494 = vsel %vm1759, %v10491, %v10493
        %v10495 = vrot.slane %v10391, 5
        %v10496 = vrot.slane %v10392, 5
        %v10497 = vsel %vm1759, %v10495, %v10496
        %v10498 = vrot.slane %v10393, 5
        %v10499 = vsel %vm1759, %v10496, %v10498
        %v10500 = vrot.slane %v10394, 5
        %v10501 = vrot.slane %v10395, 5
        %v10502 = vsel %vm1759, %v10500, %v10501
        %v10503 = vrot.slane %v10396, 5
        %v10504 = vsel %vm1759, %v10501, %v10503
        %v10505 = vrot.slane %v10397, 5
        %v10506 = vrot.slane %v10398, 5
        %v10507 = vsel %vm1759, %v10505, %v10506
        %v10508 = vrot.slane %v10399, 5
        %v10509 = vsel %vm1759, %v10506, %v10508
        %v10510 = vrot.slane %v10400, 5
        %v10511 = vrot.slane %v10401, 5
        %v10512 = vsel %vm1759, %v10510, %v10511
        %v10513 = vrot.slane %v10402, 5
        %v10514 = vsel %vm1759, %v10511, %v10513
        %v10515 = vrot.slane %v10403, 5
        %v10516 = vrot.slane %v10404, 5
        %v10517 = vsel %vm1759, %v10515, %v10516
        %v10518 = vrot.slane %v10405, 5
        %v10519 = vsel %vm1759, %v10516, %v10518
        %v10520 = vrot.slane %v10406, 5
        %v10521 = vrot.slane %v10407, 5
        %v10522 = vsel %vm1759, %v10520, %v10521
        %v10523 = vrot.slane %v10408, 5
        %v10524 = vsel %vm1759, %v10521, %v10523
        %v10525 = vrot.slane %v10409, 5
        %v10526 = vrot.slane %v10410, 5
        %v10527 = vsel %vm1759, %v10525, %v10526
        %v10528 = vrot.slane %v10411, 5
        %v10529 = vsel %vm1759, %v10526, %v10528
        %v10530 = vrot.slane %v10412, 5
        %v10531 = vrot.slane %v10413, 5
        %v10532 = vsel %vm1759, %v10530, %v10531
        %v10533 = vrot.slane %v10414, 5
        %v10534 = vsel %vm1759, %v10531, %v10533
        %v10535 = vrot.slane %v10415, 5
        %v10536 = vrot.slane %v10416, 5
        %v10537 = vsel %vm1759, %v10535, %v10536
        %v10538 = vrot.slane %v10417, 5
        %v10539 = vsel %vm1759, %v10536, %v10538
        %v10540 = vrot.slane %v10418, 5
        %v10541 = vrot.slane %v10419, 5
        %v10542 = vsel %vm1759, %v10540, %v10541
        %v10543 = vrot.slane %v10420, 5
        %v10544 = vsel %vm1759, %v10541, %v10543
        %v10545 = vrot.slane %v10421, 5
        %v10546 = vrot.slane %v10422, 5
        %v10547 = vsel %vm1759, %v10545, %v10546
        %v10548 = vrot.slane %v10423, 5
        %v10549 = vsel %vm1759, %v10546, %v10548
        %v10550 = vrot.slane %v10424, 5
        %v10551 = vrot.slane %v10425, 5
        %v10552 = vsel %vm1759, %v10550, %v10551
        %v10553 = vrot.slane %v10426, 5
        %v10554 = vsel %vm1759, %v10551, %v10553
        %v10603 = vadd.f32 %v10329, %v10475
        %v10604 = vadd.f32 %v10330, %v10477
        %v10605 = vadd.f32 %v10331, %v10479
        %v10606 = vadd.f32 %v10332, %v10480
        %v10607 = vadd.f32 %v10333, %v10482
        %v10608 = vadd.f32 %v10334, %v10484
        %v10609 = vadd.f32 %v10335, %v10485
        %v10610 = vadd.f32 %v10336, %v10487
        %v10611 = vadd.f32 %v10337, %v10489
        %v10612 = vadd.f32 %v10338, %v10490
        %v10613 = vadd.f32 %v10339, %v10492
        %v10614 = vadd.f32 %v10340, %v10494
        %v10615 = vadd.f32 %v10341, %v10495
        %v10616 = vadd.f32 %v10342, %v10497
        %v10617 = vadd.f32 %v10343, %v10499
        %v10618 = vadd.f32 %v10344, %v10500
        %v10619 = vadd.f32 %v10345, %v10502
        %v10620 = vadd.f32 %v10346, %v10504
        %v10621 = vadd.f32 %v10347, %v10505
        %v10622 = vadd.f32 %v10348, %v10507
        %v10623 = vadd.f32 %v10349, %v10509
        %v10624 = vadd.f32 %v10350, %v10510
        %v10625 = vadd.f32 %v10351, %v10512
        %v10626 = vadd.f32 %v10352, %v10514
        %v10627 = vadd.f32 %v10353, %v10515
        %v10628 = vadd.f32 %v10354, %v10517
        %v10629 = vadd.f32 %v10355, %v10519
        %v10630 = vadd.f32 %v10356, %v10520
        %v10631 = vadd.f32 %v10357, %v10522
        %v10632 = vadd.f32 %v10358, %v10524
        %v10633 = vadd.f32 %v10359, %v10525
        %v10634 = vadd.f32 %v10360, %v10527
        %v10635 = vadd.f32 %v10361, %v10529
        %v10636 = vadd.f32 %v10362, %v10530
        %v10637 = vadd.f32 %v10363, %v10532
        %v10638 = vadd.f32 %v10364, %v10534
        %v10639 = vadd.f32 %v10365, %v10535
        %v10640 = vadd.f32 %v10366, %v10537
        %v10641 = vadd.f32 %v10367, %v10539
        %v10642 = vadd.f32 %v10368, %v10540
        %v10643 = vadd.f32 %v10369, %v10542
        %v10644 = vadd.f32 %v10370, %v10544
        %v10645 = vadd.f32 %v10371, %v10545
        %v10646 = vadd.f32 %v10372, %v10547
        %v10647 = vadd.f32 %v10373, %v10549
        %v10648 = vadd.f32 %v10374, %v10550
        %v10649 = vadd.f32 %v10375, %v10552
        %v10650 = vadd.f32 %v10376, %v10554
        %v10651 = vld [vmem:[%s1 + $0x29] sm:$0x1]
        %v10652 = vperm.slane %v10651, 0
        %v10653 = vmul.f32 %v9184, %v10652
        %v10654 = vmul.f32 %v9185, %v10652
        %v10655 = vmul.f32 %v9186, %v10652
        %v10656 = vmul.f32 %v9188, %v10652
        %v10657 = vmul.f32 %v9189, %v10652
        %v10658 = vmul.f32 %v9190, %v10652
        %v10659 = vmul.f32 %v9192, %v10652
        %v10660 = vmul.f32 %v9193, %v10652
        %v10661 = vmul.f32 %v9194, %v10652
        %v10662 = vmul.f32 %v9196, %v10652
        %v10663 = vmul.f32 %v9197, %v10652
        %v10664 = vmul.f32 %v9198, %v10652
        %v10665 = vmul.f32 %v9200, %v10652
        %v10666 = vmul.f32 %v9201, %v10652
        %v10667 = vmul.f32 %v9202, %v10652
        %v10668 = vmul.f32 %v9204, %v10652
        %v10669 = vmul.f32 %v9205, %v10652
        %v10670 = vmul.f32 %v9206, %v10652
        %v10671 = vmul.f32 %v9208, %v10652
        %v10672 = vmul.f32 %v9209, %v10652
        %v10673 = vmul.f32 %v9210, %v10652
        %v10674 = vmul.f32 %v9212, %v10652
        %v10675 = vmul.f32 %v9213, %v10652
        %v10676 = vmul.f32 %v9214, %v10652
        %v10677 = vmul.f32 %v9216, %v10652
        %v10678 = vmul.f32 %v9217, %v10652
        %v10679 = vmul.f32 %v9218, %v10652
        %v10680 = vmul.f32 %v9220, %v10652
        %v10681 = vmul.f32 %v9221, %v10652
        %v10682 = vmul.f32 %v9222, %v10652
        %v10683 = vmul.f32 %v9224, %v10652
        %v10684 = vmul.f32 %v9225, %v10652
        %v10685 = vmul.f32 %v9226, %v10652
        %v10686 = vmul.f32 %v9228, %v10652
        %v10687 = vmul.f32 %v9229, %v10652
        %v10688 = vmul.f32 %v9230, %v10652
        %v10689 = vmul.f32 %v9232, %v10652
        %v10690 = vmul.f32 %v9233, %v10652
        %v10691 = vmul.f32 %v9234, %v10652
        %v10692 = vmul.f32 %v9236, %v10652
        %v10693 = vmul.f32 %v9237, %v10652
        %v10694 = vmul.f32 %v9238, %v10652
        %v10695 = vmul.f32 %v9240, %v10652
        %v10696 = vmul.f32 %v9241, %v10652
        %v10697 = vmul.f32 %v9242, %v10652
        %v10698 = vmul.f32 %v9244, %v10652
        %v10699 = vmul.f32 %v9245, %v10652
        %v10700 = vmul.f32 %v9246, %v10652
        %v10749 = vrot.slane %v10653, 6
        %v10750 = vrot.slane %v10654, 6
        %v10751 = vsel %vm2034, %v10749, %v10750
        %v10752 = vrot.slane %v10655, 6
        %v10753 = vsel %vm2034, %v10750, %v10752
        %v10754 = vrot.slane %v10656, 6
        %v10755 = vrot.slane %v10657, 6
        %v10756 = vsel %vm2034, %v10754, %v10755
        %v10757 = vrot.slane %v10658, 6
        %v10758 = vsel %vm2034, %v10755, %v10757
        %v10759 = vrot.slane %v10659, 6
        %v10760 = vrot.slane %v10660, 6
        %v10761 = vsel %vm2034, %v10759, %v10760
        %v10762 = vrot.slane %v10661, 6
        %v10763 = vsel %vm2034, %v10760, %v10762
        %v10764 = vrot.slane %v10662, 6
        %v10765 = vrot.slane %v10663, 6
        %v10766 = vsel %vm2034, %v10764, %v10765
        %v10767 = vrot.slane %v10664, 6
        %v10768 = vsel %vm2034, %v10765, %v10767
        %v10769 = vrot.slane %v10665, 6
        %v10770 = vrot.slane %v10666, 6
        %v10771 = vsel %vm2034, %v10769, %v10770
        %v10772 = vrot.slane %v10667, 6
        %v10773 = vsel %vm2034, %v10770, %v10772
        %v10774 = vrot.slane %v10668, 6
        %v10775 = vrot.slane %v10669, 6
        %v10776 = vsel %vm2034, %v10774, %v10775
        %v10777 = vrot.slane %v10670, 6
        %v10778 = vsel %vm2034, %v10775, %v10777
        %v10779 = vrot.slane %v10671, 6
        %v10780 = vrot.slane %v10672, 6
        %v10781 = vsel %vm2034, %v10779, %v10780
        %v10782 = vrot.slane %v10673, 6
        %v10783 = vsel %vm2034, %v10780, %v10782
        %v10784 = vrot.slane %v10674, 6
        %v10785 = vrot.slane %v10675, 6
        %v10786 = vsel %vm2034, %v10784, %v10785
        %v10787 = vrot.slane %v10676, 6
        %v10788 = vsel %vm2034, %v10785, %v10787
        %v10789 = vrot.slane %v10677, 6
        %v10790 = vrot.slane %v10678, 6
        %v10791 = vsel %vm2034, %v10789, %v10790
        %v10792 = vrot.slane %v10679, 6
        %v10793 = vsel %vm2034, %v10790, %v10792
        %v10794 = vrot.slane %v10680, 6
        %v10795 = vrot.slane %v10681, 6
        %v10796 = vsel %vm2034, %v10794, %v10795
        %v10797 = vrot.slane %v10682, 6
        %v10798 = vsel %vm2034, %v10795, %v10797
        %v10799 = vrot.slane %v10683, 6
        %v10800 = vrot.slane %v10684, 6
        %v10801 = vsel %vm2034, %v10799, %v10800
        %v10802 = vrot.slane %v10685, 6
        %v10803 = vsel %vm2034, %v10800, %v10802
        %v10804 = vrot.slane %v10686, 6
        %v10805 = vrot.slane %v10687, 6
        %v10806 = vsel %vm2034, %v10804, %v10805
        %v10807 = vrot.slane %v10688, 6
        %v10808 = vsel %vm2034, %v10805, %v10807
        %v10809 = vrot.slane %v10689, 6
        %v10810 = vrot.slane %v10690, 6
        %v10811 = vsel %vm2034, %v10809, %v10810
        %v10812 = vrot.slane %v10691, 6
        %v10813 = vsel %vm2034, %v10810, %v10812
        %v10814 = vrot.slane %v10692, 6
        %v10815 = vrot.slane %v10693, 6
        %v10816 = vsel %vm2034, %v10814, %v10815
        %v10817 = vrot.slane %v10694, 6
        %v10818 = vsel %vm2034, %v10815, %v10817
        %v10819 = vrot.slane %v10695, 6
        %v10820 = vrot.slane %v10696, 6
        %v10821 = vsel %vm2034, %v10819, %v10820
        %v10822 = vrot.slane %v10697, 6
        %v10823 = vsel %vm2034, %v10820, %v10822
        %v10824 = vrot.slane %v10698, 6
        %v10825 = vrot.slane %v10699, 6
        %v10826 = vsel %vm2034, %v10824, %v10825
        %v10827 = vrot.slane %v10700, 6
        %v10828 = vsel %vm2034, %v10825, %v10827
        %v10877 = vadd.f32 %v10603, %v10749
        %v10878 = vadd.f32 %v10604, %v10751
        %v10879 = vadd.f32 %v10605, %v10753
        %v10880 = vadd.f32 %v10606, %v10754
        %v10881 = vadd.f32 %v10607, %v10756
        %v10882 = vadd.f32 %v10608, %v10758
        %v10883 = vadd.f32 %v10609, %v10759
        %v10884 = vadd.f32 %v10610, %v10761
        %v10885 = vadd.f32 %v10611, %v10763
        %v10886 = vadd.f32 %v10612, %v10764
        %v10887 = vadd.f32 %v10613, %v10766
        %v10888 = vadd.f32 %v10614, %v10768
        %v10889 = vadd.f32 %v10615, %v10769
        %v10890 = vadd.f32 %v10616, %v10771
        %v10891 = vadd.f32 %v10617, %v10773
        %v10892 = vadd.f32 %v10618, %v10774
        %v10893 = vadd.f32 %v10619, %v10776
        %v10894 = vadd.f32 %v10620, %v10778
        %v10895 = vadd.f32 %v10621, %v10779
        %v10896 = vadd.f32 %v10622, %v10781
        %v10897 = vadd.f32 %v10623, %v10783
        %v10898 = vadd.f32 %v10624, %v10784
        %v10899 = vadd.f32 %v10625, %v10786
        %v10900 = vadd.f32 %v10626, %v10788
        %v10901 = vadd.f32 %v10627, %v10789
        %v10902 = vadd.f32 %v10628, %v10791
        %v10903 = vadd.f32 %v10629, %v10793
        %v10904 = vadd.f32 %v10630, %v10794
        %v10905 = vadd.f32 %v10631, %v10796
        %v10906 = vadd.f32 %v10632, %v10798
        %v10907 = vadd.f32 %v10633, %v10799
        %v10908 = vadd.f32 %v10634, %v10801
        %v10909 = vadd.f32 %v10635, %v10803
        %v10910 = vadd.f32 %v10636, %v10804
        %v10911 = vadd.f32 %v10637, %v10806
        %v10912 = vadd.f32 %v10638, %v10808
        %v10913 = vadd.f32 %v10639, %v10809
        %v10914 = vadd.f32 %v10640, %v10811
        %v10915 = vadd.f32 %v10641, %v10813
        %v10916 = vadd.f32 %v10642, %v10814
        %v10917 = vadd.f32 %v10643, %v10816
        %v10918 = vadd.f32 %v10644, %v10818
        %v10919 = vadd.f32 %v10645, %v10819
        %v10920 = vadd.f32 %v10646, %v10821
        %v10921 = vadd.f32 %v10647, %v10823
        %v10922 = vadd.f32 %v10648, %v10824
        %v10923 = vadd.f32 %v10649, %v10826
        %v10924 = vadd.f32 %v10650, %v10828
        %s10925 = scalar_lea.vmem [#allocation2], 192
        %v10926 = vld [vmem:[%s10925] sm:$0xff]
        %v10927 = vld [vmem:[%s10925 + $0x8] sm:$0xff]
        %v10928 = vld [vmem:[%s10925 + $0x10] sm:$0xff]
        %v10929 = vld [vmem:[%s10925 + $0x18] sm:$0x7]
        %v10930 = vld [vmem:[%s10925 + $0x20] sm:$0xff]
        %v10931 = vld [vmem:[%s10925 + $0x28] sm:$0xff]
        %v10932 = vld [vmem:[%s10925 + $0x30] sm:$0xff]
        %v10933 = vld [vmem:[%s10925 + $0x38] sm:$0x7]
        %v10934 = vld [vmem:[%s10925 + $0x40] sm:$0xff]
        %v10935 = vld [vmem:[%s10925 + $0x48] sm:$0xff]
        %v10936 = vld [vmem:[%s10925 + $0x50] sm:$0xff]
        %v10937 = vld [vmem:[%s10925 + $0x58] sm:$0x7]
        %v10938 = vld [vmem:[%s10925 + $0x60] sm:$0xff]
        %v10939 = vld [vmem:[%s10925 + $0x68] sm:$0xff]
        %v10940 = vld [vmem:[%s10925 + $0x70] sm:$0xff]
        %v10941 = vld [vmem:[%s10925 + $0x78] sm:$0x7]
        %v10942 = vld [vmem:[%s10925 + $0x80] sm:$0xff]
        %v10943 = vld [vmem:[%s10925 + $0x88] sm:$0xff]
        %v10944 = vld [vmem:[%s10925 + $0x90] sm:$0xff]
        %v10945 = vld [vmem:[%s10925 + $0x98] sm:$0x7]
        %v10946 = vld [vmem:[%s10925 + $0xa0] sm:$0xff]
        %v10947 = vld [vmem:[%s10925 + $0xa8] sm:$0xff]
        %v10948 = vld [vmem:[%s10925 + $0xb0] sm:$0xff]
        %v10949 = vld [vmem:[%s10925 + $0xb8] sm:$0x7]
        %v10950 = vld [vmem:[%s10925 + $0xc0] sm:$0xff]
        %v10951 = vld [vmem:[%s10925 + $0xc8] sm:$0xff]
        %v10952 = vld [vmem:[%s10925 + $0xd0] sm:$0xff]
        %v10953 = vld [vmem:[%s10925 + $0xd8] sm:$0x7]
        %v10954 = vld [vmem:[%s10925 + $0xe0] sm:$0xff]
        %v10955 = vld [vmem:[%s10925 + $0xe8] sm:$0xff]
        %v10956 = vld [vmem:[%s10925 + $0xf0] sm:$0xff]
        %v10957 = vld [vmem:[%s10925 + $0xf8] sm:$0x7]
        %v10958 = vld [vmem:[%s10925 + $0x100] sm:$0xff]
        %v10959 = vld [vmem:[%s10925 + $0x108] sm:$0xff]
        %v10960 = vld [vmem:[%s10925 + $0x110] sm:$0xff]
        %v10961 = vld [vmem:[%s10925 + $0x118] sm:$0x7]
        %v10962 = vld [vmem:[%s10925 + $0x120] sm:$0xff]
        %v10963 = vld [vmem:[%s10925 + $0x128] sm:$0xff]
        %v10964 = vld [vmem:[%s10925 + $0x130] sm:$0xff]
        %v10965 = vld [vmem:[%s10925 + $0x138] sm:$0x7]
        %v10966 = vld [vmem:[%s10925 + $0x140] sm:$0xff]
        %v10967 = vld [vmem:[%s10925 + $0x148] sm:$0xff]
        %v10968 = vld [vmem:[%s10925 + $0x150] sm:$0xff]
        %v10969 = vld [vmem:[%s10925 + $0x158] sm:$0x7]
        %v10970 = vld [vmem:[%s10925 + $0x160] sm:$0xff]
        %v10971 = vld [vmem:[%s10925 + $0x168] sm:$0xff]
        %v10972 = vld [vmem:[%s10925 + $0x170] sm:$0xff]
        %v10973 = vld [vmem:[%s10925 + $0x178] sm:$0x7]
        %v10974 = vld [vmem:[%s10925 + $0x180] sm:$0xff]
        %v10975 = vld [vmem:[%s10925 + $0x188] sm:$0xff]
        %v10976 = vld [vmem:[%s10925 + $0x190] sm:$0xff]
        %v10977 = vld [vmem:[%s10925 + $0x198] sm:$0x7]
        %v10978 = vld [vmem:[%s10925 + $0x1a0] sm:$0xff]
        %v10979 = vld [vmem:[%s10925 + $0x1a8] sm:$0xff]
        %v10980 = vld [vmem:[%s10925 + $0x1b0] sm:$0xff]
        %v10981 = vld [vmem:[%s10925 + $0x1b8] sm:$0x7]
        %v10982 = vld [vmem:[%s10925 + $0x1c0] sm:$0xff]
        %v10983 = vld [vmem:[%s10925 + $0x1c8] sm:$0xff]
        %v10984 = vld [vmem:[%s10925 + $0x1d0] sm:$0xff]
        %v10985 = vld [vmem:[%s10925 + $0x1d8] sm:$0x7]
        %v10986 = vld [vmem:[%s10925 + $0x1e0] sm:$0xff]
        %v10987 = vld [vmem:[%s10925 + $0x1e8] sm:$0xff]
        %v10988 = vld [vmem:[%s10925 + $0x1f0] sm:$0xff]
        %v10989 = vld [vmem:[%s10925 + $0x1f8] sm:$0x7]
        %v10990 = vld [vmem:[%s1 + $0x2a] sm:$0x1]
        %v10991 = vperm.slane %v10990, 0
        %v10992 = vmul.f32 %v10926, %v10991
        %v10993 = vmul.f32 %v10927, %v10991
        %v10994 = vmul.f32 %v10928, %v10991
        %v10995 = vmul.f32 %v10930, %v10991
        %v10996 = vmul.f32 %v10931, %v10991
        %v10997 = vmul.f32 %v10932, %v10991
        %v10998 = vmul.f32 %v10934, %v10991
        %v10999 = vmul.f32 %v10935, %v10991
        %v11000 = vmul.f32 %v10936, %v10991
        %v11001 = vmul.f32 %v10938, %v10991
        %v11002 = vmul.f32 %v10939, %v10991
        %v11003 = vmul.f32 %v10940, %v10991
        %v11004 = vmul.f32 %v10942, %v10991
        %v11005 = vmul.f32 %v10943, %v10991
        %v11006 = vmul.f32 %v10944, %v10991
        %v11007 = vmul.f32 %v10946, %v10991
        %v11008 = vmul.f32 %v10947, %v10991
        %v11009 = vmul.f32 %v10948, %v10991
        %v11010 = vmul.f32 %v10950, %v10991
        %v11011 = vmul.f32 %v10951, %v10991
        %v11012 = vmul.f32 %v10952, %v10991
        %v11013 = vmul.f32 %v10954, %v10991
        %v11014 = vmul.f32 %v10955, %v10991
        %v11015 = vmul.f32 %v10956, %v10991
        %v11016 = vmul.f32 %v10958, %v10991
        %v11017 = vmul.f32 %v10959, %v10991
        %v11018 = vmul.f32 %v10960, %v10991
        %v11019 = vmul.f32 %v10962, %v10991
        %v11020 = vmul.f32 %v10963, %v10991
        %v11021 = vmul.f32 %v10964, %v10991
        %v11022 = vmul.f32 %v10966, %v10991
        %v11023 = vmul.f32 %v10967, %v10991
        %v11024 = vmul.f32 %v10968, %v10991
        %v11025 = vmul.f32 %v10970, %v10991
        %v11026 = vmul.f32 %v10971, %v10991
        %v11027 = vmul.f32 %v10972, %v10991
        %v11028 = vmul.f32 %v10974, %v10991
        %v11029 = vmul.f32 %v10975, %v10991
        %v11030 = vmul.f32 %v10976, %v10991
        %v11031 = vmul.f32 %v10978, %v10991
        %v11032 = vmul.f32 %v10979, %v10991
        %v11033 = vmul.f32 %v10980, %v10991
        %v11034 = vmul.f32 %v10982, %v10991
        %v11035 = vmul.f32 %v10983, %v10991
        %v11036 = vmul.f32 %v10984, %v10991
        %v11037 = vmul.f32 %v10986, %v10991
        %v11038 = vmul.f32 %v10987, %v10991
        %v11039 = vmul.f32 %v10988, %v10991
        %v11040 = vadd.f32 %v10877, %v10992
        %v11041 = vadd.f32 %v10878, %v10993
        %v11042 = vadd.f32 %v10879, %v10994
        %v11043 = vadd.f32 %v10880, %v10995
        %v11044 = vadd.f32 %v10881, %v10996
        %v11045 = vadd.f32 %v10882, %v10997
        %v11046 = vadd.f32 %v10883, %v10998
        %v11047 = vadd.f32 %v10884, %v10999
        %v11048 = vadd.f32 %v10885, %v11000
        %v11049 = vadd.f32 %v10886, %v11001
        %v11050 = vadd.f32 %v10887, %v11002
        %v11051 = vadd.f32 %v10888, %v11003
        %v11052 = vadd.f32 %v10889, %v11004
        %v11053 = vadd.f32 %v10890, %v11005
        %v11054 = vadd.f32 %v10891, %v11006
        %v11055 = vadd.f32 %v10892, %v11007
        %v11056 = vadd.f32 %v10893, %v11008
        %v11057 = vadd.f32 %v10894, %v11009
        %v11058 = vadd.f32 %v10895, %v11010
        %v11059 = vadd.f32 %v10896, %v11011
        %v11060 = vadd.f32 %v10897, %v11012
        %v11061 = vadd.f32 %v10898, %v11013
        %v11062 = vadd.f32 %v10899, %v11014
        %v11063 = vadd.f32 %v10900, %v11015
        %v11064 = vadd.f32 %v10901, %v11016
        %v11065 = vadd.f32 %v10902, %v11017
        %v11066 = vadd.f32 %v10903, %v11018
        %v11067 = vadd.f32 %v10904, %v11019
        %v11068 = vadd.f32 %v10905, %v11020
        %v11069 = vadd.f32 %v10906, %v11021
        %v11070 = vadd.f32 %v10907, %v11022
        %v11071 = vadd.f32 %v10908, %v11023
        %v11072 = vadd.f32 %v10909, %v11024
        %v11073 = vadd.f32 %v10910, %v11025
        %v11074 = vadd.f32 %v10911, %v11026
        %v11075 = vadd.f32 %v10912, %v11027
        %v11076 = vadd.f32 %v10913, %v11028
        %v11077 = vadd.f32 %v10914, %v11029
        %v11078 = vadd.f32 %v10915, %v11030
        %v11079 = vadd.f32 %v10916, %v11031
        %v11080 = vadd.f32 %v10917, %v11032
        %v11081 = vadd.f32 %v10918, %v11033
        %v11082 = vadd.f32 %v10919, %v11034
        %v11083 = vadd.f32 %v10920, %v11035
        %v11084 = vadd.f32 %v10921, %v11036
        %v11085 = vadd.f32 %v10922, %v11037
        %v11086 = vadd.f32 %v10923, %v11038
        %v11087 = vadd.f32 %v10924, %v11039
        %v11088 = vld [vmem:[%s1 + $0x2b] sm:$0x1]
        %v11089 = vperm.slane %v11088, 0
        %v11090 = vmul.f32 %v10926, %v11089
        %v11091 = vmul.f32 %v10927, %v11089
        %v11092 = vmul.f32 %v10928, %v11089
        %v11093 = vmul.f32 %v10930, %v11089
        %v11094 = vmul.f32 %v10931, %v11089
        %v11095 = vmul.f32 %v10932, %v11089
        %v11096 = vmul.f32 %v10934, %v11089
        %v11097 = vmul.f32 %v10935, %v11089
        %v11098 = vmul.f32 %v10936, %v11089
        %v11099 = vmul.f32 %v10938, %v11089
        %v11100 = vmul.f32 %v10939, %v11089
        %v11101 = vmul.f32 %v10940, %v11089
        %v11102 = vmul.f32 %v10942, %v11089
        %v11103 = vmul.f32 %v10943, %v11089
        %v11104 = vmul.f32 %v10944, %v11089
        %v11105 = vmul.f32 %v10946, %v11089
        %v11106 = vmul.f32 %v10947, %v11089
        %v11107 = vmul.f32 %v10948, %v11089
        %v11108 = vmul.f32 %v10950, %v11089
        %v11109 = vmul.f32 %v10951, %v11089
        %v11110 = vmul.f32 %v10952, %v11089
        %v11111 = vmul.f32 %v10954, %v11089
        %v11112 = vmul.f32 %v10955, %v11089
        %v11113 = vmul.f32 %v10956, %v11089
        %v11114 = vmul.f32 %v10958, %v11089
        %v11115 = vmul.f32 %v10959, %v11089
        %v11116 = vmul.f32 %v10960, %v11089
        %v11117 = vmul.f32 %v10962, %v11089
        %v11118 = vmul.f32 %v10963, %v11089
        %v11119 = vmul.f32 %v10964, %v11089
        %v11120 = vmul.f32 %v10966, %v11089
        %v11121 = vmul.f32 %v10967, %v11089
        %v11122 = vmul.f32 %v10968, %v11089
        %v11123 = vmul.f32 %v10970, %v11089
        %v11124 = vmul.f32 %v10971, %v11089
        %v11125 = vmul.f32 %v10972, %v11089
        %v11126 = vmul.f32 %v10974, %v11089
        %v11127 = vmul.f32 %v10975, %v11089
        %v11128 = vmul.f32 %v10976, %v11089
        %v11129 = vmul.f32 %v10978, %v11089
        %v11130 = vmul.f32 %v10979, %v11089
        %v11131 = vmul.f32 %v10980, %v11089
        %v11132 = vmul.f32 %v10982, %v11089
        %v11133 = vmul.f32 %v10983, %v11089
        %v11134 = vmul.f32 %v10984, %v11089
        %v11135 = vmul.f32 %v10986, %v11089
        %v11136 = vmul.f32 %v10987, %v11089
        %v11137 = vmul.f32 %v10988, %v11089
        %v11186 = vrot.slane %v11090, 1
        %v11187 = vrot.slane %v11091, 1
        %v11188 = vsel %vm723, %v11186, %v11187
        %v11189 = vrot.slane %v11092, 1
        %v11190 = vsel %vm723, %v11187, %v11189
        %v11191 = vrot.slane %v11093, 1
        %v11192 = vrot.slane %v11094, 1
        %v11193 = vsel %vm723, %v11191, %v11192
        %v11194 = vrot.slane %v11095, 1
        %v11195 = vsel %vm723, %v11192, %v11194
        %v11196 = vrot.slane %v11096, 1
        %v11197 = vrot.slane %v11097, 1
        %v11198 = vsel %vm723, %v11196, %v11197
        %v11199 = vrot.slane %v11098, 1
        %v11200 = vsel %vm723, %v11197, %v11199
        %v11201 = vrot.slane %v11099, 1
        %v11202 = vrot.slane %v11100, 1
        %v11203 = vsel %vm723, %v11201, %v11202
        %v11204 = vrot.slane %v11101, 1
        %v11205 = vsel %vm723, %v11202, %v11204
        %v11206 = vrot.slane %v11102, 1
        %v11207 = vrot.slane %v11103, 1
        %v11208 = vsel %vm723, %v11206, %v11207
        %v11209 = vrot.slane %v11104, 1
        %v11210 = vsel %vm723, %v11207, %v11209
        %v11211 = vrot.slane %v11105, 1
        %v11212 = vrot.slane %v11106, 1
        %v11213 = vsel %vm723, %v11211, %v11212
        %v11214 = vrot.slane %v11107, 1
        %v11215 = vsel %vm723, %v11212, %v11214
        %v11216 = vrot.slane %v11108, 1
        %v11217 = vrot.slane %v11109, 1
        %v11218 = vsel %vm723, %v11216, %v11217
        %v11219 = vrot.slane %v11110, 1
        %v11220 = vsel %vm723, %v11217, %v11219
        %v11221 = vrot.slane %v11111, 1
        %v11222 = vrot.slane %v11112, 1
        %v11223 = vsel %vm723, %v11221, %v11222
        %v11224 = vrot.slane %v11113, 1
        %v11225 = vsel %vm723, %v11222, %v11224
        %v11226 = vrot.slane %v11114, 1
        %v11227 = vrot.slane %v11115, 1
        %v11228 = vsel %vm723, %v11226, %v11227
        %v11229 = vrot.slane %v11116, 1
        %v11230 = vsel %vm723, %v11227, %v11229
        %v11231 = vrot.slane %v11117, 1
        %v11232 = vrot.slane %v11118, 1
        %v11233 = vsel %vm723, %v11231, %v11232
        %v11234 = vrot.slane %v11119, 1
        %v11235 = vsel %vm723, %v11232, %v11234
        %v11236 = vrot.slane %v11120, 1
        %v11237 = vrot.slane %v11121, 1
        %v11238 = vsel %vm723, %v11236, %v11237
        %v11239 = vrot.slane %v11122, 1
        %v11240 = vsel %vm723, %v11237, %v11239
        %v11241 = vrot.slane %v11123, 1
        %v11242 = vrot.slane %v11124, 1
        %v11243 = vsel %vm723, %v11241, %v11242
        %v11244 = vrot.slane %v11125, 1
        %v11245 = vsel %vm723, %v11242, %v11244
        %v11246 = vrot.slane %v11126, 1
        %v11247 = vrot.slane %v11127, 1
        %v11248 = vsel %vm723, %v11246, %v11247
        %v11249 = vrot.slane %v11128, 1
        %v11250 = vsel %vm723, %v11247, %v11249
        %v11251 = vrot.slane %v11129, 1
        %v11252 = vrot.slane %v11130, 1
        %v11253 = vsel %vm723, %v11251, %v11252
        %v11254 = vrot.slane %v11131, 1
        %v11255 = vsel %vm723, %v11252, %v11254
        %v11256 = vrot.slane %v11132, 1
        %v11257 = vrot.slane %v11133, 1
        %v11258 = vsel %vm723, %v11256, %v11257
        %v11259 = vrot.slane %v11134, 1
        %v11260 = vsel %vm723, %v11257, %v11259
        %v11261 = vrot.slane %v11135, 1
        %v11262 = vrot.slane %v11136, 1
        %v11263 = vsel %vm723, %v11261, %v11262
        %v11264 = vrot.slane %v11137, 1
        %v11265 = vsel %vm723, %v11262, %v11264
        %v11314 = vadd.f32 %v11040, %v11188
        %v11315 = vadd.f32 %v11041, %v11190
        %v11316 = vadd.f32 %v11042, %v11189
        %v11317 = vadd.f32 %v11043, %v11193
        %v11318 = vadd.f32 %v11044, %v11195
        %v11319 = vadd.f32 %v11045, %v11194
        %v11320 = vadd.f32 %v11046, %v11198
        %v11321 = vadd.f32 %v11047, %v11200
        %v11322 = vadd.f32 %v11048, %v11199
        %v11323 = vadd.f32 %v11049, %v11203
        %v11324 = vadd.f32 %v11050, %v11205
        %v11325 = vadd.f32 %v11051, %v11204
        %v11326 = vadd.f32 %v11052, %v11208
        %v11327 = vadd.f32 %v11053, %v11210
        %v11328 = vadd.f32 %v11054, %v11209
        %v11329 = vadd.f32 %v11055, %v11213
        %v11330 = vadd.f32 %v11056, %v11215
        %v11331 = vadd.f32 %v11057, %v11214
        %v11332 = vadd.f32 %v11058, %v11218
        %v11333 = vadd.f32 %v11059, %v11220
        %v11334 = vadd.f32 %v11060, %v11219
        %v11335 = vadd.f32 %v11061, %v11223
        %v11336 = vadd.f32 %v11062, %v11225
        %v11337 = vadd.f32 %v11063, %v11224
        %v11338 = vadd.f32 %v11064, %v11228
        %v11339 = vadd.f32 %v11065, %v11230
        %v11340 = vadd.f32 %v11066, %v11229
        %v11341 = vadd.f32 %v11067, %v11233
        %v11342 = vadd.f32 %v11068, %v11235
        %v11343 = vadd.f32 %v11069, %v11234
        %v11344 = vadd.f32 %v11070, %v11238
        %v11345 = vadd.f32 %v11071, %v11240
        %v11346 = vadd.f32 %v11072, %v11239
        %v11347 = vadd.f32 %v11073, %v11243
        %v11348 = vadd.f32 %v11074, %v11245
        %v11349 = vadd.f32 %v11075, %v11244
        %v11350 = vadd.f32 %v11076, %v11248
        %v11351 = vadd.f32 %v11077, %v11250
        %v11352 = vadd.f32 %v11078, %v11249
        %v11353 = vadd.f32 %v11079, %v11253
        %v11354 = vadd.f32 %v11080, %v11255
        %v11355 = vadd.f32 %v11081, %v11254
        %v11356 = vadd.f32 %v11082, %v11258
        %v11357 = vadd.f32 %v11083, %v11260
        %v11358 = vadd.f32 %v11084, %v11259
        %v11359 = vadd.f32 %v11085, %v11263
        %v11360 = vadd.f32 %v11086, %v11265
        %v11361 = vadd.f32 %v11087, %v11264
        %v11362 = vld [vmem:[%s1 + $0x2c] sm:$0x1]
        %v11363 = vperm.slane %v11362, 0
        %v11364 = vmul.f32 %v10926, %v11363
        %v11365 = vmul.f32 %v10927, %v11363
        %v11366 = vmul.f32 %v10928, %v11363
        %v11367 = vmul.f32 %v10930, %v11363
        %v11368 = vmul.f32 %v10931, %v11363
        %v11369 = vmul.f32 %v10932, %v11363
        %v11370 = vmul.f32 %v10934, %v11363
        %v11371 = vmul.f32 %v10935, %v11363
        %v11372 = vmul.f32 %v10936, %v11363
        %v11373 = vmul.f32 %v10938, %v11363
        %v11374 = vmul.f32 %v10939, %v11363
        %v11375 = vmul.f32 %v10940, %v11363
        %v11376 = vmul.f32 %v10942, %v11363
        %v11377 = vmul.f32 %v10943, %v11363
        %v11378 = vmul.f32 %v10944, %v11363
        %v11379 = vmul.f32 %v10946, %v11363
        %v11380 = vmul.f32 %v10947, %v11363
        %v11381 = vmul.f32 %v10948, %v11363
        %v11382 = vmul.f32 %v10950, %v11363
        %v11383 = vmul.f32 %v10951, %v11363
        %v11384 = vmul.f32 %v10952, %v11363
        %v11385 = vmul.f32 %v10954, %v11363
        %v11386 = vmul.f32 %v10955, %v11363
        %v11387 = vmul.f32 %v10956, %v11363
        %v11388 = vmul.f32 %v10958, %v11363
        %v11389 = vmul.f32 %v10959, %v11363
        %v11390 = vmul.f32 %v10960, %v11363
        %v11391 = vmul.f32 %v10962, %v11363
        %v11392 = vmul.f32 %v10963, %v11363
        %v11393 = vmul.f32 %v10964, %v11363
        %v11394 = vmul.f32 %v10966, %v11363
        %v11395 = vmul.f32 %v10967, %v11363
        %v11396 = vmul.f32 %v10968, %v11363
        %v11397 = vmul.f32 %v10970, %v11363
        %v11398 = vmul.f32 %v10971, %v11363
        %v11399 = vmul.f32 %v10972, %v11363
        %v11400 = vmul.f32 %v10974, %v11363
        %v11401 = vmul.f32 %v10975, %v11363
        %v11402 = vmul.f32 %v10976, %v11363
        %v11403 = vmul.f32 %v10978, %v11363
        %v11404 = vmul.f32 %v10979, %v11363
        %v11405 = vmul.f32 %v10980, %v11363
        %v11406 = vmul.f32 %v10982, %v11363
        %v11407 = vmul.f32 %v10983, %v11363
        %v11408 = vmul.f32 %v10984, %v11363
        %v11409 = vmul.f32 %v10986, %v11363
        %v11410 = vmul.f32 %v10987, %v11363
        %v11411 = vmul.f32 %v10988, %v11363
        %v11460 = vrot.slane %v11364, 2
        %v11461 = vrot.slane %v11365, 2
        %v11462 = vsel %vm998, %v11460, %v11461
        %v11463 = vrot.slane %v11366, 2
        %v11464 = vsel %vm998, %v11461, %v11463
        %v11465 = vrot.slane %v11367, 2
        %v11466 = vrot.slane %v11368, 2
        %v11467 = vsel %vm998, %v11465, %v11466
        %v11468 = vrot.slane %v11369, 2
        %v11469 = vsel %vm998, %v11466, %v11468
        %v11470 = vrot.slane %v11370, 2
        %v11471 = vrot.slane %v11371, 2
        %v11472 = vsel %vm998, %v11470, %v11471
        %v11473 = vrot.slane %v11372, 2
        %v11474 = vsel %vm998, %v11471, %v11473
        %v11475 = vrot.slane %v11373, 2
        %v11476 = vrot.slane %v11374, 2
        %v11477 = vsel %vm998, %v11475, %v11476
        %v11478 = vrot.slane %v11375, 2
        %v11479 = vsel %vm998, %v11476, %v11478
        %v11480 = vrot.slane %v11376, 2
        %v11481 = vrot.slane %v11377, 2
        %v11482 = vsel %vm998, %v11480, %v11481
        %v11483 = vrot.slane %v11378, 2
        %v11484 = vsel %vm998, %v11481, %v11483
        %v11485 = vrot.slane %v11379, 2
        %v11486 = vrot.slane %v11380, 2
        %v11487 = vsel %vm998, %v11485, %v11486
        %v11488 = vrot.slane %v11381, 2
        %v11489 = vsel %vm998, %v11486, %v11488
        %v11490 = vrot.slane %v11382, 2
        %v11491 = vrot.slane %v11383, 2
        %v11492 = vsel %vm998, %v11490, %v11491
        %v11493 = vrot.slane %v11384, 2
        %v11494 = vsel %vm998, %v11491, %v11493
        %v11495 = vrot.slane %v11385, 2
        %v11496 = vrot.slane %v11386, 2
        %v11497 = vsel %vm998, %v11495, %v11496
        %v11498 = vrot.slane %v11387, 2
        %v11499 = vsel %vm998, %v11496, %v11498
        %v11500 = vrot.slane %v11388, 2
        %v11501 = vrot.slane %v11389, 2
        %v11502 = vsel %vm998, %v11500, %v11501
        %v11503 = vrot.slane %v11390, 2
        %v11504 = vsel %vm998, %v11501, %v11503
        %v11505 = vrot.slane %v11391, 2
        %v11506 = vrot.slane %v11392, 2
        %v11507 = vsel %vm998, %v11505, %v11506
        %v11508 = vrot.slane %v11393, 2
        %v11509 = vsel %vm998, %v11506, %v11508
        %v11510 = vrot.slane %v11394, 2
        %v11511 = vrot.slane %v11395, 2
        %v11512 = vsel %vm998, %v11510, %v11511
        %v11513 = vrot.slane %v11396, 2
        %v11514 = vsel %vm998, %v11511, %v11513
        %v11515 = vrot.slane %v11397, 2
        %v11516 = vrot.slane %v11398, 2
        %v11517 = vsel %vm998, %v11515, %v11516
        %v11518 = vrot.slane %v11399, 2
        %v11519 = vsel %vm998, %v11516, %v11518
        %v11520 = vrot.slane %v11400, 2
        %v11521 = vrot.slane %v11401, 2
        %v11522 = vsel %vm998, %v11520, %v11521
        %v11523 = vrot.slane %v11402, 2
        %v11524 = vsel %vm998, %v11521, %v11523
        %v11525 = vrot.slane %v11403, 2
        %v11526 = vrot.slane %v11404, 2
        %v11527 = vsel %vm998, %v11525, %v11526
        %v11528 = vrot.slane %v11405, 2
        %v11529 = vsel %vm998, %v11526, %v11528
        %v11530 = vrot.slane %v11406, 2
        %v11531 = vrot.slane %v11407, 2
        %v11532 = vsel %vm998, %v11530, %v11531
        %v11533 = vrot.slane %v11408, 2
        %v11534 = vsel %vm998, %v11531, %v11533
        %v11535 = vrot.slane %v11409, 2
        %v11536 = vrot.slane %v11410, 2
        %v11537 = vsel %vm998, %v11535, %v11536
        %v11538 = vrot.slane %v11411, 2
        %v11539 = vsel %vm998, %v11536, %v11538
        %v11588 = vadd.f32 %v11314, %v11462
        %v11589 = vadd.f32 %v11315, %v11464
        %v11590 = vadd.f32 %v11316, %v11463
        %v11591 = vadd.f32 %v11317, %v11467
        %v11592 = vadd.f32 %v11318, %v11469
        %v11593 = vadd.f32 %v11319, %v11468
        %v11594 = vadd.f32 %v11320, %v11472
        %v11595 = vadd.f32 %v11321, %v11474
        %v11596 = vadd.f32 %v11322, %v11473
        %v11597 = vadd.f32 %v11323, %v11477
        %v11598 = vadd.f32 %v11324, %v11479
        %v11599 = vadd.f32 %v11325, %v11478
        %v11600 = vadd.f32 %v11326, %v11482
        %v11601 = vadd.f32 %v11327, %v11484
        %v11602 = vadd.f32 %v11328, %v11483
        %v11603 = vadd.f32 %v11329, %v11487
        %v11604 = vadd.f32 %v11330, %v11489
        %v11605 = vadd.f32 %v11331, %v11488
        %v11606 = vadd.f32 %v11332, %v11492
        %v11607 = vadd.f32 %v11333, %v11494
        %v11608 = vadd.f32 %v11334, %v11493
        %v11609 = vadd.f32 %v11335, %v11497
        %v11610 = vadd.f32 %v11336, %v11499
        %v11611 = vadd.f32 %v11337, %v11498
        %v11612 = vadd.f32 %v11338, %v11502
        %v11613 = vadd.f32 %v11339, %v11504
        %v11614 = vadd.f32 %v11340, %v11503
        %v11615 = vadd.f32 %v11341, %v11507
        %v11616 = vadd.f32 %v11342, %v11509
        %v11617 = vadd.f32 %v11343, %v11508
        %v11618 = vadd.f32 %v11344, %v11512
        %v11619 = vadd.f32 %v11345, %v11514
        %v11620 = vadd.f32 %v11346, %v11513
        %v11621 = vadd.f32 %v11347, %v11517
        %v11622 = vadd.f32 %v11348, %v11519
        %v11623 = vadd.f32 %v11349, %v11518
        %v11624 = vadd.f32 %v11350, %v11522
        %v11625 = vadd.f32 %v11351, %v11524
        %v11626 = vadd.f32 %v11352, %v11523
        %v11627 = vadd.f32 %v11353, %v11527
        %v11628 = vadd.f32 %v11354, %v11529
        %v11629 = vadd.f32 %v11355, %v11528
        %v11630 = vadd.f32 %v11356, %v11532
        %v11631 = vadd.f32 %v11357, %v11534
        %v11632 = vadd.f32 %v11358, %v11533
        %v11633 = vadd.f32 %v11359, %v11537
        %v11634 = vadd.f32 %v11360, %v11539
        %v11635 = vadd.f32 %v11361, %v11538
        %v11636 = vld [vmem:[%s1 + $0x2d] sm:$0x1]
        %v11637 = vperm.slane %v11636, 0
        %v11638 = vmul.f32 %v10927, %v11637
        %v11639 = vmul.f32 %v10928, %v11637
        %v11640 = vmul.f32 %v10931, %v11637
        %v11641 = vmul.f32 %v10932, %v11637
        %v11642 = vmul.f32 %v10935, %v11637
        %v11643 = vmul.f32 %v10936, %v11637
        %v11644 = vmul.f32 %v10939, %v11637
        %v11645 = vmul.f32 %v10940, %v11637
        %v11646 = vmul.f32 %v10943, %v11637
        %v11647 = vmul.f32 %v10944, %v11637
        %v11648 = vmul.f32 %v10947, %v11637
        %v11649 = vmul.f32 %v10948, %v11637
        %v11650 = vmul.f32 %v10951, %v11637
        %v11651 = vmul.f32 %v10952, %v11637
        %v11652 = vmul.f32 %v10955, %v11637
        %v11653 = vmul.f32 %v10956, %v11637
        %v11654 = vmul.f32 %v10959, %v11637
        %v11655 = vmul.f32 %v10960, %v11637
        %v11656 = vmul.f32 %v10963, %v11637
        %v11657 = vmul.f32 %v10964, %v11637
        %v11658 = vmul.f32 %v10967, %v11637
        %v11659 = vmul.f32 %v10968, %v11637
        %v11660 = vmul.f32 %v10971, %v11637
        %v11661 = vmul.f32 %v10972, %v11637
        %v11662 = vmul.f32 %v10975, %v11637
        %v11663 = vmul.f32 %v10976, %v11637
        %v11664 = vmul.f32 %v10979, %v11637
        %v11665 = vmul.f32 %v10980, %v11637
        %v11666 = vmul.f32 %v10983, %v11637
        %v11667 = vmul.f32 %v10984, %v11637
        %v11668 = vmul.f32 %v10987, %v11637
        %v11669 = vmul.f32 %v10988, %v11637
        %v11702 = vrot.slane %v11638, 3
        %v11703 = vrot.slane %v11639, 3
        %v11704 = vsel %vm1241, %v11702, %v11703
        %v11705 = vrot.slane %v11640, 3
        %v11706 = vrot.slane %v11641, 3
        %v11707 = vsel %vm1241, %v11705, %v11706
        %v11708 = vrot.slane %v11642, 3
        %v11709 = vrot.slane %v11643, 3
        %v11710 = vsel %vm1241, %v11708, %v11709
        %v11711 = vrot.slane %v11644, 3
        %v11712 = vrot.slane %v11645, 3
        %v11713 = vsel %vm1241, %v11711, %v11712
        %v11714 = vrot.slane %v11646, 3
        %v11715 = vrot.slane %v11647, 3
        %v11716 = vsel %vm1241, %v11714, %v11715
        %v11717 = vrot.slane %v11648, 3
        %v11718 = vrot.slane %v11649, 3
        %v11719 = vsel %vm1241, %v11717, %v11718
        %v11720 = vrot.slane %v11650, 3
        %v11721 = vrot.slane %v11651, 3
        %v11722 = vsel %vm1241, %v11720, %v11721
        %v11723 = vrot.slane %v11652, 3
        %v11724 = vrot.slane %v11653, 3
        %v11725 = vsel %vm1241, %v11723, %v11724
        %v11726 = vrot.slane %v11654, 3
        %v11727 = vrot.slane %v11655, 3
        %v11728 = vsel %vm1241, %v11726, %v11727
        %v11729 = vrot.slane %v11656, 3
        %v11730 = vrot.slane %v11657, 3
        %v11731 = vsel %vm1241, %v11729, %v11730
        %v11732 = vrot.slane %v11658, 3
        %v11733 = vrot.slane %v11659, 3
        %v11734 = vsel %vm1241, %v11732, %v11733
        %v11735 = vrot.slane %v11660, 3
        %v11736 = vrot.slane %v11661, 3
        %v11737 = vsel %vm1241, %v11735, %v11736
        %v11738 = vrot.slane %v11662, 3
        %v11739 = vrot.slane %v11663, 3
        %v11740 = vsel %vm1241, %v11738, %v11739
        %v11741 = vrot.slane %v11664, 3
        %v11742 = vrot.slane %v11665, 3
        %v11743 = vsel %vm1241, %v11741, %v11742
        %v11744 = vrot.slane %v11666, 3
        %v11745 = vrot.slane %v11667, 3
        %v11746 = vsel %vm1241, %v11744, %v11745
        %v11747 = vrot.slane %v11668, 3
        %v11748 = vrot.slane %v11669, 3
        %v11749 = vsel %vm1241, %v11747, %v11748
        %v11798 = vadd.f32 %v11588, %v11702
        %v11799 = vadd.f32 %v11589, %v11704
        %v11800 = vadd.f32 %v11590, %v11703
        %v11801 = vadd.f32 %v11591, %v11705
        %v11802 = vadd.f32 %v11592, %v11707
        %v11803 = vadd.f32 %v11593, %v11706
        %v11804 = vadd.f32 %v11594, %v11708
        %v11805 = vadd.f32 %v11595, %v11710
        %v11806 = vadd.f32 %v11596, %v11709
        %v11807 = vadd.f32 %v11597, %v11711
        %v11808 = vadd.f32 %v11598, %v11713
        %v11809 = vadd.f32 %v11599, %v11712
        %v11810 = vadd.f32 %v11600, %v11714
        %v11811 = vadd.f32 %v11601, %v11716
        %v11812 = vadd.f32 %v11602, %v11715
        %v11813 = vadd.f32 %v11603, %v11717
        %v11814 = vadd.f32 %v11604, %v11719
        %v11815 = vadd.f32 %v11605, %v11718
        %v11816 = vadd.f32 %v11606, %v11720
        %v11817 = vadd.f32 %v11607, %v11722
        %v11818 = vadd.f32 %v11608, %v11721
        %v11819 = vadd.f32 %v11609, %v11723
        %v11820 = vadd.f32 %v11610, %v11725
        %v11821 = vadd.f32 %v11611, %v11724
        %v11822 = vadd.f32 %v11612, %v11726
        %v11823 = vadd.f32 %v11613, %v11728
        %v11824 = vadd.f32 %v11614, %v11727
        %v11825 = vadd.f32 %v11615, %v11729
        %v11826 = vadd.f32 %v11616, %v11731
        %v11827 = vadd.f32 %v11617, %v11730
        %v11828 = vadd.f32 %v11618, %v11732
        %v11829 = vadd.f32 %v11619, %v11734
        %v11830 = vadd.f32 %v11620, %v11733
        %v11831 = vadd.f32 %v11621, %v11735
        %v11832 = vadd.f32 %v11622, %v11737
        %v11833 = vadd.f32 %v11623, %v11736
        %v11834 = vadd.f32 %v11624, %v11738
        %v11835 = vadd.f32 %v11625, %v11740
        %v11836 = vadd.f32 %v11626, %v11739
        %v11837 = vadd.f32 %v11627, %v11741
        %v11838 = vadd.f32 %v11628, %v11743
        %v11839 = vadd.f32 %v11629, %v11742
        %v11840 = vadd.f32 %v11630, %v11744
        %v11841 = vadd.f32 %v11631, %v11746
        %v11842 = vadd.f32 %v11632, %v11745
        %v11843 = vadd.f32 %v11633, %v11747
        %v11844 = vadd.f32 %v11634, %v11749
        %v11845 = vadd.f32 %v11635, %v11748
        %v11846 = vld [vmem:[%s1 + $0x2e] sm:$0x1]
        %v11847 = vperm.slane %v11846, 0
        %v11848 = vmul.f32 %v10927, %v11847
        %v11849 = vmul.f32 %v10928, %v11847
        %v11850 = vmul.f32 %v10929, %v11847
        %v11851 = vmul.f32 %v10931, %v11847
        %v11852 = vmul.f32 %v10932, %v11847
        %v11853 = vmul.f32 %v10933, %v11847
        %v11854 = vmul.f32 %v10935, %v11847
        %v11855 = vmul.f32 %v10936, %v11847
        %v11856 = vmul.f32 %v10937, %v11847
        %v11857 = vmul.f32 %v10939, %v11847
        %v11858 = vmul.f32 %v10940, %v11847
        %v11859 = vmul.f32 %v10941, %v11847
        %v11860 = vmul.f32 %v10943, %v11847
        %v11861 = vmul.f32 %v10944, %v11847
        %v11862 = vmul.f32 %v10945, %v11847
        %v11863 = vmul.f32 %v10947, %v11847
        %v11864 = vmul.f32 %v10948, %v11847
        %v11865 = vmul.f32 %v10949, %v11847
        %v11866 = vmul.f32 %v10951, %v11847
        %v11867 = vmul.f32 %v10952, %v11847
        %v11868 = vmul.f32 %v10953, %v11847
        %v11869 = vmul.f32 %v10955, %v11847
        %v11870 = vmul.f32 %v10956, %v11847
        %v11871 = vmul.f32 %v10957, %v11847
        %v11872 = vmul.f32 %v10959, %v11847
        %v11873 = vmul.f32 %v10960, %v11847
        %v11874 = vmul.f32 %v10961, %v11847
        %v11875 = vmul.f32 %v10963, %v11847
        %v11876 = vmul.f32 %v10964, %v11847
        %v11877 = vmul.f32 %v10965, %v11847
        %v11878 = vmul.f32 %v10967, %v11847
        %v11879 = vmul.f32 %v10968, %v11847
        %v11880 = vmul.f32 %v10969, %v11847
        %v11881 = vmul.f32 %v10971, %v11847
        %v11882 = vmul.f32 %v10972, %v11847
        %v11883 = vmul.f32 %v10973, %v11847
        %v11884 = vmul.f32 %v10975, %v11847
        %v11885 = vmul.f32 %v10976, %v11847
        %v11886 = vmul.f32 %v10977, %v11847
        %v11887 = vmul.f32 %v10979, %v11847
        %v11888 = vmul.f32 %v10980, %v11847
        %v11889 = vmul.f32 %v10981, %v11847
        %v11890 = vmul.f32 %v10983, %v11847
        %v11891 = vmul.f32 %v10984, %v11847
        %v11892 = vmul.f32 %v10985, %v11847
        %v11893 = vmul.f32 %v10987, %v11847
        %v11894 = vmul.f32 %v10988, %v11847
        %v11895 = vmul.f32 %v10989, %v11847
        %v11944 = vrot.slane %v11848, 4
        %v11945 = vrot.slane %v11849, 4
        %v11946 = vsel %vm1484, %v11944, %v11945
        %v11947 = vrot.slane %v11850, 4
        %v11948 = vsel %vm1484, %v11945, %v11947
        %v11949 = vrot.slane %v11851, 4
        %v11950 = vrot.slane %v11852, 4
        %v11951 = vsel %vm1484, %v11949, %v11950
        %v11952 = vrot.slane %v11853, 4
        %v11953 = vsel %vm1484, %v11950, %v11952
        %v11954 = vrot.slane %v11854, 4
        %v11955 = vrot.slane %v11855, 4
        %v11956 = vsel %vm1484, %v11954, %v11955
        %v11957 = vrot.slane %v11856, 4
        %v11958 = vsel %vm1484, %v11955, %v11957
        %v11959 = vrot.slane %v11857, 4
        %v11960 = vrot.slane %v11858, 4
        %v11961 = vsel %vm1484, %v11959, %v11960
        %v11962 = vrot.slane %v11859, 4
        %v11963 = vsel %vm1484, %v11960, %v11962
        %v11964 = vrot.slane %v11860, 4
        %v11965 = vrot.slane %v11861, 4
        %v11966 = vsel %vm1484, %v11964, %v11965
        %v11967 = vrot.slane %v11862, 4
        %v11968 = vsel %vm1484, %v11965, %v11967
        %v11969 = vrot.slane %v11863, 4
        %v11970 = vrot.slane %v11864, 4
        %v11971 = vsel %vm1484, %v11969, %v11970
        %v11972 = vrot.slane %v11865, 4
        %v11973 = vsel %vm1484, %v11970, %v11972
        %v11974 = vrot.slane %v11866, 4
        %v11975 = vrot.slane %v11867, 4
        %v11976 = vsel %vm1484, %v11974, %v11975
        %v11977 = vrot.slane %v11868, 4
        %v11978 = vsel %vm1484, %v11975, %v11977
        %v11979 = vrot.slane %v11869, 4
        %v11980 = vrot.slane %v11870, 4
        %v11981 = vsel %vm1484, %v11979, %v11980
        %v11982 = vrot.slane %v11871, 4
        %v11983 = vsel %vm1484, %v11980, %v11982
        %v11984 = vrot.slane %v11872, 4
        %v11985 = vrot.slane %v11873, 4
        %v11986 = vsel %vm1484, %v11984, %v11985
        %v11987 = vrot.slane %v11874, 4
        %v11988 = vsel %vm1484, %v11985, %v11987
        %v11989 = vrot.slane %v11875, 4
        %v11990 = vrot.slane %v11876, 4
        %v11991 = vsel %vm1484, %v11989, %v11990
        %v11992 = vrot.slane %v11877, 4
        %v11993 = vsel %vm1484, %v11990, %v11992
        %v11994 = vrot.slane %v11878, 4
        %v11995 = vrot.slane %v11879, 4
        %v11996 = vsel %vm1484, %v11994, %v11995
        %v11997 = vrot.slane %v11880, 4
        %v11998 = vsel %vm1484, %v11995, %v11997
        %v11999 = vrot.slane %v11881, 4
        %v12000 = vrot.slane %v11882, 4
        %v12001 = vsel %vm1484, %v11999, %v12000
        %v12002 = vrot.slane %v11883, 4
        %v12003 = vsel %vm1484, %v12000, %v12002
        %v12004 = vrot.slane %v11884, 4
        %v12005 = vrot.slane %v11885, 4
        %v12006 = vsel %vm1484, %v12004, %v12005
        %v12007 = vrot.slane %v11886, 4
        %v12008 = vsel %vm1484, %v12005, %v12007
        %v12009 = vrot.slane %v11887, 4
        %v12010 = vrot.slane %v11888, 4
        %v12011 = vsel %vm1484, %v12009, %v12010
        %v12012 = vrot.slane %v11889, 4
        %v12013 = vsel %vm1484, %v12010, %v12012
        %v12014 = vrot.slane %v11890, 4
        %v12015 = vrot.slane %v11891, 4
        %v12016 = vsel %vm1484, %v12014, %v12015
        %v12017 = vrot.slane %v11892, 4
        %v12018 = vsel %vm1484, %v12015, %v12017
        %v12019 = vrot.slane %v11893, 4
        %v12020 = vrot.slane %v11894, 4
        %v12021 = vsel %vm1484, %v12019, %v12020
        %v12022 = vrot.slane %v11895, 4
        %v12023 = vsel %vm1484, %v12020, %v12022
        %v12072 = vadd.f32 %v11798, %v11944
        %v12073 = vadd.f32 %v11799, %v11946
        %v12074 = vadd.f32 %v11800, %v11948
        %v12075 = vadd.f32 %v11801, %v11949
        %v12076 = vadd.f32 %v11802, %v11951
        %v12077 = vadd.f32 %v11803, %v11953
        %v12078 = vadd.f32 %v11804, %v11954
        %v12079 = vadd.f32 %v11805, %v11956
        %v12080 = vadd.f32 %v11806, %v11958
        %v12081 = vadd.f32 %v11807, %v11959
        %v12082 = vadd.f32 %v11808, %v11961
        %v12083 = vadd.f32 %v11809, %v11963
        %v12084 = vadd.f32 %v11810, %v11964
        %v12085 = vadd.f32 %v11811, %v11966
        %v12086 = vadd.f32 %v11812, %v11968
        %v12087 = vadd.f32 %v11813, %v11969
        %v12088 = vadd.f32 %v11814, %v11971
        %v12089 = vadd.f32 %v11815, %v11973
        %v12090 = vadd.f32 %v11816, %v11974
        %v12091 = vadd.f32 %v11817, %v11976
        %v12092 = vadd.f32 %v11818, %v11978
        %v12093 = vadd.f32 %v11819, %v11979
        %v12094 = vadd.f32 %v11820, %v11981
        %v12095 = vadd.f32 %v11821, %v11983
        %v12096 = vadd.f32 %v11822, %v11984
        %v12097 = vadd.f32 %v11823, %v11986
        %v12098 = vadd.f32 %v11824, %v11988
        %v12099 = vadd.f32 %v11825, %v11989
        %v12100 = vadd.f32 %v11826, %v11991
        %v12101 = vadd.f32 %v11827, %v11993
        %v12102 = vadd.f32 %v11828, %v11994
        %v12103 = vadd.f32 %v11829, %v11996
        %v12104 = vadd.f32 %v11830, %v11998
        %v12105 = vadd.f32 %v11831, %v11999
        %v12106 = vadd.f32 %v11832, %v12001
        %v12107 = vadd.f32 %v11833, %v12003
        %v12108 = vadd.f32 %v11834, %v12004
        %v12109 = vadd.f32 %v11835, %v12006
        %v12110 = vadd.f32 %v11836, %v12008
        %v12111 = vadd.f32 %v11837, %v12009
        %v12112 = vadd.f32 %v11838, %v12011
        %v12113 = vadd.f32 %v11839, %v12013
        %v12114 = vadd.f32 %v11840, %v12014
        %v12115 = vadd.f32 %v11841, %v12016
        %v12116 = vadd.f32 %v11842, %v12018
        %v12117 = vadd.f32 %v11843, %v12019
        %v12118 = vadd.f32 %v11844, %v12021
        %v12119 = vadd.f32 %v11845, %v12023
        %v12120 = vld [vmem:[%s1 + $0x2f] sm:$0x1]
        %v12121 = vperm.slane %v12120, 0
        %v12122 = vmul.f32 %v10927, %v12121
        %v12123 = vmul.f32 %v10928, %v12121
        %v12124 = vmul.f32 %v10929, %v12121
        %v12125 = vmul.f32 %v10931, %v12121
        %v12126 = vmul.f32 %v10932, %v12121
        %v12127 = vmul.f32 %v10933, %v12121
        %v12128 = vmul.f32 %v10935, %v12121
        %v12129 = vmul.f32 %v10936, %v12121
        %v12130 = vmul.f32 %v10937, %v12121
        %v12131 = vmul.f32 %v10939, %v12121
        %v12132 = vmul.f32 %v10940, %v12121
        %v12133 = vmul.f32 %v10941, %v12121
        %v12134 = vmul.f32 %v10943, %v12121
        %v12135 = vmul.f32 %v10944, %v12121
        %v12136 = vmul.f32 %v10945, %v12121
        %v12137 = vmul.f32 %v10947, %v12121
        %v12138 = vmul.f32 %v10948, %v12121
        %v12139 = vmul.f32 %v10949, %v12121
        %v12140 = vmul.f32 %v10951, %v12121
        %v12141 = vmul.f32 %v10952, %v12121
        %v12142 = vmul.f32 %v10953, %v12121
        %v12143 = vmul.f32 %v10955, %v12121
        %v12144 = vmul.f32 %v10956, %v12121
        %v12145 = vmul.f32 %v10957, %v12121
        %v12146 = vmul.f32 %v10959, %v12121
        %v12147 = vmul.f32 %v10960, %v12121
        %v12148 = vmul.f32 %v10961, %v12121
        %v12149 = vmul.f32 %v10963, %v12121
        %v12150 = vmul.f32 %v10964, %v12121
        %v12151 = vmul.f32 %v10965, %v12121
        %v12152 = vmul.f32 %v10967, %v12121
        %v12153 = vmul.f32 %v10968, %v12121
        %v12154 = vmul.f32 %v10969, %v12121
        %v12155 = vmul.f32 %v10971, %v12121
        %v12156 = vmul.f32 %v10972, %v12121
        %v12157 = vmul.f32 %v10973, %v12121
        %v12158 = vmul.f32 %v10975, %v12121
        %v12159 = vmul.f32 %v10976, %v12121
        %v12160 = vmul.f32 %v10977, %v12121
        %v12161 = vmul.f32 %v10979, %v12121
        %v12162 = vmul.f32 %v10980, %v12121
        %v12163 = vmul.f32 %v10981, %v12121
        %v12164 = vmul.f32 %v10983, %v12121
        %v12165 = vmul.f32 %v10984, %v12121
        %v12166 = vmul.f32 %v10985, %v12121
        %v12167 = vmul.f32 %v10987, %v12121
        %v12168 = vmul.f32 %v10988, %v12121
        %v12169 = vmul.f32 %v10989, %v12121
        %v12218 = vrot.slane %v12122, 5
        %v12219 = vrot.slane %v12123, 5
        %v12220 = vsel %vm1759, %v12218, %v12219
        %v12221 = vrot.slane %v12124, 5
        %v12222 = vsel %vm1759, %v12219, %v12221
        %v12223 = vrot.slane %v12125, 5
        %v12224 = vrot.slane %v12126, 5
        %v12225 = vsel %vm1759, %v12223, %v12224
        %v12226 = vrot.slane %v12127, 5
        %v12227 = vsel %vm1759, %v12224, %v12226
        %v12228 = vrot.slane %v12128, 5
        %v12229 = vrot.slane %v12129, 5
        %v12230 = vsel %vm1759, %v12228, %v12229
        %v12231 = vrot.slane %v12130, 5
        %v12232 = vsel %vm1759, %v12229, %v12231
        %v12233 = vrot.slane %v12131, 5
        %v12234 = vrot.slane %v12132, 5
        %v12235 = vsel %vm1759, %v12233, %v12234
        %v12236 = vrot.slane %v12133, 5
        %v12237 = vsel %vm1759, %v12234, %v12236
        %v12238 = vrot.slane %v12134, 5
        %v12239 = vrot.slane %v12135, 5
        %v12240 = vsel %vm1759, %v12238, %v12239
        %v12241 = vrot.slane %v12136, 5
        %v12242 = vsel %vm1759, %v12239, %v12241
        %v12243 = vrot.slane %v12137, 5
        %v12244 = vrot.slane %v12138, 5
        %v12245 = vsel %vm1759, %v12243, %v12244
        %v12246 = vrot.slane %v12139, 5
        %v12247 = vsel %vm1759, %v12244, %v12246
        %v12248 = vrot.slane %v12140, 5
        %v12249 = vrot.slane %v12141, 5
        %v12250 = vsel %vm1759, %v12248, %v12249
        %v12251 = vrot.slane %v12142, 5
        %v12252 = vsel %vm1759, %v12249, %v12251
        %v12253 = vrot.slane %v12143, 5
        %v12254 = vrot.slane %v12144, 5
        %v12255 = vsel %vm1759, %v12253, %v12254
        %v12256 = vrot.slane %v12145, 5
        %v12257 = vsel %vm1759, %v12254, %v12256
        %v12258 = vrot.slane %v12146, 5
        %v12259 = vrot.slane %v12147, 5
        %v12260 = vsel %vm1759, %v12258, %v12259
        %v12261 = vrot.slane %v12148, 5
        %v12262 = vsel %vm1759, %v12259, %v12261
        %v12263 = vrot.slane %v12149, 5
        %v12264 = vrot.slane %v12150, 5
        %v12265 = vsel %vm1759, %v12263, %v12264
        %v12266 = vrot.slane %v12151, 5
        %v12267 = vsel %vm1759, %v12264, %v12266
        %v12268 = vrot.slane %v12152, 5
        %v12269 = vrot.slane %v12153, 5
        %v12270 = vsel %vm1759, %v12268, %v12269
        %v12271 = vrot.slane %v12154, 5
        %v12272 = vsel %vm1759, %v12269, %v12271
        %v12273 = vrot.slane %v12155, 5
        %v12274 = vrot.slane %v12156, 5
        %v12275 = vsel %vm1759, %v12273, %v12274
        %v12276 = vrot.slane %v12157, 5
        %v12277 = vsel %vm1759, %v12274, %v12276
        %v12278 = vrot.slane %v12158, 5
        %v12279 = vrot.slane %v12159, 5
        %v12280 = vsel %vm1759, %v12278, %v12279
        %v12281 = vrot.slane %v12160, 5
        %v12282 = vsel %vm1759, %v12279, %v12281
        %v12283 = vrot.slane %v12161, 5
        %v12284 = vrot.slane %v12162, 5
        %v12285 = vsel %vm1759, %v12283, %v12284
        %v12286 = vrot.slane %v12163, 5
        %v12287 = vsel %vm1759, %v12284, %v12286
        %v12288 = vrot.slane %v12164, 5
        %v12289 = vrot.slane %v12165, 5
        %v12290 = vsel %vm1759, %v12288, %v12289
        %v12291 = vrot.slane %v12166, 5
        %v12292 = vsel %vm1759, %v12289, %v12291
        %v12293 = vrot.slane %v12167, 5
        %v12294 = vrot.slane %v12168, 5
        %v12295 = vsel %vm1759, %v12293, %v12294
        %v12296 = vrot.slane %v12169, 5
        %v12297 = vsel %vm1759, %v12294, %v12296
        %v12346 = vadd.f32 %v12072, %v12218
        %v12347 = vadd.f32 %v12073, %v12220
        %v12348 = vadd.f32 %v12074, %v12222
        %v12349 = vadd.f32 %v12075, %v12223
        %v12350 = vadd.f32 %v12076, %v12225
        %v12351 = vadd.f32 %v12077, %v12227
        %v12352 = vadd.f32 %v12078, %v12228
        %v12353 = vadd.f32 %v12079, %v12230
        %v12354 = vadd.f32 %v12080, %v12232
        %v12355 = vadd.f32 %v12081, %v12233
        %v12356 = vadd.f32 %v12082, %v12235
        %v12357 = vadd.f32 %v12083, %v12237
        %v12358 = vadd.f32 %v12084, %v12238
        %v12359 = vadd.f32 %v12085, %v12240
        %v12360 = vadd.f32 %v12086, %v12242
        %v12361 = vadd.f32 %v12087, %v12243
        %v12362 = vadd.f32 %v12088, %v12245
        %v12363 = vadd.f32 %v12089, %v12247
        %v12364 = vadd.f32 %v12090, %v12248
        %v12365 = vadd.f32 %v12091, %v12250
        %v12366 = vadd.f32 %v12092, %v12252
        %v12367 = vadd.f32 %v12093, %v12253
        %v12368 = vadd.f32 %v12094, %v12255
        %v12369 = vadd.f32 %v12095, %v12257
        %v12370 = vadd.f32 %v12096, %v12258
        %v12371 = vadd.f32 %v12097, %v12260
        %v12372 = vadd.f32 %v12098, %v12262
        %v12373 = vadd.f32 %v12099, %v12263
        %v12374 = vadd.f32 %v12100, %v12265
        %v12375 = vadd.f32 %v12101, %v12267
        %v12376 = vadd.f32 %v12102, %v12268
        %v12377 = vadd.f32 %v12103, %v12270
        %v12378 = vadd.f32 %v12104, %v12272
        %v12379 = vadd.f32 %v12105, %v12273
        %v12380 = vadd.f32 %v12106, %v12275
        %v12381 = vadd.f32 %v12107, %v12277
        %v12382 = vadd.f32 %v12108, %v12278
        %v12383 = vadd.f32 %v12109, %v12280
        %v12384 = vadd.f32 %v12110, %v12282
        %v12385 = vadd.f32 %v12111, %v12283
        %v12386 = vadd.f32 %v12112, %v12285
        %v12387 = vadd.f32 %v12113, %v12287
        %v12388 = vadd.f32 %v12114, %v12288
        %v12389 = vadd.f32 %v12115, %v12290
        %v12390 = vadd.f32 %v12116, %v12292
        %v12391 = vadd.f32 %v12117, %v12293
        %v12392 = vadd.f32 %v12118, %v12295
        %v12393 = vadd.f32 %v12119, %v12297
        %v12394 = vld [vmem:[%s1 + $0x30] sm:$0x1]
        %v12395 = vperm.slane %v12394, 0
        %v12396 = vmul.f32 %v10927, %v12395
        %v12397 = vmul.f32 %v10928, %v12395
        %v12398 = vmul.f32 %v10929, %v12395
        %v12399 = vmul.f32 %v10931, %v12395
        %v12400 = vmul.f32 %v10932, %v12395
        %v12401 = vmul.f32 %v10933, %v12395
        %v12402 = vmul.f32 %v10935, %v12395
        %v12403 = vmul.f32 %v10936, %v12395
        %v12404 = vmul.f32 %v10937, %v12395
        %v12405 = vmul.f32 %v10939, %v12395
        %v12406 = vmul.f32 %v10940, %v12395
        %v12407 = vmul.f32 %v10941, %v12395
        %v12408 = vmul.f32 %v10943, %v12395
        %v12409 = vmul.f32 %v10944, %v12395
        %v12410 = vmul.f32 %v10945, %v12395
        %v12411 = vmul.f32 %v10947, %v12395
        %v12412 = vmul.f32 %v10948, %v12395
        %v12413 = vmul.f32 %v10949, %v12395
        %v12414 = vmul.f32 %v10951, %v12395
        %v12415 = vmul.f32 %v10952, %v12395
        %v12416 = vmul.f32 %v10953, %v12395
        %v12417 = vmul.f32 %v10955, %v12395
        %v12418 = vmul.f32 %v10956, %v12395
        %v12419 = vmul.f32 %v10957, %v12395
        %v12420 = vmul.f32 %v10959, %v12395
        %v12421 = vmul.f32 %v10960, %v12395
        %v12422 = vmul.f32 %v10961, %v12395
        %v12423 = vmul.f32 %v10963, %v12395
        %v12424 = vmul.f32 %v10964, %v12395
        %v12425 = vmul.f32 %v10965, %v12395
        %v12426 = vmul.f32 %v10967, %v12395
        %v12427 = vmul.f32 %v10968, %v12395
        %v12428 = vmul.f32 %v10969, %v12395
        %v12429 = vmul.f32 %v10971, %v12395
        %v12430 = vmul.f32 %v10972, %v12395
        %v12431 = vmul.f32 %v10973, %v12395
        %v12432 = vmul.f32 %v10975, %v12395
        %v12433 = vmul.f32 %v10976, %v12395
        %v12434 = vmul.f32 %v10977, %v12395
        %v12435 = vmul.f32 %v10979, %v12395
        %v12436 = vmul.f32 %v10980, %v12395
        %v12437 = vmul.f32 %v10981, %v12395
        %v12438 = vmul.f32 %v10983, %v12395
        %v12439 = vmul.f32 %v10984, %v12395
        %v12440 = vmul.f32 %v10985, %v12395
        %v12441 = vmul.f32 %v10987, %v12395
        %v12442 = vmul.f32 %v10988, %v12395
        %v12443 = vmul.f32 %v10989, %v12395
        %v12492 = vrot.slane %v12396, 6
        %v12493 = vrot.slane %v12397, 6
        %v12494 = vsel %vm2034, %v12492, %v12493
        %v12495 = vrot.slane %v12398, 6
        %v12496 = vsel %vm2034, %v12493, %v12495
        %v12497 = vrot.slane %v12399, 6
        %v12498 = vrot.slane %v12400, 6
        %v12499 = vsel %vm2034, %v12497, %v12498
        %v12500 = vrot.slane %v12401, 6
        %v12501 = vsel %vm2034, %v12498, %v12500
        %v12502 = vrot.slane %v12402, 6
        %v12503 = vrot.slane %v12403, 6
        %v12504 = vsel %vm2034, %v12502, %v12503
        %v12505 = vrot.slane %v12404, 6
        %v12506 = vsel %vm2034, %v12503, %v12505
        %v12507 = vrot.slane %v12405, 6
        %v12508 = vrot.slane %v12406, 6
        %v12509 = vsel %vm2034, %v12507, %v12508
        %v12510 = vrot.slane %v12407, 6
        %v12511 = vsel %vm2034, %v12508, %v12510
        %v12512 = vrot.slane %v12408, 6
        %v12513 = vrot.slane %v12409, 6
        %v12514 = vsel %vm2034, %v12512, %v12513
        %v12515 = vrot.slane %v12410, 6
        %v12516 = vsel %vm2034, %v12513, %v12515
        %v12517 = vrot.slane %v12411, 6
        %v12518 = vrot.slane %v12412, 6
        %v12519 = vsel %vm2034, %v12517, %v12518
        %v12520 = vrot.slane %v12413, 6
        %v12521 = vsel %vm2034, %v12518, %v12520
        %v12522 = vrot.slane %v12414, 6
        %v12523 = vrot.slane %v12415, 6
        %v12524 = vsel %vm2034, %v12522, %v12523
        %v12525 = vrot.slane %v12416, 6
        %v12526 = vsel %vm2034, %v12523, %v12525
        %v12527 = vrot.slane %v12417, 6
        %v12528 = vrot.slane %v12418, 6
        %v12529 = vsel %vm2034, %v12527, %v12528
        %v12530 = vrot.slane %v12419, 6
        %v12531 = vsel %vm2034, %v12528, %v12530
        %v12532 = vrot.slane %v12420, 6
        %v12533 = vrot.slane %v12421, 6
        %v12534 = vsel %vm2034, %v12532, %v12533
        %v12535 = vrot.slane %v12422, 6
        %v12536 = vsel %vm2034, %v12533, %v12535
        %v12537 = vrot.slane %v12423, 6
        %v12538 = vrot.slane %v12424, 6
        %v12539 = vsel %vm2034, %v12537, %v12538
        %v12540 = vrot.slane %v12425, 6
        %v12541 = vsel %vm2034, %v12538, %v12540
        %v12542 = vrot.slane %v12426, 6
        %v12543 = vrot.slane %v12427, 6
        %v12544 = vsel %vm2034, %v12542, %v12543
        %v12545 = vrot.slane %v12428, 6
        %v12546 = vsel %vm2034, %v12543, %v12545
        %v12547 = vrot.slane %v12429, 6
        %v12548 = vrot.slane %v12430, 6
        %v12549 = vsel %vm2034, %v12547, %v12548
        %v12550 = vrot.slane %v12431, 6
        %v12551 = vsel %vm2034, %v12548, %v12550
        %v12552 = vrot.slane %v12432, 6
        %v12553 = vrot.slane %v12433, 6
        %v12554 = vsel %vm2034, %v12552, %v12553
        %v12555 = vrot.slane %v12434, 6
        %v12556 = vsel %vm2034, %v12553, %v12555
        %v12557 = vrot.slane %v12435, 6
        %v12558 = vrot.slane %v12436, 6
        %v12559 = vsel %vm2034, %v12557, %v12558
        %v12560 = vrot.slane %v12437, 6
        %v12561 = vsel %vm2034, %v12558, %v12560
        %v12562 = vrot.slane %v12438, 6
        %v12563 = vrot.slane %v12439, 6
        %v12564 = vsel %vm2034, %v12562, %v12563
        %v12565 = vrot.slane %v12440, 6
        %v12566 = vsel %vm2034, %v12563, %v12565
        %v12567 = vrot.slane %v12441, 6
        %v12568 = vrot.slane %v12442, 6
        %v12569 = vsel %vm2034, %v12567, %v12568
        %v12570 = vrot.slane %v12443, 6
        %v12571 = vsel %vm2034, %v12568, %v12570
        %v12620 = vadd.f32 %v12346, %v12492
        %v12621 = vadd.f32 %v12347, %v12494
        %v12622 = vadd.f32 %v12348, %v12496
        %v12623 = vadd.f32 %v12349, %v12497
        %v12624 = vadd.f32 %v12350, %v12499
        %v12625 = vadd.f32 %v12351, %v12501
        %v12626 = vadd.f32 %v12352, %v12502
        %v12627 = vadd.f32 %v12353, %v12504
        %v12628 = vadd.f32 %v12354, %v12506
        %v12629 = vadd.f32 %v12355, %v12507
        %v12630 = vadd.f32 %v12356, %v12509
        %v12631 = vadd.f32 %v12357, %v12511
        %v12632 = vadd.f32 %v12358, %v12512
        %v12633 = vadd.f32 %v12359, %v12514
        %v12634 = vadd.f32 %v12360, %v12516
        %v12635 = vadd.f32 %v12361, %v12517
        %v12636 = vadd.f32 %v12362, %v12519
        %v12637 = vadd.f32 %v12363, %v12521
        %v12638 = vadd.f32 %v12364, %v12522
        %v12639 = vadd.f32 %v12365, %v12524
        %v12640 = vadd.f32 %v12366, %v12526
        %v12641 = vadd.f32 %v12367, %v12527
        %v12642 = vadd.f32 %v12368, %v12529
        %v12643 = vadd.f32 %v12369, %v12531
        %v12644 = vadd.f32 %v12370, %v12532
        %v12645 = vadd.f32 %v12371, %v12534
        %v12646 = vadd.f32 %v12372, %v12536
        %v12647 = vadd.f32 %v12373, %v12537
        %v12648 = vadd.f32 %v12374, %v12539
        %v12649 = vadd.f32 %v12375, %v12541
        %v12650 = vadd.f32 %v12376, %v12542
        %v12651 = vadd.f32 %v12377, %v12544
        %v12652 = vadd.f32 %v12378, %v12546
        %v12653 = vadd.f32 %v12379, %v12547
        %v12654 = vadd.f32 %v12380, %v12549
        %v12655 = vadd.f32 %v12381, %v12551
        %v12656 = vadd.f32 %v12382, %v12552
        %v12657 = vadd.f32 %v12383, %v12554
        %v12658 = vadd.f32 %v12384, %v12556
        %v12659 = vadd.f32 %v12385, %v12557
        %v12660 = vadd.f32 %v12386, %v12559
        %v12661 = vadd.f32 %v12387, %v12561
        %v12662 = vadd.f32 %v12388, %v12562
        %v12663 = vadd.f32 %v12389, %v12564
        %v12664 = vadd.f32 %v12390, %v12566
        %v12665 = vadd.f32 %v12391, %v12567
        %v12666 = vadd.f32 %v12392, %v12569
        %v12667 = vadd.f32 %v12393, %v12571
        %v12716 = vrot.slane %v12620, 5
        %v12717 = vrot.slane %v12621, 5
        %v12718 = vsel %vm1759, %v12716, %v12717
        %v12719 = vrot.slane %v12622, 5
        %v12720 = vsel %vm1759, %v12717, %v12719
        %v12721 = vrot.slane %v12623, 5
        %v12722 = vrot.slane %v12624, 5
        %v12723 = vsel %vm1759, %v12721, %v12722
        %v12724 = vrot.slane %v12625, 5
        %v12725 = vsel %vm1759, %v12722, %v12724
        %v12726 = vrot.slane %v12626, 5
        %v12727 = vrot.slane %v12627, 5
        %v12728 = vsel %vm1759, %v12726, %v12727
        %v12729 = vrot.slane %v12628, 5
        %v12730 = vsel %vm1759, %v12727, %v12729
        %v12731 = vrot.slane %v12629, 5
        %v12732 = vrot.slane %v12630, 5
        %v12733 = vsel %vm1759, %v12731, %v12732
        %v12734 = vrot.slane %v12631, 5
        %v12735 = vsel %vm1759, %v12732, %v12734
        %v12736 = vrot.slane %v12632, 5
        %v12737 = vrot.slane %v12633, 5
        %v12738 = vsel %vm1759, %v12736, %v12737
        %v12739 = vrot.slane %v12634, 5
        %v12740 = vsel %vm1759, %v12737, %v12739
        %v12741 = vrot.slane %v12635, 5
        %v12742 = vrot.slane %v12636, 5
        %v12743 = vsel %vm1759, %v12741, %v12742
        %v12744 = vrot.slane %v12637, 5
        %v12745 = vsel %vm1759, %v12742, %v12744
        %v12746 = vrot.slane %v12638, 5
        %v12747 = vrot.slane %v12639, 5
        %v12748 = vsel %vm1759, %v12746, %v12747
        %v12749 = vrot.slane %v12640, 5
        %v12750 = vsel %vm1759, %v12747, %v12749
        %v12751 = vrot.slane %v12641, 5
        %v12752 = vrot.slane %v12642, 5
        %v12753 = vsel %vm1759, %v12751, %v12752
        %v12754 = vrot.slane %v12643, 5
        %v12755 = vsel %vm1759, %v12752, %v12754
        %v12756 = vrot.slane %v12644, 5
        %v12757 = vrot.slane %v12645, 5
        %v12758 = vsel %vm1759, %v12756, %v12757
        %v12759 = vrot.slane %v12646, 5
        %v12760 = vsel %vm1759, %v12757, %v12759
        %v12761 = vrot.slane %v12647, 5
        %v12762 = vrot.slane %v12648, 5
        %v12763 = vsel %vm1759, %v12761, %v12762
        %v12764 = vrot.slane %v12649, 5
        %v12765 = vsel %vm1759, %v12762, %v12764
        %v12766 = vrot.slane %v12650, 5
        %v12767 = vrot.slane %v12651, 5
        %v12768 = vsel %vm1759, %v12766, %v12767
        %v12769 = vrot.slane %v12652, 5
        %v12770 = vsel %vm1759, %v12767, %v12769
        %v12771 = vrot.slane %v12653, 5
        %v12772 = vrot.slane %v12654, 5
        %v12773 = vsel %vm1759, %v12771, %v12772
        %v12774 = vrot.slane %v12655, 5
        %v12775 = vsel %vm1759, %v12772, %v12774
        %v12776 = vrot.slane %v12656, 5
        %v12777 = vrot.slane %v12657, 5
        %v12778 = vsel %vm1759, %v12776, %v12777
        %v12779 = vrot.slane %v12658, 5
        %v12780 = vsel %vm1759, %v12777, %v12779
        %v12781 = vrot.slane %v12659, 5
        %v12782 = vrot.slane %v12660, 5
        %v12783 = vsel %vm1759, %v12781, %v12782
        %v12784 = vrot.slane %v12661, 5
        %v12785 = vsel %vm1759, %v12782, %v12784
        %v12786 = vrot.slane %v12662, 5
        %v12787 = vrot.slane %v12663, 5
        %v12788 = vsel %vm1759, %v12786, %v12787
        %v12789 = vrot.slane %v12664, 5
        %v12790 = vsel %vm1759, %v12787, %v12789
        %v12791 = vrot.slane %v12665, 5
        %v12792 = vrot.slane %v12666, 5
        %v12793 = vsel %vm1759, %v12791, %v12792
        %v12794 = vrot.slane %v12667, 5
        %v12795 = vsel %vm1759, %v12792, %v12794
        %v12828 = vpack.c.bf16 %v12720, %v12718
        %v12829 = vpack.c.bf16 %v12725, %v12723
        %v12830 = vpack.c.bf16 %v12730, %v12728
        %v12831 = vpack.c.bf16 %v12735, %v12733
        %v12832 = vpack.c.bf16 %v12740, %v12738
        %v12833 = vpack.c.bf16 %v12745, %v12743
        %v12834 = vpack.c.bf16 %v12750, %v12748
        %v12835 = vpack.c.bf16 %v12755, %v12753
        %v12836 = vpack.c.bf16 %v12760, %v12758
        %v12837 = vpack.c.bf16 %v12765, %v12763
        %v12838 = vpack.c.bf16 %v12770, %v12768
        %v12839 = vpack.c.bf16 %v12775, %v12773
        %v12840 = vpack.c.bf16 %v12780, %v12778
        %v12841 = vpack.c.bf16 %v12785, %v12783
        %v12842 = vpack.c.bf16 %v12790, %v12788
        %v12843 = vpack.c.bf16 %v12795, %v12793
        %v12844 = vld [vmem:[%s2] sm:$0xf]
        %v12845 = vld [vmem:[%s2 + $0x4] sm:$0xf]
        %v12846 = vld [vmem:[%s2 + $0x8] sm:$0xf]
        %v12847 = vld [vmem:[%s2 + $0xc] sm:$0xf]
        %v12849 = vperm.slane %v461, 0
        %v12855 = vunpack.c.l.b16 %v12844
        %v12856 = vunpack.c.l.b16 %v12845
        %v12857 = vunpack.c.l.b16 %v12846
        %v12858 = vunpack.c.l.b16 %v12847
        %v12859 = vpack.c.b16 %v12856, %v12855
        %v12860 = vpack.c.b16 %v12858, %v12857
        %v12864 = vsel %vm369, %v12828, 0
        %v12867 = vsel %vm369, %v12829, 0
        %v12870 = vsel %vm369, %v12830, 0
        %v12873 = vsel %vm369, %v12831, 0
        %v12876 = vsel %vm369, %v12832, 0
        %v12879 = vsel %vm369, %v12833, 0
        %v12882 = vsel %vm369, %v12834, 0
        %v12885 = vsel %vm369, %v12835, 0
        %v12888 = vsel %vm369, %v12836, 0
        %v12891 = vsel %vm369, %v12837, 0
        %v12894 = vsel %vm369, %v12838, 0
        %v12897 = vsel %vm369, %v12839, 0
        %v12900 = vsel %vm369, %v12840, 0
        %v12903 = vsel %vm369, %v12841, 0
        %v12906 = vsel %vm369, %v12842, 0
        %v12909 = vsel %vm369, %v12843, 0
        %12911 = vmatpush.bf16.msra.mxu0 0
        %12912 = vmatpush.bf16.msra.mxu0 0
        %12913 = vmatpush.bf16.msra.mxu0 0
        %12914 = vmatpush.bf16.msra.mxu0 0
        %12915 = vmatpush.bf16.msra.mxu0 0
        %12916 = vmatpush.bf16.msra.mxu0 0
        %12917 = vmatpush.bf16.msra.mxu0 %v12860
        %12918 = vmatpush.bf16.msra.mxu0 %v12859
        %12919 = vmatmul.bf16.gmra.mxu0 %v12864
        %v12920 = vpop.f32.mrf.mxu0
        %v12921 = vadd.f32 %v12849, %v12920
        %v12922 = vpop.f32.mrf.mxu0
        %v12923 = vadd.f32 %v12849, %v12922
        %12924 = vmatmul.bf16.gmra.mxu0 %v12867
        %v12925 = vpop.f32.mrf.mxu0
        %v12926 = vadd.f32 %v12849, %v12925
        %v12927 = vpop.f32.mrf.mxu0
        %v12928 = vadd.f32 %v12849, %v12927
        %12929 = vmatmul.bf16.gmra.mxu0 %v12870
        %v12930 = vpop.f32.mrf.mxu0
        %v12931 = vadd.f32 %v12849, %v12930
        %v12932 = vpop.f32.mrf.mxu0
        %v12933 = vadd.f32 %v12849, %v12932
        %12934 = vmatmul.bf16.gmra.mxu0 %v12873
        %v12935 = vpop.f32.mrf.mxu0
        %v12936 = vadd.f32 %v12849, %v12935
        %v12937 = vpop.f32.mrf.mxu0
        %v12938 = vadd.f32 %v12849, %v12937
        %12939 = vmatmul.bf16.gmra.mxu0 %v12876
        %v12940 = vpop.f32.mrf.mxu0
        %v12941 = vadd.f32 %v12849, %v12940
        %v12942 = vpop.f32.mrf.mxu0
        %v12943 = vadd.f32 %v12849, %v12942
        %12944 = vmatmul.bf16.gmra.mxu0 %v12879
        %v12945 = vpop.f32.mrf.mxu0
        %v12946 = vadd.f32 %v12849, %v12945
        %v12947 = vpop.f32.mrf.mxu0
        %v12948 = vadd.f32 %v12849, %v12947
        %12949 = vmatmul.bf16.gmra.mxu0 %v12882
        %v12950 = vpop.f32.mrf.mxu0
        %v12951 = vadd.f32 %v12849, %v12950
        %v12952 = vpop.f32.mrf.mxu0
        %v12953 = vadd.f32 %v12849, %v12952
        %12954 = vmatmul.bf16.gmra.mxu0 %v12885
        %v12955 = vpop.f32.mrf.mxu0
        %v12956 = vadd.f32 %v12849, %v12955
        %v12957 = vpop.f32.mrf.mxu0
        %v12958 = vadd.f32 %v12849, %v12957
        %12959 = vmatmul.bf16.gmra.mxu0 %v12888
        %v12960 = vpop.f32.mrf.mxu0
        %v12961 = vadd.f32 %v12849, %v12960
        %v12962 = vpop.f32.mrf.mxu0
        %v12963 = vadd.f32 %v12849, %v12962
        %12964 = vmatmul.bf16.gmra.mxu0 %v12891
        %v12965 = vpop.f32.mrf.mxu0
        %v12966 = vadd.f32 %v12849, %v12965
        %v12967 = vpop.f32.mrf.mxu0
        %v12968 = vadd.f32 %v12849, %v12967
        %12969 = vmatmul.bf16.gmra.mxu0 %v12894
        %v12970 = vpop.f32.mrf.mxu0
        %v12971 = vadd.f32 %v12849, %v12970
        %v12972 = vpop.f32.mrf.mxu0
        %v12973 = vadd.f32 %v12849, %v12972
        %12974 = vmatmul.bf16.gmra.mxu0 %v12897
        %v12975 = vpop.f32.mrf.mxu0
        %v12976 = vadd.f32 %v12849, %v12975
        %v12977 = vpop.f32.mrf.mxu0
        %v12978 = vadd.f32 %v12849, %v12977
        %12979 = vmatmul.bf16.gmra.mxu0 %v12900
        %v12980 = vpop.f32.mrf.mxu0
        %v12981 = vadd.f32 %v12849, %v12980
        %v12982 = vpop.f32.mrf.mxu0
        %v12983 = vadd.f32 %v12849, %v12982
        %12984 = vmatmul.bf16.gmra.mxu0 %v12903
        %v12985 = vpop.f32.mrf.mxu0
        %v12986 = vadd.f32 %v12849, %v12985
        %v12987 = vpop.f32.mrf.mxu0
        %v12988 = vadd.f32 %v12849, %v12987
        %12989 = vmatmul.bf16.gmra.mxu0 %v12906
        %v12990 = vpop.f32.mrf.mxu0
        %v12991 = vadd.f32 %v12849, %v12990
        %v12992 = vpop.f32.mrf.mxu0
        %v12993 = vadd.f32 %v12849, %v12992
        %12994 = vmatmul.bf16.gmra.mxu0 %v12909
        %v12995 = vpop.f32.mrf.mxu0
        %v12996 = vadd.f32 %v12849, %v12995
        %v12997 = vpop.f32.mrf.mxu0
        %v12998 = vadd.f32 %v12849, %v12997
        %12999 = vdwg.mxu0
        %v13000 = vadd.f32 %v12921, 3.0
        %v13001 = vadd.f32 %v12923, 3.0
        %v13002 = vadd.f32 %v12926, 3.0
        %v13003 = vadd.f32 %v12928, 3.0
        %v13004 = vadd.f32 %v12931, 3.0
        %v13005 = vadd.f32 %v12933, 3.0
        %v13006 = vadd.f32 %v12936, 3.0
        %v13007 = vadd.f32 %v12938, 3.0
        %v13008 = vadd.f32 %v12941, 3.0
        %v13009 = vadd.f32 %v12943, 3.0
        %v13010 = vadd.f32 %v12946, 3.0
        %v13011 = vadd.f32 %v12948, 3.0
        %v13012 = vadd.f32 %v12951, 3.0
        %v13013 = vadd.f32 %v12953, 3.0
        %v13014 = vadd.f32 %v12956, 3.0
        %v13015 = vadd.f32 %v12958, 3.0
        %v13016 = vadd.f32 %v12961, 3.0
        %v13017 = vadd.f32 %v12963, 3.0
        %v13018 = vadd.f32 %v12966, 3.0
        %v13019 = vadd.f32 %v12968, 3.0
        %v13020 = vadd.f32 %v12971, 3.0
        %v13021 = vadd.f32 %v12973, 3.0
        %v13022 = vadd.f32 %v12976, 3.0
        %v13023 = vadd.f32 %v12978, 3.0
        %v13024 = vadd.f32 %v12981, 3.0
        %v13025 = vadd.f32 %v12983, 3.0
        %v13026 = vadd.f32 %v12986, 3.0
        %v13027 = vadd.f32 %v12988, 3.0
        %v13028 = vadd.f32 %v12991, 3.0
        %v13029 = vadd.f32 %v12993, 3.0
        %v13030 = vadd.f32 %v12996, 3.0
        %v13031 = vadd.f32 %v12998, 3.0
        %v13032 = vmax.f32 %v13000, 0.0
        %v13033 = vmax.f32 %v13001, 0.0
        %v13034 = vmax.f32 %v13002, 0.0
        %v13035 = vmax.f32 %v13003, 0.0
        %v13036 = vmax.f32 %v13004, 0.0
        %v13037 = vmax.f32 %v13005, 0.0
        %v13038 = vmax.f32 %v13006, 0.0
        %v13039 = vmax.f32 %v13007, 0.0
        %v13040 = vmax.f32 %v13008, 0.0
        %v13041 = vmax.f32 %v13009, 0.0
        %v13042 = vmax.f32 %v13010, 0.0
        %v13043 = vmax.f32 %v13011, 0.0
        %v13044 = vmax.f32 %v13012, 0.0
        %v13045 = vmax.f32 %v13013, 0.0
        %v13046 = vmax.f32 %v13014, 0.0
        %v13047 = vmax.f32 %v13015, 0.0
        %v13048 = vmax.f32 %v13016, 0.0
        %v13049 = vmax.f32 %v13017, 0.0
        %v13050 = vmax.f32 %v13018, 0.0
        %v13051 = vmax.f32 %v13019, 0.0
        %v13052 = vmax.f32 %v13020, 0.0
        %v13053 = vmax.f32 %v13021, 0.0
        %v13054 = vmax.f32 %v13022, 0.0
        %v13055 = vmax.f32 %v13023, 0.0
        %v13056 = vmax.f32 %v13024, 0.0
        %v13057 = vmax.f32 %v13025, 0.0
        %v13058 = vmax.f32 %v13026, 0.0
        %v13059 = vmax.f32 %v13027, 0.0
        %v13060 = vmax.f32 %v13028, 0.0
        %v13061 = vmax.f32 %v13029, 0.0
        %v13062 = vmax.f32 %v13030, 0.0
        %v13063 = vmax.f32 %v13031, 0.0
        %v13064 = vmin.f32 %v13032, 6.0
        %v13065 = vmin.f32 %v13033, 6.0
        %v13066 = vmin.f32 %v13034, 6.0
        %v13067 = vmin.f32 %v13035, 6.0
        %v13068 = vmin.f32 %v13036, 6.0
        %v13069 = vmin.f32 %v13037, 6.0
        %v13070 = vmin.f32 %v13038, 6.0
        %v13071 = vmin.f32 %v13039, 6.0
        %v13072 = vmin.f32 %v13040, 6.0
        %v13073 = vmin.f32 %v13041, 6.0
        %v13074 = vmin.f32 %v13042, 6.0
        %v13075 = vmin.f32 %v13043, 6.0
        %v13076 = vmin.f32 %v13044, 6.0
        %v13077 = vmin.f32 %v13045, 6.0
        %v13078 = vmin.f32 %v13046, 6.0
        %v13079 = vmin.f32 %v13047, 6.0
        %v13080 = vmin.f32 %v13048, 6.0
        %v13081 = vmin.f32 %v13049, 6.0
        %v13082 = vmin.f32 %v13050, 6.0
        %v13083 = vmin.f32 %v13051, 6.0
        %v13084 = vmin.f32 %v13052, 6.0
        %v13085 = vmin.f32 %v13053, 6.0
        %v13086 = vmin.f32 %v13054, 6.0
        %v13087 = vmin.f32 %v13055, 6.0
        %v13088 = vmin.f32 %v13056, 6.0
        %v13089 = vmin.f32 %v13057, 6.0
        %v13090 = vmin.f32 %v13058, 6.0
        %v13091 = vmin.f32 %v13059, 6.0
        %v13092 = vmin.f32 %v13060, 6.0
        %v13093 = vmin.f32 %v13061, 6.0
        %v13094 = vmin.f32 %v13062, 6.0
        %v13095 = vmin.f32 %v13063, 6.0
        %v13096 = vmul.f32 %v12921, %v13064
        %v13097 = vmul.f32 %v12923, %v13065
        %v13098 = vmul.f32 %v12926, %v13066
        %v13099 = vmul.f32 %v12928, %v13067
        %v13100 = vmul.f32 %v12931, %v13068
        %v13101 = vmul.f32 %v12933, %v13069
        %v13102 = vmul.f32 %v12936, %v13070
        %v13103 = vmul.f32 %v12938, %v13071
        %v13104 = vmul.f32 %v12941, %v13072
        %v13105 = vmul.f32 %v12943, %v13073
        %v13106 = vmul.f32 %v12946, %v13074
        %v13107 = vmul.f32 %v12948, %v13075
        %v13108 = vmul.f32 %v12951, %v13076
        %v13109 = vmul.f32 %v12953, %v13077
        %v13110 = vmul.f32 %v12956, %v13078
        %v13111 = vmul.f32 %v12958, %v13079
        %v13112 = vmul.f32 %v12961, %v13080
        %v13113 = vmul.f32 %v12963, %v13081
        %v13114 = vmul.f32 %v12966, %v13082
        %v13115 = vmul.f32 %v12968, %v13083
        %v13116 = vmul.f32 %v12971, %v13084
        %v13117 = vmul.f32 %v12973, %v13085
        %v13118 = vmul.f32 %v12976, %v13086
        %v13119 = vmul.f32 %v12978, %v13087
        %v13120 = vmul.f32 %v12981, %v13088
        %v13121 = vmul.f32 %v12983, %v13089
        %v13122 = vmul.f32 %v12986, %v13090
        %v13123 = vmul.f32 %v12988, %v13091
        %v13124 = vmul.f32 %v12991, %v13092
        %v13125 = vmul.f32 %v12993, %v13093
        %v13126 = vmul.f32 %v12996, %v13094
        %v13127 = vmul.f32 %v12998, %v13095
        %v13128 = vpack.c.bf16 %v13097, %v13096
        %v13129 = vpack.c.bf16 %v13099, %v13098
        %v13130 = vpack.c.bf16 %v13101, %v13100
        %v13131 = vpack.c.bf16 %v13103, %v13102
        %v13132 = vpack.c.bf16 %v13105, %v13104
        %v13133 = vpack.c.bf16 %v13107, %v13106
        %v13134 = vpack.c.bf16 %v13109, %v13108
        %v13135 = vpack.c.bf16 %v13111, %v13110
        %v13136 = vpack.c.bf16 %v13113, %v13112
        %v13137 = vpack.c.bf16 %v13115, %v13114
        %v13138 = vpack.c.bf16 %v13117, %v13116
        %v13139 = vpack.c.bf16 %v13119, %v13118
        %v13140 = vpack.c.bf16 %v13121, %v13120
        %v13141 = vpack.c.bf16 %v13123, %v13122
        %v13142 = vpack.c.bf16 %v13125, %v13124
        %v13143 = vpack.c.bf16 %v13127, %v13126
        %v13144 = vld [vmem:[%s4] sm:$0xf]
        %v13145 = vld [vmem:[%s4 + $0x4] sm:$0xf]
        %v13146 = vld [vmem:[%s4 + $0x8] sm:$0xf]
        %v13147 = vld [vmem:[%s4 + $0xc] sm:$0xf]
        %v13148 = vld [vmem:[%s4 + $0x10] sm:$0xf]
        %v13149 = vld [vmem:[%s4 + $0x14] sm:$0xf]
        %v13150 = vld [vmem:[%s4 + $0x18] sm:$0xf]
        %v13151 = vld [vmem:[%s4 + $0x1c] sm:$0xf]
        %v13152 = vld [vmem:[%s4 + $0x20] sm:$0xf]
        %v13153 = vld [vmem:[%s4 + $0x24] sm:$0xf]
        %v13154 = vld [vmem:[%s4 + $0x28] sm:$0xf]
        %v13155 = vld [vmem:[%s4 + $0x2c] sm:$0xf]
        %v13156 = vld [vmem:[%s4 + $0x30] sm:$0xf]
        %v13157 = vld [vmem:[%s4 + $0x34] sm:$0xf]
        %v13158 = vld [vmem:[%s4 + $0x38] sm:$0xf]
        %v13159 = vld [vmem:[%s4 + $0x3c] sm:$0xf]
        %v13161 = vperm.slane %v462, 0
        %v13179 = vunpack.c.l.b16 %v13144
        %v13180 = vunpack.c.l.b16 %v13145
        %v13181 = vunpack.c.l.b16 %v13146
        %v13182 = vunpack.c.l.b16 %v13147
        %v13183 = vunpack.c.l.b16 %v13148
        %v13184 = vunpack.c.l.b16 %v13149
        %v13185 = vunpack.c.l.b16 %v13150
        %v13186 = vunpack.c.l.b16 %v13151
        %v13187 = vunpack.c.l.b16 %v13152
        %v13188 = vunpack.c.l.b16 %v13153
        %v13189 = vunpack.c.l.b16 %v13154
        %v13190 = vunpack.c.l.b16 %v13155
        %v13191 = vunpack.c.l.b16 %v13156
        %v13192 = vunpack.c.l.b16 %v13157
        %v13193 = vunpack.c.l.b16 %v13158
        %v13194 = vunpack.c.l.b16 %v13159
        %v13195 = vpack.c.b16 %v13180, %v13179
        %v13196 = vpack.c.b16 %v13182, %v13181
        %v13197 = vpack.c.b16 %v13184, %v13183
        %v13198 = vpack.c.b16 %v13186, %v13185
        %v13199 = vpack.c.b16 %v13188, %v13187
        %v13200 = vpack.c.b16 %v13190, %v13189
        %v13201 = vpack.c.b16 %v13192, %v13191
        %v13202 = vpack.c.b16 %v13194, %v13193
        %13211 = vmatpush.bf16.msra.mxu0 %v13202
        %13212 = vmatpush.bf16.msra.mxu0 %v13201
        %13213 = vmatpush.bf16.msra.mxu0 %v13200
        %13214 = vmatpush.bf16.msra.mxu0 %v13199
        %13215 = vmatpush.bf16.msra.mxu0 %v13198
        %13216 = vmatpush.bf16.msra.mxu0 %v13197
        %13217 = vmatpush.bf16.msra.mxu0 %v13196
        %13218 = vmatpush.bf16.msra.mxu0 %v13195
        %13219 = vmatmul.bf16.gmra.mxu0 %v13128
        %v13220 = vpop.f32.mrf.mxu0
        %v13221 = vadd.f32 %v13161, %v13220
        %v13222 = vpop.f32.mrf.mxu0
        %v13223 = vadd.f32 %v13161, %v13222
        %13224 = vmatmul.bf16.gmra.mxu0 %v13129
        %v13225 = vpop.f32.mrf.mxu0
        %v13226 = vadd.f32 %v13161, %v13225
        %v13227 = vpop.f32.mrf.mxu0
        %v13228 = vadd.f32 %v13161, %v13227
        %13229 = vmatmul.bf16.gmra.mxu0 %v13130
        %v13230 = vpop.f32.mrf.mxu0
        %v13231 = vadd.f32 %v13161, %v13230
        %v13232 = vpop.f32.mrf.mxu0
        %v13233 = vadd.f32 %v13161, %v13232
        %13234 = vmatmul.bf16.gmra.mxu0 %v13131
        %v13235 = vpop.f32.mrf.mxu0
        %v13236 = vadd.f32 %v13161, %v13235
        %v13237 = vpop.f32.mrf.mxu0
        %v13238 = vadd.f32 %v13161, %v13237
        %13239 = vmatmul.bf16.gmra.mxu0 %v13132
        %v13240 = vpop.f32.mrf.mxu0
        %v13241 = vadd.f32 %v13161, %v13240
        %v13242 = vpop.f32.mrf.mxu0
        %v13243 = vadd.f32 %v13161, %v13242
        %13244 = vmatmul.bf16.gmra.mxu0 %v13133
        %v13245 = vpop.f32.mrf.mxu0
        %v13246 = vadd.f32 %v13161, %v13245
        %v13247 = vpop.f32.mrf.mxu0
        %v13248 = vadd.f32 %v13161, %v13247
        %13249 = vmatmul.bf16.gmra.mxu0 %v13134
        %v13250 = vpop.f32.mrf.mxu0
        %v13251 = vadd.f32 %v13161, %v13250
        %v13252 = vpop.f32.mrf.mxu0
        %v13253 = vadd.f32 %v13161, %v13252
        %13254 = vmatmul.bf16.gmra.mxu0 %v13135
        %v13255 = vpop.f32.mrf.mxu0
        %v13256 = vadd.f32 %v13161, %v13255
        %v13257 = vpop.f32.mrf.mxu0
        %v13258 = vadd.f32 %v13161, %v13257
        %13259 = vmatmul.bf16.gmra.mxu0 %v13136
        %v13260 = vpop.f32.mrf.mxu0
        %v13261 = vadd.f32 %v13161, %v13260
        %v13262 = vpop.f32.mrf.mxu0
        %v13263 = vadd.f32 %v13161, %v13262
        %13264 = vmatmul.bf16.gmra.mxu0 %v13137
        %v13265 = vpop.f32.mrf.mxu0
        %v13266 = vadd.f32 %v13161, %v13265
        %v13267 = vpop.f32.mrf.mxu0
        %v13268 = vadd.f32 %v13161, %v13267
        %13269 = vmatmul.bf16.gmra.mxu0 %v13138
        %v13270 = vpop.f32.mrf.mxu0
        %v13271 = vadd.f32 %v13161, %v13270
        %v13272 = vpop.f32.mrf.mxu0
        %v13273 = vadd.f32 %v13161, %v13272
        %13274 = vmatmul.bf16.gmra.mxu0 %v13139
        %v13275 = vpop.f32.mrf.mxu0
        %v13276 = vadd.f32 %v13161, %v13275
        %v13277 = vpop.f32.mrf.mxu0
        %v13278 = vadd.f32 %v13161, %v13277
        %13279 = vmatmul.bf16.gmra.mxu0 %v13140
        %v13280 = vpop.f32.mrf.mxu0
        %v13281 = vadd.f32 %v13161, %v13280
        %v13282 = vpop.f32.mrf.mxu0
        %v13283 = vadd.f32 %v13161, %v13282
        %13284 = vmatmul.bf16.gmra.mxu0 %v13141
        %v13285 = vpop.f32.mrf.mxu0
        %v13286 = vadd.f32 %v13161, %v13285
        %v13287 = vpop.f32.mrf.mxu0
        %v13288 = vadd.f32 %v13161, %v13287
        %13289 = vmatmul.bf16.gmra.mxu0 %v13142
        %v13290 = vpop.f32.mrf.mxu0
        %v13291 = vadd.f32 %v13161, %v13290
        %v13292 = vpop.f32.mrf.mxu0
        %v13293 = vadd.f32 %v13161, %v13292
        %13294 = vmatmul.bf16.gmra.mxu0 %v13143
        %v13295 = vpop.f32.mrf.mxu0
        %v13296 = vadd.f32 %v13161, %v13295
        %v13297 = vpop.f32.mrf.mxu0
        %v13298 = vadd.f32 %v13161, %v13297
        %13299 = vdwg.mxu0
        %v13300 = vld [vmem:[%s368 + $0x8] sm:$0xff]
        %v13301 = vld [vmem:[%s368 + $0x10] sm:$0xff]
        %v13302 = vld [vmem:[%s368 + $0x28] sm:$0xff]
        %v13303 = vld [vmem:[%s368 + $0x30] sm:$0xff]
        %v13304 = vld [vmem:[%s368 + $0x48] sm:$0xff]
        %v13305 = vld [vmem:[%s368 + $0x50] sm:$0xff]
        %v13306 = vld [vmem:[%s368 + $0x68] sm:$0xff]
        %v13307 = vld [vmem:[%s368 + $0x70] sm:$0xff]
        %v13308 = vld [vmem:[%s368 + $0x88] sm:$0xff]
        %v13309 = vld [vmem:[%s368 + $0x90] sm:$0xff]
        %v13310 = vld [vmem:[%s368 + $0xa8] sm:$0xff]
        %v13311 = vld [vmem:[%s368 + $0xb0] sm:$0xff]
        %v13312 = vld [vmem:[%s368 + $0xc8] sm:$0xff]
        %v13313 = vld [vmem:[%s368 + $0xd0] sm:$0xff]
        %v13314 = vld [vmem:[%s368 + $0xe8] sm:$0xff]
        %v13315 = vld [vmem:[%s368 + $0xf0] sm:$0xff]
        %v13316 = vld [vmem:[%s368 + $0x108] sm:$0xff]
        %v13317 = vld [vmem:[%s368 + $0x110] sm:$0xff]
        %v13318 = vld [vmem:[%s368 + $0x128] sm:$0xff]
        %v13319 = vld [vmem:[%s368 + $0x130] sm:$0xff]
        %v13320 = vld [vmem:[%s368 + $0x148] sm:$0xff]
        %v13321 = vld [vmem:[%s368 + $0x150] sm:$0xff]
        %v13322 = vld [vmem:[%s368 + $0x168] sm:$0xff]
        %v13323 = vld [vmem:[%s368 + $0x170] sm:$0xff]
        %v13324 = vld [vmem:[%s368 + $0x188] sm:$0xff]
        %v13325 = vld [vmem:[%s368 + $0x190] sm:$0xff]
        %v13326 = vld [vmem:[%s368 + $0x1a8] sm:$0xff]
        %v13327 = vld [vmem:[%s368 + $0x1b0] sm:$0xff]
        %v13328 = vld [vmem:[%s368 + $0x1c8] sm:$0xff]
        %v13329 = vld [vmem:[%s368 + $0x1d0] sm:$0xff]
        %v13330 = vld [vmem:[%s368 + $0x1e8] sm:$0xff]
        %v13331 = vld [vmem:[%s368 + $0x1f0] sm:$0xff]
        %v13332 = vadd.f32 %v13300, %v13221
        %v13333 = vadd.f32 %v13301, %v13223
        %v13334 = vadd.f32 %v13302, %v13226
        %v13335 = vadd.f32 %v13303, %v13228
        %v13336 = vadd.f32 %v13304, %v13231
        %v13337 = vadd.f32 %v13305, %v13233
        %v13338 = vadd.f32 %v13306, %v13236
        %v13339 = vadd.f32 %v13307, %v13238
        %v13340 = vadd.f32 %v13308, %v13241
        %v13341 = vadd.f32 %v13309, %v13243
        %v13342 = vadd.f32 %v13310, %v13246
        %v13343 = vadd.f32 %v13311, %v13248
        %v13344 = vadd.f32 %v13312, %v13251
        %v13345 = vadd.f32 %v13313, %v13253
        %v13346 = vadd.f32 %v13314, %v13256
        %v13347 = vadd.f32 %v13315, %v13258
        %v13348 = vadd.f32 %v13316, %v13261
        %v13349 = vadd.f32 %v13317, %v13263
        %v13350 = vadd.f32 %v13318, %v13266
        %v13351 = vadd.f32 %v13319, %v13268
        %v13352 = vadd.f32 %v13320, %v13271
        %v13353 = vadd.f32 %v13321, %v13273
        %v13354 = vadd.f32 %v13322, %v13276
        %v13355 = vadd.f32 %v13323, %v13278
        %v13356 = vadd.f32 %v13324, %v13281
        %v13357 = vadd.f32 %v13325, %v13283
        %v13358 = vadd.f32 %v13326, %v13286
        %v13359 = vadd.f32 %v13327, %v13288
        %v13360 = vadd.f32 %v13328, %v13291
        %v13361 = vadd.f32 %v13329, %v13293
        %v13362 = vadd.f32 %v13330, %v13296
        %v13363 = vadd.f32 %v13331, %v13298
        %13364 = vst.msk [vmem:[%s285] sm:$0xff] %vm369, %v13332
        %13365 = vst.msk [vmem:[%s285 + $0x8] sm:$0xff] %vm369, %v13333
        %13366 = vst.msk [vmem:[%s285 + $0x10] sm:$0xff] %vm369, %v13334
        %13367 = vst.msk [vmem:[%s285 + $0x18] sm:$0xff] %vm369, %v13335
        %13368 = vst.msk [vmem:[%s285 + $0x20] sm:$0xff] %vm369, %v13336
        %13369 = vst.msk [vmem:[%s285 + $0x28] sm:$0xff] %vm369, %v13337
        %13370 = vst.msk [vmem:[%s285 + $0x30] sm:$0xff] %vm369, %v13338
        %13371 = vst.msk [vmem:[%s285 + $0x38] sm:$0xff] %vm369, %v13339
        %13372 = vst.msk [vmem:[%s285 + $0x40] sm:$0xff] %vm369, %v13340
        %13373 = vst.msk [vmem:[%s285 + $0x48] sm:$0xff] %vm369, %v13341
        %13374 = vst.msk [vmem:[%s285 + $0x50] sm:$0xff] %vm369, %v13342
        %13375 = vst.msk [vmem:[%s285 + $0x58] sm:$0xff] %vm369, %v13343
        %13376 = vst.msk [vmem:[%s285 + $0x60] sm:$0xff] %vm369, %v13344
        %13377 = vst.msk [vmem:[%s285 + $0x68] sm:$0xff] %vm369, %v13345
        %13378 = vst.msk [vmem:[%s285 + $0x70] sm:$0xff] %vm369, %v13346
        %13379 = vst.msk [vmem:[%s285 + $0x78] sm:$0xff] %vm369, %v13347
        %13380 = vst.msk [vmem:[%s285 + $0x80] sm:$0xff] %vm369, %v13348
        %13381 = vst.msk [vmem:[%s285 + $0x88] sm:$0xff] %vm369, %v13349
        %13382 = vst.msk [vmem:[%s285 + $0x90] sm:$0xff] %vm369, %v13350
        %13383 = vst.msk [vmem:[%s285 + $0x98] sm:$0xff] %vm369, %v13351
        %13384 = vst.msk [vmem:[%s285 + $0xa0] sm:$0xff] %vm369, %v13352
        %13385 = vst.msk [vmem:[%s285 + $0xa8] sm:$0xff] %vm369, %v13353
        %13386 = vst.msk [vmem:[%s285 + $0xb0] sm:$0xff] %vm369, %v13354
        %13387 = vst.msk [vmem:[%s285 + $0xb8] sm:$0xff] %vm369, %v13355
        %13388 = vst.msk [vmem:[%s285 + $0xc0] sm:$0xff] %vm369, %v13356
        %13389 = vst.msk [vmem:[%s285 + $0xc8] sm:$0xff] %vm369, %v13357
        %13390 = vst.msk [vmem:[%s285 + $0xd0] sm:$0xff] %vm369, %v13358
        %13391 = vst.msk [vmem:[%s285 + $0xd8] sm:$0xff] %vm369, %v13359
        %13392 = vst.msk [vmem:[%s285 + $0xe0] sm:$0xff] %vm369, %v13360
        %13393 = vst.msk [vmem:[%s285 + $0xe8] sm:$0xff] %vm369, %v13361
        %13394 = vst.msk [vmem:[%s285 + $0xf0] sm:$0xff] %vm369, %v13362
        %13395 = vst.msk [vmem:[%s285 + $0xf8] sm:$0xff] %vm369, %v13363
        %s13396 = sand.u32 %s176, 1
        %s13397 = scalar_lea.sflag [#allocation5], %s13396
        %s13398 = sand.u32 %s176, 1
        %s13399 = smul.addr %s13398, 256
        %s13400 = scalar_lea.vmem [#allocation6], %s13399
        // Predicated region
        $region65: #{conv_encoder_bnhs.1} parent=43 // pred_check
          %p13401 = pneg %p186
        $region66: #{conv_encoder_bnhs.1} parent=43 // pred_check_branch
          %13403 = sbr.rel (%p13401) target = $region68
        $region67: #{conv_encoder_bnhs.1} parent=43 // pred_region
          %s13404 = smul.u32 16, %s28
          %13406 = vsyncadd %s13397, 0
          %s13407 = smul.addr %s13404, 2
          %s13408 = smul.addr %s27, 32
          %s13409 = sadd.s32 %s13407, %s13408
          %s13410 = smul.addr %s13409, 8
          %s13411 = scalar_lea.hbm %s6, %s13410
          %s13412 = sshll.u32 %s13400, 4
          %s13413 = int_to_ptr.vmem [resolvable:$true] %s13412
          %s13414 = sshll.u32 %s13411, 4
          %s13415 = int_to_ptr.hbm [resolvable:$true] %s13414
          %13420 = dma.vmem_to_hbm [thread:$0]  %s13413, 4096, %s13415, %s13397, 128, 128, 8
        $region68: #{conv_encoder_bnhs.1} parent=43 // pred_fallthru
          _
      $region44: #{conv_encoder_bnhs.1} parent=5 // pred_fallthru
        _
      %p13421 = scmp.le.s32.totalorder 2, %s18
      // Predicated region
      $region69: #{conv_encoder_bnhs.1} parent=5 // pred_check
        %p13422 = pneg %p13421
      $region70: #{conv_encoder_bnhs.1} parent=5 // pred_check_branch
        %13424 = sbr.rel (%p13422) target = $region72
      $region71: #{conv_encoder_bnhs.1} parent=5 // pred_region
        %s13425 = ssub.s32 %s18, 2
        // Predicated region
        $region73: #{conv_encoder_bnhs.1} parent=71 // pred_check
          %p13426 = pneg %p192
        $region74: #{conv_encoder_bnhs.1} parent=71 // pred_check_branch
          %13428 = sbr.rel (%p13426) target = $region76
        $region75: #{conv_encoder_bnhs.1} parent=71 // pred_region
          %s13429 = sand.u32 %s177, 1
          %s13430 = scalar_lea.sflag [#allocation5], %s13429
          %s13431 = sand.u32 %s177, 1
          %s13432 = smul.addr %s13431, 256
          %s13433 = scalar_lea.vmem [#allocation6], %s13432
          %13435 = dma.done %s13430, 4096
        $region76: #{conv_encoder_bnhs.1} parent=71 // pred_fallthru
          _
      $region72: #{conv_encoder_bnhs.1} parent=5 // pred_fallthru
        _
    $region6: #{conv_encoder_bnhs.1} parent=1 // loop_footer
      %s22 = sadd.s32 1, %s18
    $region7: #{conv_encoder_bnhs.1} parent=1 // loop_footer_branch
      %17 = sbr.rel target = $region3
    $region8: #{conv_encoder_bnhs.1} parent=1 // loop_exit
      _
    %13436 = vsyncpa [#allocation4], 1
    %s13437 = scalar_lea.sflag [#allocation4], 1
    %13438 = vsyncpa %s13437, 1
    %13439 = vsyncpa [#allocation5], 1
    %s13440 = scalar_lea.sflag [#allocation5], 1
    %13441 = vsyncpa %s13440, 1

</llo_original>
